<compile_context>
chip_gen: v5e
topology: v5e:2x2
jax: 0.10.0
libtpu: 0.0.40
codegen_flags: <defaults>
</compile_context>

<pallas_src>
import functools

import numpy as np
import jax
import jax.numpy as jnp
from jax.experimental import pallas as pl
from jax.experimental.pallas import tpu as pltpu

_BN_EPS = 1e-5


# ----------------------------------------------------------------------------
# activation helper (static choice, baked into kernels)
# ----------------------------------------------------------------------------
def _apply_act(y, act):
    if act == "relu":
        return jnp.maximum(y, 0.0)
    if act == "leaky_relu":
        return jnp.where(y >= 0.0, y, 0.01 * y)   # PyTorch default slope
    if act == "sigmoid":
        return jax.nn.sigmoid(y)
    if act == "tanh":
        return jnp.tanh(y)
    if act == "none":
        return y
    raise ValueError(act)


# ----------------------------------------------------------------------------
# Pallas kernel 1: TCN temporal conv (kernel (9,1), pad (4,0)), im2col done
# in-kernel as 9 shifted matmuls.  Bias + (optional) BatchNorm2d are folded
# into the per-channel scale/shift epilogue.  Grid over batch, "parallel".
# ----------------------------------------------------------------------------
def _tcn_kernel(xp_ref, w_ref, s_ref, sh_ref, o_ref, *, act, T, N, Cout):
    # xp_ref: ((T+8)*N, Cin) for one batch sample; w_ref: (9, Cin, Cout)
    xall = xp_ref[...]
    acc = jnp.zeros((T * N, Cout), jnp.float32)
    for k in range(9):                                  # static unroll, 9 taps
        acc = acc + jnp.dot(xall[k * N:k * N + T * N, :], w_ref[k],
                            preferred_element_type=jnp.float32)
    y = acc * s_ref[...] + sh_ref[...]
    o_ref[...] = _apply_act(y, act)


def pallas_tcn_conv(xpad, w, scale, shift, act):
    """xpad: (B, T+8, N, Cin) already zero-padded along T; w: (9, Cin, Cout)."""
    B, Tp, N, Cin = xpad.shape
    T = Tp - 8
    Cout = w.shape[2]
    xp2 = xpad.reshape(B, Tp * N, Cin)
    cost = pl.CostEstimate(
        flops=2 * B * T * N * 9 * Cin * Cout,
        transcendentals=0,
        bytes_accessed=4 * (B * Tp * N * Cin + 9 * Cin * Cout + 2 * Cout
                            + B * T * N * Cout))
    y = pl.pallas_call(
        functools.partial(_tcn_kernel, act=act, T=T, N=N, Cout=Cout),
        out_shape=jax.ShapeDtypeStruct((B, T * N, Cout), jnp.float32),
        grid=(B,),
        in_specs=[
            pl.BlockSpec((None, Tp * N, Cin), lambda b: (b, 0, 0)),
            pl.BlockSpec((9, Cin, Cout), lambda b: (0, 0, 0)),
            pl.BlockSpec((1, Cout), lambda b: (0, 0)),
            pl.BlockSpec((1, Cout), lambda b: (0, 0)),
        ],
        out_specs=pl.BlockSpec((None, T * N, Cout), lambda b: (b, 0, 0)),
        compiler_params=pltpu.CompilerParams(dimension_semantics=("parallel",)),
        cost_estimate=cost,
    )(xp2, w, scale.reshape(1, Cout), shift.reshape(1, Cout))
    return y.reshape(B, T, N, Cout)


# ----------------------------------------------------------------------------
# Pallas kernel 2: batched GCNConv + fused per-frame BatchNorm + activation.
# All G = B*T graphs are processed with two plain 2-D matmuls per block of
# graphs:  Y = (I_Gb ⊗ A_hat) @ (X @ W) + b, then y*scale_row + shift_row.
# ----------------------------------------------------------------------------
def _gcn_kernel(x_ref, w_ref, a_ref, b_ref, s_ref, sh_ref, o_ref, *, act):
    z = jnp.dot(x_ref[...], w_ref[...], preferred_element_type=jnp.float32)
    y = jnp.dot(a_ref[...], z, preferred_element_type=jnp.float32) + b_ref[...]
    o_ref[...] = _apply_act(y * s_ref[...] + sh_ref[...], act)


def pallas_gcn(x_flat, w, a_blk, b, scale_row, shift_row, act, nblocks):
    M, Cin = x_flat.shape          # M = B*T*Nn rows, ordered (b, t, n)
    Cout = w.shape[1]
    assert M % nblocks == 0
    Mb = M // nblocks
    assert a_blk.shape == (Mb, Mb)
    cost = pl.CostEstimate(
        flops=2 * M * Cin * Cout + 2 * M * Mb * Cout,
        transcendentals=0,
        bytes_accessed=4 * (M * Cin + Cin * Cout + nblocks * Mb * Mb
                            + Cout + 2 * M + M * Cout))
    return pl.pallas_call(
        functools.partial(_gcn_kernel, act=act),
        out_shape=jax.ShapeDtypeStruct((M, Cout), jnp.float32),
        grid=(nblocks,),
        in_specs=[
            pl.BlockSpec((Mb, Cin), lambda i: (i, 0)),
            pl.BlockSpec((Cin, Cout), lambda i: (0, 0)),
            pl.BlockSpec((Mb, Mb), lambda i: (0, 0)),
            pl.BlockSpec((1, Cout), lambda i: (0, 0)),
            pl.BlockSpec((Mb, 1), lambda i: (i, 0)),
            pl.BlockSpec((Mb, 1), lambda i: (i, 0)),
        ],
        out_specs=pl.BlockSpec((Mb, Cout), lambda i: (i, 0)),
        compiler_params=pltpu.CompilerParams(dimension_semantics=("parallel",)),
        cost_estimate=cost,
    )(x_flat, w, a_blk, b.reshape(1, Cout),
      scale_row.reshape(M, 1), shift_row.reshape(M, 1))


def _gcn_nblocks(G, Nn):
    # Two graph-blocks let the "parallel" grid use both TensorCores on v7x;
    # fall back to a single full block if divisibility does not allow it.
    if G % 2 == 0 and ((G // 2) * Nn) % 8 == 0:
        return 2
    return 1


# ----------------------------------------------------------------------------
# Pallas kernel 3: fused GatingLayer — per-(b,c) mean / unbiased std over (T,N)
# + Linear/ReLU/Linear/Sigmoid in ONE kernel.  The per-batch MLP is block-
# diagonalised (I_B ⊗ W) so everything stays rank-2 on a (1, B*C) stats row.
# ----------------------------------------------------------------------------
def _gating_kernel(x_ref, w1a_ref, w1b_ref, b1_ref, w2_ref, b2_ref, g_ref, *, L):
    x = x_ref[...]                                           # (L, B*C)
    mean = jnp.sum(x, axis=0, keepdims=True) * (1.0 / L)     # (1, B*C)
    d = x - mean
    var = jnp.sum(d * d, axis=0, keepdims=True) * (1.0 / (L - 1))  # torch.std
    std = jnp.sqrt(var)
    h = (jnp.dot(mean, w1a_ref[...], preferred_element_type=jnp.float32)
         + jnp.dot(std, w1b_ref[...], preferred_element_type=jnp.float32)
         + b1_ref[...])
    h = jnp.maximum(h, 0.0)
    g = jnp.dot(h, w2_ref[...], preferred_element_type=jnp.float32) + b2_ref[...]
    g_ref[...] = jax.nn.sigmoid(g)                           # (1, B*C)


def pallas_gating(x_bcl, w1, b1, w2, b2):
    B, C, L = x_bcl.shape
    H = w1.shape[1]
    eye_b = jnp.eye(B, dtype=jnp.float32)
    w1a_big = jnp.kron(eye_b, w1[:C])          # (B*C, B*H)
    w1b_big = jnp.kron(eye_b, w1[C:])          # (B*C, B*H)
    w2_big = jnp.kron(eye_b, w2)               # (B*H, B*C)
    b1_t = jnp.tile(b1, B).reshape(1, B * H)
    b2_t = jnp.tile(b2, B).reshape(1, B * C)
    x_lbc = x_bcl.transpose(2, 0, 1).reshape(L, B * C)
    gate = pl.pallas_call(
        functools.partial(_gating_kernel, L=L),
        out_shape=jax.ShapeDtypeStruct((1, B * C), jnp.float32),
        grid=(1,),
        in_specs=[
            pl.BlockSpec((L, B * C), lambda i: (0, 0)),
            pl.BlockSpec((B * C, B * H), lambda i: (0, 0)),
            pl.BlockSpec((B * C, B * H), lambda i: (0, 0)),
            pl.BlockSpec((1, B * H), lambda i: (0, 0)),
            pl.BlockSpec((B * H, B * C), lambda i: (0, 0)),
            pl.BlockSpec((1, B * C), lambda i: (0, 0)),
        ],
        out_specs=pl.BlockSpec((1, B * C), lambda i: (0, 0)),
    )(x_lbc, w1a_big, w1b_big, b1_t, w2_big, b2_t)
    return gate.reshape(B, C)


# ----------------------------------------------------------------------------
# Pallas kernel 4: the whole 4-layer RegressionHead (Linear + folded
# BatchNorm1d + LeakyReLU, Dropout = eval identity) fused in one kernel;
# the three branch features are batched into one (3B, C) input.
# ----------------------------------------------------------------------------
def _head_kernel(x_ref, *refs, acts):
    o_ref = refs[-1]
    h = x_ref[...]
    for i, act in enumerate(acts):
        w, s, sh = refs[3 * i], refs[3 * i + 1], refs[3 * i + 2]
        h = _apply_act(jnp.dot(h, w[...], preferred_element_type=jnp.float32)
                       * s[...] + sh[...], act)
    o_ref[...] = h


def pallas_head(x, head):
    M, K = x.shape
    acts = tuple(lay["act"] for lay in head)
    args = [x]
    in_specs = [pl.BlockSpec((M, K), lambda i: (0, 0))]
    flops, din = 0, K
    for lay in head:
        W = lay["W"]
        dout = W.shape[1]
        args += [W, lay["scale"].reshape(1, dout), lay["shift"].reshape(1, dout)]
        in_specs += [pl.BlockSpec((din, dout), lambda i: (0, 0)),
                     pl.BlockSpec((1, dout), lambda i: (0, 0)),
                     pl.BlockSpec((1, dout), lambda i: (0, 0))]
        flops += 2 * M * din * dout
        din = dout
    out_dim = head[-1]["W"].shape[1]
    bytes_accessed = 4 * (sum(int(np.prod(a.shape)) for a in args) + M * out_dim)
    return pl.pallas_call(
        functools.partial(_head_kernel, acts=acts),
        out_shape=jax.ShapeDtypeStruct((M, out_dim), jnp.float32),
        grid=(1,),
        in_specs=in_specs,
        out_specs=pl.BlockSpec((M, out_dim), lambda i: (0, 0)),
        cost_estimate=pl.CostEstimate(flops=flops, transcendentals=0,
                                      bytes_accessed=bytes_accessed),
    )(*args)


# ----------------------------------------------------------------------------
# module-level apply functions (glue: pad / reshape / concat in plain JAX)
# ----------------------------------------------------------------------------
def tcn_apply(x, p):
    """TCNModule: Conv2d(k=(9,1), pad=(4,0)) x num_layers -> BatchNorm2d -> act."""
    for layer in p["layers"]:
        xpad = jnp.pad(x, ((0, 0), (4, 4), (0, 0), (0, 0)))
        x = pallas_tcn_conv(xpad, layer["W"], layer["scale"], layer["shift"],
                            layer["act"])
    return x


def gcn_module_apply(x, p, a_blk, nblocks):
    """GCNModule: GCNConv x num_layers -> BatchNorm2d(T) -> activation."""
    B, T, Nn, C = x.shape
    G = B * T
    xf = x.reshape(G * Nn, C)
    nlay = len(p["convs"])
    for i, (W, b) in enumerate(p["convs"]):
        if i == nlay - 1:
            # row r = (b*T + t)*Nn + n  ->  frame t = (r // Nn) % T
            s_row = jnp.repeat(jnp.tile(p["bn_scale_t"], B), Nn)
            sh_row = jnp.repeat(jnp.tile(p["bn_shift_t"], B), Nn)
            act = p["act"]
        else:
            s_row = jnp.ones((G * Nn,), jnp.float32)
            sh_row = jnp.zeros((G * Nn,), jnp.float32)
            act = "none"
        xf = pallas_gcn(xf, W, a_blk, b, s_row, sh_row, act, nblocks)
    return xf.reshape(B, T, Nn, -1)


def gtcn_apply(x, p, a_blk, nblocks):
    """GTCN: [GCN, (TCN, GCN)*], residual add after every GCN block."""
    res = x
    for kind, lp in p["layers"]:
        if kind == "tcn":
            x = tcn_apply(x, lp)
        else:
            x = gcn_module_apply(x, lp, a_blk, nblocks)
            # NOTE: CBAM branch in the reference is dead code (condition checks
            # isinstance(layer, TCNModule) inside the non-TCN branch).
            if res.shape == x.shape:
                x = x + res
            res = x
    return x


def model_forward(x, a_hat, params):
    """x: (B, T, N, 7) float32; a_hat: (N, N) GCN-normalized adjacency."""
    B, T, Nn, C = x.shape
    xc = jnp.transpose(x, (0, 3, 1, 2))                      # (B, C, T, N)
    # input BatchNorm2d(in_channel) (eval, folded) -- elementwise glue
    xc = (xc * params["in_bn_scale"][None, :, None, None]
          + params["in_bn_shift"][None, :, None, None])

    x1 = xc[:, :3]
    x2 = xc[:, 3:7]
    x3 = xc

    # GatingLayer (use_gating=True): one fused kernel
    gate = pallas_gating(x3.reshape(B, C, T * Nn),
                         params["gate_w1"], params["gate_b1"],
                         params["gate_w2"], params["gate_b2"])
    x3 = x3 * gate[:, :, None, None]

    # back to channels-last (B, T, N, C)
    x1 = jnp.transpose(x1, (0, 2, 3, 1))
    x2 = jnp.transpose(x2, (0, 2, 3, 1))
    x3 = jnp.transpose(x3, (0, 2, 3, 1))

    # block-diagonal (I ⊗ A_hat) shared by every GCN layer / branch
    G = B * T
    nblocks = _gcn_nblocks(G, Nn)
    a_blk = jnp.kron(jnp.eye(G // nblocks, dtype=jnp.float32), a_hat)

    # branch 1
    x1 = jnp.concatenate([x1, tcn_apply(x1, params["tcn1"])], axis=3)
    x1 = gtcn_apply(x1, params["gtcn1"], a_blk, nblocks)
    x1_feature = jnp.mean(x1, axis=(1, 2))

    # branch 2
    x2 = jnp.concatenate([x2, tcn_apply(x2, params["tcn2"])], axis=3)
    x2 = (x1 + x2) / 2.0
    x2 = gtcn_apply(x2, params["gtcn2"], a_blk, nblocks)
    x2_feature = jnp.mean(x2, axis=(1, 2))

    # branch 3
    x3 = jnp.concatenate([x3, tcn_apply(x3, params["tcn3"])], axis=3)
    x3 = (x1 + x2 + x3) / 3.0
    x3 = gtcn_apply(x3, params["gtcn3"], a_blk, nblocks)
    x3_feature = jnp.mean(x3, axis=(1, 2))

    # RegressionHead shares weights & eval-mode BN -> batch the three calls
    feats = jnp.concatenate([x1_feature, x2_feature, x3_feature], axis=0)
    cls = pallas_head(feats, params["head"])
    cls_1, cls_2, cls_3 = cls[:B], cls[B:2 * B], cls[2 * B:]
    return cls_1, cls_2, cls_3, gate, x1_feature, x3_feature


# ----------------------------------------------------------------------------
# deterministic parameter construction (synthetic weights, eval-mode BN folded)
# ----------------------------------------------------------------------------
def _init(key, shape, s=0.1):
    return s * jax.random.normal(key, shape, jnp.float32)


def make_params(key, c_in, T, tcn_out, gcn_out, gtcn_num_layers,
                tcn_num_layers=1, gcn_num_layers=1):
    keys = iter(jax.random.split(key, 256))
    bn_id = np.float32(1.0 / np.sqrt(1.0 + _BN_EPS))   # eval BN, identity init
    p = {}
    p["in_bn_scale"] = jnp.full((c_in,), bn_id, jnp.float32)
    p["in_bn_shift"] = jnp.zeros((c_in,), jnp.float32)
    # GatingLayer(in_features=c_in, reduction_features=4)
    p["gate_w1"] = _init(next(keys), (2 * c_in, 4))
    p["gate_b1"] = _init(next(keys), (4,))
    p["gate_w2"] = _init(next(keys), (4, c_in))
    p["gate_b2"] = _init(next(keys), (c_in,))

    def tcn_params(cin, cout, act="relu"):
        layers, c = [], cin
        bn_scale = jnp.full((cout,), bn_id, jnp.float32)
        bn_shift = jnp.zeros((cout,), jnp.float32)
        for li in range(tcn_num_layers):
            W = _init(next(keys), (9, c, cout))       # (tap, Cin, Cout)
            b = _init(next(keys), (cout,))
            last = li == tcn_num_layers - 1
            # fold Conv2d bias (+ trailing BatchNorm2d on the last conv) into
            # the per-channel scale/shift epilogue
            scale = bn_scale if last else jnp.ones((cout,), jnp.float32)
            shift = (bn_scale * b + bn_shift) if last else b
            layers.append(dict(W=W, scale=scale, shift=shift,
                               act=act if last else "none"))
            c = cout
        return dict(layers=layers)

    def gcn_params(cin, cout, act="relu"):
        convs, c = [], cin
        for _ in range(gcn_num_layers):
            convs.append((_init(next(keys), (c, cout)),
                          _init(next(keys), (cout,))))
            c = cout
        return dict(convs=convs,
                    bn_scale_t=jnp.full((T,), bn_id, jnp.float32),
                    bn_shift_t=jnp.zeros((T,), jnp.float32),
                    act=act)

    def gtcn_params():
        layers = [("gcn", gcn_params(tcn_out, gcn_out))]
        for _ in range(gtcn_num_layers - 1):
            layers.append(("tcn", tcn_params(gcn_out, tcn_out)))
            layers.append(("gcn", gcn_params(tcn_out, gcn_out)))
        return dict(layers=layers)

    p["tcn1"] = tcn_params(3, tcn_out - 3)
    p["tcn2"] = tcn_params(4, tcn_out - 4)
    p["tcn3"] = tcn_params(c_in, tcn_out - c_in)
    p["gtcn1"] = gtcn_params()
    p["gtcn2"] = gtcn_params()
    p["gtcn3"] = gtcn_params()

    # RegressionHead: Linear + BatchNorm1d(eval) + LeakyReLU (Dropout = id)
    dims = [tcn_out, 256, 128, 64]
    head = []
    for i in range(3):
        W = _init(next(keys), (dims[i], dims[i + 1]))
        b = _init(next(keys), (dims[i + 1],))
        scale = jnp.full((dims[i + 1],), bn_id, jnp.float32)
        head.append(dict(W=W, scale=scale, shift=scale * b, act="leaky_relu"))
    W = _init(next(keys), (64, 1))
    b = _init(next(keys), (1,))
    head.append(dict(W=W, scale=jnp.ones((1,), jnp.float32), shift=b, act="none"))
    p["head"] = head
    return p


def build_ring_adjacency(num_nodes):
    """Dense GCN-normalized adjacency (self-loops + symmetric deg^-1/2 norm)."""
    src, dst = [], []
    for i in range(num_nodes):
        j = (i + 1) % num_nodes
        src += [i, j]
        dst += [j, i]
    A = np.zeros((num_nodes, num_nodes), np.float32)
    A[np.array(dst), np.array(src)] = 1.0
    A = A + np.eye(num_nodes, dtype=np.float32)
    deg = A.sum(axis=1)
    dinv = 1.0 / np.sqrt(deg)
    return jnp.asarray(dinv[:, None] * A * dinv[None, :])


# TODO(synk): GATConv ('gat') path and train-mode BatchNorm/Dropout statistics
# are not implemented; this reproduces the 'gcn' / eval-mode configuration.

if __name__ == "__main__":
    B, T, Nn, C_IN = 2, 8, 16, 7          # in_channel is fixed at 7 by slicing
    TCN_OUT, GCN_OUT, GTCN_LAYERS = 32, 32, 2

    key = jax.random.PRNGKey(0)
    kx, kp = jax.random.split(key)
    x = jax.random.normal(kx, (B, T, Nn, C_IN), jnp.float32)
    a_hat = build_ring_adjacency(Nn)
    params = make_params(kp, C_IN, T, TCN_OUT, GCN_OUT, GTCN_LAYERS)

    # close over params (contains static act strings) so the whole forward jits
    fwd = jax.jit(lambda xx, aa: model_forward(xx, aa, params))
    outs = fwd(x, a_hat)
    outs = jax.block_until_ready(outs)

    cls_1, cls_2, cls_3, gate, x1_feat, x3_feat = outs
    assert cls_1.shape == (B, 1) and cls_2.shape == (B, 1) and cls_3.shape == (B, 1)
    assert gate.shape == (B, C_IN)
    assert x1_feat.shape == (B, TCN_OUT) and x3_feat.shape == (B, TCN_OUT)
    assert all(bool(jnp.all(jnp.isfinite(o))) for o in outs)
    print("KERNEL_OK")
</pallas_src>

<mosaic_0001>
module attributes {stable_mosaic.version = 11 : i64} {
  func.func @_tcn_kernel(%arg0: i32, %arg1: memref<1x256x3xf32, #tpu.memory_space<vmem>>, %arg2: memref<9x3x29xf32, #tpu.memory_space<vmem>>, %arg3: memref<1x29xf32, #tpu.memory_space<vmem>>, %arg4: memref<1x29xf32, #tpu.memory_space<vmem>>, %arg5: memref<1x128x29xf32, #tpu.memory_space<vmem>>) attributes {dimension_semantics = [#tpu.dimension_semantics<parallel>], iteration_bounds = array<i64: 2>, scalar_prefetch = 0 : i64, scratch_operands = 0 : i64, tpu.core_type = #tpu.core_type<tc>, window_params = [{transform_indices = @transform_0, window_bounds = array<i64: 1, 256, 3>}, {pipeline_mode = #tpu.pipeline_mode<synchronous>, transform_indices = @transform_1, window_bounds = array<i64: 9, 3, 29>}, {pipeline_mode = #tpu.pipeline_mode<synchronous>, transform_indices = @transform_2, window_bounds = array<i64: 1, 29>}, {pipeline_mode = #tpu.pipeline_mode<synchronous>, transform_indices = @transform_3, window_bounds = array<i64: 1, 29>}, {transform_indices = @transform_4, window_bounds = array<i64: 1, 128, 29>}]} {
    %c0 = arith.constant 0 : index
    %c0_0 = arith.constant 0 : index
    %c0_1 = arith.constant 0 : index
    %0 = vector.load %arg1[%c0, %c0_0, %c0_1] : memref<1x256x3xf32, #tpu.memory_space<vmem>>, vector<1x256x3xf32>
    %1 = vector.shape_cast %0 : vector<1x256x3xf32> to vector<256x3xf32>
    %cst = arith.constant 0.000000e+00 : f32
    %2 = vector.broadcast %cst : f32 to vector<128x29xf32>
    %3 = vector.extract_strided_slice %1 {offsets = [0, 0], sizes = [128, 3], strides = [1, 1]} : vector<256x3xf32> to vector<128x3xf32>
    %c0_2 = arith.constant 0 : index
    %c0_3 = arith.constant 0 : index
    %c0_4 = arith.constant 0 : index
    %4 = vector.load %arg2[%c0_2, %c0_3, %c0_4] : memref<9x3x29xf32, #tpu.memory_space<vmem>>, vector<1x3x29xf32>
    %5 = vector.shape_cast %4 : vector<1x3x29xf32> to vector<3x29xf32>
    %cst_5 = arith.constant dense<0.000000e+00> : vector<128x29xf32>
    %6 = tpu.matmul %3, %5, %cst_5 {dimension_numbers = #tpu.dot_dimension_numbers<[1], [0], [0], [1], [0, 0, 1, 1], [], []>} : vector<128x3xf32>, vector<3x29xf32>, vector<128x29xf32> -> vector<128x29xf32>
    %7 = arith.addf %2, %6 : vector<128x29xf32>
    %8 = vector.extract_strided_slice %1 {offsets = [16, 0], sizes = [128, 3], strides = [1, 1]} : vector<256x3xf32> to vector<128x3xf32>
    %c1 = arith.constant 1 : index
    %c0_6 = arith.constant 0 : index
    %c0_7 = arith.constant 0 : index
    %9 = vector.load %arg2[%c1, %c0_6, %c0_7] : memref<9x3x29xf32, #tpu.memory_space<vmem>>, vector<1x3x29xf32>
    %10 = vector.shape_cast %9 : vector<1x3x29xf32> to vector<3x29xf32>
    %cst_8 = arith.constant dense<0.000000e+00> : vector<128x29xf32>
    %11 = tpu.matmul %8, %10, %cst_8 {dimension_numbers = #tpu.dot_dimension_numbers<[1], [0], [0], [1], [0, 0, 1, 1], [], []>} : vector<128x3xf32>, vector<3x29xf32>, vector<128x29xf32> -> vector<128x29xf32>
    %12 = arith.addf %7, %11 : vector<128x29xf32>
    %13 = vector.extract_strided_slice %1 {offsets = [32, 0], sizes = [128, 3], strides = [1, 1]} : vector<256x3xf32> to vector<128x3xf32>
    %c2 = arith.constant 2 : index
    %c0_9 = arith.constant 0 : index
    %c0_10 = arith.constant 0 : index
    %14 = vector.load %arg2[%c2, %c0_9, %c0_10] : memref<9x3x29xf32, #tpu.memory_space<vmem>>, vector<1x3x29xf32>
    %15 = vector.shape_cast %14 : vector<1x3x29xf32> to vector<3x29xf32>
    %cst_11 = arith.constant dense<0.000000e+00> : vector<128x29xf32>
    %16 = tpu.matmul %13, %15, %cst_11 {dimension_numbers = #tpu.dot_dimension_numbers<[1], [0], [0], [1], [0, 0, 1, 1], [], []>} : vector<128x3xf32>, vector<3x29xf32>, vector<128x29xf32> -> vector<128x29xf32>
    %17 = arith.addf %12, %16 : vector<128x29xf32>
    %18 = vector.extract_strided_slice %1 {offsets = [48, 0], sizes = [128, 3], strides = [1, 1]} : vector<256x3xf32> to vector<128x3xf32>
    %c3 = arith.constant 3 : index
    %c0_12 = arith.constant 0 : index
    %c0_13 = arith.constant 0 : index
    %19 = vector.load %arg2[%c3, %c0_12, %c0_13] : memref<9x3x29xf32, #tpu.memory_space<vmem>>, vector<1x3x29xf32>
    %20 = vector.shape_cast %19 : vector<1x3x29xf32> to vector<3x29xf32>
    %cst_14 = arith.constant dense<0.000000e+00> : vector<128x29xf32>
    %21 = tpu.matmul %18, %20, %cst_14 {dimension_numbers = #tpu.dot_dimension_numbers<[1], [0], [0], [1], [0, 0, 1, 1], [], []>} : vector<128x3xf32>, vector<3x29xf32>, vector<128x29xf32> -> vector<128x29xf32>
    %22 = arith.addf %17, %21 : vector<128x29xf32>
    %23 = vector.extract_strided_slice %1 {offsets = [64, 0], sizes = [128, 3], strides = [1, 1]} : vector<256x3xf32> to vector<128x3xf32>
    %c4 = arith.constant 4 : index
    %c0_15 = arith.constant 0 : index
    %c0_16 = arith.constant 0 : index
    %24 = vector.load %arg2[%c4, %c0_15, %c0_16] : memref<9x3x29xf32, #tpu.memory_space<vmem>>, vector<1x3x29xf32>
    %25 = vector.shape_cast %24 : vector<1x3x29xf32> to vector<3x29xf32>
    %cst_17 = arith.constant dense<0.000000e+00> : vector<128x29xf32>
    %26 = tpu.matmul %23, %25, %cst_17 {dimension_numbers = #tpu.dot_dimension_numbers<[1], [0], [0], [1], [0, 0, 1, 1], [], []>} : vector<128x3xf32>, vector<3x29xf32>, vector<128x29xf32> -> vector<128x29xf32>
    %27 = arith.addf %22, %26 : vector<128x29xf32>
    %28 = vector.extract_strided_slice %1 {offsets = [80, 0], sizes = [128, 3], strides = [1, 1]} : vector<256x3xf32> to vector<128x3xf32>
    %c5 = arith.constant 5 : index
    %c0_18 = arith.constant 0 : index
    %c0_19 = arith.constant 0 : index
    %29 = vector.load %arg2[%c5, %c0_18, %c0_19] : memref<9x3x29xf32, #tpu.memory_space<vmem>>, vector<1x3x29xf32>
    %30 = vector.shape_cast %29 : vector<1x3x29xf32> to vector<3x29xf32>
    %cst_20 = arith.constant dense<0.000000e+00> : vector<128x29xf32>
    %31 = tpu.matmul %28, %30, %cst_20 {dimension_numbers = #tpu.dot_dimension_numbers<[1], [0], [0], [1], [0, 0, 1, 1], [], []>} : vector<128x3xf32>, vector<3x29xf32>, vector<128x29xf32> -> vector<128x29xf32>
    %32 = arith.addf %27, %31 : vector<128x29xf32>
    %33 = vector.extract_strided_slice %1 {offsets = [96, 0], sizes = [128, 3], strides = [1, 1]} : vector<256x3xf32> to vector<128x3xf32>
    %c6 = arith.constant 6 : index
    %c0_21 = arith.constant 0 : index
    %c0_22 = arith.constant 0 : index
    %34 = vector.load %arg2[%c6, %c0_21, %c0_22] : memref<9x3x29xf32, #tpu.memory_space<vmem>>, vector<1x3x29xf32>
    %35 = vector.shape_cast %34 : vector<1x3x29xf32> to vector<3x29xf32>
    %cst_23 = arith.constant dense<0.000000e+00> : vector<128x29xf32>
    %36 = tpu.matmul %33, %35, %cst_23 {dimension_numbers = #tpu.dot_dimension_numbers<[1], [0], [0], [1], [0, 0, 1, 1], [], []>} : vector<128x3xf32>, vector<3x29xf32>, vector<128x29xf32> -> vector<128x29xf32>
    %37 = arith.addf %32, %36 : vector<128x29xf32>
    %38 = vector.extract_strided_slice %1 {offsets = [112, 0], sizes = [128, 3], strides = [1, 1]} : vector<256x3xf32> to vector<128x3xf32>
    %c7 = arith.constant 7 : index
    %c0_24 = arith.constant 0 : index
    %c0_25 = arith.constant 0 : index
    %39 = vector.load %arg2[%c7, %c0_24, %c0_25] : memref<9x3x29xf32, #tpu.memory_space<vmem>>, vector<1x3x29xf32>
    %40 = vector.shape_cast %39 : vector<1x3x29xf32> to vector<3x29xf32>
    %cst_26 = arith.constant dense<0.000000e+00> : vector<128x29xf32>
    %41 = tpu.matmul %38, %40, %cst_26 {dimension_numbers = #tpu.dot_dimension_numbers<[1], [0], [0], [1], [0, 0, 1, 1], [], []>} : vector<128x3xf32>, vector<3x29xf32>, vector<128x29xf32> -> vector<128x29xf32>
    %42 = arith.addf %37, %41 : vector<128x29xf32>
    %43 = vector.extract_strided_slice %1 {offsets = [128, 0], sizes = [128, 3], strides = [1, 1]} : vector<256x3xf32> to vector<128x3xf32>
    %c8 = arith.constant 8 : index
    %c0_27 = arith.constant 0 : index
    %c0_28 = arith.constant 0 : index
    %44 = vector.load %arg2[%c8, %c0_27, %c0_28] : memref<9x3x29xf32, #tpu.memory_space<vmem>>, vector<1x3x29xf32>
    %45 = vector.shape_cast %44 : vector<1x3x29xf32> to vector<3x29xf32>
    %cst_29 = arith.constant dense<0.000000e+00> : vector<128x29xf32>
    %46 = tpu.matmul %43, %45, %cst_29 {dimension_numbers = #tpu.dot_dimension_numbers<[1], [0], [0], [1], [0, 0, 1, 1], [], []>} : vector<128x3xf32>, vector<3x29xf32>, vector<128x29xf32> -> vector<128x29xf32>
    %47 = arith.addf %42, %46 : vector<128x29xf32>
    %c0_30 = arith.constant 0 : index
    %c0_31 = arith.constant 0 : index
    %48 = vector.load %arg3[%c0_30, %c0_31] : memref<1x29xf32, #tpu.memory_space<vmem>>, vector<1x29xf32>
    %49 = vector.broadcast %48 : vector<1x29xf32> to vector<128x29xf32>
    %50 = arith.mulf %47, %49 : vector<128x29xf32>
    %c0_32 = arith.constant 0 : index
    %c0_33 = arith.constant 0 : index
    %51 = vector.load %arg4[%c0_32, %c0_33] : memref<1x29xf32, #tpu.memory_space<vmem>>, vector<1x29xf32>
    %52 = vector.broadcast %51 : vector<1x29xf32> to vector<128x29xf32>
    %53 = arith.addf %50, %52 : vector<128x29xf32>
    %cst_34 = arith.constant 0.000000e+00 : f32
    %54 = vector.broadcast %cst_34 : f32 to vector<128x29xf32>
    %55 = arith.maximumf %53, %54 : vector<128x29xf32>
    %c0_35 = arith.constant 0 : index
    %c0_36 = arith.constant 0 : index
    %c0_37 = arith.constant 0 : index
    %56 = vector.load %arg5[%c0_35, %c0_36, %c0_37] : memref<1x128x29xf32, #tpu.memory_space<vmem>>, vector<1x128x29xf32>
    %57 = vector.shape_cast %56 : vector<1x128x29xf32> to vector<128x29xf32>
    %58 = vector.shape_cast %55 : vector<128x29xf32> to vector<1x128x29xf32>
    tpu.vector_store %arg5[%c0_35, %c0_36, %c0_37], %58 {strides = array<i32>} : memref<1x128x29xf32, #tpu.memory_space<vmem>>, vector<1x128x29xf32>,
    return
  }
  func.func @transform_0(%arg0: i32) -> (i32, i32, i32) {
    %c0_i32 = arith.constant 0 : i32
    %c0_i32_0 = arith.constant 0 : i32
    %c0_i32_1 = arith.constant 0 : i32
    return %arg0, %c0_i32, %c0_i32_0 : i32, i32, i32
  }
  func.func @transform_1(%arg0: i32) -> (i32, i32, i32) {
    %c0_i32 = arith.constant 0 : i32
    %c0_i32_0 = arith.constant 0 : i32
    %c0_i32_1 = arith.constant 0 : i32
    %c0_i32_2 = arith.constant 0 : i32
    return %c0_i32, %c0_i32_0, %c0_i32_1 : i32, i32, i32
  }
  func.func @transform_2(%arg0: i32) -> (i32, i32) {
    %c0_i32 = arith.constant 0 : i32
    %c0_i32_0 = arith.constant 0 : i32
    %c0_i32_1 = arith.constant 0 : i32
    return %c0_i32, %c0_i32_0 : i32, i32
  }
  func.func @transform_3(%arg0: i32) -> (i32, i32) {
    %c0_i32 = arith.constant 0 : i32
    %c0_i32_0 = arith.constant 0 : i32
    %c0_i32_1 = arith.constant 0 : i32
    return %c0_i32, %c0_i32_0 : i32, i32
  }
  func.func @transform_4(%arg0: i32) -> (i32, i32, i32) {
    %c0_i32 = arith.constant 0 : i32
    %c0_i32_0 = arith.constant 0 : i32
    %c0_i32_1 = arith.constant 0 : i32
    return %arg0, %c0_i32, %c0_i32_0 : i32, i32, i32
  }
}

module attributes {stable_mosaic.version = 11 : i64} {
  func.func @_gcn_kernel(%arg0: i32, %arg1: memref<128x32xf32, #tpu.memory_space<vmem>>, %arg2: memref<32x32xf32, #tpu.memory_space<vmem>>, %arg3: memref<128x128xf32, #tpu.memory_space<vmem>>, %arg4: memref<1x32xf32, #tpu.memory_space<vmem>>, %arg5: memref<128x1xf32, #tpu.memory_space<vmem>>, %arg6: memref<128x1xf32, #tpu.memory_space<vmem>>, %arg7: memref<128x32xf32, #tpu.memory_space<vmem>>) attributes {dimension_semantics = [#tpu.dimension_semantics<parallel>], iteration_bounds = array<i64: 2>, scalar_prefetch = 0 : i64, scratch_operands = 0 : i64, tpu.core_type = #tpu.core_type<tc>, window_params = [{transform_indices = @transform_0, window_bounds = array<i64: 128, 32>}, {pipeline_mode = #tpu.pipeline_mode<synchronous>, transform_indices = @transform_1, window_bounds = array<i64: 32, 32>}, {pipeline_mode = #tpu.pipeline_mode<synchronous>, transform_indices = @transform_2, window_bounds = array<i64: 128, 128>}, {pipeline_mode = #tpu.pipeline_mode<synchronous>, transform_indices = @transform_3, window_bounds = array<i64: 1, 32>}, {transform_indices = @transform_4, window_bounds = array<i64: 128, 1>}, {transform_indices = @transform_5, window_bounds = array<i64: 128, 1>}, {transform_indices = @transform_6, window_bounds = array<i64: 128, 32>}]} {
    %c0 = arith.constant 0 : index
    %c0_0 = arith.constant 0 : index
    %0 = vector.load %arg1[%c0, %c0_0] : memref<128x32xf32, #tpu.memory_space<vmem>>, vector<128x32xf32>
    %c0_1 = arith.constant 0 : index
    %c0_2 = arith.constant 0 : index
    %1 = vector.load %arg2[%c0_1, %c0_2] : memref<32x32xf32, #tpu.memory_space<vmem>>, vector<32x32xf32>
    %cst = arith.constant dense<0.000000e+00> : vector<128x32xf32>
    %2 = tpu.matmul %0, %1, %cst {dimension_numbers = #tpu.dot_dimension_numbers<[1], [0], [0], [1], [0, 0, 1, 1], [], []>} : vector<128x32xf32>, vector<32x32xf32>, vector<128x32xf32> -> vector<128x32xf32>
    %c0_3 = arith.constant 0 : index
    %c0_4 = arith.constant 0 : index
    %3 = vector.load %arg3[%c0_3, %c0_4] : memref<128x128xf32, #tpu.memory_space<vmem>>, vector<128x128xf32>
    %cst_5 = arith.constant dense<0.000000e+00> : vector<128x32xf32>
    %4 = tpu.matmul %3, %2, %cst_5 {dimension_numbers = #tpu.dot_dimension_numbers<[1], [0], [0], [1], [0, 0, 1, 1], [], []>} : vector<128x128xf32>, vector<128x32xf32>, vector<128x32xf32> -> vector<128x32xf32>
    %c0_6 = arith.constant 0 : index
    %c0_7 = arith.constant 0 : index
    %5 = vector.load %arg4[%c0_6, %c0_7] : memref<1x32xf32, #tpu.memory_space<vmem>>, vector<1x32xf32>
    %6 = vector.broadcast %5 : vector<1x32xf32> to vector<128x32xf32>
    %7 = arith.addf %4, %6 : vector<128x32xf32>
    %c0_8 = arith.constant 0 : index
    %c0_9 = arith.constant 0 : index
    %8 = vector.load %arg5[%c0_8, %c0_9] : memref<128x1xf32, #tpu.memory_space<vmem>>, vector<128x1xf32>
    %9 = vector.broadcast %8 : vector<128x1xf32> to vector<128x32xf32>
    %10 = arith.mulf %7, %9 : vector<128x32xf32>
    %c0_10 = arith.constant 0 : index
    %c0_11 = arith.constant 0 : index
    %11 = vector.load %arg6[%c0_10, %c0_11] : memref<128x1xf32, #tpu.memory_space<vmem>>, vector<128x1xf32>
    %12 = vector.broadcast %11 : vector<128x1xf32> to vector<128x32xf32>
    %13 = arith.addf %10, %12 : vector<128x32xf32>
    %cst_12 = arith.constant 0.000000e+00 : f32
    %14 = vector.broadcast %cst_12 : f32 to vector<128x32xf32>
    %15 = arith.maximumf %13, %14 : vector<128x32xf32>
    %c0_13 = arith.constant 0 : index
    %c0_14 = arith.constant 0 : index
    %16 = vector.load %arg7[%c0_13, %c0_14] : memref<128x32xf32, #tpu.memory_space<vmem>>, vector<128x32xf32>
    tpu.vector_store %arg7[%c0_13, %c0_14], %15 {strides = array<i32>} : memref<128x32xf32, #tpu.memory_space<vmem>>, vector<128x32xf32>,
    return
  }
  func.func @transform_0(%arg0: i32) -> (i32, i32) {
    %c0_i32 = arith.constant 0 : i32
    %c0_i32_0 = arith.constant 0 : i32
    return %arg0, %c0_i32 : i32, i32
  }
  func.func @transform_1(%arg0: i32) -> (i32, i32) {
    %c0_i32 = arith.constant 0 : i32
    %c0_i32_0 = arith.constant 0 : i32
    %c0_i32_1 = arith.constant 0 : i32
    return %c0_i32, %c0_i32_0 : i32, i32
  }
  func.func @transform_2(%arg0: i32) -> (i32, i32) {
    %c0_i32 = arith.constant 0 : i32
    %c0_i32_0 = arith.constant 0 : i32
    %c0_i32_1 = arith.constant 0 : i32
    return %c0_i32, %c0_i32_0 : i32, i32
  }
  func.func @transform_3(%arg0: i32) -> (i32, i32) {
    %c0_i32 = arith.constant 0 : i32
    %c0_i32_0 = arith.constant 0 : i32
    %c0_i32_1 = arith.constant 0 : i32
    return %c0_i32, %c0_i32_0 : i32, i32
  }
  func.func @transform_4(%arg0: i32) -> (i32, i32) {
    %c0_i32 = arith.constant 0 : i32
    %c0_i32_0 = arith.constant 0 : i32
    return %arg0, %c0_i32 : i32, i32
  }
  func.func @transform_5(%arg0: i32) -> (i32, i32) {
    %c0_i32 = arith.constant 0 : i32
    %c0_i32_0 = arith.constant 0 : i32
    return %arg0, %c0_i32 : i32, i32
  }
  func.func @transform_6(%arg0: i32) -> (i32, i32) {
    %c0_i32 = arith.constant 0 : i32
    %c0_i32_0 = arith.constant 0 : i32
    return %arg0, %c0_i32 : i32, i32
  }
}

module attributes {stable_mosaic.version = 11 : i64} {
  func.func @_tcn_kernel(%arg0: i32, %arg1: memref<1x256x32xf32, #tpu.memory_space<vmem>>, %arg2: memref<9x32x32xf32, #tpu.memory_space<vmem>>, %arg3: memref<1x32xf32, #tpu.memory_space<vmem>>, %arg4: memref<1x32xf32, #tpu.memory_space<vmem>>, %arg5: memref<1x128x32xf32, #tpu.memory_space<vmem>>) attributes {dimension_semantics = [#tpu.dimension_semantics<parallel>], iteration_bounds = array<i64: 2>, scalar_prefetch = 0 : i64, scratch_operands = 0 : i64, tpu.core_type = #tpu.core_type<tc>, window_params = [{transform_indices = @transform_0, window_bounds = array<i64: 1, 256, 32>}, {pipeline_mode = #tpu.pipeline_mode<synchronous>, transform_indices = @transform_1, window_bounds = array<i64: 9, 32, 32>}, {pipeline_mode = #tpu.pipeline_mode<synchronous>, transform_indices = @transform_2, window_bounds = array<i64: 1, 32>}, {pipeline_mode = #tpu.pipeline_mode<synchronous>, transform_indices = @transform_3, window_bounds = array<i64: 1, 32>}, {transform_indices = @transform_4, window_bounds = array<i64: 1, 128, 32>}]} {
    %c0 = arith.constant 0 : index
    %c0_0 = arith.constant 0 : index
    %c0_1 = arith.constant 0 : index
    %0 = vector.load %arg1[%c0, %c0_0, %c0_1] : memref<1x256x32xf32, #tpu.memory_space<vmem>>, vector<1x256x32xf32>
    %1 = vector.shape_cast %0 : vector<1x256x32xf32> to vector<256x32xf32>
    %cst = arith.constant 0.000000e+00 : f32
    %2 = vector.broadcast %cst : f32 to vector<128x32xf32>
    %3 = vector.extract_strided_slice %1 {offsets = [0, 0], sizes = [128, 32], strides = [1, 1]} : vector<256x32xf32> to vector<128x32xf32>
    %c0_2 = arith.constant 0 : index
    %c0_3 = arith.constant 0 : index
    %c0_4 = arith.constant 0 : index
    %4 = vector.load %arg2[%c0_2, %c0_3, %c0_4] : memref<9x32x32xf32, #tpu.memory_space<vmem>>, vector<1x32x32xf32>
    %5 = vector.shape_cast %4 : vector<1x32x32xf32> to vector<32x32xf32>
    %cst_5 = arith.constant dense<0.000000e+00> : vector<128x32xf32>
    %6 = tpu.matmul %3, %5, %cst_5 {dimension_numbers = #tpu.dot_dimension_numbers<[1], [0], [0], [1], [0, 0, 1, 1], [], []>} : vector<128x32xf32>, vector<32x32xf32>, vector<128x32xf32> -> vector<128x32xf32>
    %7 = arith.addf %2, %6 : vector<128x32xf32>
    %8 = vector.extract_strided_slice %1 {offsets = [16, 0], sizes = [128, 32], strides = [1, 1]} : vector<256x32xf32> to vector<128x32xf32>
    %c1 = arith.constant 1 : index
    %c0_6 = arith.constant 0 : index
    %c0_7 = arith.constant 0 : index
    %9 = vector.load %arg2[%c1, %c0_6, %c0_7] : memref<9x32x32xf32, #tpu.memory_space<vmem>>, vector<1x32x32xf32>
    %10 = vector.shape_cast %9 : vector<1x32x32xf32> to vector<32x32xf32>
    %cst_8 = arith.constant dense<0.000000e+00> : vector<128x32xf32>
    %11 = tpu.matmul %8, %10, %cst_8 {dimension_numbers = #tpu.dot_dimension_numbers<[1], [0], [0], [1], [0, 0, 1, 1], [], []>} : vector<128x32xf32>, vector<32x32xf32>, vector<128x32xf32> -> vector<128x32xf32>
    %12 = arith.addf %7, %11 : vector<128x32xf32>
    %13 = vector.extract_strided_slice %1 {offsets = [32, 0], sizes = [128, 32], strides = [1, 1]} : vector<256x32xf32> to vector<128x32xf32>
    %c2 = arith.constant 2 : index
    %c0_9 = arith.constant 0 : index
    %c0_10 = arith.constant 0 : index
    %14 = vector.load %arg2[%c2, %c0_9, %c0_10] : memref<9x32x32xf32, #tpu.memory_space<vmem>>, vector<1x32x32xf32>
    %15 = vector.shape_cast %14 : vector<1x32x32xf32> to vector<32x32xf32>
    %cst_11 = arith.constant dense<0.000000e+00> : vector<128x32xf32>
    %16 = tpu.matmul %13, %15, %cst_11 {dimension_numbers = #tpu.dot_dimension_numbers<[1], [0], [0], [1], [0, 0, 1, 1], [], []>} : vector<128x32xf32>, vector<32x32xf32>, vector<128x32xf32> -> vector<128x32xf32>
    %17 = arith.addf %12, %16 : vector<128x32xf32>
    %18 = vector.extract_strided_slice %1 {offsets = [48, 0], sizes = [128, 32], strides = [1, 1]} : vector<256x32xf32> to vector<128x32xf32>
    %c3 = arith.constant 3 : index
    %c0_12 = arith.constant 0 : index
    %c0_13 = arith.constant 0 : index
    %19 = vector.load %arg2[%c3, %c0_12, %c0_13] : memref<9x32x32xf32, #tpu.memory_space<vmem>>, vector<1x32x32xf32>
    %20 = vector.shape_cast %19 : vector<1x32x32xf32> to vector<32x32xf32>
    %cst_14 = arith.constant dense<0.000000e+00> : vector<128x32xf32>
    %21 = tpu.matmul %18, %20, %cst_14 {dimension_numbers = #tpu.dot_dimension_numbers<[1], [0], [0], [1], [0, 0, 1, 1], [], []>} : vector<128x32xf32>, vector<32x32xf32>, vector<128x32xf32> -> vector<128x32xf32>
    %22 = arith.addf %17, %21 : vector<128x32xf32>
    %23 = vector.extract_strided_slice %1 {offsets = [64, 0], sizes = [128, 32], strides = [1, 1]} : vector<256x32xf32> to vector<128x32xf32>
    %c4 = arith.constant 4 : index
    %c0_15 = arith.constant 0 : index
    %c0_16 = arith.constant 0 : index
    %24 = vector.load %arg2[%c4, %c0_15, %c0_16] : memref<9x32x32xf32, #tpu.memory_space<vmem>>, vector<1x32x32xf32>
    %25 = vector.shape_cast %24 : vector<1x32x32xf32> to vector<32x32xf32>
    %cst_17 = arith.constant dense<0.000000e+00> : vector<128x32xf32>
    %26 = tpu.matmul %23, %25, %cst_17 {dimension_numbers = #tpu.dot_dimension_numbers<[1], [0], [0], [1], [0, 0, 1, 1], [], []>} : vector<128x32xf32>, vector<32x32xf32>, vector<128x32xf32> -> vector<128x32xf32>
    %27 = arith.addf %22, %26 : vector<128x32xf32>
    %28 = vector.extract_strided_slice %1 {offsets = [80, 0], sizes = [128, 32], strides = [1, 1]} : vector<256x32xf32> to vector<128x32xf32>
    %c5 = arith.constant 5 : index
    %c0_18 = arith.constant 0 : index
    %c0_19 = arith.constant 0 : index
    %29 = vector.load %arg2[%c5, %c0_18, %c0_19] : memref<9x32x32xf32, #tpu.memory_space<vmem>>, vector<1x32x32xf32>
    %30 = vector.shape_cast %29 : vector<1x32x32xf32> to vector<32x32xf32>
    %cst_20 = arith.constant dense<0.000000e+00> : vector<128x32xf32>
    %31 = tpu.matmul %28, %30, %cst_20 {dimension_numbers = #tpu.dot_dimension_numbers<[1], [0], [0], [1], [0, 0, 1, 1], [], []>} : vector<128x32xf32>, vector<32x32xf32>, vector<128x32xf32> -> vector<128x32xf32>
    %32 = arith.addf %27, %31 : vector<128x32xf32>
    %33 = vector.extract_strided_slice %1 {offsets = [96, 0], sizes = [128, 32], strides = [1, 1]} : vector<256x32xf32> to vector<128x32xf32>
    %c6 = arith.constant 6 : index
    %c0_21 = arith.constant 0 : index
    %c0_22 = arith.constant 0 : index
    %34 = vector.load %arg2[%c6, %c0_21, %c0_22] : memref<9x32x32xf32, #tpu.memory_space<vmem>>, vector<1x32x32xf32>
    %35 = vector.shape_cast %34 : vector<1x32x32xf32> to vector<32x32xf32>
    %cst_23 = arith.constant dense<0.000000e+00> : vector<128x32xf32>
    %36 = tpu.matmul %33, %35, %cst_23 {dimension_numbers = #tpu.dot_dimension_numbers<[1], [0], [0], [1], [0, 0, 1, 1], [], []>} : vector<128x32xf32>, vector<32x32xf32>, vector<128x32xf32> -> vector<128x32xf32>
    %37 = arith.addf %32, %36 : vector<128x32xf32>
    %38 = vector.extract_strided_slice %1 {offsets = [112, 0], sizes = [128, 32], strides = [1, 1]} : vector<256x32xf32> to vector<128x32xf32>
    %c7 = arith.constant 7 : index
    %c0_24 = arith.constant 0 : index
    %c0_25 = arith.constant 0 : index
    %39 = vector.load %arg2[%c7, %c0_24, %c0_25] : memref<9x32x32xf32, #tpu.memory_space<vmem>>, vector<1x32x32xf32>
    %40 = vector.shape_cast %39 : vector<1x32x32xf32> to vector<32x32xf32>
    %cst_26 = arith.constant dense<0.000000e+00> : vector<128x32xf32>
    %41 = tpu.matmul %38, %40, %cst_26 {dimension_numbers = #tpu.dot_dimension_numbers<[1], [0], [0], [1], [0, 0, 1, 1], [], []>} : vector<128x32xf32>, vector<32x32xf32>, vector<128x32xf32> -> vector<128x32xf32>
    %42 = arith.addf %37, %41 : vector<128x32xf32>
    %43 = vector.extract_strided_slice %1 {offsets = [128, 0], sizes = [128, 32], strides = [1, 1]} : vector<256x32xf32> to vector<128x32xf32>
    %c8 = arith.constant 8 : index
    %c0_27 = arith.constant 0 : index
    %c0_28 = arith.constant 0 : index
    %44 = vector.load %arg2[%c8, %c0_27, %c0_28] : memref<9x32x32xf32, #tpu.memory_space<vmem>>, vector<1x32x32xf32>
    %45 = vector.shape_cast %44 : vector<1x32x32xf32> to vector<32x32xf32>
    %cst_29 = arith.constant dense<0.000000e+00> : vector<128x32xf32>
    %46 = tpu.matmul %43, %45, %cst_29 {dimension_numbers = #tpu.dot_dimension_numbers<[1], [0], [0], [1], [0, 0, 1, 1], [], []>} : vector<128x32xf32>, vector<32x32xf32>, vector<128x32xf32> -> vector<128x32xf32>
    %47 = arith.addf %42, %46 : vector<128x32xf32>
    %c0_30 = arith.constant 0 : index
    %c0_31 = arith.constant 0 : index
    %48 = vector.load %arg3[%c0_30, %c0_31] : memref<1x32xf32, #tpu.memory_space<vmem>>, vector<1x32xf32>
    %49 = vector.broadcast %48 : vector<1x32xf32> to vector<128x32xf32>
    %50 = arith.mulf %47, %49 : vector<128x32xf32>
    %c0_32 = arith.constant 0 : index
    %c0_33 = arith.constant 0 : index
    %51 = vector.load %arg4[%c0_32, %c0_33] : memref<1x32xf32, #tpu.memory_space<vmem>>, vector<1x32xf32>
    %52 = vector.broadcast %51 : vector<1x32xf32> to vector<128x32xf32>
    %53 = arith.addf %50, %52 : vector<128x32xf32>
    %cst_34 = arith.constant 0.000000e+00 : f32
    %54 = vector.broadcast %cst_34 : f32 to vector<128x32xf32>
    %55 = arith.maximumf %53, %54 : vector<128x32xf32>
    %c0_35 = arith.constant 0 : index
    %c0_36 = arith.constant 0 : index
    %c0_37 = arith.constant 0 : index
    %56 = vector.load %arg5[%c0_35, %c0_36, %c0_37] : memref<1x128x32xf32, #tpu.memory_space<vmem>>, vector<1x128x32xf32>
    %57 = vector.shape_cast %56 : vector<1x128x32xf32> to vector<128x32xf32>
    %58 = vector.shape_cast %55 : vector<128x32xf32> to vector<1x128x32xf32>
    tpu.vector_store %arg5[%c0_35, %c0_36, %c0_37], %58 {strides = array<i32>} : memref<1x128x32xf32, #tpu.memory_space<vmem>>, vector<1x128x32xf32>,
    return
  }
  func.func @transform_0(%arg0: i32) -> (i32, i32, i32) {
    %c0_i32 = arith.constant 0 : i32
    %c0_i32_0 = arith.constant 0 : i32
    %c0_i32_1 = arith.constant 0 : i32
    return %arg0, %c0_i32, %c0_i32_0 : i32, i32, i32
  }
  func.func @transform_1(%arg0: i32) -> (i32, i32, i32) {
    %c0_i32 = arith.constant 0 : i32
    %c0_i32_0 = arith.constant 0 : i32
    %c0_i32_1 = arith.constant 0 : i32
    %c0_i32_2 = arith.constant 0 : i32
    return %c0_i32, %c0_i32_0, %c0_i32_1 : i32, i32, i32
  }
  func.func @transform_2(%arg0: i32) -> (i32, i32) {
    %c0_i32 = arith.constant 0 : i32
    %c0_i32_0 = arith.constant 0 : i32
    %c0_i32_1 = arith.constant 0 : i32
    return %c0_i32, %c0_i32_0 : i32, i32
  }
  func.func @transform_3(%arg0: i32) -> (i32, i32) {
    %c0_i32 = arith.constant 0 : i32
    %c0_i32_0 = arith.constant 0 : i32
    %c0_i32_1 = arith.constant 0 : i32
    return %c0_i32, %c0_i32_0 : i32, i32
  }
  func.func @transform_4(%arg0: i32) -> (i32, i32, i32) {
    %c0_i32 = arith.constant 0 : i32
    %c0_i32_0 = arith.constant 0 : i32
    %c0_i32_1 = arith.constant 0 : i32
    return %arg0, %c0_i32, %c0_i32_0 : i32, i32, i32
  }
}

module attributes {stable_mosaic.version = 11 : i64} {
  func.func @_tcn_kernel(%arg0: i32, %arg1: memref<1x256x4xf32, #tpu.memory_space<vmem>>, %arg2: memref<9x4x28xf32, #tpu.memory_space<vmem>>, %arg3: memref<1x28xf32, #tpu.memory_space<vmem>>, %arg4: memref<1x28xf32, #tpu.memory_space<vmem>>, %arg5: memref<1x128x28xf32, #tpu.memory_space<vmem>>) attributes {dimension_semantics = [#tpu.dimension_semantics<parallel>], iteration_bounds = array<i64: 2>, scalar_prefetch = 0 : i64, scratch_operands = 0 : i64, tpu.core_type = #tpu.core_type<tc>, window_params = [{transform_indices = @transform_0, window_bounds = array<i64: 1, 256, 4>}, {pipeline_mode = #tpu.pipeline_mode<synchronous>, transform_indices = @transform_1, window_bounds = array<i64: 9, 4, 28>}, {pipeline_mode = #tpu.pipeline_mode<synchronous>, transform_indices = @transform_2, window_bounds = array<i64: 1, 28>}, {pipeline_mode = #tpu.pipeline_mode<synchronous>, transform_indices = @transform_3, window_bounds = array<i64: 1, 28>}, {transform_indices = @transform_4, window_bounds = array<i64: 1, 128, 28>}]} {
    %c0 = arith.constant 0 : index
    %c0_0 = arith.constant 0 : index
    %c0_1 = arith.constant 0 : index
    %0 = vector.load %arg1[%c0, %c0_0, %c0_1] : memref<1x256x4xf32, #tpu.memory_space<vmem>>, vector<1x256x4xf32>
    %1 = vector.shape_cast %0 : vector<1x256x4xf32> to vector<256x4xf32>
    %cst = arith.constant 0.000000e+00 : f32
    %2 = vector.broadcast %cst : f32 to vector<128x28xf32>
    %3 = vector.extract_strided_slice %1 {offsets = [0, 0], sizes = [128, 4], strides = [1, 1]} : vector<256x4xf32> to vector<128x4xf32>
    %c0_2 = arith.constant 0 : index
    %c0_3 = arith.constant 0 : index
    %c0_4 = arith.constant 0 : index
    %4 = vector.load %arg2[%c0_2, %c0_3, %c0_4] : memref<9x4x28xf32, #tpu.memory_space<vmem>>, vector<1x4x28xf32>
    %5 = vector.shape_cast %4 : vector<1x4x28xf32> to vector<4x28xf32>
    %cst_5 = arith.constant dense<0.000000e+00> : vector<128x28xf32>
    %6 = tpu.matmul %3, %5, %cst_5 {dimension_numbers = #tpu.dot_dimension_numbers<[1], [0], [0], [1], [0, 0, 1, 1], [], []>} : vector<128x4xf32>, vector<4x28xf32>, vector<128x28xf32> -> vector<128x28xf32>
    %7 = arith.addf %2, %6 : vector<128x28xf32>
    %8 = vector.extract_strided_slice %1 {offsets = [16, 0], sizes = [128, 4], strides = [1, 1]} : vector<256x4xf32> to vector<128x4xf32>
    %c1 = arith.constant 1 : index
    %c0_6 = arith.constant 0 : index
    %c0_7 = arith.constant 0 : index
    %9 = vector.load %arg2[%c1, %c0_6, %c0_7] : memref<9x4x28xf32, #tpu.memory_space<vmem>>, vector<1x4x28xf32>
    %10 = vector.shape_cast %9 : vector<1x4x28xf32> to vector<4x28xf32>
    %cst_8 = arith.constant dense<0.000000e+00> : vector<128x28xf32>
    %11 = tpu.matmul %8, %10, %cst_8 {dimension_numbers = #tpu.dot_dimension_numbers<[1], [0], [0], [1], [0, 0, 1, 1], [], []>} : vector<128x4xf32>, vector<4x28xf32>, vector<128x28xf32> -> vector<128x28xf32>
    %12 = arith.addf %7, %11 : vector<128x28xf32>
    %13 = vector.extract_strided_slice %1 {offsets = [32, 0], sizes = [128, 4], strides = [1, 1]} : vector<256x4xf32> to vector<128x4xf32>
    %c2 = arith.constant 2 : index
    %c0_9 = arith.constant 0 : index
    %c0_10 = arith.constant 0 : index
    %14 = vector.load %arg2[%c2, %c0_9, %c0_10] : memref<9x4x28xf32, #tpu.memory_space<vmem>>, vector<1x4x28xf32>
    %15 = vector.shape_cast %14 : vector<1x4x28xf32> to vector<4x28xf32>
    %cst_11 = arith.constant dense<0.000000e+00> : vector<128x28xf32>
    %16 = tpu.matmul %13, %15, %cst_11 {dimension_numbers = #tpu.dot_dimension_numbers<[1], [0], [0], [1], [0, 0, 1, 1], [], []>} : vector<128x4xf32>, vector<4x28xf32>, vector<128x28xf32> -> vector<128x28xf32>
    %17 = arith.addf %12, %16 : vector<128x28xf32>
    %18 = vector.extract_strided_slice %1 {offsets = [48, 0], sizes = [128, 4], strides = [1, 1]} : vector<256x4xf32> to vector<128x4xf32>
    %c3 = arith.constant 3 : index
    %c0_12 = arith.constant 0 : index
    %c0_13 = arith.constant 0 : index
    %19 = vector.load %arg2[%c3, %c0_12, %c0_13] : memref<9x4x28xf32, #tpu.memory_space<vmem>>, vector<1x4x28xf32>
    %20 = vector.shape_cast %19 : vector<1x4x28xf32> to vector<4x28xf32>
    %cst_14 = arith.constant dense<0.000000e+00> : vector<128x28xf32>
    %21 = tpu.matmul %18, %20, %cst_14 {dimension_numbers = #tpu.dot_dimension_numbers<[1], [0], [0], [1], [0, 0, 1, 1], [], []>} : vector<128x4xf32>, vector<4x28xf32>, vector<128x28xf32> -> vector<128x28xf32>
    %22 = arith.addf %17, %21 : vector<128x28xf32>
    %23 = vector.extract_strided_slice %1 {offsets = [64, 0], sizes = [128, 4], strides = [1, 1]} : vector<256x4xf32> to vector<128x4xf32>
    %c4 = arith.constant 4 : index
    %c0_15 = arith.constant 0 : index
    %c0_16 = arith.constant 0 : index
    %24 = vector.load %arg2[%c4, %c0_15, %c0_16] : memref<9x4x28xf32, #tpu.memory_space<vmem>>, vector<1x4x28xf32>
    %25 = vector.shape_cast %24 : vector<1x4x28xf32> to vector<4x28xf32>
    %cst_17 = arith.constant dense<0.000000e+00> : vector<128x28xf32>
    %26 = tpu.matmul %23, %25, %cst_17 {dimension_numbers = #tpu.dot_dimension_numbers<[1], [0], [0], [1], [0, 0, 1, 1], [], []>} : vector<128x4xf32>, vector<4x28xf32>, vector<128x28xf32> -> vector<128x28xf32>
    %27 = arith.addf %22, %26 : vector<128x28xf32>
    %28 = vector.extract_strided_slice %1 {offsets = [80, 0], sizes = [128, 4], strides = [1, 1]} : vector<256x4xf32> to vector<128x4xf32>
    %c5 = arith.constant 5 : index
    %c0_18 = arith.constant 0 : index
    %c0_19 = arith.constant 0 : index
    %29 = vector.load %arg2[%c5, %c0_18, %c0_19] : memref<9x4x28xf32, #tpu.memory_space<vmem>>, vector<1x4x28xf32>
    %30 = vector.shape_cast %29 : vector<1x4x28xf32> to vector<4x28xf32>
    %cst_20 = arith.constant dense<0.000000e+00> : vector<128x28xf32>
    %31 = tpu.matmul %28, %30, %cst_20 {dimension_numbers = #tpu.dot_dimension_numbers<[1], [0], [0], [1], [0, 0, 1, 1], [], []>} : vector<128x4xf32>, vector<4x28xf32>, vector<128x28xf32> -> vector<128x28xf32>
    %32 = arith.addf %27, %31 : vector<128x28xf32>
    %33 = vector.extract_strided_slice %1 {offsets = [96, 0], sizes = [128, 4], strides = [1, 1]} : vector<256x4xf32> to vector<128x4xf32>
    %c6 = arith.constant 6 : index
    %c0_21 = arith.constant 0 : index
    %c0_22 = arith.constant 0 : index
    %34 = vector.load %arg2[%c6, %c0_21, %c0_22] : memref<9x4x28xf32, #tpu.memory_space<vmem>>, vector<1x4x28xf32>
    %35 = vector.shape_cast %34 : vector<1x4x28xf32> to vector<4x28xf32>
    %cst_23 = arith.constant dense<0.000000e+00> : vector<128x28xf32>
    %36 = tpu.matmul %33, %35, %cst_23 {dimension_numbers = #tpu.dot_dimension_numbers<[1], [0], [0], [1], [0, 0, 1, 1], [], []>} : vector<128x4xf32>, vector<4x28xf32>, vector<128x28xf32> -> vector<128x28xf32>
    %37 = arith.addf %32, %36 : vector<128x28xf32>
    %38 = vector.extract_strided_slice %1 {offsets = [112, 0], sizes = [128, 4], strides = [1, 1]} : vector<256x4xf32> to vector<128x4xf32>
    %c7 = arith.constant 7 : index
    %c0_24 = arith.constant 0 : index
    %c0_25 = arith.constant 0 : index
    %39 = vector.load %arg2[%c7, %c0_24, %c0_25] : memref<9x4x28xf32, #tpu.memory_space<vmem>>, vector<1x4x28xf32>
    %40 = vector.shape_cast %39 : vector<1x4x28xf32> to vector<4x28xf32>
    %cst_26 = arith.constant dense<0.000000e+00> : vector<128x28xf32>
    %41 = tpu.matmul %38, %40, %cst_26 {dimension_numbers = #tpu.dot_dimension_numbers<[1], [0], [0], [1], [0, 0, 1, 1], [], []>} : vector<128x4xf32>, vector<4x28xf32>, vector<128x28xf32> -> vector<128x28xf32>
    %42 = arith.addf %37, %41 : vector<128x28xf32>
    %43 = vector.extract_strided_slice %1 {offsets = [128, 0], sizes = [128, 4], strides = [1, 1]} : vector<256x4xf32> to vector<128x4xf32>
    %c8 = arith.constant 8 : index
    %c0_27 = arith.constant 0 : index
    %c0_28 = arith.constant 0 : index
    %44 = vector.load %arg2[%c8, %c0_27, %c0_28] : memref<9x4x28xf32, #tpu.memory_space<vmem>>, vector<1x4x28xf32>
    %45 = vector.shape_cast %44 : vector<1x4x28xf32> to vector<4x28xf32>
    %cst_29 = arith.constant dense<0.000000e+00> : vector<128x28xf32>
    %46 = tpu.matmul %43, %45, %cst_29 {dimension_numbers = #tpu.dot_dimension_numbers<[1], [0], [0], [1], [0, 0, 1, 1], [], []>} : vector<128x4xf32>, vector<4x28xf32>, vector<128x28xf32> -> vector<128x28xf32>
    %47 = arith.addf %42, %46 : vector<128x28xf32>
    %c0_30 = arith.constant 0 : index
    %c0_31 = arith.constant 0 : index
    %48 = vector.load %arg3[%c0_30, %c0_31] : memref<1x28xf32, #tpu.memory_space<vmem>>, vector<1x28xf32>
    %49 = vector.broadcast %48 : vector<1x28xf32> to vector<128x28xf32>
    %50 = arith.mulf %47, %49 : vector<128x28xf32>
    %c0_32 = arith.constant 0 : index
    %c0_33 = arith.constant 0 : index
    %51 = vector.load %arg4[%c0_32, %c0_33] : memref<1x28xf32, #tpu.memory_space<vmem>>, vector<1x28xf32>
    %52 = vector.broadcast %51 : vector<1x28xf32> to vector<128x28xf32>
    %53 = arith.addf %50, %52 : vector<128x28xf32>
    %cst_34 = arith.constant 0.000000e+00 : f32
    %54 = vector.broadcast %cst_34 : f32 to vector<128x28xf32>
    %55 = arith.maximumf %53, %54 : vector<128x28xf32>
    %c0_35 = arith.constant 0 : index
    %c0_36 = arith.constant 0 : index
    %c0_37 = arith.constant 0 : index
    %56 = vector.load %arg5[%c0_35, %c0_36, %c0_37] : memref<1x128x28xf32, #tpu.memory_space<vmem>>, vector<1x128x28xf32>
    %57 = vector.shape_cast %56 : vector<1x128x28xf32> to vector<128x28xf32>
    %58 = vector.shape_cast %55 : vector<128x28xf32> to vector<1x128x28xf32>
    tpu.vector_store %arg5[%c0_35, %c0_36, %c0_37], %58 {strides = array<i32>} : memref<1x128x28xf32, #tpu.memory_space<vmem>>, vector<1x128x28xf32>,
    return
  }
  func.func @transform_0(%arg0: i32) -> (i32, i32, i32) {
    %c0_i32 = arith.constant 0 : i32
    %c0_i32_0 = arith.constant 0 : i32
    %c0_i32_1 = arith.constant 0 : i32
    return %arg0, %c0_i32, %c0_i32_0 : i32, i32, i32
  }
  func.func @transform_1(%arg0: i32) -> (i32, i32, i32) {
    %c0_i32 = arith.constant 0 : i32
    %c0_i32_0 = arith.constant 0 : i32
    %c0_i32_1 = arith.constant 0 : i32
    %c0_i32_2 = arith.constant 0 : i32
    return %c0_i32, %c0_i32_0, %c0_i32_1 : i32, i32, i32
  }
  func.func @transform_2(%arg0: i32) -> (i32, i32) {
    %c0_i32 = arith.constant 0 : i32
    %c0_i32_0 = arith.constant 0 : i32
    %c0_i32_1 = arith.constant 0 : i32
    return %c0_i32, %c0_i32_0 : i32, i32
  }
  func.func @transform_3(%arg0: i32) -> (i32, i32) {
    %c0_i32 = arith.constant 0 : i32
    %c0_i32_0 = arith.constant 0 : i32
    %c0_i32_1 = arith.constant 0 : i32
    return %c0_i32, %c0_i32_0 : i32, i32
  }
  func.func @transform_4(%arg0: i32) -> (i32, i32, i32) {
    %c0_i32 = arith.constant 0 : i32
    %c0_i32_0 = arith.constant 0 : i32
    %c0_i32_1 = arith.constant 0 : i32
    return %arg0, %c0_i32, %c0_i32_0 : i32, i32, i32
  }
}

module attributes {stable_mosaic.version = 11 : i64} {
  func.func @_gating_kernel(%arg0: i32, %arg1: memref<128x14xf32, #tpu.memory_space<vmem>>, %arg2: memref<14x8xf32, #tpu.memory_space<vmem>>, %arg3: memref<14x8xf32, #tpu.memory_space<vmem>>, %arg4: memref<1x8xf32, #tpu.memory_space<vmem>>, %arg5: memref<8x14xf32, #tpu.memory_space<vmem>>, %arg6: memref<1x14xf32, #tpu.memory_space<vmem>>, %arg7: memref<1x14xf32, #tpu.memory_space<vmem>>) attributes {dimension_semantics = [#tpu.dimension_semantics<arbitrary>], iteration_bounds = array<i64: 1>, scalar_prefetch = 0 : i64, scratch_operands = 0 : i64, tpu.core_type = #tpu.core_type<tc>, window_params = [{pipeline_mode = #tpu.pipeline_mode<synchronous>, transform_indices = @transform_0, window_bounds = array<i64: 128, 14>}, {pipeline_mode = #tpu.pipeline_mode<synchronous>, transform_indices = @transform_1, window_bounds = array<i64: 14, 8>}, {pipeline_mode = #tpu.pipeline_mode<synchronous>, transform_indices = @transform_2, window_bounds = array<i64: 14, 8>}, {pipeline_mode = #tpu.pipeline_mode<synchronous>, transform_indices = @transform_3, window_bounds = array<i64: 1, 8>}, {pipeline_mode = #tpu.pipeline_mode<synchronous>, transform_indices = @transform_4, window_bounds = array<i64: 8, 14>}, {pipeline_mode = #tpu.pipeline_mode<synchronous>, transform_indices = @transform_5, window_bounds = array<i64: 1, 14>}, {pipeline_mode = #tpu.pipeline_mode<synchronous>, transform_indices = @transform_6, window_bounds = array<i64: 1, 14>}]} {
    %c0 = arith.constant 0 : index
    %c0_0 = arith.constant 0 : index
    %0 = vector.load %arg1[%c0, %c0_0] : memref<128x14xf32, #tpu.memory_space<vmem>>, vector<128x14xf32>
    %cst = arith.constant dense<0.000000e+00> : vector<14xf32>
    %1 = vector.multi_reduction <add>, %0, %cst [0] : vector<128x14xf32> to vector<14xf32>
    %2 = vector.shape_cast %1 : vector<14xf32> to vector<1x14xf32>
    %cst_1 = arith.constant 7.812500e-03 : f32
    %3 = vector.broadcast %cst_1 : f32 to vector<1x14xf32>
    %4 = arith.mulf %2, %3 : vector<1x14xf32>
    %5 = vector.broadcast %4 : vector<1x14xf32> to vector<128x14xf32>
    %6 = arith.subf %0, %5 : vector<128x14xf32>
    %7 = arith.mulf %6, %6 : vector<128x14xf32>
    %cst_2 = arith.constant dense<0.000000e+00> : vector<14xf32>
    %8 = vector.multi_reduction <add>, %7, %cst_2 [0] : vector<128x14xf32> to vector<14xf32>
    %9 = vector.shape_cast %8 : vector<14xf32> to vector<1x14xf32>
    %cst_3 = arith.constant 0.00787401571 : f32
    %10 = vector.broadcast %cst_3 : f32 to vector<1x14xf32>
    %11 = arith.mulf %9, %10 : vector<1x14xf32>
    %12 = math.sqrt %11 : vector<1x14xf32>
    %c0_4 = arith.constant 0 : index
    %c0_5 = arith.constant 0 : index
    %13 = vector.load %arg2[%c0_4, %c0_5] : memref<14x8xf32, #tpu.memory_space<vmem>>, vector<14x8xf32>
    %cst_6 = arith.constant dense<0.000000e+00> : vector<1x8xf32>
    %14 = tpu.matmul %4, %13, %cst_6 {dimension_numbers = #tpu.dot_dimension_numbers<[1], [0], [0], [1], [0, 0, 1, 1], [], []>} : vector<1x14xf32>, vector<14x8xf32>, vector<1x8xf32> -> vector<1x8xf32>
    %c0_7 = arith.constant 0 : index
    %c0_8 = arith.constant 0 : index
    %15 = vector.load %arg3[%c0_7, %c0_8] : memref<14x8xf32, #tpu.memory_space<vmem>>, vector<14x8xf32>
    %cst_9 = arith.constant dense<0.000000e+00> : vector<1x8xf32>
    %16 = tpu.matmul %12, %15, %cst_9 {dimension_numbers = #tpu.dot_dimension_numbers<[1], [0], [0], [1], [0, 0, 1, 1], [], []>} : vector<1x14xf32>, vector<14x8xf32>, vector<1x8xf32> -> vector<1x8xf32>
    %17 = arith.addf %14, %16 : vector<1x8xf32>
    %c0_10 = arith.constant 0 : index
    %c0_11 = arith.constant 0 : index
    %18 = vector.load %arg4[%c0_10, %c0_11] : memref<1x8xf32, #tpu.memory_space<vmem>>, vector<1x8xf32>
    %19 = arith.addf %17, %18 : vector<1x8xf32>
    %cst_12 = arith.constant 0.000000e+00 : f32
    %20 = vector.broadcast %cst_12 : f32 to vector<1x8xf32>
    %21 = arith.maximumf %19, %20 : vector<1x8xf32>
    %c0_13 = arith.constant 0 : index
    %c0_14 = arith.constant 0 : index
    %22 = vector.load %arg5[%c0_13, %c0_14] : memref<8x14xf32, #tpu.memory_space<vmem>>, vector<8x14xf32>
    %cst_15 = arith.constant dense<0.000000e+00> : vector<1x14xf32>
    %23 = tpu.matmul %21, %22, %cst_15 {dimension_numbers = #tpu.dot_dimension_numbers<[1], [0], [0], [1], [0, 0, 1, 1], [], []>} : vector<1x8xf32>, vector<8x14xf32>, vector<1x14xf32> -> vector<1x14xf32>
    %c0_16 = arith.constant 0 : index
    %c0_17 = arith.constant 0 : index
    %24 = vector.load %arg6[%c0_16, %c0_17] : memref<1x14xf32, #tpu.memory_space<vmem>>, vector<1x14xf32>
    %25 = arith.addf %23, %24 : vector<1x14xf32>
    %26 = arith.negf %25 : vector<1x14xf32>
    %27 = math.exp %26 : vector<1x14xf32>
    %cst_18 = arith.constant 1.000000e+00 : f32
    %28 = vector.broadcast %cst_18 : f32 to vector<1x14xf32>
    %29 = arith.addf %28, %27 : vector<1x14xf32>
    %30 = arith.divf %28, %29 : vector<1x14xf32>
    %c0_19 = arith.constant 0 : index
    %c0_20 = arith.constant 0 : index
    %31 = vector.load %arg7[%c0_19, %c0_20] : memref<1x14xf32, #tpu.memory_space<vmem>>, vector<1x14xf32>
    tpu.vector_store %arg7[%c0_19, %c0_20], %30 {strides = array<i32>} : memref<1x14xf32, #tpu.memory_space<vmem>>, vector<1x14xf32>,
    return
  }
  func.func @transform_0(%arg0: i32) -> (i32, i32) {
    %c0_i32 = arith.constant 0 : i32
    %c0_i32_0 = arith.constant 0 : i32
    %c0_i32_1 = arith.constant 0 : i32
    return %c0_i32, %c0_i32_0 : i32, i32
  }
  func.func @transform_1(%arg0: i32) -> (i32, i32) {
    %c0_i32 = arith.constant 0 : i32
    %c0_i32_0 = arith.constant 0 : i32
    %c0_i32_1 = arith.constant 0 : i32
    return %c0_i32, %c0_i32_0 : i32, i32
  }
  func.func @transform_2(%arg0: i32) -> (i32, i32) {
    %c0_i32 = arith.constant 0 : i32
    %c0_i32_0 = arith.constant 0 : i32
    %c0_i32_1 = arith.constant 0 : i32
    return %c0_i32, %c0_i32_0 : i32, i32
  }
  func.func @transform_3(%arg0: i32) -> (i32, i32) {
    %c0_i32 = arith.constant 0 : i32
    %c0_i32_0 = arith.constant 0 : i32
    %c0_i32_1 = arith.constant 0 : i32
    return %c0_i32, %c0_i32_0 : i32, i32
  }
  func.func @transform_4(%arg0: i32) -> (i32, i32) {
    %c0_i32 = arith.constant 0 : i32
    %c0_i32_0 = arith.constant 0 : i32
    %c0_i32_1 = arith.constant 0 : i32
    return %c0_i32, %c0_i32_0 : i32, i32
  }
  func.func @transform_5(%arg0: i32) -> (i32, i32) {
    %c0_i32 = arith.constant 0 : i32
    %c0_i32_0 = arith.constant 0 : i32
    %c0_i32_1 = arith.constant 0 : i32
    return %c0_i32, %c0_i32_0 : i32, i32
  }
  func.func @transform_6(%arg0: i32) -> (i32, i32) {
    %c0_i32 = arith.constant 0 : i32
    %c0_i32_0 = arith.constant 0 : i32
    %c0_i32_1 = arith.constant 0 : i32
    return %c0_i32, %c0_i32_0 : i32, i32
  }
}

module attributes {stable_mosaic.version = 11 : i64} {
  func.func @_tcn_kernel(%arg0: i32, %arg1: memref<1x256x7xf32, #tpu.memory_space<vmem>>, %arg2: memref<9x7x25xf32, #tpu.memory_space<vmem>>, %arg3: memref<1x25xf32, #tpu.memory_space<vmem>>, %arg4: memref<1x25xf32, #tpu.memory_space<vmem>>, %arg5: memref<1x128x25xf32, #tpu.memory_space<vmem>>) attributes {dimension_semantics = [#tpu.dimension_semantics<parallel>], iteration_bounds = array<i64: 2>, scalar_prefetch = 0 : i64, scratch_operands = 0 : i64, tpu.core_type = #tpu.core_type<tc>, window_params = [{transform_indices = @transform_0, window_bounds = array<i64: 1, 256, 7>}, {pipeline_mode = #tpu.pipeline_mode<synchronous>, transform_indices = @transform_1, window_bounds = array<i64: 9, 7, 25>}, {pipeline_mode = #tpu.pipeline_mode<synchronous>, transform_indices = @transform_2, window_bounds = array<i64: 1, 25>}, {pipeline_mode = #tpu.pipeline_mode<synchronous>, transform_indices = @transform_3, window_bounds = array<i64: 1, 25>}, {transform_indices = @transform_4, window_bounds = array<i64: 1, 128, 25>}]} {
    %c0 = arith.constant 0 : index
    %c0_0 = arith.constant 0 : index
    %c0_1 = arith.constant 0 : index
    %0 = vector.load %arg1[%c0, %c0_0, %c0_1] : memref<1x256x7xf32, #tpu.memory_space<vmem>>, vector<1x256x7xf32>
    %1 = vector.shape_cast %0 : vector<1x256x7xf32> to vector<256x7xf32>
    %cst = arith.constant 0.000000e+00 : f32
    %2 = vector.broadcast %cst : f32 to vector<128x25xf32>
    %3 = vector.extract_strided_slice %1 {offsets = [0, 0], sizes = [128, 7], strides = [1, 1]} : vector<256x7xf32> to vector<128x7xf32>
    %c0_2 = arith.constant 0 : index
    %c0_3 = arith.constant 0 : index
    %c0_4 = arith.constant 0 : index
    %4 = vector.load %arg2[%c0_2, %c0_3, %c0_4] : memref<9x7x25xf32, #tpu.memory_space<vmem>>, vector<1x7x25xf32>
    %5 = vector.shape_cast %4 : vector<1x7x25xf32> to vector<7x25xf32>
    %cst_5 = arith.constant dense<0.000000e+00> : vector<128x25xf32>
    %6 = tpu.matmul %3, %5, %cst_5 {dimension_numbers = #tpu.dot_dimension_numbers<[1], [0], [0], [1], [0, 0, 1, 1], [], []>} : vector<128x7xf32>, vector<7x25xf32>, vector<128x25xf32> -> vector<128x25xf32>
    %7 = arith.addf %2, %6 : vector<128x25xf32>
    %8 = vector.extract_strided_slice %1 {offsets = [16, 0], sizes = [128, 7], strides = [1, 1]} : vector<256x7xf32> to vector<128x7xf32>
    %c1 = arith.constant 1 : index
    %c0_6 = arith.constant 0 : index
    %c0_7 = arith.constant 0 : index
    %9 = vector.load %arg2[%c1, %c0_6, %c0_7] : memref<9x7x25xf32, #tpu.memory_space<vmem>>, vector<1x7x25xf32>
    %10 = vector.shape_cast %9 : vector<1x7x25xf32> to vector<7x25xf32>
    %cst_8 = arith.constant dense<0.000000e+00> : vector<128x25xf32>
    %11 = tpu.matmul %8, %10, %cst_8 {dimension_numbers = #tpu.dot_dimension_numbers<[1], [0], [0], [1], [0, 0, 1, 1], [], []>} : vector<128x7xf32>, vector<7x25xf32>, vector<128x25xf32> -> vector<128x25xf32>
    %12 = arith.addf %7, %11 : vector<128x25xf32>
    %13 = vector.extract_strided_slice %1 {offsets = [32, 0], sizes = [128, 7], strides = [1, 1]} : vector<256x7xf32> to vector<128x7xf32>
    %c2 = arith.constant 2 : index
    %c0_9 = arith.constant 0 : index
    %c0_10 = arith.constant 0 : index
    %14 = vector.load %arg2[%c2, %c0_9, %c0_10] : memref<9x7x25xf32, #tpu.memory_space<vmem>>, vector<1x7x25xf32>
    %15 = vector.shape_cast %14 : vector<1x7x25xf32> to vector<7x25xf32>
    %cst_11 = arith.constant dense<0.000000e+00> : vector<128x25xf32>
    %16 = tpu.matmul %13, %15, %cst_11 {dimension_numbers = #tpu.dot_dimension_numbers<[1], [0], [0], [1], [0, 0, 1, 1], [], []>} : vector<128x7xf32>, vector<7x25xf32>, vector<128x25xf32> -> vector<128x25xf32>
    %17 = arith.addf %12, %16 : vector<128x25xf32>
    %18 = vector.extract_strided_slice %1 {offsets = [48, 0], sizes = [128, 7], strides = [1, 1]} : vector<256x7xf32> to vector<128x7xf32>
    %c3 = arith.constant 3 : index
    %c0_12 = arith.constant 0 : index
    %c0_13 = arith.constant 0 : index
    %19 = vector.load %arg2[%c3, %c0_12, %c0_13] : memref<9x7x25xf32, #tpu.memory_space<vmem>>, vector<1x7x25xf32>
    %20 = vector.shape_cast %19 : vector<1x7x25xf32> to vector<7x25xf32>
    %cst_14 = arith.constant dense<0.000000e+00> : vector<128x25xf32>
    %21 = tpu.matmul %18, %20, %cst_14 {dimension_numbers = #tpu.dot_dimension_numbers<[1], [0], [0], [1], [0, 0, 1, 1], [], []>} : vector<128x7xf32>, vector<7x25xf32>, vector<128x25xf32> -> vector<128x25xf32>
    %22 = arith.addf %17, %21 : vector<128x25xf32>
    %23 = vector.extract_strided_slice %1 {offsets = [64, 0], sizes = [128, 7], strides = [1, 1]} : vector<256x7xf32> to vector<128x7xf32>
    %c4 = arith.constant 4 : index
    %c0_15 = arith.constant 0 : index
    %c0_16 = arith.constant 0 : index
    %24 = vector.load %arg2[%c4, %c0_15, %c0_16] : memref<9x7x25xf32, #tpu.memory_space<vmem>>, vector<1x7x25xf32>
    %25 = vector.shape_cast %24 : vector<1x7x25xf32> to vector<7x25xf32>
    %cst_17 = arith.constant dense<0.000000e+00> : vector<128x25xf32>
    %26 = tpu.matmul %23, %25, %cst_17 {dimension_numbers = #tpu.dot_dimension_numbers<[1], [0], [0], [1], [0, 0, 1, 1], [], []>} : vector<128x7xf32>, vector<7x25xf32>, vector<128x25xf32> -> vector<128x25xf32>
    %27 = arith.addf %22, %26 : vector<128x25xf32>
    %28 = vector.extract_strided_slice %1 {offsets = [80, 0], sizes = [128, 7], strides = [1, 1]} : vector<256x7xf32> to vector<128x7xf32>
    %c5 = arith.constant 5 : index
    %c0_18 = arith.constant 0 : index
    %c0_19 = arith.constant 0 : index
    %29 = vector.load %arg2[%c5, %c0_18, %c0_19] : memref<9x7x25xf32, #tpu.memory_space<vmem>>, vector<1x7x25xf32>
    %30 = vector.shape_cast %29 : vector<1x7x25xf32> to vector<7x25xf32>
    %cst_20 = arith.constant dense<0.000000e+00> : vector<128x25xf32>
    %31 = tpu.matmul %28, %30, %cst_20 {dimension_numbers = #tpu.dot_dimension_numbers<[1], [0], [0], [1], [0, 0, 1, 1], [], []>} : vector<128x7xf32>, vector<7x25xf32>, vector<128x25xf32> -> vector<128x25xf32>
    %32 = arith.addf %27, %31 : vector<128x25xf32>
    %33 = vector.extract_strided_slice %1 {offsets = [96, 0], sizes = [128, 7], strides = [1, 1]} : vector<256x7xf32> to vector<128x7xf32>
    %c6 = arith.constant 6 : index
    %c0_21 = arith.constant 0 : index
    %c0_22 = arith.constant 0 : index
    %34 = vector.load %arg2[%c6, %c0_21, %c0_22] : memref<9x7x25xf32, #tpu.memory_space<vmem>>, vector<1x7x25xf32>
    %35 = vector.shape_cast %34 : vector<1x7x25xf32> to vector<7x25xf32>
    %cst_23 = arith.constant dense<0.000000e+00> : vector<128x25xf32>
    %36 = tpu.matmul %33, %35, %cst_23 {dimension_numbers = #tpu.dot_dimension_numbers<[1], [0], [0], [1], [0, 0, 1, 1], [], []>} : vector<128x7xf32>, vector<7x25xf32>, vector<128x25xf32> -> vector<128x25xf32>
    %37 = arith.addf %32, %36 : vector<128x25xf32>
    %38 = vector.extract_strided_slice %1 {offsets = [112, 0], sizes = [128, 7], strides = [1, 1]} : vector<256x7xf32> to vector<128x7xf32>
    %c7 = arith.constant 7 : index
    %c0_24 = arith.constant 0 : index
    %c0_25 = arith.constant 0 : index
    %39 = vector.load %arg2[%c7, %c0_24, %c0_25] : memref<9x7x25xf32, #tpu.memory_space<vmem>>, vector<1x7x25xf32>
    %40 = vector.shape_cast %39 : vector<1x7x25xf32> to vector<7x25xf32>
    %cst_26 = arith.constant dense<0.000000e+00> : vector<128x25xf32>
    %41 = tpu.matmul %38, %40, %cst_26 {dimension_numbers = #tpu.dot_dimension_numbers<[1], [0], [0], [1], [0, 0, 1, 1], [], []>} : vector<128x7xf32>, vector<7x25xf32>, vector<128x25xf32> -> vector<128x25xf32>
    %42 = arith.addf %37, %41 : vector<128x25xf32>
    %43 = vector.extract_strided_slice %1 {offsets = [128, 0], sizes = [128, 7], strides = [1, 1]} : vector<256x7xf32> to vector<128x7xf32>
    %c8 = arith.constant 8 : index
    %c0_27 = arith.constant 0 : index
    %c0_28 = arith.constant 0 : index
    %44 = vector.load %arg2[%c8, %c0_27, %c0_28] : memref<9x7x25xf32, #tpu.memory_space<vmem>>, vector<1x7x25xf32>
    %45 = vector.shape_cast %44 : vector<1x7x25xf32> to vector<7x25xf32>
    %cst_29 = arith.constant dense<0.000000e+00> : vector<128x25xf32>
    %46 = tpu.matmul %43, %45, %cst_29 {dimension_numbers = #tpu.dot_dimension_numbers<[1], [0], [0], [1], [0, 0, 1, 1], [], []>} : vector<128x7xf32>, vector<7x25xf32>, vector<128x25xf32> -> vector<128x25xf32>
    %47 = arith.addf %42, %46 : vector<128x25xf32>
    %c0_30 = arith.constant 0 : index
    %c0_31 = arith.constant 0 : index
    %48 = vector.load %arg3[%c0_30, %c0_31] : memref<1x25xf32, #tpu.memory_space<vmem>>, vector<1x25xf32>
    %49 = vector.broadcast %48 : vector<1x25xf32> to vector<128x25xf32>
    %50 = arith.mulf %47, %49 : vector<128x25xf32>
    %c0_32 = arith.constant 0 : index
    %c0_33 = arith.constant 0 : index
    %51 = vector.load %arg4[%c0_32, %c0_33] : memref<1x25xf32, #tpu.memory_space<vmem>>, vector<1x25xf32>
    %52 = vector.broadcast %51 : vector<1x25xf32> to vector<128x25xf32>
    %53 = arith.addf %50, %52 : vector<128x25xf32>
    %cst_34 = arith.constant 0.000000e+00 : f32
    %54 = vector.broadcast %cst_34 : f32 to vector<128x25xf32>
    %55 = arith.maximumf %53, %54 : vector<128x25xf32>
    %c0_35 = arith.constant 0 : index
    %c0_36 = arith.constant 0 : index
    %c0_37 = arith.constant 0 : index
    %56 = vector.load %arg5[%c0_35, %c0_36, %c0_37] : memref<1x128x25xf32, #tpu.memory_space<vmem>>, vector<1x128x25xf32>
    %57 = vector.shape_cast %56 : vector<1x128x25xf32> to vector<128x25xf32>
    %58 = vector.shape_cast %55 : vector<128x25xf32> to vector<1x128x25xf32>
    tpu.vector_store %arg5[%c0_35, %c0_36, %c0_37], %58 {strides = array<i32>} : memref<1x128x25xf32, #tpu.memory_space<vmem>>, vector<1x128x25xf32>,
    return
  }
  func.func @transform_0(%arg0: i32) -> (i32, i32, i32) {
    %c0_i32 = arith.constant 0 : i32
    %c0_i32_0 = arith.constant 0 : i32
    %c0_i32_1 = arith.constant 0 : i32
    return %arg0, %c0_i32, %c0_i32_0 : i32, i32, i32
  }
  func.func @transform_1(%arg0: i32) -> (i32, i32, i32) {
    %c0_i32 = arith.constant 0 : i32
    %c0_i32_0 = arith.constant 0 : i32
    %c0_i32_1 = arith.constant 0 : i32
    %c0_i32_2 = arith.constant 0 : i32
    return %c0_i32, %c0_i32_0, %c0_i32_1 : i32, i32, i32
  }
  func.func @transform_2(%arg0: i32) -> (i32, i32) {
    %c0_i32 = arith.constant 0 : i32
    %c0_i32_0 = arith.constant 0 : i32
    %c0_i32_1 = arith.constant 0 : i32
    return %c0_i32, %c0_i32_0 : i32, i32
  }
  func.func @transform_3(%arg0: i32) -> (i32, i32) {
    %c0_i32 = arith.constant 0 : i32
    %c0_i32_0 = arith.constant 0 : i32
    %c0_i32_1 = arith.constant 0 : i32
    return %c0_i32, %c0_i32_0 : i32, i32
  }
  func.func @transform_4(%arg0: i32) -> (i32, i32, i32) {
    %c0_i32 = arith.constant 0 : i32
    %c0_i32_0 = arith.constant 0 : i32
    %c0_i32_1 = arith.constant 0 : i32
    return %arg0, %c0_i32, %c0_i32_0 : i32, i32, i32
  }
}

module attributes {stable_mosaic.version = 11 : i64} {
  func.func @_head_kernel(%arg0: i32, %arg1: memref<6x32xf32, #tpu.memory_space<vmem>>, %arg2: memref<32x256xf32, #tpu.memory_space<vmem>>, %arg3: memref<1x256xf32, #tpu.memory_space<vmem>>, %arg4: memref<1x256xf32, #tpu.memory_space<vmem>>, %arg5: memref<256x128xf32, #tpu.memory_space<vmem>>, %arg6: memref<1x128xf32, #tpu.memory_space<vmem>>, %arg7: memref<1x128xf32, #tpu.memory_space<vmem>>, %arg8: memref<128x64xf32, #tpu.memory_space<vmem>>, %arg9: memref<1x64xf32, #tpu.memory_space<vmem>>, %arg10: memref<1x64xf32, #tpu.memory_space<vmem>>, %arg11: memref<64x1xf32, #tpu.memory_space<vmem>>, %arg12: memref<1x1xf32, #tpu.memory_space<vmem>>, %arg13: memref<1x1xf32, #tpu.memory_space<vmem>>, %arg14: memref<6x1xf32, #tpu.memory_space<vmem>>) attributes {dimension_semantics = [#tpu.dimension_semantics<arbitrary>], iteration_bounds = array<i64: 1>, scalar_prefetch = 0 : i64, scratch_operands = 0 : i64, tpu.core_type = #tpu.core_type<tc>, window_params = [{pipeline_mode = #tpu.pipeline_mode<synchronous>, transform_indices = @transform_0, window_bounds = array<i64: 6, 32>}, {pipeline_mode = #tpu.pipeline_mode<synchronous>, transform_indices = @transform_1, window_bounds = array<i64: 32, 256>}, {pipeline_mode = #tpu.pipeline_mode<synchronous>, transform_indices = @transform_2, window_bounds = array<i64: 1, 256>}, {pipeline_mode = #tpu.pipeline_mode<synchronous>, transform_indices = @transform_3, window_bounds = array<i64: 1, 256>}, {pipeline_mode = #tpu.pipeline_mode<synchronous>, transform_indices = @transform_4, window_bounds = array<i64: 256, 128>}, {pipeline_mode = #tpu.pipeline_mode<synchronous>, transform_indices = @transform_5, window_bounds = array<i64: 1, 128>}, {pipeline_mode = #tpu.pipeline_mode<synchronous>, transform_indices = @transform_6, window_bounds = array<i64: 1, 128>}, {pipeline_mode = #tpu.pipeline_mode<synchronous>, transform_indices = @transform_7, window_bounds = array<i64: 128, 64>}, {pipeline_mode = #tpu.pipeline_mode<synchronous>, transform_indices = @transform_8, window_bounds = array<i64: 1, 64>}, {pipeline_mode = #tpu.pipeline_mode<synchronous>, transform_indices = @transform_9, window_bounds = array<i64: 1, 64>}, {pipeline_mode = #tpu.pipeline_mode<synchronous>, transform_indices = @transform_10, window_bounds = array<i64: 64, 1>}, {pipeline_mode = #tpu.pipeline_mode<synchronous>, transform_indices = @transform_11, window_bounds = array<i64: 1, 1>}, {pipeline_mode = #tpu.pipeline_mode<synchronous>, transform_indices = @transform_12, window_bounds = array<i64: 1, 1>}, {pipeline_mode = #tpu.pipeline_mode<synchronous>, transform_indices = @transform_13, window_bounds = array<i64: 6, 1>}]} {
    %c0 = arith.constant 0 : index
    %c0_0 = arith.constant 0 : index
    %0 = vector.load %arg1[%c0, %c0_0] : memref<6x32xf32, #tpu.memory_space<vmem>>, vector<6x32xf32>
    %c0_1 = arith.constant 0 : index
    %c0_2 = arith.constant 0 : index
    %1 = vector.load %arg2[%c0_1, %c0_2] : memref<32x256xf32, #tpu.memory_space<vmem>>, vector<32x256xf32>
    %cst = arith.constant dense<0.000000e+00> : vector<6x256xf32>
    %2 = tpu.matmul %0, %1, %cst {dimension_numbers = #tpu.dot_dimension_numbers<[1], [0], [0], [1], [0, 0, 1, 1], [], []>} : vector<6x32xf32>, vector<32x256xf32>, vector<6x256xf32> -> vector<6x256xf32>
    %c0_3 = arith.constant 0 : index
    %c0_4 = arith.constant 0 : index
    %3 = vector.load %arg3[%c0_3, %c0_4] : memref<1x256xf32, #tpu.memory_space<vmem>>, vector<1x256xf32>
    %4 = vector.broadcast %3 : vector<1x256xf32> to vector<6x256xf32>
    %5 = arith.mulf %2, %4 : vector<6x256xf32>
    %c0_5 = arith.constant 0 : index
    %c0_6 = arith.constant 0 : index
    %6 = vector.load %arg4[%c0_5, %c0_6] : memref<1x256xf32, #tpu.memory_space<vmem>>, vector<1x256xf32>
    %7 = vector.broadcast %6 : vector<1x256xf32> to vector<6x256xf32>
    %8 = arith.addf %5, %7 : vector<6x256xf32>
    %cst_7 = arith.constant 0.000000e+00 : f32
    %9 = vector.broadcast %cst_7 : f32 to vector<6x256xf32>
    %10 = arith.cmpf oge, %8, %9 : vector<6x256xf32>
    %cst_8 = arith.constant 0.00999999977 : f32
    %11 = vector.broadcast %cst_8 : f32 to vector<6x256xf32>
    %12 = arith.mulf %11, %8 : vector<6x256xf32>
    %13 = arith.select %10, %8, %12 : vector<6x256xi1>, vector<6x256xf32>
    %c0_9 = arith.constant 0 : index
    %c0_10 = arith.constant 0 : index
    %14 = vector.load %arg5[%c0_9, %c0_10] : memref<256x128xf32, #tpu.memory_space<vmem>>, vector<256x128xf32>
    %cst_11 = arith.constant dense<0.000000e+00> : vector<6x128xf32>
    %15 = tpu.matmul %13, %14, %cst_11 {dimension_numbers = #tpu.dot_dimension_numbers<[1], [0], [0], [1], [0, 0, 1, 1], [], []>} : vector<6x256xf32>, vector<256x128xf32>, vector<6x128xf32> -> vector<6x128xf32>
    %c0_12 = arith.constant 0 : index
    %c0_13 = arith.constant 0 : index
    %16 = vector.load %arg6[%c0_12, %c0_13] : memref<1x128xf32, #tpu.memory_space<vmem>>, vector<1x128xf32>
    %17 = vector.broadcast %16 : vector<1x128xf32> to vector<6x128xf32>
    %18 = arith.mulf %15, %17 : vector<6x128xf32>
    %c0_14 = arith.constant 0 : index
    %c0_15 = arith.constant 0 : index
    %19 = vector.load %arg7[%c0_14, %c0_15] : memref<1x128xf32, #tpu.memory_space<vmem>>, vector<1x128xf32>
    %20 = vector.broadcast %19 : vector<1x128xf32> to vector<6x128xf32>
    %21 = arith.addf %18, %20 : vector<6x128xf32>
    %cst_16 = arith.constant 0.000000e+00 : f32
    %22 = vector.broadcast %cst_16 : f32 to vector<6x128xf32>
    %23 = arith.cmpf oge, %21, %22 : vector<6x128xf32>
    %cst_17 = arith.constant 0.00999999977 : f32
    %24 = vector.broadcast %cst_17 : f32 to vector<6x128xf32>
    %25 = arith.mulf %24, %21 : vector<6x128xf32>
    %26 = arith.select %23, %21, %25 : vector<6x128xi1>, vector<6x128xf32>
    %c0_18 = arith.constant 0 : index
    %c0_19 = arith.constant 0 : index
    %27 = vector.load %arg8[%c0_18, %c0_19] : memref<128x64xf32, #tpu.memory_space<vmem>>, vector<128x64xf32>
    %cst_20 = arith.constant dense<0.000000e+00> : vector<6x64xf32>
    %28 = tpu.matmul %26, %27, %cst_20 {dimension_numbers = #tpu.dot_dimension_numbers<[1], [0], [0], [1], [0, 0, 1, 1], [], []>} : vector<6x128xf32>, vector<128x64xf32>, vector<6x64xf32> -> vector<6x64xf32>
    %c0_21 = arith.constant 0 : index
    %c0_22 = arith.constant 0 : index
    %29 = vector.load %arg9[%c0_21, %c0_22] : memref<1x64xf32, #tpu.memory_space<vmem>>, vector<1x64xf32>
    %30 = vector.broadcast %29 : vector<1x64xf32> to vector<6x64xf32>
    %31 = arith.mulf %28, %30 : vector<6x64xf32>
    %c0_23 = arith.constant 0 : index
    %c0_24 = arith.constant 0 : index
    %32 = vector.load %arg10[%c0_23, %c0_24] : memref<1x64xf32, #tpu.memory_space<vmem>>, vector<1x64xf32>
    %33 = vector.broadcast %32 : vector<1x64xf32> to vector<6x64xf32>
    %34 = arith.addf %31, %33 : vector<6x64xf32>
    %cst_25 = arith.constant 0.000000e+00 : f32
    %35 = vector.broadcast %cst_25 : f32 to vector<6x64xf32>
    %36 = arith.cmpf oge, %34, %35 : vector<6x64xf32>
    %cst_26 = arith.constant 0.00999999977 : f32
    %37 = vector.broadcast %cst_26 : f32 to vector<6x64xf32>
    %38 = arith.mulf %37, %34 : vector<6x64xf32>
    %39 = arith.select %36, %34, %38 : vector<6x64xi1>, vector<6x64xf32>
    %c0_27 = arith.constant 0 : index
    %c0_28 = arith.constant 0 : index
    %40 = vector.load %arg11[%c0_27, %c0_28] : memref<64x1xf32, #tpu.memory_space<vmem>>, vector<64x1xf32>
    %cst_29 = arith.constant dense<0.000000e+00> : vector<6x1xf32>
    %41 = tpu.matmul %39, %40, %cst_29 {dimension_numbers = #tpu.dot_dimension_numbers<[1], [0], [0], [1], [0, 0, 1, 1], [], []>} : vector<6x64xf32>, vector<64x1xf32>, vector<6x1xf32> -> vector<6x1xf32>
    %c0_30 = arith.constant 0 : index
    %c0_31 = arith.constant 0 : index
    %42 = vector.load %arg12[%c0_30, %c0_31] : memref<1x1xf32, #tpu.memory_space<vmem>>, vector<1x1xf32>
    %43 = vector.broadcast %42 : vector<1x1xf32> to vector<6x1xf32>
    %44 = arith.mulf %41, %43 : vector<6x1xf32>
    %c0_32 = arith.constant 0 : index
    %c0_33 = arith.constant 0 : index
    %45 = vector.load %arg13[%c0_32, %c0_33] : memref<1x1xf32, #tpu.memory_space<vmem>>, vector<1x1xf32>
    %46 = vector.broadcast %45 : vector<1x1xf32> to vector<6x1xf32>
    %47 = arith.addf %44, %46 : vector<6x1xf32>
    %c0_34 = arith.constant 0 : index
    %c0_35 = arith.constant 0 : index
    %48 = vector.load %arg14[%c0_34, %c0_35] : memref<6x1xf32, #tpu.memory_space<vmem>>, vector<6x1xf32>
    tpu.vector_store %arg14[%c0_34, %c0_35], %47 {strides = array<i32>} : memref<6x1xf32, #tpu.memory_space<vmem>>, vector<6x1xf32>,
    return
  }
  func.func @transform_0(%arg0: i32) -> (i32, i32) {
    %c0_i32 = arith.constant 0 : i32
    %c0_i32_0 = arith.constant 0 : i32
    %c0_i32_1 = arith.constant 0 : i32
    return %c0_i32, %c0_i32_0 : i32, i32
  }
  func.func @transform_1(%arg0: i32) -> (i32, i32) {
    %c0_i32 = arith.constant 0 : i32
    %c0_i32_0 = arith.constant 0 : i32
    %c0_i32_1 = arith.constant 0 : i32
    return %c0_i32, %c0_i32_0 : i32, i32
  }
  func.func @transform_2(%arg0: i32) -> (i32, i32) {
    %c0_i32 = arith.constant 0 : i32
    %c0_i32_0 = arith.constant 0 : i32
    %c0_i32_1 = arith.constant 0 : i32
    return %c0_i32, %c0_i32_0 : i32, i32
  }
  func.func @transform_3(%arg0: i32) -> (i32, i32) {
    %c0_i32 = arith.constant 0 : i32
    %c0_i32_0 = arith.constant 0 : i32
    %c0_i32_1 = arith.constant 0 : i32
    return %c0_i32, %c0_i32_0 : i32, i32
  }
  func.func @transform_4(%arg0: i32) -> (i32, i32) {
    %c0_i32 = arith.constant 0 : i32
    %c0_i32_0 = arith.constant 0 : i32
    %c0_i32_1 = arith.constant 0 : i32
    return %c0_i32, %c0_i32_0 : i32, i32
  }
  func.func @transform_5(%arg0: i32) -> (i32, i32) {
    %c0_i32 = arith.constant 0 : i32
    %c0_i32_0 = arith.constant 0 : i32
    %c0_i32_1 = arith.constant 0 : i32
    return %c0_i32, %c0_i32_0 : i32, i32
  }
  func.func @transform_6(%arg0: i32) -> (i32, i32) {
    %c0_i32 = arith.constant 0 : i32
    %c0_i32_0 = arith.constant 0 : i32
    %c0_i32_1 = arith.constant 0 : i32
    return %c0_i32, %c0_i32_0 : i32, i32
  }
  func.func @transform_7(%arg0: i32) -> (i32, i32) {
    %c0_i32 = arith.constant 0 : i32
    %c0_i32_0 = arith.constant 0 : i32
    %c0_i32_1 = arith.constant 0 : i32
    return %c0_i32, %c0_i32_0 : i32, i32
  }
  func.func @transform_8(%arg0: i32) -> (i32, i32) {
    %c0_i32 = arith.constant 0 : i32
    %c0_i32_0 = arith.constant 0 : i32
    %c0_i32_1 = arith.constant 0 : i32
    return %c0_i32, %c0_i32_0 : i32, i32
  }
  func.func @transform_9(%arg0: i32) -> (i32, i32) {
    %c0_i32 = arith.constant 0 : i32
    %c0_i32_0 = arith.constant 0 : i32
    %c0_i32_1 = arith.constant 0 : i32
    return %c0_i32, %c0_i32_0 : i32, i32
  }
  func.func @transform_10(%arg0: i32) -> (i32, i32) {
    %c0_i32 = arith.constant 0 : i32
    %c0_i32_0 = arith.constant 0 : i32
    %c0_i32_1 = arith.constant 0 : i32
    return %c0_i32, %c0_i32_0 : i32, i32
  }
  func.func @transform_11(%arg0: i32) -> (i32, i32) {
    %c0_i32 = arith.constant 0 : i32
    %c0_i32_0 = arith.constant 0 : i32
    %c0_i32_1 = arith.constant 0 : i32
    return %c0_i32, %c0_i32_0 : i32, i32
  }
  func.func @transform_12(%arg0: i32) -> (i32, i32) {
    %c0_i32 = arith.constant 0 : i32
    %c0_i32_0 = arith.constant 0 : i32
    %c0_i32_1 = arith.constant 0 : i32
    return %c0_i32, %c0_i32_0 : i32, i32
  }
  func.func @transform_13(%arg0: i32) -> (i32, i32) {
    %c0_i32 = arith.constant 0 : i32
    %c0_i32_0 = arith.constant 0 : i32
    %c0_i32_1 = arith.constant 0 : i32
    return %c0_i32, %c0_i32_0 : i32, i32
  }
}

</mosaic_0001>

<llo_original>
// kernel: _lambda_.16
$region0: #{_lambda_.16}
  #allocation0 [shape = 'u32[]', space=smem, size = 0x4, offset = 0x4, fixed_abs, tag = 'smem constant byte address 0x4 - core index']
  #allocation1 [shape = 'u32[72,128]{1,0:T(1,128)}', space=vmem, size = 0x9000, scoped, tag = 'internal scratch']
  %s0 = inlined_call_operand.vmem [shape: f32[256,32], index: 0, kind: input, shape index: {}]
  %s1 = inlined_call_operand.vmem [shape: f32[32,32], index: 1, kind: input, shape index: {}]
  %s2 = inlined_call_operand.vmem [shape: f32[128,128], index: 2, kind: input, shape index: {}]
  %s3 = inlined_call_operand.vmem [shape: f32[1,32], index: 3, kind: input, shape index: {}]
  %s4 = inlined_call_operand.vmem [shape: f32[256,1], index: 4, kind: input, shape index: {}]
  %s5 = inlined_call_operand.vmem [shape: f32[256,1], index: 5, kind: input, shape index: {}]
  %s6 = inlined_call_operand.vmem [shape: f32[256,32], index: 6, kind: output, shape index: {}]
  %s7 = sld [smem:[#allocation0]]
  $region57: #{_lambda_.16} parent=0
    _
  %s9 = ssub.s32 1, %s7
  %s10 = scalar_select 0, %s9, %s7
  loop: start=0, step=1, limit=4
  $region2: #{_lambda_.16} parent=0 // loop_pre_header
    _
  $region3: #{_lambda_.16} parent=0 // loop_header
    %s12 = sphi 0, %s16
    %p13 = scmp.ge.s32.totalorder %s12, 4
    %s22 = sphi 0, %s24
    %s25 = sphi 0, %s22
    %s26 = sphi 0, %s25
    %s42 = sphi 0, %s26
    %s46 = sphi 0, %s46
    %s48 = sphi 0, %s46
    %s49 = sphi 0, %s48
    %s63 = sphi 0, %s49
    %s67 = sphi 0, %s67
    %s69 = sphi 0, %s67
    %s70 = sphi 0, %s69
    %s84 = sphi 0, %s70
    %s88 = sphi 0, %s88
    %s90 = sphi 0, %s88
    %s91 = sphi 0, %s90
    %s105 = sphi 0, %s91
    %s111 = sphi 0, %s113
    %s114 = sphi 0, %s111
    %s115 = sphi 0, %s114
    %s131 = sphi 0, %s115
    %s137 = sphi 0, %s139
    %s140 = sphi 0, %s137
    %s141 = sphi 0, %s140
    %s157 = sphi 0, %s141
    %s163 = sphi 0, %s165
    %s166 = sphi 0, %s163
    %s167 = sphi 0, %s166
    %s183 = sphi 0, %s167
  $region4: #{_lambda_.16} parent=0 // loop_header_branch
    %15 = sbr.rel (%p13) target = $region8
  $region5: #{_lambda_.16} parent=0 // loop_body
    %s17 = ssub.s32 %s12, 1
    %s18 = ssub.s32 %s12, 2
    %s19 = sadd.s32 %s12, 1
    %s20 = ssub.s32 %s12, %s19
    %p21 = scmp.eq.s32.totalorder %s20, 0
    %s23 = sadd.s32 %s22, 1
    %s24 = scalar_select %p21, %s22, %s23
    %p27 = pneg %p21
    %p28 = scmp.eq.s32.totalorder %s12, 1
    %p29 = por %p27, %p28
    %p30 = scmp.ne.s32.totalorder %s22, %s25
    %p31 = scmp.eq.s32.totalorder %s12, 0
    %p32 = por %p30, %p31
    %p33 = scmp.ne.s32.totalorder %s22, %s25
    %p34 = scmp.eq.s32.totalorder %s17, 1
    %p35 = por %p33, %p34
    %p36 = scmp.ne.s32.totalorder %s25, %s26
    %p37 = scmp.eq.s32.totalorder %s17, 0
    %p38 = por %p36, %p37
    %p39 = scmp.ne.s32.totalorder %s25, %s26
    %p40 = scmp.eq.s32.totalorder %s18, 1
    %p41 = por %p39, %p40
    %p43 = scmp.ne.s32.totalorder %s26, %s42
    %p44 = scmp.eq.s32.totalorder %s18, 0
    %p45 = por %p43, %p44
    %s47 = sadd.s32 %s46, 1
    %p50 = scmp.eq.s32.totalorder %s12, 1
    %p51 = scmp.ne.s32.totalorder %s46, %s48
    %p52 = scmp.eq.s32.totalorder %s12, 0
    %p53 = por %p51, %p52
    %p54 = scmp.ne.s32.totalorder %s46, %s48
    %p55 = scmp.eq.s32.totalorder %s17, 1
    %p56 = por %p54, %p55
    %p57 = scmp.ne.s32.totalorder %s48, %s49
    %p58 = scmp.eq.s32.totalorder %s17, 0
    %p59 = por %p57, %p58
    %p60 = scmp.ne.s32.totalorder %s48, %s49
    %p61 = scmp.eq.s32.totalorder %s18, 1
    %p62 = por %p60, %p61
    %p64 = scmp.ne.s32.totalorder %s49, %s63
    %p65 = scmp.eq.s32.totalorder %s18, 0
    %p66 = por %p64, %p65
    %s68 = sadd.s32 %s67, 1
    %p71 = scmp.eq.s32.totalorder %s12, 1
    %p72 = scmp.ne.s32.totalorder %s67, %s69
    %p73 = scmp.eq.s32.totalorder %s12, 0
    %p74 = por %p72, %p73
    %p75 = scmp.ne.s32.totalorder %s67, %s69
    %p76 = scmp.eq.s32.totalorder %s17, 1
    %p77 = por %p75, %p76
    %p78 = scmp.ne.s32.totalorder %s69, %s70
    %p79 = scmp.eq.s32.totalorder %s17, 0
    %p80 = por %p78, %p79
    %p81 = scmp.ne.s32.totalorder %s69, %s70
    %p82 = scmp.eq.s32.totalorder %s18, 1
    %p83 = por %p81, %p82
    %p85 = scmp.ne.s32.totalorder %s70, %s84
    %p86 = scmp.eq.s32.totalorder %s18, 0
    %p87 = por %p85, %p86
    %s89 = sadd.s32 %s88, 1
    %p92 = scmp.eq.s32.totalorder %s12, 1
    %p93 = scmp.ne.s32.totalorder %s88, %s90
    %p94 = scmp.eq.s32.totalorder %s12, 0
    %p95 = por %p93, %p94
    %p96 = scmp.ne.s32.totalorder %s88, %s90
    %p97 = scmp.eq.s32.totalorder %s17, 1
    %p98 = por %p96, %p97
    %p99 = scmp.ne.s32.totalorder %s90, %s91
    %p100 = scmp.eq.s32.totalorder %s17, 0
    %p101 = por %p99, %p100
    %p102 = scmp.ne.s32.totalorder %s90, %s91
    %p103 = scmp.eq.s32.totalorder %s18, 1
    %p104 = por %p102, %p103
    %p106 = scmp.ne.s32.totalorder %s91, %s105
    %p107 = scmp.eq.s32.totalorder %s18, 0
    %p108 = por %p106, %p107
    %s109 = ssub.s32 %s12, %s19
    %p110 = scmp.eq.s32.totalorder %s109, 0
    %s112 = sadd.s32 %s111, 1
    %s113 = scalar_select %p110, %s111, %s112
    %p116 = pneg %p110
    %p117 = scmp.eq.s32.totalorder %s12, 1
    %p118 = por %p116, %p117
    %p119 = scmp.ne.s32.totalorder %s111, %s114
    %p120 = scmp.eq.s32.totalorder %s12, 0
    %p121 = por %p119, %p120
    %p122 = scmp.ne.s32.totalorder %s111, %s114
    %p123 = scmp.eq.s32.totalorder %s17, 1
    %p124 = por %p122, %p123
    %p125 = scmp.ne.s32.totalorder %s114, %s115
    %p126 = scmp.eq.s32.totalorder %s17, 0
    %p127 = por %p125, %p126
    %p128 = scmp.ne.s32.totalorder %s114, %s115
    %p129 = scmp.eq.s32.totalorder %s18, 1
    %p130 = por %p128, %p129
    %p132 = scmp.ne.s32.totalorder %s115, %s131
    %p133 = scmp.eq.s32.totalorder %s18, 0
    %p134 = por %p132, %p133
    %s135 = ssub.s32 %s12, %s19
    %p136 = scmp.eq.s32.totalorder %s135, 0
    %s138 = sadd.s32 %s137, 1
    %s139 = scalar_select %p136, %s137, %s138
    %p142 = pneg %p136
    %p143 = scmp.eq.s32.totalorder %s12, 1
    %p144 = por %p142, %p143
    %p145 = scmp.ne.s32.totalorder %s137, %s140
    %p146 = scmp.eq.s32.totalorder %s12, 0
    %p147 = por %p145, %p146
    %p148 = scmp.ne.s32.totalorder %s137, %s140
    %p149 = scmp.eq.s32.totalorder %s17, 1
    %p150 = por %p148, %p149
    %p151 = scmp.ne.s32.totalorder %s140, %s141
    %p152 = scmp.eq.s32.totalorder %s17, 0
    %p153 = por %p151, %p152
    %p154 = scmp.ne.s32.totalorder %s140, %s141
    %p155 = scmp.eq.s32.totalorder %s18, 1
    %p156 = por %p154, %p155
    %p158 = scmp.ne.s32.totalorder %s141, %s157
    %p159 = scmp.eq.s32.totalorder %s18, 0
    %p160 = por %p158, %p159
    %s161 = ssub.s32 %s12, %s19
    %p162 = scmp.eq.s32.totalorder %s161, 0
    %s164 = sadd.s32 %s163, 1
    %s165 = scalar_select %p162, %s163, %s164
    %p168 = pneg %p162
    %p169 = scmp.eq.s32.totalorder %s12, 1
    %p170 = por %p168, %p169
    %p171 = scmp.ne.s32.totalorder %s163, %s166
    %p172 = scmp.eq.s32.totalorder %s12, 0
    %p173 = por %p171, %p172
    %p174 = scmp.ne.s32.totalorder %s163, %s166
    %p175 = scmp.eq.s32.totalorder %s17, 1
    %p176 = por %p174, %p175
    %p177 = scmp.ne.s32.totalorder %s166, %s167
    %p178 = scmp.eq.s32.totalorder %s17, 0
    %p179 = por %p177, %p178
    %p180 = scmp.ne.s32.totalorder %s166, %s167
    %p181 = scmp.eq.s32.totalorder %s18, 1
    %p182 = por %p180, %p181
    %p184 = scmp.ne.s32.totalorder %s167, %s183
    %p185 = scmp.eq.s32.totalorder %s18, 0
    %p186 = por %p184, %p185
    %p187 = scmp.le.s32.totalorder 1, %s12
    %p188 = scmp.lt.s32.totalorder %s12, 3
    %p189 = pnand %p187, %p188
    %p190 = pneg %p189
    // Predicated region
    $region9: #{_lambda_.16} parent=5 // pred_check
      _
    $region10: #{_lambda_.16} parent=5 // pred_check_branch
      %192 = sbr.rel (%p189) target = $region12
    $region11: #{_lambda_.16} parent=5 // pred_region
      %s193 = ssub.s32 %s12, 1
      // Predicated region
      $region13: #{_lambda_.16} parent=11 // pred_check
        %p194 = pneg %p59
      $region14: #{_lambda_.16} parent=11 // pred_check_branch
        %196 = sbr.rel (%p194) target = $region16
      $region15: #{_lambda_.16} parent=11 // pred_region
        _
      $region16: #{_lambda_.16} parent=11 // pred_fallthru
        _
      // Predicated region
      $region17: #{_lambda_.16} parent=11 // pred_check
        %p197 = pneg %p80
      $region18: #{_lambda_.16} parent=11 // pred_check_branch
        %199 = sbr.rel (%p197) target = $region20
      $region19: #{_lambda_.16} parent=11 // pred_region
        _
      $region20: #{_lambda_.16} parent=11 // pred_fallthru
        _
      // Predicated region
      $region21: #{_lambda_.16} parent=11 // pred_check
        %p200 = pneg %p101
      $region22: #{_lambda_.16} parent=11 // pred_check_branch
        %202 = sbr.rel (%p200) target = $region24
      $region23: #{_lambda_.16} parent=11 // pred_region
        _
      $region24: #{_lambda_.16} parent=11 // pred_fallthru
        _
    $region12: #{_lambda_.16} parent=5 // pred_fallthru
      _
    %p203 = scmp.lt.s32.totalorder %s12, 2
    // Predicated region
    $region25: #{_lambda_.16} parent=5 // pred_check
      %p204 = pneg %p203
    $region26: #{_lambda_.16} parent=5 // pred_check_branch
      %206 = sbr.rel (%p204) target = $region28
    $region27: #{_lambda_.16} parent=5 // pred_region
      // Predicated region
      $region29: #{_lambda_.16} parent=27 // pred_check
        %p207 = pneg %p32
      $region30: #{_lambda_.16} parent=27 // pred_check_branch
        %209 = sbr.rel (%p207) target = $region32
      $region31: #{_lambda_.16} parent=27 // pred_region
        %s210 = smul.u32 16, %s12
        %p211 = scmp.lt.s32.totalorder %s210, 31
        %s212 = scalar_select %p211, %s210, 31
        %s213 = smul.addr %s212, 8
        %s214 = scalar_lea.vmem %s0, %s213
        %s215 = smul.u32 16, %s12
      $region32: #{_lambda_.16} parent=27 // pred_fallthru
        _
      // Predicated region
      $region33: #{_lambda_.16} parent=27 // pred_check
        %p216 = pneg %p121
      $region34: #{_lambda_.16} parent=27 // pred_check_branch
        %218 = sbr.rel (%p216) target = $region36
      $region35: #{_lambda_.16} parent=27 // pred_region
        %s219 = smul.u32 16, %s12
        %p220 = scmp.lt.s32.totalorder %s219, 31
        %s221 = scalar_select %p220, %s219, 31
        %s222 = smul.addr %s221, 8
        %s223 = scalar_lea.vmem %s4, %s222
        %s224 = smul.u32 16, %s12
      $region36: #{_lambda_.16} parent=27 // pred_fallthru
        _
      // Predicated region
      $region37: #{_lambda_.16} parent=27 // pred_check
        %p225 = pneg %p147
      $region38: #{_lambda_.16} parent=27 // pred_check_branch
        %227 = sbr.rel (%p225) target = $region40
      $region39: #{_lambda_.16} parent=27 // pred_region
        %s228 = smul.u32 16, %s12
        %p229 = scmp.lt.s32.totalorder %s228, 31
        %s230 = scalar_select %p229, %s228, 31
        %s231 = smul.addr %s230, 8
        %s232 = scalar_lea.vmem %s5, %s231
        %s233 = smul.u32 16, %s12
      $region40: #{_lambda_.16} parent=27 // pred_fallthru
        _
    $region28: #{_lambda_.16} parent=5 // pred_fallthru
      _
    %p234 = scmp.le.s32.totalorder 1, %s12
    %p235 = scmp.lt.s32.totalorder %s12, 3
    %p236 = pnand %p234, %p235
    %p237 = pneg %p236
    // Predicated region
    $region41: #{_lambda_.16} parent=5 // pred_check
      _
    $region42: #{_lambda_.16} parent=5 // pred_check_branch
      %239 = sbr.rel (%p236) target = $region44
    $region43: #{_lambda_.16} parent=5 // pred_region
      %s240 = ssub.s32 %s12, 1
      %s241 = smul.u32 16, %s17
      %p242 = scmp.lt.s32.totalorder %s241, 31
      %s243 = scalar_select %p242, %s241, 31
      %s244 = smul.addr %s243, 8
      %s245 = scalar_lea.vmem %s0, %s244
      %p246 = pneg %p38
      %p247 = pneg %p35
      %p248 = pneg %p59
      %p249 = pneg %p56
      %p250 = pneg %p80
      %p251 = pneg %p77
      %p252 = pneg %p101
      %p253 = pneg %p98
      %s254 = smul.u32 16, %s17
      %p255 = scmp.lt.s32.totalorder %s254, 31
      %s256 = scalar_select %p255, %s254, 31
      %s257 = smul.addr %s256, 8
      %s258 = scalar_lea.vmem %s4, %s257
      %p259 = pneg %p127
      %p260 = pneg %p124
      %s261 = smul.u32 16, %s17
      %p262 = scmp.lt.s32.totalorder %s261, 31
      %s263 = scalar_select %p262, %s261, 31
      %s264 = smul.addr %s263, 8
      %s265 = scalar_lea.vmem %s5, %s264
      %p266 = pneg %p153
      %p267 = pneg %p150
      %p268 = pneg %p179
      %p269 = pneg %p176
      %s270 = smul.u32 16, %s17
      %p271 = scmp.lt.s32.totalorder %s270, 31
      %s272 = scalar_select %p271, %s270, 31
      %s273 = smul.addr %s272, 8
      %s274 = scalar_lea.vmem %s6, %s273
      %s275 = smul.u32 16, %s17
      %p276 = scmp.lt.s32.totalorder %s275, 31
      %s277 = scalar_select %p276, %s275, 31
      %s278 = smul.addr %s277, 8
      %s279 = scalar_lea.vmem %s0, %s278
      %s280 = smul.u32 16, %s17
      %s281 = smul.u32 16, %s17
      %p282 = scmp.lt.s32.totalorder %s281, 31
      %s283 = scalar_select %p282, %s281, 31
      %s284 = smul.addr %s283, 8
      %s285 = scalar_lea.vmem %s4, %s284
      %s286 = smul.u32 16, %s17
      %s287 = smul.u32 16, %s17
      %p288 = scmp.lt.s32.totalorder %s287, 31
      %s289 = scalar_select %p288, %s287, 31
      %s290 = smul.addr %s289, 8
      %s291 = scalar_lea.vmem %s5, %s290
      %s292 = smul.u32 16, %s17
      %s293 = smul.u32 16, %s17
      %p294 = scmp.lt.s32.totalorder %s293, 31
      %s295 = scalar_select %p294, %s293, 31
      %s296 = smul.addr %s295, 8
      %s297 = scalar_lea.vmem %s6, %s296
      %s298 = smul.u32 16, %s17
      %v299 = vld [vmem:[%s279] sm:$0xff]
      %v300 = vld [vmem:[%s279 + $0x8] sm:$0xff]
      %v301 = vld [vmem:[%s279 + $0x10] sm:$0xff]
      %v302 = vld [vmem:[%s279 + $0x18] sm:$0xff]
      %v303 = vld [vmem:[%s279 + $0x20] sm:$0xff]
      %v304 = vld [vmem:[%s279 + $0x28] sm:$0xff]
      %v305 = vld [vmem:[%s279 + $0x30] sm:$0xff]
      %v306 = vld [vmem:[%s279 + $0x38] sm:$0xff]
      %v307 = vld [vmem:[%s279 + $0x40] sm:$0xff]
      %v308 = vld [vmem:[%s279 + $0x48] sm:$0xff]
      %v309 = vld [vmem:[%s279 + $0x50] sm:$0xff]
      %v310 = vld [vmem:[%s279 + $0x58] sm:$0xff]
      %v311 = vld [vmem:[%s279 + $0x60] sm:$0xff]
      %v312 = vld [vmem:[%s279 + $0x68] sm:$0xff]
      %v313 = vld [vmem:[%s279 + $0x70] sm:$0xff]
      %v314 = vld [vmem:[%s279 + $0x78] sm:$0xff]
      %v315 = vld [vmem:[%s1] sm:$0xff]
      %v316 = vld [vmem:[%s1 + $0x8] sm:$0xff]
      %v317 = vld [vmem:[%s1 + $0x10] sm:$0xff]
      %v318 = vld [vmem:[%s1 + $0x18] sm:$0xff]
      %vm319 = vcmask 261120
      %v321 = vsel %vm319, %v299, 0
      %v324 = vsel %vm319, %v300, 0
      %v327 = vsel %vm319, %v301, 0
      %v330 = vsel %vm319, %v302, 0
      %v333 = vsel %vm319, %v303, 0
      %v336 = vsel %vm319, %v304, 0
      %v339 = vsel %vm319, %v305, 0
      %v342 = vsel %vm319, %v306, 0
      %v345 = vsel %vm319, %v307, 0
      %v348 = vsel %vm319, %v308, 0
      %v351 = vsel %vm319, %v309, 0
      %v354 = vsel %vm319, %v310, 0
      %v357 = vsel %vm319, %v311, 0
      %v360 = vsel %vm319, %v312, 0
      %v363 = vsel %vm319, %v313, 0
      %v366 = vsel %vm319, %v314, 0
      %368 = vmatpush.msra.mxu0 0.0
      %369 = vmatpush.msra.mxu0 0.0
      %370 = vmatpush.msra.mxu0 0.0
      %371 = vmatpush.msra.mxu0 0.0
      %372 = vmatpush.msra.mxu0 0.0
      %373 = vmatpush.msra.mxu0 0.0
      %374 = vmatpush.msra.mxu0 0.0
      %375 = vmatpush.msra.mxu0 0.0
      %376 = vmatpush.msra.mxu0 0.0
      %377 = vmatpush.msra.mxu0 0.0
      %378 = vmatpush.msra.mxu0 0.0
      %379 = vmatpush.msra.mxu0 0.0
      %380 = vmatpush.msra.mxu0 %v318
      %381 = vmatpush.msra.mxu0 %v317
      %382 = vmatpush.msra.mxu0 %v316
      %383 = vmatpush.msra.mxu0 %v315
      %384 = vmatmul.f32.gmra.mxu0 %v321
      %v385 = vpop.f32.mrf.mxu0
      %v386 = vadd.f32 0.0, %v385
      %387 = vmatmul.f32.gmra.mxu0 %v324
      %v388 = vpop.f32.mrf.mxu0
      %v389 = vadd.f32 0.0, %v388
      %390 = vmatmul.f32.gmra.mxu0 %v327
      %v391 = vpop.f32.mrf.mxu0
      %v392 = vadd.f32 0.0, %v391
      %393 = vmatmul.f32.gmra.mxu0 %v330
      %v394 = vpop.f32.mrf.mxu0
      %v395 = vadd.f32 0.0, %v394
      %396 = vmatmul.f32.gmra.mxu0 %v333
      %v397 = vpop.f32.mrf.mxu0
      %v398 = vadd.f32 0.0, %v397
      %399 = vmatmul.f32.gmra.mxu0 %v336
      %v400 = vpop.f32.mrf.mxu0
      %v401 = vadd.f32 0.0, %v400
      %402 = vmatmul.f32.gmra.mxu0 %v339
      %v403 = vpop.f32.mrf.mxu0
      %v404 = vadd.f32 0.0, %v403
      %405 = vmatmul.f32.gmra.mxu0 %v342
      %v406 = vpop.f32.mrf.mxu0
      %v407 = vadd.f32 0.0, %v406
      %408 = vmatmul.f32.gmra.mxu0 %v345
      %v409 = vpop.f32.mrf.mxu0
      %v410 = vadd.f32 0.0, %v409
      %411 = vmatmul.f32.gmra.mxu0 %v348
      %v412 = vpop.f32.mrf.mxu0
      %v413 = vadd.f32 0.0, %v412
      %414 = vmatmul.f32.gmra.mxu0 %v351
      %v415 = vpop.f32.mrf.mxu0
      %v416 = vadd.f32 0.0, %v415
      %417 = vmatmul.f32.gmra.mxu0 %v354
      %v418 = vpop.f32.mrf.mxu0
      %v419 = vadd.f32 0.0, %v418
      %420 = vmatmul.f32.gmra.mxu0 %v357
      %v421 = vpop.f32.mrf.mxu0
      %v422 = vadd.f32 0.0, %v421
      %423 = vmatmul.f32.gmra.mxu0 %v360
      %v424 = vpop.f32.mrf.mxu0
      %v425 = vadd.f32 0.0, %v424
      %426 = vmatmul.f32.gmra.mxu0 %v363
      %v427 = vpop.f32.mrf.mxu0
      %v428 = vadd.f32 0.0, %v427
      %429 = vmatmul.f32.gmra.mxu0 %v366
      %v430 = vpop.f32.mrf.mxu0
      %v431 = vadd.f32 0.0, %v430
      %432 = vdwg.mxu0
      %v433 = vld [vmem:[%s2] sm:$0xff]
      %v434 = vld [vmem:[%s2 + $0x8] sm:$0xff]
      %v435 = vld [vmem:[%s2 + $0x10] sm:$0xff]
      %v436 = vld [vmem:[%s2 + $0x18] sm:$0xff]
      %v437 = vld [vmem:[%s2 + $0x20] sm:$0xff]
      %v438 = vld [vmem:[%s2 + $0x28] sm:$0xff]
      %v439 = vld [vmem:[%s2 + $0x30] sm:$0xff]
      %v440 = vld [vmem:[%s2 + $0x38] sm:$0xff]
      %v441 = vld [vmem:[%s2 + $0x40] sm:$0xff]
      %v442 = vld [vmem:[%s2 + $0x48] sm:$0xff]
      %v443 = vld [vmem:[%s2 + $0x50] sm:$0xff]
      %v444 = vld [vmem:[%s2 + $0x58] sm:$0xff]
      %v445 = vld [vmem:[%s2 + $0x60] sm:$0xff]
      %v446 = vld [vmem:[%s2 + $0x68] sm:$0xff]
      %v447 = vld [vmem:[%s2 + $0x70] sm:$0xff]
      %v448 = vld [vmem:[%s2 + $0x78] sm:$0xff]
      %v449 = vld [vmem:[%s3] sm:$0x1]
      %v451 = vperm.slane %v449, 0
      %453 = vmatpush.msra.mxu0 %v431
      %454 = vmatpush.msra.mxu0 %v428
      %455 = vmatpush.msra.mxu0 %v425
      %456 = vmatpush.msra.mxu0 %v422
      %457 = vmatpush.msra.mxu0 %v419
      %458 = vmatpush.msra.mxu0 %v416
      %459 = vmatpush.msra.mxu0 %v413
      %460 = vmatpush.msra.mxu0 %v410
      %461 = vmatpush.msra.mxu0 %v407
      %462 = vmatpush.msra.mxu0 %v404
      %463 = vmatpush.msra.mxu0 %v401
      %464 = vmatpush.msra.mxu0 %v398
      %465 = vmatpush.msra.mxu0 %v395
      %466 = vmatpush.msra.mxu0 %v392
      %467 = vmatpush.msra.mxu0 %v389
      %468 = vmatpush.msra.mxu0 %v386
      %469 = vmatmul.f32.gmra.mxu0 %v433
      %v470 = vpop.f32.mrf.mxu0
      %v471 = vadd.f32 %v451, %v470
      %472 = vmatmul.f32.gmra.mxu0 %v434
      %v473 = vpop.f32.mrf.mxu0
      %v474 = vadd.f32 %v451, %v473
      %475 = vmatmul.f32.gmra.mxu0 %v435
      %v476 = vpop.f32.mrf.mxu0
      %v477 = vadd.f32 %v451, %v476
      %478 = vmatmul.f32.gmra.mxu0 %v436
      %v479 = vpop.f32.mrf.mxu0
      %v480 = vadd.f32 %v451, %v479
      %481 = vmatmul.f32.gmra.mxu0 %v437
      %v482 = vpop.f32.mrf.mxu0
      %v483 = vadd.f32 %v451, %v482
      %484 = vmatmul.f32.gmra.mxu0 %v438
      %v485 = vpop.f32.mrf.mxu0
      %v486 = vadd.f32 %v451, %v485
      %487 = vmatmul.f32.gmra.mxu0 %v439
      %v488 = vpop.f32.mrf.mxu0
      %v489 = vadd.f32 %v451, %v488
      %490 = vmatmul.f32.gmra.mxu0 %v440
      %v491 = vpop.f32.mrf.mxu0
      %v492 = vadd.f32 %v451, %v491
      %493 = vmatmul.f32.gmra.mxu0 %v441
      %v494 = vpop.f32.mrf.mxu0
      %v495 = vadd.f32 %v451, %v494
      %496 = vmatmul.f32.gmra.mxu0 %v442
      %v497 = vpop.f32.mrf.mxu0
      %v498 = vadd.f32 %v451, %v497
      %499 = vmatmul.f32.gmra.mxu0 %v443
      %v500 = vpop.f32.mrf.mxu0
      %v501 = vadd.f32 %v451, %v500
      %502 = vmatmul.f32.gmra.mxu0 %v444
      %v503 = vpop.f32.mrf.mxu0
      %v504 = vadd.f32 %v451, %v503
      %505 = vmatmul.f32.gmra.mxu0 %v445
      %v506 = vpop.f32.mrf.mxu0
      %v507 = vadd.f32 %v451, %v506
      %508 = vmatmul.f32.gmra.mxu0 %v446
      %v509 = vpop.f32.mrf.mxu0
      %v510 = vadd.f32 %v451, %v509
      %511 = vmatmul.f32.gmra.mxu0 %v447
      %v512 = vpop.f32.mrf.mxu0
      %v513 = vadd.f32 %v451, %v512
      %514 = vmatmul.f32.gmra.mxu0 %v448
      %v515 = vpop.f32.mrf.mxu0
      %v516 = vadd.f32 %v451, %v515
      %517 = vdwg.mxu0
      %v518 = vld [vmem:[%s285] sm:$0xff]
      %v519 = vld [vmem:[%s285 + $0x8] sm:$0xff]
      %v520 = vld [vmem:[%s285 + $0x10] sm:$0xff]
      %v521 = vld [vmem:[%s285 + $0x18] sm:$0xff]
      %v522 = vld [vmem:[%s285 + $0x20] sm:$0xff]
      %v523 = vld [vmem:[%s285 + $0x28] sm:$0xff]
      %v524 = vld [vmem:[%s285 + $0x30] sm:$0xff]
      %v525 = vld [vmem:[%s285 + $0x38] sm:$0xff]
      %v526 = vld [vmem:[%s285 + $0x40] sm:$0xff]
      %v527 = vld [vmem:[%s285 + $0x48] sm:$0xff]
      %v528 = vld [vmem:[%s285 + $0x50] sm:$0xff]
      %v529 = vld [vmem:[%s285 + $0x58] sm:$0xff]
      %v530 = vld [vmem:[%s285 + $0x60] sm:$0xff]
      %v531 = vld [vmem:[%s285 + $0x68] sm:$0xff]
      %v532 = vld [vmem:[%s285 + $0x70] sm:$0xff]
      %v533 = vld [vmem:[%s285 + $0x78] sm:$0xff]
      %535 = vset.pattern.permute.xlu0 0
      %536 = vperm.xlu0 %535, %v518
      %v537 = vpop.permute.xlu0 %536
      %540 = vset.pattern.permute.xlu0 0
      %541 = vperm.xlu0 %540, %v519
      %v542 = vpop.permute.xlu0 %541
      %545 = vset.pattern.permute.xlu0 0
      %546 = vperm.xlu0 %545, %v520
      %v547 = vpop.permute.xlu0 %546
      %550 = vset.pattern.permute.xlu0 0
      %551 = vperm.xlu0 %550, %v521
      %v552 = vpop.permute.xlu0 %551
      %555 = vset.pattern.permute.xlu0 0
      %556 = vperm.xlu0 %555, %v522
      %v557 = vpop.permute.xlu0 %556
      %560 = vset.pattern.permute.xlu0 0
      %561 = vperm.xlu0 %560, %v523
      %v562 = vpop.permute.xlu0 %561
      %565 = vset.pattern.permute.xlu0 0
      %566 = vperm.xlu0 %565, %v524
      %v567 = vpop.permute.xlu0 %566
      %570 = vset.pattern.permute.xlu0 0
      %571 = vperm.xlu0 %570, %v525
      %v572 = vpop.permute.xlu0 %571
      %575 = vset.pattern.permute.xlu0 0
      %576 = vperm.xlu0 %575, %v526
      %v577 = vpop.permute.xlu0 %576
      %580 = vset.pattern.permute.xlu0 0
      %581 = vperm.xlu0 %580, %v527
      %v582 = vpop.permute.xlu0 %581
      %585 = vset.pattern.permute.xlu0 0
      %586 = vperm.xlu0 %585, %v528
      %v587 = vpop.permute.xlu0 %586
      %590 = vset.pattern.permute.xlu0 0
      %591 = vperm.xlu0 %590, %v529
      %v592 = vpop.permute.xlu0 %591
      %595 = vset.pattern.permute.xlu0 0
      %596 = vperm.xlu0 %595, %v530
      %v597 = vpop.permute.xlu0 %596
      %600 = vset.pattern.permute.xlu0 0
      %601 = vperm.xlu0 %600, %v531
      %v602 = vpop.permute.xlu0 %601
      %605 = vset.pattern.permute.xlu0 0
      %606 = vperm.xlu0 %605, %v532
      %v607 = vpop.permute.xlu0 %606
      %610 = vset.pattern.permute.xlu0 0
      %611 = vperm.xlu0 %610, %v533
      %v612 = vpop.permute.xlu0 %611
      %v614 = vmul.f32 %v471, %v537
      %v615 = vmul.f32 %v474, %v542
      %v616 = vmul.f32 %v477, %v547
      %v617 = vmul.f32 %v480, %v552
      %v618 = vmul.f32 %v483, %v557
      %v619 = vmul.f32 %v486, %v562
      %v620 = vmul.f32 %v489, %v567
      %v621 = vmul.f32 %v492, %v572
      %v622 = vmul.f32 %v495, %v577
      %v623 = vmul.f32 %v498, %v582
      %v624 = vmul.f32 %v501, %v587
      %v625 = vmul.f32 %v504, %v592
      %v626 = vmul.f32 %v507, %v597
      %v627 = vmul.f32 %v510, %v602
      %v628 = vmul.f32 %v513, %v607
      %v629 = vmul.f32 %v516, %v612
      %v630 = vld [vmem:[%s291] sm:$0xff]
      %v631 = vld [vmem:[%s291 + $0x8] sm:$0xff]
      %v632 = vld [vmem:[%s291 + $0x10] sm:$0xff]
      %v633 = vld [vmem:[%s291 + $0x18] sm:$0xff]
      %v634 = vld [vmem:[%s291 + $0x20] sm:$0xff]
      %v635 = vld [vmem:[%s291 + $0x28] sm:$0xff]
      %v636 = vld [vmem:[%s291 + $0x30] sm:$0xff]
      %v637 = vld [vmem:[%s291 + $0x38] sm:$0xff]
      %v638 = vld [vmem:[%s291 + $0x40] sm:$0xff]
      %v639 = vld [vmem:[%s291 + $0x48] sm:$0xff]
      %v640 = vld [vmem:[%s291 + $0x50] sm:$0xff]
      %v641 = vld [vmem:[%s291 + $0x58] sm:$0xff]
      %v642 = vld [vmem:[%s291 + $0x60] sm:$0xff]
      %v643 = vld [vmem:[%s291 + $0x68] sm:$0xff]
      %v644 = vld [vmem:[%s291 + $0x70] sm:$0xff]
      %v645 = vld [vmem:[%s291 + $0x78] sm:$0xff]
      %647 = vset.pattern.permute.xlu0 0
      %648 = vperm.xlu0 %647, %v630
      %v649 = vpop.permute.xlu0 %648
      %652 = vset.pattern.permute.xlu0 0
      %653 = vperm.xlu0 %652, %v631
      %v654 = vpop.permute.xlu0 %653
      %657 = vset.pattern.permute.xlu0 0
      %658 = vperm.xlu0 %657, %v632
      %v659 = vpop.permute.xlu0 %658
      %662 = vset.pattern.permute.xlu0 0
      %663 = vperm.xlu0 %662, %v633
      %v664 = vpop.permute.xlu0 %663
      %667 = vset.pattern.permute.xlu0 0
      %668 = vperm.xlu0 %667, %v634
      %v669 = vpop.permute.xlu0 %668
      %672 = vset.pattern.permute.xlu0 0
      %673 = vperm.xlu0 %672, %v635
      %v674 = vpop.permute.xlu0 %673
      %677 = vset.pattern.permute.xlu0 0
      %678 = vperm.xlu0 %677, %v636
      %v679 = vpop.permute.xlu0 %678
      %682 = vset.pattern.permute.xlu0 0
      %683 = vperm.xlu0 %682, %v637
      %v684 = vpop.permute.xlu0 %683
      %687 = vset.pattern.permute.xlu0 0
      %688 = vperm.xlu0 %687, %v638
      %v689 = vpop.permute.xlu0 %688
      %692 = vset.pattern.permute.xlu0 0
      %693 = vperm.xlu0 %692, %v639
      %v694 = vpop.permute.xlu0 %693
      %697 = vset.pattern.permute.xlu0 0
      %698 = vperm.xlu0 %697, %v640
      %v699 = vpop.permute.xlu0 %698
      %702 = vset.pattern.permute.xlu0 0
      %703 = vperm.xlu0 %702, %v641
      %v704 = vpop.permute.xlu0 %703
      %707 = vset.pattern.permute.xlu0 0
      %708 = vperm.xlu0 %707, %v642
      %v709 = vpop.permute.xlu0 %708
      %712 = vset.pattern.permute.xlu0 0
      %713 = vperm.xlu0 %712, %v643
      %v714 = vpop.permute.xlu0 %713
      %717 = vset.pattern.permute.xlu0 0
      %718 = vperm.xlu0 %717, %v644
      %v719 = vpop.permute.xlu0 %718
      %722 = vset.pattern.permute.xlu0 0
      %723 = vperm.xlu0 %722, %v645
      %v724 = vpop.permute.xlu0 %723
      %v726 = vadd.f32 %v614, %v649
      %v727 = vadd.f32 %v615, %v654
      %v728 = vadd.f32 %v616, %v659
      %v729 = vadd.f32 %v617, %v664
      %v730 = vadd.f32 %v618, %v669
      %v731 = vadd.f32 %v619, %v674
      %v732 = vadd.f32 %v620, %v679
      %v733 = vadd.f32 %v621, %v684
      %v734 = vadd.f32 %v622, %v689
      %v735 = vadd.f32 %v623, %v694
      %v736 = vadd.f32 %v624, %v699
      %v737 = vadd.f32 %v625, %v704
      %v738 = vadd.f32 %v626, %v709
      %v739 = vadd.f32 %v627, %v714
      %v740 = vadd.f32 %v628, %v719
      %v741 = vadd.f32 %v629, %v724
      %v742 = vmax.f32 %v726, 0.0
      %v743 = vmax.f32 %v727, 0.0
      %v744 = vmax.f32 %v728, 0.0
      %v745 = vmax.f32 %v729, 0.0
      %v746 = vmax.f32 %v730, 0.0
      %v747 = vmax.f32 %v731, 0.0
      %v748 = vmax.f32 %v732, 0.0
      %v749 = vmax.f32 %v733, 0.0
      %v750 = vmax.f32 %v734, 0.0
      %v751 = vmax.f32 %v735, 0.0
      %v752 = vmax.f32 %v736, 0.0
      %v753 = vmax.f32 %v737, 0.0
      %v754 = vmax.f32 %v738, 0.0
      %v755 = vmax.f32 %v739, 0.0
      %v756 = vmax.f32 %v740, 0.0
      %v757 = vmax.f32 %v741, 0.0
      %758 = vst.msk [vmem:[%s297] sm:$0xff] %vm319, %v742
      %759 = vst.msk [vmem:[%s297 + $0x8] sm:$0xff] %vm319, %v743
      %760 = vst.msk [vmem:[%s297 + $0x10] sm:$0xff] %vm319, %v744
      %761 = vst.msk [vmem:[%s297 + $0x18] sm:$0xff] %vm319, %v745
      %762 = vst.msk [vmem:[%s297 + $0x20] sm:$0xff] %vm319, %v746
      %763 = vst.msk [vmem:[%s297 + $0x28] sm:$0xff] %vm319, %v747
      %764 = vst.msk [vmem:[%s297 + $0x30] sm:$0xff] %vm319, %v748
      %765 = vst.msk [vmem:[%s297 + $0x38] sm:$0xff] %vm319, %v749
      %766 = vst.msk [vmem:[%s297 + $0x40] sm:$0xff] %vm319, %v750
      %767 = vst.msk [vmem:[%s297 + $0x48] sm:$0xff] %vm319, %v751
      %768 = vst.msk [vmem:[%s297 + $0x50] sm:$0xff] %vm319, %v752
      %769 = vst.msk [vmem:[%s297 + $0x58] sm:$0xff] %vm319, %v753
      %770 = vst.msk [vmem:[%s297 + $0x60] sm:$0xff] %vm319, %v754
      %771 = vst.msk [vmem:[%s297 + $0x68] sm:$0xff] %vm319, %v755
      %772 = vst.msk [vmem:[%s297 + $0x70] sm:$0xff] %vm319, %v756
      %773 = vst.msk [vmem:[%s297 + $0x78] sm:$0xff] %vm319, %v757
      %s774 = smul.u32 16, %s17
      %p775 = scmp.lt.s32.totalorder %s774, 31
      %s776 = scalar_select %p775, %s774, 31
      %s777 = smul.addr %s776, 8
      %s778 = scalar_lea.vmem %s6, %s777
      // Predicated region
      $region45: #{_lambda_.16} parent=43 // pred_check
        %p779 = pneg %p176
      $region46: #{_lambda_.16} parent=43 // pred_check_branch
        %781 = sbr.rel (%p779) target = $region48
      $region47: #{_lambda_.16} parent=43 // pred_region
        %s782 = smul.u32 16, %s17
      $region48: #{_lambda_.16} parent=43 // pred_fallthru
        _
    $region44: #{_lambda_.16} parent=5 // pred_fallthru
      _
    %p783 = scmp.le.s32.totalorder 2, %s12
    // Predicated region
    $region49: #{_lambda_.16} parent=5 // pred_check
      %p784 = pneg %p783
    $region50: #{_lambda_.16} parent=5 // pred_check_branch
      %786 = sbr.rel (%p784) target = $region52
    $region51: #{_lambda_.16} parent=5 // pred_region
      %s787 = ssub.s32 %s12, 2
      // Predicated region
      $region53: #{_lambda_.16} parent=51 // pred_check
        %p788 = pneg %p182
      $region54: #{_lambda_.16} parent=51 // pred_check_branch
        %790 = sbr.rel (%p788) target = $region56
      $region55: #{_lambda_.16} parent=51 // pred_region
        %s791 = smul.u32 16, %s18
        %p792 = scmp.lt.s32.totalorder %s791, 31
        %s793 = scalar_select %p792, %s791, 31
        %s794 = smul.addr %s793, 8
        %s795 = scalar_lea.vmem %s6, %s794
      $region56: #{_lambda_.16} parent=51 // pred_fallthru
        _
    $region52: #{_lambda_.16} parent=5 // pred_fallthru
      _
  $region6: #{_lambda_.16} parent=0 // loop_footer
    %s16 = sadd.s32 1, %s12
  $region7: #{_lambda_.16} parent=0 // loop_footer_branch
    %11 = sbr.rel target = $region3
  $region8: #{_lambda_.16} parent=0 // loop_exit
    _

// kernel: _lambda_.15
$region0: #{_lambda_.15}
  #allocation0 [shape = 'u32[]', space=smem, size = 0x4, offset = 0x4, fixed_abs, tag = 'smem constant byte address 0x4 - core index']
  #allocation1 [shape = 'u32[72,128]{1,0:T(1,128)}', space=vmem, size = 0x9000, scoped, tag = 'internal scratch']
  %s0 = inlined_call_operand.vmem [shape: f32[2,256,3], index: 0, kind: input, shape index: {}]
  %s1 = inlined_call_operand.vmem [shape: f32[9,3,29], index: 1, kind: input, shape index: {}]
  %s2 = inlined_call_operand.vmem [shape: f32[1,29], index: 2, kind: input, shape index: {}]
  %s3 = inlined_call_operand.vmem [shape: f32[1,29], index: 3, kind: input, shape index: {}]
  %s4 = inlined_call_operand.vmem [shape: f32[2,128,29], index: 4, kind: output, shape index: {}]
  %s5 = sld [smem:[#allocation0]]
  $region49: #{_lambda_.15} parent=0
    _
  %s7 = ssub.s32 1, %s5
  %s8 = scalar_select 0, %s7, %s5
  loop: start=0, step=1, limit=4
  $region2: #{_lambda_.15} parent=0 // loop_pre_header
    _
  $region3: #{_lambda_.15} parent=0 // loop_header
    %s10 = sphi 0, %s14
    %p11 = scmp.ge.s32.totalorder %s10, 4
    %s20 = sphi 0, %s22
    %s23 = sphi 0, %s20
    %s24 = sphi 0, %s23
    %s40 = sphi 0, %s24
    %s44 = sphi 0, %s44
    %s46 = sphi 0, %s44
    %s47 = sphi 0, %s46
    %s61 = sphi 0, %s47
    %s65 = sphi 0, %s65
    %s67 = sphi 0, %s65
    %s68 = sphi 0, %s67
    %s82 = sphi 0, %s68
    %s86 = sphi 0, %s86
    %s88 = sphi 0, %s86
    %s89 = sphi 0, %s88
    %s103 = sphi 0, %s89
    %s109 = sphi 0, %s111
    %s112 = sphi 0, %s109
    %s113 = sphi 0, %s112
    %s129 = sphi 0, %s113
  $region4: #{_lambda_.15} parent=0 // loop_header_branch
    %13 = sbr.rel (%p11) target = $region8
  $region5: #{_lambda_.15} parent=0 // loop_body
    %s15 = ssub.s32 %s10, 1
    %s16 = ssub.s32 %s10, 2
    %s17 = sadd.s32 %s10, 1
    %s18 = ssub.s32 %s10, %s17
    %p19 = scmp.eq.s32.totalorder %s18, 0
    %s21 = sadd.s32 %s20, 1
    %s22 = scalar_select %p19, %s20, %s21
    %p25 = pneg %p19
    %p26 = scmp.eq.s32.totalorder %s10, 1
    %p27 = por %p25, %p26
    %p28 = scmp.ne.s32.totalorder %s20, %s23
    %p29 = scmp.eq.s32.totalorder %s10, 0
    %p30 = por %p28, %p29
    %p31 = scmp.ne.s32.totalorder %s20, %s23
    %p32 = scmp.eq.s32.totalorder %s15, 1
    %p33 = por %p31, %p32
    %p34 = scmp.ne.s32.totalorder %s23, %s24
    %p35 = scmp.eq.s32.totalorder %s15, 0
    %p36 = por %p34, %p35
    %p37 = scmp.ne.s32.totalorder %s23, %s24
    %p38 = scmp.eq.s32.totalorder %s16, 1
    %p39 = por %p37, %p38
    %p41 = scmp.ne.s32.totalorder %s24, %s40
    %p42 = scmp.eq.s32.totalorder %s16, 0
    %p43 = por %p41, %p42
    %s45 = sadd.s32 %s44, 1
    %p48 = scmp.eq.s32.totalorder %s10, 1
    %p49 = scmp.ne.s32.totalorder %s44, %s46
    %p50 = scmp.eq.s32.totalorder %s10, 0
    %p51 = por %p49, %p50
    %p52 = scmp.ne.s32.totalorder %s44, %s46
    %p53 = scmp.eq.s32.totalorder %s15, 1
    %p54 = por %p52, %p53
    %p55 = scmp.ne.s32.totalorder %s46, %s47
    %p56 = scmp.eq.s32.totalorder %s15, 0
    %p57 = por %p55, %p56
    %p58 = scmp.ne.s32.totalorder %s46, %s47
    %p59 = scmp.eq.s32.totalorder %s16, 1
    %p60 = por %p58, %p59
    %p62 = scmp.ne.s32.totalorder %s47, %s61
    %p63 = scmp.eq.s32.totalorder %s16, 0
    %p64 = por %p62, %p63
    %s66 = sadd.s32 %s65, 1
    %p69 = scmp.eq.s32.totalorder %s10, 1
    %p70 = scmp.ne.s32.totalorder %s65, %s67
    %p71 = scmp.eq.s32.totalorder %s10, 0
    %p72 = por %p70, %p71
    %p73 = scmp.ne.s32.totalorder %s65, %s67
    %p74 = scmp.eq.s32.totalorder %s15, 1
    %p75 = por %p73, %p74
    %p76 = scmp.ne.s32.totalorder %s67, %s68
    %p77 = scmp.eq.s32.totalorder %s15, 0
    %p78 = por %p76, %p77
    %p79 = scmp.ne.s32.totalorder %s67, %s68
    %p80 = scmp.eq.s32.totalorder %s16, 1
    %p81 = por %p79, %p80
    %p83 = scmp.ne.s32.totalorder %s68, %s82
    %p84 = scmp.eq.s32.totalorder %s16, 0
    %p85 = por %p83, %p84
    %s87 = sadd.s32 %s86, 1
    %p90 = scmp.eq.s32.totalorder %s10, 1
    %p91 = scmp.ne.s32.totalorder %s86, %s88
    %p92 = scmp.eq.s32.totalorder %s10, 0
    %p93 = por %p91, %p92
    %p94 = scmp.ne.s32.totalorder %s86, %s88
    %p95 = scmp.eq.s32.totalorder %s15, 1
    %p96 = por %p94, %p95
    %p97 = scmp.ne.s32.totalorder %s88, %s89
    %p98 = scmp.eq.s32.totalorder %s15, 0
    %p99 = por %p97, %p98
    %p100 = scmp.ne.s32.totalorder %s88, %s89
    %p101 = scmp.eq.s32.totalorder %s16, 1
    %p102 = por %p100, %p101
    %p104 = scmp.ne.s32.totalorder %s89, %s103
    %p105 = scmp.eq.s32.totalorder %s16, 0
    %p106 = por %p104, %p105
    %s107 = ssub.s32 %s10, %s17
    %p108 = scmp.eq.s32.totalorder %s107, 0
    %s110 = sadd.s32 %s109, 1
    %s111 = scalar_select %p108, %s109, %s110
    %p114 = pneg %p108
    %p115 = scmp.eq.s32.totalorder %s10, 1
    %p116 = por %p114, %p115
    %p117 = scmp.ne.s32.totalorder %s109, %s112
    %p118 = scmp.eq.s32.totalorder %s10, 0
    %p119 = por %p117, %p118
    %p120 = scmp.ne.s32.totalorder %s109, %s112
    %p121 = scmp.eq.s32.totalorder %s15, 1
    %p122 = por %p120, %p121
    %p123 = scmp.ne.s32.totalorder %s112, %s113
    %p124 = scmp.eq.s32.totalorder %s15, 0
    %p125 = por %p123, %p124
    %p126 = scmp.ne.s32.totalorder %s112, %s113
    %p127 = scmp.eq.s32.totalorder %s16, 1
    %p128 = por %p126, %p127
    %p130 = scmp.ne.s32.totalorder %s113, %s129
    %p131 = scmp.eq.s32.totalorder %s16, 0
    %p132 = por %p130, %p131
    %p133 = scmp.le.s32.totalorder 1, %s10
    %p134 = scmp.lt.s32.totalorder %s10, 3
    %p135 = pnand %p133, %p134
    %p136 = pneg %p135
    // Predicated region
    $region9: #{_lambda_.15} parent=5 // pred_check
      _
    $region10: #{_lambda_.15} parent=5 // pred_check_branch
      %138 = sbr.rel (%p135) target = $region12
    $region11: #{_lambda_.15} parent=5 // pred_region
      %s139 = ssub.s32 %s10, 1
      // Predicated region
      $region13: #{_lambda_.15} parent=11 // pred_check
        %p140 = pneg %p57
      $region14: #{_lambda_.15} parent=11 // pred_check_branch
        %142 = sbr.rel (%p140) target = $region16
      $region15: #{_lambda_.15} parent=11 // pred_region
        _
      $region16: #{_lambda_.15} parent=11 // pred_fallthru
        _
      // Predicated region
      $region17: #{_lambda_.15} parent=11 // pred_check
        %p143 = pneg %p78
      $region18: #{_lambda_.15} parent=11 // pred_check_branch
        %145 = sbr.rel (%p143) target = $region20
      $region19: #{_lambda_.15} parent=11 // pred_region
        _
      $region20: #{_lambda_.15} parent=11 // pred_fallthru
        _
      // Predicated region
      $region21: #{_lambda_.15} parent=11 // pred_check
        %p146 = pneg %p99
      $region22: #{_lambda_.15} parent=11 // pred_check_branch
        %148 = sbr.rel (%p146) target = $region24
      $region23: #{_lambda_.15} parent=11 // pred_region
        _
      $region24: #{_lambda_.15} parent=11 // pred_fallthru
        _
    $region12: #{_lambda_.15} parent=5 // pred_fallthru
      _
    %p149 = scmp.lt.s32.totalorder %s10, 2
    // Predicated region
    $region25: #{_lambda_.15} parent=5 // pred_check
      %p150 = pneg %p149
    $region26: #{_lambda_.15} parent=5 // pred_check_branch
      %152 = sbr.rel (%p150) target = $region28
    $region27: #{_lambda_.15} parent=5 // pred_region
      // Predicated region
      $region29: #{_lambda_.15} parent=27 // pred_check
        %p153 = pneg %p30
      $region30: #{_lambda_.15} parent=27 // pred_check_branch
        %155 = sbr.rel (%p153) target = $region32
      $region31: #{_lambda_.15} parent=27 // pred_region
        %p156 = scmp.lt.s32.totalorder %s10, 1
        %s157 = scalar_select %p156, %s10, 1
        %s158 = smul.addr %s157, 32
        %s159 = smul.addr %s158, 8
        %s160 = scalar_lea.vmem %s0, %s159
      $region32: #{_lambda_.15} parent=27 // pred_fallthru
        _
    $region28: #{_lambda_.15} parent=5 // pred_fallthru
      _
    %p161 = scmp.le.s32.totalorder 1, %s10
    %p162 = scmp.lt.s32.totalorder %s10, 3
    %p163 = pnand %p161, %p162
    %p164 = pneg %p163
    // Predicated region
    $region33: #{_lambda_.15} parent=5 // pred_check
      _
    $region34: #{_lambda_.15} parent=5 // pred_check_branch
      %166 = sbr.rel (%p163) target = $region36
    $region35: #{_lambda_.15} parent=5 // pred_region
      %s167 = ssub.s32 %s10, 1
      %p168 = scmp.lt.s32.totalorder %s15, 1
      %s169 = scalar_select %p168, %s15, 1
      %s170 = smul.addr %s169, 32
      %s171 = smul.addr %s170, 8
      %s172 = scalar_lea.vmem %s0, %s171
      %p173 = pneg %p36
      %p174 = pneg %p33
      %p175 = pneg %p57
      %p176 = pneg %p54
      %p177 = pneg %p78
      %p178 = pneg %p75
      %p179 = pneg %p99
      %p180 = pneg %p96
      %p181 = pneg %p125
      %p182 = pneg %p122
      %p183 = scmp.lt.s32.totalorder %s15, 1
      %s184 = scalar_select %p183, %s15, 1
      %s185 = smul.addr %s184, 16
      %s186 = smul.addr %s185, 8
      %s187 = scalar_lea.vmem %s4, %s186
      %p188 = scmp.lt.s32.totalorder %s15, 1
      %s189 = scalar_select %p188, %s15, 1
      %s190 = smul.addr %s189, 32
      %s191 = smul.addr %s190, 8
      %s192 = scalar_lea.vmem %s0, %s191
      %p193 = scmp.lt.s32.totalorder %s15, 1
      %s194 = scalar_select %p193, %s15, 1
      %s195 = smul.addr %s194, 16
      %s196 = smul.addr %s195, 8
      %s197 = scalar_lea.vmem %s4, %s196
      %v198 = vld [vmem:[%s192] sm:$0xff]
      %v199 = vld [vmem:[%s192 + $0x8] sm:$0xff]
      %v200 = vld [vmem:[%s192 + $0x10] sm:$0xff]
      %v201 = vld [vmem:[%s192 + $0x18] sm:$0xff]
      %v202 = vld [vmem:[%s192 + $0x20] sm:$0xff]
      %v203 = vld [vmem:[%s192 + $0x28] sm:$0xff]
      %v204 = vld [vmem:[%s192 + $0x30] sm:$0xff]
      %v205 = vld [vmem:[%s192 + $0x38] sm:$0xff]
      %v206 = vld [vmem:[%s192 + $0x40] sm:$0xff]
      %v207 = vld [vmem:[%s192 + $0x48] sm:$0xff]
      %v208 = vld [vmem:[%s192 + $0x50] sm:$0xff]
      %v209 = vld [vmem:[%s192 + $0x58] sm:$0xff]
      %v210 = vld [vmem:[%s192 + $0x60] sm:$0xff]
      %v211 = vld [vmem:[%s192 + $0x68] sm:$0xff]
      %v212 = vld [vmem:[%s192 + $0x70] sm:$0xff]
      %v213 = vld [vmem:[%s192 + $0x78] sm:$0xff]
      %v214 = vld [vmem:[%s192 + $0x80] sm:$0xff]
      %v215 = vld [vmem:[%s192 + $0x88] sm:$0xff]
      %v216 = vld [vmem:[%s192 + $0x90] sm:$0xff]
      %v217 = vld [vmem:[%s192 + $0x98] sm:$0xff]
      %v218 = vld [vmem:[%s192 + $0xa0] sm:$0xff]
      %v219 = vld [vmem:[%s192 + $0xa8] sm:$0xff]
      %v220 = vld [vmem:[%s192 + $0xb0] sm:$0xff]
      %v221 = vld [vmem:[%s192 + $0xb8] sm:$0xff]
      %v222 = vld [vmem:[%s192 + $0xc0] sm:$0xff]
      %v223 = vld [vmem:[%s192 + $0xc8] sm:$0xff]
      %v224 = vld [vmem:[%s192 + $0xd0] sm:$0xff]
      %v225 = vld [vmem:[%s192 + $0xd8] sm:$0xff]
      %v226 = vld [vmem:[%s192 + $0xe0] sm:$0xff]
      %v227 = vld [vmem:[%s192 + $0xe8] sm:$0xff]
      %v228 = vld [vmem:[%s192 + $0xf0] sm:$0xff]
      %v229 = vld [vmem:[%s192 + $0xf8] sm:$0xff]
      %v230 = vld [vmem:[%s1] sm:$0x7]
      %s231 = scalar_lea.vmem %s1, 4
      %v232 = vld [vmem:[%s231] sm:$0x7]
      %vm233 = vcmask 23552
      %v235 = vsel %vm233, %v200, 0
      %v238 = vsel %vm233, %v201, 0
      %v241 = vsel %vm233, %v202, 0
      %v244 = vsel %vm233, %v203, 0
      %v247 = vsel %vm233, %v204, 0
      %v250 = vsel %vm233, %v205, 0
      %v253 = vsel %vm233, %v206, 0
      %v256 = vsel %vm233, %v207, 0
      %v259 = vsel %vm233, %v208, 0
      %v262 = vsel %vm233, %v209, 0
      %v265 = vsel %vm233, %v210, 0
      %v268 = vsel %vm233, %v211, 0
      %v271 = vsel %vm233, %v212, 0
      %v274 = vsel %vm233, %v213, 0
      %v277 = vsel %vm233, %v214, 0
      %v280 = vsel %vm233, %v215, 0
      %vm282 = vcmask 1042432
      %v284 = vsel %vm282, %v232, 0
      %286 = vmatpush.msra.mxu0 0.0
      %287 = vmatpush.msra.mxu0 0.0
      %288 = vmatpush.msra.mxu0 0.0
      %289 = vmatpush.msra.mxu0 0.0
      %290 = vmatpush.msra.mxu0 0.0
      %291 = vmatpush.msra.mxu0 0.0
      %292 = vmatpush.msra.mxu0 0.0
      %293 = vmatpush.msra.mxu0 0.0
      %294 = vmatpush.msra.mxu0 0.0
      %295 = vmatpush.msra.mxu0 0.0
      %296 = vmatpush.msra.mxu0 0.0
      %297 = vmatpush.msra.mxu0 0.0
      %298 = vmatpush.msra.mxu0 0.0
      %299 = vmatpush.msra.mxu0 0.0
      %300 = vmatpush.msra.mxu0 0.0
      %301 = vmatpush.msra.mxu0 %v284
      %302 = vmatmul.f32.gmra.mxu0 %v235
      %v303 = vpop.f32.mrf.mxu0
      %v304 = vadd.f32 0.0, %v303
      %305 = vmatmul.f32.gmra.mxu0 %v238
      %v306 = vpop.f32.mrf.mxu0
      %v307 = vadd.f32 0.0, %v306
      %308 = vmatmul.f32.gmra.mxu0 %v241
      %v309 = vpop.f32.mrf.mxu0
      %v310 = vadd.f32 0.0, %v309
      %311 = vmatmul.f32.gmra.mxu0 %v244
      %v312 = vpop.f32.mrf.mxu0
      %v313 = vadd.f32 0.0, %v312
      %314 = vmatmul.f32.gmra.mxu0 %v247
      %v315 = vpop.f32.mrf.mxu0
      %v316 = vadd.f32 0.0, %v315
      %317 = vmatmul.f32.gmra.mxu0 %v250
      %v318 = vpop.f32.mrf.mxu0
      %v319 = vadd.f32 0.0, %v318
      %320 = vmatmul.f32.gmra.mxu0 %v253
      %v321 = vpop.f32.mrf.mxu0
      %v322 = vadd.f32 0.0, %v321
      %323 = vmatmul.f32.gmra.mxu0 %v256
      %v324 = vpop.f32.mrf.mxu0
      %v325 = vadd.f32 0.0, %v324
      %326 = vmatmul.f32.gmra.mxu0 %v259
      %v327 = vpop.f32.mrf.mxu0
      %v328 = vadd.f32 0.0, %v327
      %329 = vmatmul.f32.gmra.mxu0 %v262
      %v330 = vpop.f32.mrf.mxu0
      %v331 = vadd.f32 0.0, %v330
      %332 = vmatmul.f32.gmra.mxu0 %v265
      %v333 = vpop.f32.mrf.mxu0
      %v334 = vadd.f32 0.0, %v333
      %335 = vmatmul.f32.gmra.mxu0 %v268
      %v336 = vpop.f32.mrf.mxu0
      %v337 = vadd.f32 0.0, %v336
      %338 = vmatmul.f32.gmra.mxu0 %v271
      %v339 = vpop.f32.mrf.mxu0
      %v340 = vadd.f32 0.0, %v339
      %341 = vmatmul.f32.gmra.mxu0 %v274
      %v342 = vpop.f32.mrf.mxu0
      %v343 = vadd.f32 0.0, %v342
      %344 = vmatmul.f32.gmra.mxu0 %v277
      %v345 = vpop.f32.mrf.mxu0
      %v346 = vadd.f32 0.0, %v345
      %347 = vmatmul.f32.gmra.mxu0 %v280
      %v348 = vpop.f32.mrf.mxu0
      %v349 = vadd.f32 0.0, %v348
      %350 = vdwg.mxu0
      %v352 = vsel %vm233, %v198, 0
      %v355 = vsel %vm233, %v199, 0
      %v358 = vsel %vm282, %v230, 0
      %360 = vmatpush.msra.mxu0 0.0
      %361 = vmatpush.msra.mxu0 0.0
      %362 = vmatpush.msra.mxu0 0.0
      %363 = vmatpush.msra.mxu0 0.0
      %364 = vmatpush.msra.mxu0 0.0
      %365 = vmatpush.msra.mxu0 0.0
      %366 = vmatpush.msra.mxu0 0.0
      %367 = vmatpush.msra.mxu0 0.0
      %368 = vmatpush.msra.mxu0 0.0
      %369 = vmatpush.msra.mxu0 0.0
      %370 = vmatpush.msra.mxu0 0.0
      %371 = vmatpush.msra.mxu0 0.0
      %372 = vmatpush.msra.mxu0 0.0
      %373 = vmatpush.msra.mxu0 0.0
      %374 = vmatpush.msra.mxu0 0.0
      %375 = vmatpush.msra.mxu0 %v358
      %376 = vmatmul.f32.gmra.mxu0 %v352
      %v377 = vpop.f32.mrf.mxu0
      %v378 = vadd.f32 %v304, %v377
      %379 = vmatmul.f32.gmra.mxu0 %v355
      %v380 = vpop.f32.mrf.mxu0
      %v381 = vadd.f32 %v307, %v380
      %382 = vmatmul.f32.gmra.mxu0 %v235
      %v383 = vpop.f32.mrf.mxu0
      %v384 = vadd.f32 %v310, %v383
      %385 = vmatmul.f32.gmra.mxu0 %v238
      %v386 = vpop.f32.mrf.mxu0
      %v387 = vadd.f32 %v313, %v386
      %388 = vmatmul.f32.gmra.mxu0 %v241
      %v389 = vpop.f32.mrf.mxu0
      %v390 = vadd.f32 %v316, %v389
      %391 = vmatmul.f32.gmra.mxu0 %v244
      %v392 = vpop.f32.mrf.mxu0
      %v393 = vadd.f32 %v319, %v392
      %394 = vmatmul.f32.gmra.mxu0 %v247
      %v395 = vpop.f32.mrf.mxu0
      %v396 = vadd.f32 %v322, %v395
      %397 = vmatmul.f32.gmra.mxu0 %v250
      %v398 = vpop.f32.mrf.mxu0
      %v399 = vadd.f32 %v325, %v398
      %400 = vmatmul.f32.gmra.mxu0 %v253
      %v401 = vpop.f32.mrf.mxu0
      %v402 = vadd.f32 %v328, %v401
      %403 = vmatmul.f32.gmra.mxu0 %v256
      %v404 = vpop.f32.mrf.mxu0
      %v405 = vadd.f32 %v331, %v404
      %406 = vmatmul.f32.gmra.mxu0 %v259
      %v407 = vpop.f32.mrf.mxu0
      %v408 = vadd.f32 %v334, %v407
      %409 = vmatmul.f32.gmra.mxu0 %v262
      %v410 = vpop.f32.mrf.mxu0
      %v411 = vadd.f32 %v337, %v410
      %412 = vmatmul.f32.gmra.mxu0 %v265
      %v413 = vpop.f32.mrf.mxu0
      %v414 = vadd.f32 %v340, %v413
      %415 = vmatmul.f32.gmra.mxu0 %v268
      %v416 = vpop.f32.mrf.mxu0
      %v417 = vadd.f32 %v343, %v416
      %418 = vmatmul.f32.gmra.mxu0 %v271
      %v419 = vpop.f32.mrf.mxu0
      %v420 = vadd.f32 %v346, %v419
      %421 = vmatmul.f32.gmra.mxu0 %v274
      %v422 = vpop.f32.mrf.mxu0
      %v423 = vadd.f32 %v349, %v422
      %424 = vdwg.mxu0
      %s425 = scalar_lea.vmem %s1, 8
      %v426 = vld [vmem:[%s425] sm:$0x7]
      %v428 = vsel %vm233, %v216, 0
      %v431 = vsel %vm233, %v217, 0
      %v434 = vsel %vm282, %v426, 0
      %436 = vmatpush.msra.mxu0 0.0
      %437 = vmatpush.msra.mxu0 0.0
      %438 = vmatpush.msra.mxu0 0.0
      %439 = vmatpush.msra.mxu0 0.0
      %440 = vmatpush.msra.mxu0 0.0
      %441 = vmatpush.msra.mxu0 0.0
      %442 = vmatpush.msra.mxu0 0.0
      %443 = vmatpush.msra.mxu0 0.0
      %444 = vmatpush.msra.mxu0 0.0
      %445 = vmatpush.msra.mxu0 0.0
      %446 = vmatpush.msra.mxu0 0.0
      %447 = vmatpush.msra.mxu0 0.0
      %448 = vmatpush.msra.mxu0 0.0
      %449 = vmatpush.msra.mxu0 0.0
      %450 = vmatpush.msra.mxu0 0.0
      %451 = vmatpush.msra.mxu0 %v434
      %452 = vmatmul.f32.gmra.mxu0 %v241
      %v453 = vpop.f32.mrf.mxu0
      %v454 = vadd.f32 0.0, %v453
      %455 = vmatmul.f32.gmra.mxu0 %v244
      %v456 = vpop.f32.mrf.mxu0
      %v457 = vadd.f32 0.0, %v456
      %458 = vmatmul.f32.gmra.mxu0 %v247
      %v459 = vpop.f32.mrf.mxu0
      %v460 = vadd.f32 0.0, %v459
      %461 = vmatmul.f32.gmra.mxu0 %v250
      %v462 = vpop.f32.mrf.mxu0
      %v463 = vadd.f32 0.0, %v462
      %464 = vmatmul.f32.gmra.mxu0 %v253
      %v465 = vpop.f32.mrf.mxu0
      %v466 = vadd.f32 0.0, %v465
      %467 = vmatmul.f32.gmra.mxu0 %v256
      %v468 = vpop.f32.mrf.mxu0
      %v469 = vadd.f32 0.0, %v468
      %470 = vmatmul.f32.gmra.mxu0 %v259
      %v471 = vpop.f32.mrf.mxu0
      %v472 = vadd.f32 0.0, %v471
      %473 = vmatmul.f32.gmra.mxu0 %v262
      %v474 = vpop.f32.mrf.mxu0
      %v475 = vadd.f32 0.0, %v474
      %476 = vmatmul.f32.gmra.mxu0 %v265
      %v477 = vpop.f32.mrf.mxu0
      %v478 = vadd.f32 0.0, %v477
      %479 = vmatmul.f32.gmra.mxu0 %v268
      %v480 = vpop.f32.mrf.mxu0
      %v481 = vadd.f32 0.0, %v480
      %482 = vmatmul.f32.gmra.mxu0 %v271
      %v483 = vpop.f32.mrf.mxu0
      %v484 = vadd.f32 0.0, %v483
      %485 = vmatmul.f32.gmra.mxu0 %v274
      %v486 = vpop.f32.mrf.mxu0
      %v487 = vadd.f32 0.0, %v486
      %488 = vmatmul.f32.gmra.mxu0 %v277
      %v489 = vpop.f32.mrf.mxu0
      %v490 = vadd.f32 0.0, %v489
      %491 = vmatmul.f32.gmra.mxu0 %v280
      %v492 = vpop.f32.mrf.mxu0
      %v493 = vadd.f32 0.0, %v492
      %494 = vmatmul.f32.gmra.mxu0 %v428
      %v495 = vpop.f32.mrf.mxu0
      %v496 = vadd.f32 0.0, %v495
      %497 = vmatmul.f32.gmra.mxu0 %v431
      %v498 = vpop.f32.mrf.mxu0
      %v499 = vadd.f32 0.0, %v498
      %500 = vdwg.mxu0
      %v501 = vadd.f32 %v378, %v454
      %v502 = vadd.f32 %v381, %v457
      %v503 = vadd.f32 %v384, %v460
      %v504 = vadd.f32 %v387, %v463
      %v505 = vadd.f32 %v390, %v466
      %v506 = vadd.f32 %v393, %v469
      %v507 = vadd.f32 %v396, %v472
      %v508 = vadd.f32 %v399, %v475
      %v509 = vadd.f32 %v402, %v478
      %v510 = vadd.f32 %v405, %v481
      %v511 = vadd.f32 %v408, %v484
      %v512 = vadd.f32 %v411, %v487
      %v513 = vadd.f32 %v414, %v490
      %v514 = vadd.f32 %v417, %v493
      %v515 = vadd.f32 %v420, %v496
      %v516 = vadd.f32 %v423, %v499
      %s517 = scalar_lea.vmem %s1, 12
      %v518 = vld [vmem:[%s517] sm:$0x7]
      %v520 = vsel %vm233, %v218, 0
      %v523 = vsel %vm233, %v219, 0
      %v526 = vsel %vm282, %v518, 0
      %528 = vmatpush.msra.mxu0 0.0
      %529 = vmatpush.msra.mxu0 0.0
      %530 = vmatpush.msra.mxu0 0.0
      %531 = vmatpush.msra.mxu0 0.0
      %532 = vmatpush.msra.mxu0 0.0
      %533 = vmatpush.msra.mxu0 0.0
      %534 = vmatpush.msra.mxu0 0.0
      %535 = vmatpush.msra.mxu0 0.0
      %536 = vmatpush.msra.mxu0 0.0
      %537 = vmatpush.msra.mxu0 0.0
      %538 = vmatpush.msra.mxu0 0.0
      %539 = vmatpush.msra.mxu0 0.0
      %540 = vmatpush.msra.mxu0 0.0
      %541 = vmatpush.msra.mxu0 0.0
      %542 = vmatpush.msra.mxu0 0.0
      %543 = vmatpush.msra.mxu0 %v526
      %544 = vmatmul.f32.gmra.mxu0 %v247
      %v545 = vpop.f32.mrf.mxu0
      %v546 = vadd.f32 0.0, %v545
      %547 = vmatmul.f32.gmra.mxu0 %v250
      %v548 = vpop.f32.mrf.mxu0
      %v549 = vadd.f32 0.0, %v548
      %550 = vmatmul.f32.gmra.mxu0 %v253
      %v551 = vpop.f32.mrf.mxu0
      %v552 = vadd.f32 0.0, %v551
      %553 = vmatmul.f32.gmra.mxu0 %v256
      %v554 = vpop.f32.mrf.mxu0
      %v555 = vadd.f32 0.0, %v554
      %556 = vmatmul.f32.gmra.mxu0 %v259
      %v557 = vpop.f32.mrf.mxu0
      %v558 = vadd.f32 0.0, %v557
      %559 = vmatmul.f32.gmra.mxu0 %v262
      %v560 = vpop.f32.mrf.mxu0
      %v561 = vadd.f32 0.0, %v560
      %562 = vmatmul.f32.gmra.mxu0 %v265
      %v563 = vpop.f32.mrf.mxu0
      %v564 = vadd.f32 0.0, %v563
      %565 = vmatmul.f32.gmra.mxu0 %v268
      %v566 = vpop.f32.mrf.mxu0
      %v567 = vadd.f32 0.0, %v566
      %568 = vmatmul.f32.gmra.mxu0 %v271
      %v569 = vpop.f32.mrf.mxu0
      %v570 = vadd.f32 0.0, %v569
      %571 = vmatmul.f32.gmra.mxu0 %v274
      %v572 = vpop.f32.mrf.mxu0
      %v573 = vadd.f32 0.0, %v572
      %574 = vmatmul.f32.gmra.mxu0 %v277
      %v575 = vpop.f32.mrf.mxu0
      %v576 = vadd.f32 0.0, %v575
      %577 = vmatmul.f32.gmra.mxu0 %v280
      %v578 = vpop.f32.mrf.mxu0
      %v579 = vadd.f32 0.0, %v578
      %580 = vmatmul.f32.gmra.mxu0 %v428
      %v581 = vpop.f32.mrf.mxu0
      %v582 = vadd.f32 0.0, %v581
      %583 = vmatmul.f32.gmra.mxu0 %v431
      %v584 = vpop.f32.mrf.mxu0
      %v585 = vadd.f32 0.0, %v584
      %586 = vmatmul.f32.gmra.mxu0 %v520
      %v587 = vpop.f32.mrf.mxu0
      %v588 = vadd.f32 0.0, %v587
      %589 = vmatmul.f32.gmra.mxu0 %v523
      %v590 = vpop.f32.mrf.mxu0
      %v591 = vadd.f32 0.0, %v590
      %592 = vdwg.mxu0
      %v593 = vadd.f32 %v501, %v546
      %v594 = vadd.f32 %v502, %v549
      %v595 = vadd.f32 %v503, %v552
      %v596 = vadd.f32 %v504, %v555
      %v597 = vadd.f32 %v505, %v558
      %v598 = vadd.f32 %v506, %v561
      %v599 = vadd.f32 %v507, %v564
      %v600 = vadd.f32 %v508, %v567
      %v601 = vadd.f32 %v509, %v570
      %v602 = vadd.f32 %v510, %v573
      %v603 = vadd.f32 %v511, %v576
      %v604 = vadd.f32 %v512, %v579
      %v605 = vadd.f32 %v513, %v582
      %v606 = vadd.f32 %v514, %v585
      %v607 = vadd.f32 %v515, %v588
      %v608 = vadd.f32 %v516, %v591
      %s609 = scalar_lea.vmem %s1, 16
      %v610 = vld [vmem:[%s609] sm:$0x7]
      %v612 = vsel %vm233, %v220, 0
      %v615 = vsel %vm233, %v221, 0
      %v618 = vsel %vm282, %v610, 0
      %620 = vmatpush.msra.mxu0 0.0
      %621 = vmatpush.msra.mxu0 0.0
      %622 = vmatpush.msra.mxu0 0.0
      %623 = vmatpush.msra.mxu0 0.0
      %624 = vmatpush.msra.mxu0 0.0
      %625 = vmatpush.msra.mxu0 0.0
      %626 = vmatpush.msra.mxu0 0.0
      %627 = vmatpush.msra.mxu0 0.0
      %628 = vmatpush.msra.mxu0 0.0
      %629 = vmatpush.msra.mxu0 0.0
      %630 = vmatpush.msra.mxu0 0.0
      %631 = vmatpush.msra.mxu0 0.0
      %632 = vmatpush.msra.mxu0 0.0
      %633 = vmatpush.msra.mxu0 0.0
      %634 = vmatpush.msra.mxu0 0.0
      %635 = vmatpush.msra.mxu0 %v618
      %636 = vmatmul.f32.gmra.mxu0 %v253
      %v637 = vpop.f32.mrf.mxu0
      %v638 = vadd.f32 0.0, %v637
      %639 = vmatmul.f32.gmra.mxu0 %v256
      %v640 = vpop.f32.mrf.mxu0
      %v641 = vadd.f32 0.0, %v640
      %642 = vmatmul.f32.gmra.mxu0 %v259
      %v643 = vpop.f32.mrf.mxu0
      %v644 = vadd.f32 0.0, %v643
      %645 = vmatmul.f32.gmra.mxu0 %v262
      %v646 = vpop.f32.mrf.mxu0
      %v647 = vadd.f32 0.0, %v646
      %648 = vmatmul.f32.gmra.mxu0 %v265
      %v649 = vpop.f32.mrf.mxu0
      %v650 = vadd.f32 0.0, %v649
      %651 = vmatmul.f32.gmra.mxu0 %v268
      %v652 = vpop.f32.mrf.mxu0
      %v653 = vadd.f32 0.0, %v652
      %654 = vmatmul.f32.gmra.mxu0 %v271
      %v655 = vpop.f32.mrf.mxu0
      %v656 = vadd.f32 0.0, %v655
      %657 = vmatmul.f32.gmra.mxu0 %v274
      %v658 = vpop.f32.mrf.mxu0
      %v659 = vadd.f32 0.0, %v658
      %660 = vmatmul.f32.gmra.mxu0 %v277
      %v661 = vpop.f32.mrf.mxu0
      %v662 = vadd.f32 0.0, %v661
      %663 = vmatmul.f32.gmra.mxu0 %v280
      %v664 = vpop.f32.mrf.mxu0
      %v665 = vadd.f32 0.0, %v664
      %666 = vmatmul.f32.gmra.mxu0 %v428
      %v667 = vpop.f32.mrf.mxu0
      %v668 = vadd.f32 0.0, %v667
      %669 = vmatmul.f32.gmra.mxu0 %v431
      %v670 = vpop.f32.mrf.mxu0
      %v671 = vadd.f32 0.0, %v670
      %672 = vmatmul.f32.gmra.mxu0 %v520
      %v673 = vpop.f32.mrf.mxu0
      %v674 = vadd.f32 0.0, %v673
      %675 = vmatmul.f32.gmra.mxu0 %v523
      %v676 = vpop.f32.mrf.mxu0
      %v677 = vadd.f32 0.0, %v676
      %678 = vmatmul.f32.gmra.mxu0 %v612
      %v679 = vpop.f32.mrf.mxu0
      %v680 = vadd.f32 0.0, %v679
      %681 = vmatmul.f32.gmra.mxu0 %v615
      %v682 = vpop.f32.mrf.mxu0
      %v683 = vadd.f32 0.0, %v682
      %684 = vdwg.mxu0
      %v685 = vadd.f32 %v593, %v638
      %v686 = vadd.f32 %v594, %v641
      %v687 = vadd.f32 %v595, %v644
      %v688 = vadd.f32 %v596, %v647
      %v689 = vadd.f32 %v597, %v650
      %v690 = vadd.f32 %v598, %v653
      %v691 = vadd.f32 %v599, %v656
      %v692 = vadd.f32 %v600, %v659
      %v693 = vadd.f32 %v601, %v662
      %v694 = vadd.f32 %v602, %v665
      %v695 = vadd.f32 %v603, %v668
      %v696 = vadd.f32 %v604, %v671
      %v697 = vadd.f32 %v605, %v674
      %v698 = vadd.f32 %v606, %v677
      %v699 = vadd.f32 %v607, %v680
      %v700 = vadd.f32 %v608, %v683
      %s701 = scalar_lea.vmem %s1, 20
      %v702 = vld [vmem:[%s701] sm:$0x7]
      %v704 = vsel %vm233, %v222, 0
      %v707 = vsel %vm233, %v223, 0
      %v710 = vsel %vm282, %v702, 0
      %712 = vmatpush.msra.mxu0 0.0
      %713 = vmatpush.msra.mxu0 0.0
      %714 = vmatpush.msra.mxu0 0.0
      %715 = vmatpush.msra.mxu0 0.0
      %716 = vmatpush.msra.mxu0 0.0
      %717 = vmatpush.msra.mxu0 0.0
      %718 = vmatpush.msra.mxu0 0.0
      %719 = vmatpush.msra.mxu0 0.0
      %720 = vmatpush.msra.mxu0 0.0
      %721 = vmatpush.msra.mxu0 0.0
      %722 = vmatpush.msra.mxu0 0.0
      %723 = vmatpush.msra.mxu0 0.0
      %724 = vmatpush.msra.mxu0 0.0
      %725 = vmatpush.msra.mxu0 0.0
      %726 = vmatpush.msra.mxu0 0.0
      %727 = vmatpush.msra.mxu0 %v710
      %728 = vmatmul.f32.gmra.mxu0 %v259
      %v729 = vpop.f32.mrf.mxu0
      %v730 = vadd.f32 0.0, %v729
      %731 = vmatmul.f32.gmra.mxu0 %v262
      %v732 = vpop.f32.mrf.mxu0
      %v733 = vadd.f32 0.0, %v732
      %734 = vmatmul.f32.gmra.mxu0 %v265
      %v735 = vpop.f32.mrf.mxu0
      %v736 = vadd.f32 0.0, %v735
      %737 = vmatmul.f32.gmra.mxu0 %v268
      %v738 = vpop.f32.mrf.mxu0
      %v739 = vadd.f32 0.0, %v738
      %740 = vmatmul.f32.gmra.mxu0 %v271
      %v741 = vpop.f32.mrf.mxu0
      %v742 = vadd.f32 0.0, %v741
      %743 = vmatmul.f32.gmra.mxu0 %v274
      %v744 = vpop.f32.mrf.mxu0
      %v745 = vadd.f32 0.0, %v744
      %746 = vmatmul.f32.gmra.mxu0 %v277
      %v747 = vpop.f32.mrf.mxu0
      %v748 = vadd.f32 0.0, %v747
      %749 = vmatmul.f32.gmra.mxu0 %v280
      %v750 = vpop.f32.mrf.mxu0
      %v751 = vadd.f32 0.0, %v750
      %752 = vmatmul.f32.gmra.mxu0 %v428
      %v753 = vpop.f32.mrf.mxu0
      %v754 = vadd.f32 0.0, %v753
      %755 = vmatmul.f32.gmra.mxu0 %v431
      %v756 = vpop.f32.mrf.mxu0
      %v757 = vadd.f32 0.0, %v756
      %758 = vmatmul.f32.gmra.mxu0 %v520
      %v759 = vpop.f32.mrf.mxu0
      %v760 = vadd.f32 0.0, %v759
      %761 = vmatmul.f32.gmra.mxu0 %v523
      %v762 = vpop.f32.mrf.mxu0
      %v763 = vadd.f32 0.0, %v762
      %764 = vmatmul.f32.gmra.mxu0 %v612
      %v765 = vpop.f32.mrf.mxu0
      %v766 = vadd.f32 0.0, %v765
      %767 = vmatmul.f32.gmra.mxu0 %v615
      %v768 = vpop.f32.mrf.mxu0
      %v769 = vadd.f32 0.0, %v768
      %770 = vmatmul.f32.gmra.mxu0 %v704
      %v771 = vpop.f32.mrf.mxu0
      %v772 = vadd.f32 0.0, %v771
      %773 = vmatmul.f32.gmra.mxu0 %v707
      %v774 = vpop.f32.mrf.mxu0
      %v775 = vadd.f32 0.0, %v774
      %776 = vdwg.mxu0
      %v777 = vadd.f32 %v685, %v730
      %v778 = vadd.f32 %v686, %v733
      %v779 = vadd.f32 %v687, %v736
      %v780 = vadd.f32 %v688, %v739
      %v781 = vadd.f32 %v689, %v742
      %v782 = vadd.f32 %v690, %v745
      %v783 = vadd.f32 %v691, %v748
      %v784 = vadd.f32 %v692, %v751
      %v785 = vadd.f32 %v693, %v754
      %v786 = vadd.f32 %v694, %v757
      %v787 = vadd.f32 %v695, %v760
      %v788 = vadd.f32 %v696, %v763
      %v789 = vadd.f32 %v697, %v766
      %v790 = vadd.f32 %v698, %v769
      %v791 = vadd.f32 %v699, %v772
      %v792 = vadd.f32 %v700, %v775
      %s793 = scalar_lea.vmem %s1, 24
      %v794 = vld [vmem:[%s793] sm:$0x7]
      %v796 = vsel %vm233, %v224, 0
      %v799 = vsel %vm233, %v225, 0
      %v802 = vsel %vm282, %v794, 0
      %804 = vmatpush.msra.mxu0 0.0
      %805 = vmatpush.msra.mxu0 0.0
      %806 = vmatpush.msra.mxu0 0.0
      %807 = vmatpush.msra.mxu0 0.0
      %808 = vmatpush.msra.mxu0 0.0
      %809 = vmatpush.msra.mxu0 0.0
      %810 = vmatpush.msra.mxu0 0.0
      %811 = vmatpush.msra.mxu0 0.0
      %812 = vmatpush.msra.mxu0 0.0
      %813 = vmatpush.msra.mxu0 0.0
      %814 = vmatpush.msra.mxu0 0.0
      %815 = vmatpush.msra.mxu0 0.0
      %816 = vmatpush.msra.mxu0 0.0
      %817 = vmatpush.msra.mxu0 0.0
      %818 = vmatpush.msra.mxu0 0.0
      %819 = vmatpush.msra.mxu0 %v802
      %820 = vmatmul.f32.gmra.mxu0 %v265
      %v821 = vpop.f32.mrf.mxu0
      %v822 = vadd.f32 0.0, %v821
      %823 = vmatmul.f32.gmra.mxu0 %v268
      %v824 = vpop.f32.mrf.mxu0
      %v825 = vadd.f32 0.0, %v824
      %826 = vmatmul.f32.gmra.mxu0 %v271
      %v827 = vpop.f32.mrf.mxu0
      %v828 = vadd.f32 0.0, %v827
      %829 = vmatmul.f32.gmra.mxu0 %v274
      %v830 = vpop.f32.mrf.mxu0
      %v831 = vadd.f32 0.0, %v830
      %832 = vmatmul.f32.gmra.mxu0 %v277
      %v833 = vpop.f32.mrf.mxu0
      %v834 = vadd.f32 0.0, %v833
      %835 = vmatmul.f32.gmra.mxu0 %v280
      %v836 = vpop.f32.mrf.mxu0
      %v837 = vadd.f32 0.0, %v836
      %838 = vmatmul.f32.gmra.mxu0 %v428
      %v839 = vpop.f32.mrf.mxu0
      %v840 = vadd.f32 0.0, %v839
      %841 = vmatmul.f32.gmra.mxu0 %v431
      %v842 = vpop.f32.mrf.mxu0
      %v843 = vadd.f32 0.0, %v842
      %844 = vmatmul.f32.gmra.mxu0 %v520
      %v845 = vpop.f32.mrf.mxu0
      %v846 = vadd.f32 0.0, %v845
      %847 = vmatmul.f32.gmra.mxu0 %v523
      %v848 = vpop.f32.mrf.mxu0
      %v849 = vadd.f32 0.0, %v848
      %850 = vmatmul.f32.gmra.mxu0 %v612
      %v851 = vpop.f32.mrf.mxu0
      %v852 = vadd.f32 0.0, %v851
      %853 = vmatmul.f32.gmra.mxu0 %v615
      %v854 = vpop.f32.mrf.mxu0
      %v855 = vadd.f32 0.0, %v854
      %856 = vmatmul.f32.gmra.mxu0 %v704
      %v857 = vpop.f32.mrf.mxu0
      %v858 = vadd.f32 0.0, %v857
      %859 = vmatmul.f32.gmra.mxu0 %v707
      %v860 = vpop.f32.mrf.mxu0
      %v861 = vadd.f32 0.0, %v860
      %862 = vmatmul.f32.gmra.mxu0 %v796
      %v863 = vpop.f32.mrf.mxu0
      %v864 = vadd.f32 0.0, %v863
      %865 = vmatmul.f32.gmra.mxu0 %v799
      %v866 = vpop.f32.mrf.mxu0
      %v867 = vadd.f32 0.0, %v866
      %868 = vdwg.mxu0
      %v869 = vadd.f32 %v777, %v822
      %v870 = vadd.f32 %v778, %v825
      %v871 = vadd.f32 %v779, %v828
      %v872 = vadd.f32 %v780, %v831
      %v873 = vadd.f32 %v781, %v834
      %v874 = vadd.f32 %v782, %v837
      %v875 = vadd.f32 %v783, %v840
      %v876 = vadd.f32 %v784, %v843
      %v877 = vadd.f32 %v785, %v846
      %v878 = vadd.f32 %v786, %v849
      %v879 = vadd.f32 %v787, %v852
      %v880 = vadd.f32 %v788, %v855
      %v881 = vadd.f32 %v789, %v858
      %v882 = vadd.f32 %v790, %v861
      %v883 = vadd.f32 %v791, %v864
      %v884 = vadd.f32 %v792, %v867
      %s885 = scalar_lea.vmem %s1, 28
      %v886 = vld [vmem:[%s885] sm:$0x7]
      %v888 = vsel %vm233, %v226, 0
      %v891 = vsel %vm233, %v227, 0
      %v894 = vsel %vm282, %v886, 0
      %896 = vmatpush.msra.mxu0 0.0
      %897 = vmatpush.msra.mxu0 0.0
      %898 = vmatpush.msra.mxu0 0.0
      %899 = vmatpush.msra.mxu0 0.0
      %900 = vmatpush.msra.mxu0 0.0
      %901 = vmatpush.msra.mxu0 0.0
      %902 = vmatpush.msra.mxu0 0.0
      %903 = vmatpush.msra.mxu0 0.0
      %904 = vmatpush.msra.mxu0 0.0
      %905 = vmatpush.msra.mxu0 0.0
      %906 = vmatpush.msra.mxu0 0.0
      %907 = vmatpush.msra.mxu0 0.0
      %908 = vmatpush.msra.mxu0 0.0
      %909 = vmatpush.msra.mxu0 0.0
      %910 = vmatpush.msra.mxu0 0.0
      %911 = vmatpush.msra.mxu0 %v894
      %912 = vmatmul.f32.gmra.mxu0 %v271
      %v913 = vpop.f32.mrf.mxu0
      %v914 = vadd.f32 0.0, %v913
      %915 = vmatmul.f32.gmra.mxu0 %v274
      %v916 = vpop.f32.mrf.mxu0
      %v917 = vadd.f32 0.0, %v916
      %918 = vmatmul.f32.gmra.mxu0 %v277
      %v919 = vpop.f32.mrf.mxu0
      %v920 = vadd.f32 0.0, %v919
      %921 = vmatmul.f32.gmra.mxu0 %v280
      %v922 = vpop.f32.mrf.mxu0
      %v923 = vadd.f32 0.0, %v922
      %924 = vmatmul.f32.gmra.mxu0 %v428
      %v925 = vpop.f32.mrf.mxu0
      %v926 = vadd.f32 0.0, %v925
      %927 = vmatmul.f32.gmra.mxu0 %v431
      %v928 = vpop.f32.mrf.mxu0
      %v929 = vadd.f32 0.0, %v928
      %930 = vmatmul.f32.gmra.mxu0 %v520
      %v931 = vpop.f32.mrf.mxu0
      %v932 = vadd.f32 0.0, %v931
      %933 = vmatmul.f32.gmra.mxu0 %v523
      %v934 = vpop.f32.mrf.mxu0
      %v935 = vadd.f32 0.0, %v934
      %936 = vmatmul.f32.gmra.mxu0 %v612
      %v937 = vpop.f32.mrf.mxu0
      %v938 = vadd.f32 0.0, %v937
      %939 = vmatmul.f32.gmra.mxu0 %v615
      %v940 = vpop.f32.mrf.mxu0
      %v941 = vadd.f32 0.0, %v940
      %942 = vmatmul.f32.gmra.mxu0 %v704
      %v943 = vpop.f32.mrf.mxu0
      %v944 = vadd.f32 0.0, %v943
      %945 = vmatmul.f32.gmra.mxu0 %v707
      %v946 = vpop.f32.mrf.mxu0
      %v947 = vadd.f32 0.0, %v946
      %948 = vmatmul.f32.gmra.mxu0 %v796
      %v949 = vpop.f32.mrf.mxu0
      %v950 = vadd.f32 0.0, %v949
      %951 = vmatmul.f32.gmra.mxu0 %v799
      %v952 = vpop.f32.mrf.mxu0
      %v953 = vadd.f32 0.0, %v952
      %954 = vmatmul.f32.gmra.mxu0 %v888
      %v955 = vpop.f32.mrf.mxu0
      %v956 = vadd.f32 0.0, %v955
      %957 = vmatmul.f32.gmra.mxu0 %v891
      %v958 = vpop.f32.mrf.mxu0
      %v959 = vadd.f32 0.0, %v958
      %960 = vdwg.mxu0
      %v961 = vadd.f32 %v869, %v914
      %v962 = vadd.f32 %v870, %v917
      %v963 = vadd.f32 %v871, %v920
      %v964 = vadd.f32 %v872, %v923
      %v965 = vadd.f32 %v873, %v926
      %v966 = vadd.f32 %v874, %v929
      %v967 = vadd.f32 %v875, %v932
      %v968 = vadd.f32 %v876, %v935
      %v969 = vadd.f32 %v877, %v938
      %v970 = vadd.f32 %v878, %v941
      %v971 = vadd.f32 %v879, %v944
      %v972 = vadd.f32 %v880, %v947
      %v973 = vadd.f32 %v881, %v950
      %v974 = vadd.f32 %v882, %v953
      %v975 = vadd.f32 %v883, %v956
      %v976 = vadd.f32 %v884, %v959
      %s977 = scalar_lea.vmem %s1, 32
      %v978 = vld [vmem:[%s977] sm:$0x7]
      %v980 = vsel %vm233, %v228, 0
      %v983 = vsel %vm233, %v229, 0
      %v986 = vsel %vm282, %v978, 0
      %988 = vmatpush.msra.mxu0 0.0
      %989 = vmatpush.msra.mxu0 0.0
      %990 = vmatpush.msra.mxu0 0.0
      %991 = vmatpush.msra.mxu0 0.0
      %992 = vmatpush.msra.mxu0 0.0
      %993 = vmatpush.msra.mxu0 0.0
      %994 = vmatpush.msra.mxu0 0.0
      %995 = vmatpush.msra.mxu0 0.0
      %996 = vmatpush.msra.mxu0 0.0
      %997 = vmatpush.msra.mxu0 0.0
      %998 = vmatpush.msra.mxu0 0.0
      %999 = vmatpush.msra.mxu0 0.0
      %1000 = vmatpush.msra.mxu0 0.0
      %1001 = vmatpush.msra.mxu0 0.0
      %1002 = vmatpush.msra.mxu0 0.0
      %1003 = vmatpush.msra.mxu0 %v986
      %1004 = vmatmul.f32.gmra.mxu0 %v277
      %v1005 = vpop.f32.mrf.mxu0
      %v1006 = vadd.f32 0.0, %v1005
      %1007 = vmatmul.f32.gmra.mxu0 %v280
      %v1008 = vpop.f32.mrf.mxu0
      %v1009 = vadd.f32 0.0, %v1008
      %1010 = vmatmul.f32.gmra.mxu0 %v428
      %v1011 = vpop.f32.mrf.mxu0
      %v1012 = vadd.f32 0.0, %v1011
      %1013 = vmatmul.f32.gmra.mxu0 %v431
      %v1014 = vpop.f32.mrf.mxu0
      %v1015 = vadd.f32 0.0, %v1014
      %1016 = vmatmul.f32.gmra.mxu0 %v520
      %v1017 = vpop.f32.mrf.mxu0
      %v1018 = vadd.f32 0.0, %v1017
      %1019 = vmatmul.f32.gmra.mxu0 %v523
      %v1020 = vpop.f32.mrf.mxu0
      %v1021 = vadd.f32 0.0, %v1020
      %1022 = vmatmul.f32.gmra.mxu0 %v612
      %v1023 = vpop.f32.mrf.mxu0
      %v1024 = vadd.f32 0.0, %v1023
      %1025 = vmatmul.f32.gmra.mxu0 %v615
      %v1026 = vpop.f32.mrf.mxu0
      %v1027 = vadd.f32 0.0, %v1026
      %1028 = vmatmul.f32.gmra.mxu0 %v704
      %v1029 = vpop.f32.mrf.mxu0
      %v1030 = vadd.f32 0.0, %v1029
      %1031 = vmatmul.f32.gmra.mxu0 %v707
      %v1032 = vpop.f32.mrf.mxu0
      %v1033 = vadd.f32 0.0, %v1032
      %1034 = vmatmul.f32.gmra.mxu0 %v796
      %v1035 = vpop.f32.mrf.mxu0
      %v1036 = vadd.f32 0.0, %v1035
      %1037 = vmatmul.f32.gmra.mxu0 %v799
      %v1038 = vpop.f32.mrf.mxu0
      %v1039 = vadd.f32 0.0, %v1038
      %1040 = vmatmul.f32.gmra.mxu0 %v888
      %v1041 = vpop.f32.mrf.mxu0
      %v1042 = vadd.f32 0.0, %v1041
      %1043 = vmatmul.f32.gmra.mxu0 %v891
      %v1044 = vpop.f32.mrf.mxu0
      %v1045 = vadd.f32 0.0, %v1044
      %1046 = vmatmul.f32.gmra.mxu0 %v980
      %v1047 = vpop.f32.mrf.mxu0
      %v1048 = vadd.f32 0.0, %v1047
      %1049 = vmatmul.f32.gmra.mxu0 %v983
      %v1050 = vpop.f32.mrf.mxu0
      %v1051 = vadd.f32 0.0, %v1050
      %1052 = vdwg.mxu0
      %v1053 = vadd.f32 %v961, %v1006
      %v1054 = vadd.f32 %v962, %v1009
      %v1055 = vadd.f32 %v963, %v1012
      %v1056 = vadd.f32 %v964, %v1015
      %v1057 = vadd.f32 %v965, %v1018
      %v1058 = vadd.f32 %v966, %v1021
      %v1059 = vadd.f32 %v967, %v1024
      %v1060 = vadd.f32 %v968, %v1027
      %v1061 = vadd.f32 %v969, %v1030
      %v1062 = vadd.f32 %v970, %v1033
      %v1063 = vadd.f32 %v971, %v1036
      %v1064 = vadd.f32 %v972, %v1039
      %v1065 = vadd.f32 %v973, %v1042
      %v1066 = vadd.f32 %v974, %v1045
      %v1067 = vadd.f32 %v975, %v1048
      %v1068 = vadd.f32 %v976, %v1051
      %v1069 = vld [vmem:[%s2] sm:$0x1]
      %v1071 = vperm.slane %v1069, 0
      %v1073 = vmul.f32 %v1053, %v1071
      %v1074 = vmul.f32 %v1054, %v1071
      %v1075 = vmul.f32 %v1055, %v1071
      %v1076 = vmul.f32 %v1056, %v1071
      %v1077 = vmul.f32 %v1057, %v1071
      %v1078 = vmul.f32 %v1058, %v1071
      %v1079 = vmul.f32 %v1059, %v1071
      %v1080 = vmul.f32 %v1060, %v1071
      %v1081 = vmul.f32 %v1061, %v1071
      %v1082 = vmul.f32 %v1062, %v1071
      %v1083 = vmul.f32 %v1063, %v1071
      %v1084 = vmul.f32 %v1064, %v1071
      %v1085 = vmul.f32 %v1065, %v1071
      %v1086 = vmul.f32 %v1066, %v1071
      %v1087 = vmul.f32 %v1067, %v1071
      %v1088 = vmul.f32 %v1068, %v1071
      %v1089 = vld [vmem:[%s3] sm:$0x1]
      %v1091 = vperm.slane %v1089, 0
      %v1093 = vadd.f32 %v1073, %v1091
      %v1094 = vadd.f32 %v1074, %v1091
      %v1095 = vadd.f32 %v1075, %v1091
      %v1096 = vadd.f32 %v1076, %v1091
      %v1097 = vadd.f32 %v1077, %v1091
      %v1098 = vadd.f32 %v1078, %v1091
      %v1099 = vadd.f32 %v1079, %v1091
      %v1100 = vadd.f32 %v1080, %v1091
      %v1101 = vadd.f32 %v1081, %v1091
      %v1102 = vadd.f32 %v1082, %v1091
      %v1103 = vadd.f32 %v1083, %v1091
      %v1104 = vadd.f32 %v1084, %v1091
      %v1105 = vadd.f32 %v1085, %v1091
      %v1106 = vadd.f32 %v1086, %v1091
      %v1107 = vadd.f32 %v1087, %v1091
      %v1108 = vadd.f32 %v1088, %v1091
      %v1109 = vmax.f32 %v1093, 0.0
      %v1110 = vmax.f32 %v1094, 0.0
      %v1111 = vmax.f32 %v1095, 0.0
      %v1112 = vmax.f32 %v1096, 0.0
      %v1113 = vmax.f32 %v1097, 0.0
      %v1114 = vmax.f32 %v1098, 0.0
      %v1115 = vmax.f32 %v1099, 0.0
      %v1116 = vmax.f32 %v1100, 0.0
      %v1117 = vmax.f32 %v1101, 0.0
      %v1118 = vmax.f32 %v1102, 0.0
      %v1119 = vmax.f32 %v1103, 0.0
      %v1120 = vmax.f32 %v1104, 0.0
      %v1121 = vmax.f32 %v1105, 0.0
      %v1122 = vmax.f32 %v1106, 0.0
      %v1123 = vmax.f32 %v1107, 0.0
      %v1124 = vmax.f32 %v1108, 0.0
      %vm1125 = vcmask 236544
      %1126 = vst.msk [vmem:[%s197] sm:$0xff] %vm1125, %v1109
      %1127 = vst.msk [vmem:[%s197 + $0x8] sm:$0xff] %vm1125, %v1110
      %1128 = vst.msk [vmem:[%s197 + $0x10] sm:$0xff] %vm1125, %v1111
      %1129 = vst.msk [vmem:[%s197 + $0x18] sm:$0xff] %vm1125, %v1112
      %1130 = vst.msk [vmem:[%s197 + $0x20] sm:$0xff] %vm1125, %v1113
      %1131 = vst.msk [vmem:[%s197 + $0x28] sm:$0xff] %vm1125, %v1114
      %1132 = vst.msk [vmem:[%s197 + $0x30] sm:$0xff] %vm1125, %v1115
      %1133 = vst.msk [vmem:[%s197 + $0x38] sm:$0xff] %vm1125, %v1116
      %1134 = vst.msk [vmem:[%s197 + $0x40] sm:$0xff] %vm1125, %v1117
      %1135 = vst.msk [vmem:[%s197 + $0x48] sm:$0xff] %vm1125, %v1118
      %1136 = vst.msk [vmem:[%s197 + $0x50] sm:$0xff] %vm1125, %v1119
      %1137 = vst.msk [vmem:[%s197 + $0x58] sm:$0xff] %vm1125, %v1120
      %1138 = vst.msk [vmem:[%s197 + $0x60] sm:$0xff] %vm1125, %v1121
      %1139 = vst.msk [vmem:[%s197 + $0x68] sm:$0xff] %vm1125, %v1122
      %1140 = vst.msk [vmem:[%s197 + $0x70] sm:$0xff] %vm1125, %v1123
      %1141 = vst.msk [vmem:[%s197 + $0x78] sm:$0xff] %vm1125, %v1124
      %p1142 = scmp.lt.s32.totalorder %s15, 1
      %s1143 = scalar_select %p1142, %s15, 1
      %s1144 = smul.addr %s1143, 16
      %s1145 = smul.addr %s1144, 8
      %s1146 = scalar_lea.vmem %s4, %s1145
      // Predicated region
      $region37: #{_lambda_.15} parent=35 // pred_check
        %p1147 = pneg %p122
      $region38: #{_lambda_.15} parent=35 // pred_check_branch
        %1149 = sbr.rel (%p1147) target = $region40
      $region39: #{_lambda_.15} parent=35 // pred_region
        _
      $region40: #{_lambda_.15} parent=35 // pred_fallthru
        _
    $region36: #{_lambda_.15} parent=5 // pred_fallthru
      _
    %p1150 = scmp.le.s32.totalorder 2, %s10
    // Predicated region
    $region41: #{_lambda_.15} parent=5 // pred_check
      %p1151 = pneg %p1150
    $region42: #{_lambda_.15} parent=5 // pred_check_branch
      %1153 = sbr.rel (%p1151) target = $region44
    $region43: #{_lambda_.15} parent=5 // pred_region
      %s1154 = ssub.s32 %s10, 2
      // Predicated region
      $region45: #{_lambda_.15} parent=43 // pred_check
        %p1155 = pneg %p128
      $region46: #{_lambda_.15} parent=43 // pred_check_branch
        %1157 = sbr.rel (%p1155) target = $region48
      $region47: #{_lambda_.15} parent=43 // pred_region
        %p1158 = scmp.lt.s32.totalorder %s16, 1
        %s1159 = scalar_select %p1158, %s16, 1
        %s1160 = smul.addr %s1159, 16
        %s1161 = smul.addr %s1160, 8
        %s1162 = scalar_lea.vmem %s4, %s1161
      $region48: #{_lambda_.15} parent=43 // pred_fallthru
        _
    $region44: #{_lambda_.15} parent=5 // pred_fallthru
      _
  $region6: #{_lambda_.15} parent=0 // loop_footer
    %s14 = sadd.s32 1, %s10
  $region7: #{_lambda_.15} parent=0 // loop_footer_branch
    %9 = sbr.rel target = $region3
  $region8: #{_lambda_.15} parent=0 // loop_exit
    _

// kernel: _lambda_.17
$region0: #{_lambda_.17}
  #allocation0 [shape = 'u32[]', space=smem, size = 0x4, offset = 0x4, fixed_abs, tag = 'smem constant byte address 0x4 - core index']
  #allocation1 [shape = 'u32[72,128]{1,0:T(1,128)}', space=vmem, size = 0x9000, scoped, tag = 'internal scratch']
  %s0 = inlined_call_operand.vmem [shape: f32[2,256,32], index: 0, kind: input, shape index: {}]
  %s1 = inlined_call_operand.vmem [shape: f32[9,32,32], index: 1, kind: input, shape index: {}]
  %s2 = inlined_call_operand.vmem [shape: f32[1,32], index: 2, kind: input, shape index: {}]
  %s3 = inlined_call_operand.vmem [shape: f32[1,32], index: 3, kind: input, shape index: {}]
  %s4 = inlined_call_operand.vmem [shape: f32[2,128,32], index: 4, kind: output, shape index: {}]
  %s5 = sld [smem:[#allocation0]]
  $region49: #{_lambda_.17} parent=0
    _
  %s7 = ssub.s32 1, %s5
  %s8 = scalar_select 0, %s7, %s5
  loop: start=0, step=1, limit=4
  $region2: #{_lambda_.17} parent=0 // loop_pre_header
    _
  $region3: #{_lambda_.17} parent=0 // loop_header
    %s10 = sphi 0, %s14
    %p11 = scmp.ge.s32.totalorder %s10, 4
    %s20 = sphi 0, %s22
    %s23 = sphi 0, %s20
    %s24 = sphi 0, %s23
    %s40 = sphi 0, %s24
    %s44 = sphi 0, %s44
    %s46 = sphi 0, %s44
    %s47 = sphi 0, %s46
    %s61 = sphi 0, %s47
    %s65 = sphi 0, %s65
    %s67 = sphi 0, %s65
    %s68 = sphi 0, %s67
    %s82 = sphi 0, %s68
    %s86 = sphi 0, %s86
    %s88 = sphi 0, %s86
    %s89 = sphi 0, %s88
    %s103 = sphi 0, %s89
    %s109 = sphi 0, %s111
    %s112 = sphi 0, %s109
    %s113 = sphi 0, %s112
    %s129 = sphi 0, %s113
  $region4: #{_lambda_.17} parent=0 // loop_header_branch
    %13 = sbr.rel (%p11) target = $region8
  $region5: #{_lambda_.17} parent=0 // loop_body
    %s15 = ssub.s32 %s10, 1
    %s16 = ssub.s32 %s10, 2
    %s17 = sadd.s32 %s10, 1
    %s18 = ssub.s32 %s10, %s17
    %p19 = scmp.eq.s32.totalorder %s18, 0
    %s21 = sadd.s32 %s20, 1
    %s22 = scalar_select %p19, %s20, %s21
    %p25 = pneg %p19
    %p26 = scmp.eq.s32.totalorder %s10, 1
    %p27 = por %p25, %p26
    %p28 = scmp.ne.s32.totalorder %s20, %s23
    %p29 = scmp.eq.s32.totalorder %s10, 0
    %p30 = por %p28, %p29
    %p31 = scmp.ne.s32.totalorder %s20, %s23
    %p32 = scmp.eq.s32.totalorder %s15, 1
    %p33 = por %p31, %p32
    %p34 = scmp.ne.s32.totalorder %s23, %s24
    %p35 = scmp.eq.s32.totalorder %s15, 0
    %p36 = por %p34, %p35
    %p37 = scmp.ne.s32.totalorder %s23, %s24
    %p38 = scmp.eq.s32.totalorder %s16, 1
    %p39 = por %p37, %p38
    %p41 = scmp.ne.s32.totalorder %s24, %s40
    %p42 = scmp.eq.s32.totalorder %s16, 0
    %p43 = por %p41, %p42
    %s45 = sadd.s32 %s44, 1
    %p48 = scmp.eq.s32.totalorder %s10, 1
    %p49 = scmp.ne.s32.totalorder %s44, %s46
    %p50 = scmp.eq.s32.totalorder %s10, 0
    %p51 = por %p49, %p50
    %p52 = scmp.ne.s32.totalorder %s44, %s46
    %p53 = scmp.eq.s32.totalorder %s15, 1
    %p54 = por %p52, %p53
    %p55 = scmp.ne.s32.totalorder %s46, %s47
    %p56 = scmp.eq.s32.totalorder %s15, 0
    %p57 = por %p55, %p56
    %p58 = scmp.ne.s32.totalorder %s46, %s47
    %p59 = scmp.eq.s32.totalorder %s16, 1
    %p60 = por %p58, %p59
    %p62 = scmp.ne.s32.totalorder %s47, %s61
    %p63 = scmp.eq.s32.totalorder %s16, 0
    %p64 = por %p62, %p63
    %s66 = sadd.s32 %s65, 1
    %p69 = scmp.eq.s32.totalorder %s10, 1
    %p70 = scmp.ne.s32.totalorder %s65, %s67
    %p71 = scmp.eq.s32.totalorder %s10, 0
    %p72 = por %p70, %p71
    %p73 = scmp.ne.s32.totalorder %s65, %s67
    %p74 = scmp.eq.s32.totalorder %s15, 1
    %p75 = por %p73, %p74
    %p76 = scmp.ne.s32.totalorder %s67, %s68
    %p77 = scmp.eq.s32.totalorder %s15, 0
    %p78 = por %p76, %p77
    %p79 = scmp.ne.s32.totalorder %s67, %s68
    %p80 = scmp.eq.s32.totalorder %s16, 1
    %p81 = por %p79, %p80
    %p83 = scmp.ne.s32.totalorder %s68, %s82
    %p84 = scmp.eq.s32.totalorder %s16, 0
    %p85 = por %p83, %p84
    %s87 = sadd.s32 %s86, 1
    %p90 = scmp.eq.s32.totalorder %s10, 1
    %p91 = scmp.ne.s32.totalorder %s86, %s88
    %p92 = scmp.eq.s32.totalorder %s10, 0
    %p93 = por %p91, %p92
    %p94 = scmp.ne.s32.totalorder %s86, %s88
    %p95 = scmp.eq.s32.totalorder %s15, 1
    %p96 = por %p94, %p95
    %p97 = scmp.ne.s32.totalorder %s88, %s89
    %p98 = scmp.eq.s32.totalorder %s15, 0
    %p99 = por %p97, %p98
    %p100 = scmp.ne.s32.totalorder %s88, %s89
    %p101 = scmp.eq.s32.totalorder %s16, 1
    %p102 = por %p100, %p101
    %p104 = scmp.ne.s32.totalorder %s89, %s103
    %p105 = scmp.eq.s32.totalorder %s16, 0
    %p106 = por %p104, %p105
    %s107 = ssub.s32 %s10, %s17
    %p108 = scmp.eq.s32.totalorder %s107, 0
    %s110 = sadd.s32 %s109, 1
    %s111 = scalar_select %p108, %s109, %s110
    %p114 = pneg %p108
    %p115 = scmp.eq.s32.totalorder %s10, 1
    %p116 = por %p114, %p115
    %p117 = scmp.ne.s32.totalorder %s109, %s112
    %p118 = scmp.eq.s32.totalorder %s10, 0
    %p119 = por %p117, %p118
    %p120 = scmp.ne.s32.totalorder %s109, %s112
    %p121 = scmp.eq.s32.totalorder %s15, 1
    %p122 = por %p120, %p121
    %p123 = scmp.ne.s32.totalorder %s112, %s113
    %p124 = scmp.eq.s32.totalorder %s15, 0
    %p125 = por %p123, %p124
    %p126 = scmp.ne.s32.totalorder %s112, %s113
    %p127 = scmp.eq.s32.totalorder %s16, 1
    %p128 = por %p126, %p127
    %p130 = scmp.ne.s32.totalorder %s113, %s129
    %p131 = scmp.eq.s32.totalorder %s16, 0
    %p132 = por %p130, %p131
    %p133 = scmp.le.s32.totalorder 1, %s10
    %p134 = scmp.lt.s32.totalorder %s10, 3
    %p135 = pnand %p133, %p134
    %p136 = pneg %p135
    // Predicated region
    $region9: #{_lambda_.17} parent=5 // pred_check
      _
    $region10: #{_lambda_.17} parent=5 // pred_check_branch
      %138 = sbr.rel (%p135) target = $region12
    $region11: #{_lambda_.17} parent=5 // pred_region
      %s139 = ssub.s32 %s10, 1
      // Predicated region
      $region13: #{_lambda_.17} parent=11 // pred_check
        %p140 = pneg %p57
      $region14: #{_lambda_.17} parent=11 // pred_check_branch
        %142 = sbr.rel (%p140) target = $region16
      $region15: #{_lambda_.17} parent=11 // pred_region
        _
      $region16: #{_lambda_.17} parent=11 // pred_fallthru
        _
      // Predicated region
      $region17: #{_lambda_.17} parent=11 // pred_check
        %p143 = pneg %p78
      $region18: #{_lambda_.17} parent=11 // pred_check_branch
        %145 = sbr.rel (%p143) target = $region20
      $region19: #{_lambda_.17} parent=11 // pred_region
        _
      $region20: #{_lambda_.17} parent=11 // pred_fallthru
        _
      // Predicated region
      $region21: #{_lambda_.17} parent=11 // pred_check
        %p146 = pneg %p99
      $region22: #{_lambda_.17} parent=11 // pred_check_branch
        %148 = sbr.rel (%p146) target = $region24
      $region23: #{_lambda_.17} parent=11 // pred_region
        _
      $region24: #{_lambda_.17} parent=11 // pred_fallthru
        _
    $region12: #{_lambda_.17} parent=5 // pred_fallthru
      _
    %p149 = scmp.lt.s32.totalorder %s10, 2
    // Predicated region
    $region25: #{_lambda_.17} parent=5 // pred_check
      %p150 = pneg %p149
    $region26: #{_lambda_.17} parent=5 // pred_check_branch
      %152 = sbr.rel (%p150) target = $region28
    $region27: #{_lambda_.17} parent=5 // pred_region
      // Predicated region
      $region29: #{_lambda_.17} parent=27 // pred_check
        %p153 = pneg %p30
      $region30: #{_lambda_.17} parent=27 // pred_check_branch
        %155 = sbr.rel (%p153) target = $region32
      $region31: #{_lambda_.17} parent=27 // pred_region
        %p156 = scmp.lt.s32.totalorder %s10, 1
        %s157 = scalar_select %p156, %s10, 1
        %s158 = smul.addr %s157, 32
        %s159 = smul.addr %s158, 8
        %s160 = scalar_lea.vmem %s0, %s159
      $region32: #{_lambda_.17} parent=27 // pred_fallthru
        _
    $region28: #{_lambda_.17} parent=5 // pred_fallthru
      _
    %p161 = scmp.le.s32.totalorder 1, %s10
    %p162 = scmp.lt.s32.totalorder %s10, 3
    %p163 = pnand %p161, %p162
    %p164 = pneg %p163
    // Predicated region
    $region33: #{_lambda_.17} parent=5 // pred_check
      _
    $region34: #{_lambda_.17} parent=5 // pred_check_branch
      %166 = sbr.rel (%p163) target = $region36
    $region35: #{_lambda_.17} parent=5 // pred_region
      %s167 = ssub.s32 %s10, 1
      %p168 = scmp.lt.s32.totalorder %s15, 1
      %s169 = scalar_select %p168, %s15, 1
      %s170 = smul.addr %s169, 32
      %s171 = smul.addr %s170, 8
      %s172 = scalar_lea.vmem %s0, %s171
      %p173 = pneg %p36
      %p174 = pneg %p33
      %p175 = pneg %p57
      %p176 = pneg %p54
      %p177 = pneg %p78
      %p178 = pneg %p75
      %p179 = pneg %p99
      %p180 = pneg %p96
      %p181 = pneg %p125
      %p182 = pneg %p122
      %p183 = scmp.lt.s32.totalorder %s15, 1
      %s184 = scalar_select %p183, %s15, 1
      %s185 = smul.addr %s184, 16
      %s186 = smul.addr %s185, 8
      %s187 = scalar_lea.vmem %s4, %s186
      %p188 = scmp.lt.s32.totalorder %s15, 1
      %s189 = scalar_select %p188, %s15, 1
      %s190 = smul.addr %s189, 32
      %s191 = smul.addr %s190, 8
      %s192 = scalar_lea.vmem %s0, %s191
      %p193 = scmp.lt.s32.totalorder %s15, 1
      %s194 = scalar_select %p193, %s15, 1
      %s195 = smul.addr %s194, 16
      %s196 = smul.addr %s195, 8
      %s197 = scalar_lea.vmem %s4, %s196
      %v198 = vld [vmem:[%s192] sm:$0xff]
      %v199 = vld [vmem:[%s192 + $0x8] sm:$0xff]
      %v200 = vld [vmem:[%s192 + $0x10] sm:$0xff]
      %v201 = vld [vmem:[%s192 + $0x18] sm:$0xff]
      %v202 = vld [vmem:[%s192 + $0x20] sm:$0xff]
      %v203 = vld [vmem:[%s192 + $0x28] sm:$0xff]
      %v204 = vld [vmem:[%s192 + $0x30] sm:$0xff]
      %v205 = vld [vmem:[%s192 + $0x38] sm:$0xff]
      %v206 = vld [vmem:[%s192 + $0x40] sm:$0xff]
      %v207 = vld [vmem:[%s192 + $0x48] sm:$0xff]
      %v208 = vld [vmem:[%s192 + $0x50] sm:$0xff]
      %v209 = vld [vmem:[%s192 + $0x58] sm:$0xff]
      %v210 = vld [vmem:[%s192 + $0x60] sm:$0xff]
      %v211 = vld [vmem:[%s192 + $0x68] sm:$0xff]
      %v212 = vld [vmem:[%s192 + $0x70] sm:$0xff]
      %v213 = vld [vmem:[%s192 + $0x78] sm:$0xff]
      %v214 = vld [vmem:[%s192 + $0x80] sm:$0xff]
      %v215 = vld [vmem:[%s192 + $0x88] sm:$0xff]
      %v216 = vld [vmem:[%s192 + $0x90] sm:$0xff]
      %v217 = vld [vmem:[%s192 + $0x98] sm:$0xff]
      %v218 = vld [vmem:[%s192 + $0xa0] sm:$0xff]
      %v219 = vld [vmem:[%s192 + $0xa8] sm:$0xff]
      %v220 = vld [vmem:[%s192 + $0xb0] sm:$0xff]
      %v221 = vld [vmem:[%s192 + $0xb8] sm:$0xff]
      %v222 = vld [vmem:[%s192 + $0xc0] sm:$0xff]
      %v223 = vld [vmem:[%s192 + $0xc8] sm:$0xff]
      %v224 = vld [vmem:[%s192 + $0xd0] sm:$0xff]
      %v225 = vld [vmem:[%s192 + $0xd8] sm:$0xff]
      %v226 = vld [vmem:[%s192 + $0xe0] sm:$0xff]
      %v227 = vld [vmem:[%s192 + $0xe8] sm:$0xff]
      %v228 = vld [vmem:[%s192 + $0xf0] sm:$0xff]
      %v229 = vld [vmem:[%s192 + $0xf8] sm:$0xff]
      %v230 = vld [vmem:[%s1] sm:$0xff]
      %v231 = vld [vmem:[%s1 + $0x8] sm:$0xff]
      %v232 = vld [vmem:[%s1 + $0x10] sm:$0xff]
      %v233 = vld [vmem:[%s1 + $0x18] sm:$0xff]
      %s234 = scalar_lea.vmem %s1, 32
      %v235 = vld [vmem:[%s234] sm:$0xff]
      %v236 = vld [vmem:[%s234 + $0x8] sm:$0xff]
      %v237 = vld [vmem:[%s234 + $0x10] sm:$0xff]
      %v238 = vld [vmem:[%s234 + $0x18] sm:$0xff]
      %vm239 = vcmask 261120
      %v241 = vsel %vm239, %v200, 0
      %v244 = vsel %vm239, %v201, 0
      %v247 = vsel %vm239, %v202, 0
      %v250 = vsel %vm239, %v203, 0
      %v253 = vsel %vm239, %v204, 0
      %v256 = vsel %vm239, %v205, 0
      %v259 = vsel %vm239, %v206, 0
      %v262 = vsel %vm239, %v207, 0
      %v265 = vsel %vm239, %v208, 0
      %v268 = vsel %vm239, %v209, 0
      %v271 = vsel %vm239, %v210, 0
      %v274 = vsel %vm239, %v211, 0
      %v277 = vsel %vm239, %v212, 0
      %v280 = vsel %vm239, %v213, 0
      %v283 = vsel %vm239, %v214, 0
      %v286 = vsel %vm239, %v215, 0
      %288 = vmatpush.msra.mxu0 0.0
      %289 = vmatpush.msra.mxu0 0.0
      %290 = vmatpush.msra.mxu0 0.0
      %291 = vmatpush.msra.mxu0 0.0
      %292 = vmatpush.msra.mxu0 0.0
      %293 = vmatpush.msra.mxu0 0.0
      %294 = vmatpush.msra.mxu0 0.0
      %295 = vmatpush.msra.mxu0 0.0
      %296 = vmatpush.msra.mxu0 0.0
      %297 = vmatpush.msra.mxu0 0.0
      %298 = vmatpush.msra.mxu0 0.0
      %299 = vmatpush.msra.mxu0 0.0
      %300 = vmatpush.msra.mxu0 %v238
      %301 = vmatpush.msra.mxu0 %v237
      %302 = vmatpush.msra.mxu0 %v236
      %303 = vmatpush.msra.mxu0 %v235
      %304 = vmatmul.f32.gmra.mxu0 %v241
      %v305 = vpop.f32.mrf.mxu0
      %v306 = vadd.f32 0.0, %v305
      %307 = vmatmul.f32.gmra.mxu0 %v244
      %v308 = vpop.f32.mrf.mxu0
      %v309 = vadd.f32 0.0, %v308
      %310 = vmatmul.f32.gmra.mxu0 %v247
      %v311 = vpop.f32.mrf.mxu0
      %v312 = vadd.f32 0.0, %v311
      %313 = vmatmul.f32.gmra.mxu0 %v250
      %v314 = vpop.f32.mrf.mxu0
      %v315 = vadd.f32 0.0, %v314
      %316 = vmatmul.f32.gmra.mxu0 %v253
      %v317 = vpop.f32.mrf.mxu0
      %v318 = vadd.f32 0.0, %v317
      %319 = vmatmul.f32.gmra.mxu0 %v256
      %v320 = vpop.f32.mrf.mxu0
      %v321 = vadd.f32 0.0, %v320
      %322 = vmatmul.f32.gmra.mxu0 %v259
      %v323 = vpop.f32.mrf.mxu0
      %v324 = vadd.f32 0.0, %v323
      %325 = vmatmul.f32.gmra.mxu0 %v262
      %v326 = vpop.f32.mrf.mxu0
      %v327 = vadd.f32 0.0, %v326
      %328 = vmatmul.f32.gmra.mxu0 %v265
      %v329 = vpop.f32.mrf.mxu0
      %v330 = vadd.f32 0.0, %v329
      %331 = vmatmul.f32.gmra.mxu0 %v268
      %v332 = vpop.f32.mrf.mxu0
      %v333 = vadd.f32 0.0, %v332
      %334 = vmatmul.f32.gmra.mxu0 %v271
      %v335 = vpop.f32.mrf.mxu0
      %v336 = vadd.f32 0.0, %v335
      %337 = vmatmul.f32.gmra.mxu0 %v274
      %v338 = vpop.f32.mrf.mxu0
      %v339 = vadd.f32 0.0, %v338
      %340 = vmatmul.f32.gmra.mxu0 %v277
      %v341 = vpop.f32.mrf.mxu0
      %v342 = vadd.f32 0.0, %v341
      %343 = vmatmul.f32.gmra.mxu0 %v280
      %v344 = vpop.f32.mrf.mxu0
      %v345 = vadd.f32 0.0, %v344
      %346 = vmatmul.f32.gmra.mxu0 %v283
      %v347 = vpop.f32.mrf.mxu0
      %v348 = vadd.f32 0.0, %v347
      %349 = vmatmul.f32.gmra.mxu0 %v286
      %v350 = vpop.f32.mrf.mxu0
      %v351 = vadd.f32 0.0, %v350
      %352 = vdwg.mxu0
      %v354 = vsel %vm239, %v198, 0
      %v357 = vsel %vm239, %v199, 0
      %359 = vmatpush.msra.mxu0 0.0
      %360 = vmatpush.msra.mxu0 0.0
      %361 = vmatpush.msra.mxu0 0.0
      %362 = vmatpush.msra.mxu0 0.0
      %363 = vmatpush.msra.mxu0 0.0
      %364 = vmatpush.msra.mxu0 0.0
      %365 = vmatpush.msra.mxu0 0.0
      %366 = vmatpush.msra.mxu0 0.0
      %367 = vmatpush.msra.mxu0 0.0
      %368 = vmatpush.msra.mxu0 0.0
      %369 = vmatpush.msra.mxu0 0.0
      %370 = vmatpush.msra.mxu0 0.0
      %371 = vmatpush.msra.mxu0 %v233
      %372 = vmatpush.msra.mxu0 %v232
      %373 = vmatpush.msra.mxu0 %v231
      %374 = vmatpush.msra.mxu0 %v230
      %375 = vmatmul.f32.gmra.mxu0 %v354
      %v376 = vpop.f32.mrf.mxu0
      %v377 = vadd.f32 %v306, %v376
      %378 = vmatmul.f32.gmra.mxu0 %v357
      %v379 = vpop.f32.mrf.mxu0
      %v380 = vadd.f32 %v309, %v379
      %381 = vmatmul.f32.gmra.mxu0 %v241
      %v382 = vpop.f32.mrf.mxu0
      %v383 = vadd.f32 %v312, %v382
      %384 = vmatmul.f32.gmra.mxu0 %v244
      %v385 = vpop.f32.mrf.mxu0
      %v386 = vadd.f32 %v315, %v385
      %387 = vmatmul.f32.gmra.mxu0 %v247
      %v388 = vpop.f32.mrf.mxu0
      %v389 = vadd.f32 %v318, %v388
      %390 = vmatmul.f32.gmra.mxu0 %v250
      %v391 = vpop.f32.mrf.mxu0
      %v392 = vadd.f32 %v321, %v391
      %393 = vmatmul.f32.gmra.mxu0 %v253
      %v394 = vpop.f32.mrf.mxu0
      %v395 = vadd.f32 %v324, %v394
      %396 = vmatmul.f32.gmra.mxu0 %v256
      %v397 = vpop.f32.mrf.mxu0
      %v398 = vadd.f32 %v327, %v397
      %399 = vmatmul.f32.gmra.mxu0 %v259
      %v400 = vpop.f32.mrf.mxu0
      %v401 = vadd.f32 %v330, %v400
      %402 = vmatmul.f32.gmra.mxu0 %v262
      %v403 = vpop.f32.mrf.mxu0
      %v404 = vadd.f32 %v333, %v403
      %405 = vmatmul.f32.gmra.mxu0 %v265
      %v406 = vpop.f32.mrf.mxu0
      %v407 = vadd.f32 %v336, %v406
      %408 = vmatmul.f32.gmra.mxu0 %v268
      %v409 = vpop.f32.mrf.mxu0
      %v410 = vadd.f32 %v339, %v409
      %411 = vmatmul.f32.gmra.mxu0 %v271
      %v412 = vpop.f32.mrf.mxu0
      %v413 = vadd.f32 %v342, %v412
      %414 = vmatmul.f32.gmra.mxu0 %v274
      %v415 = vpop.f32.mrf.mxu0
      %v416 = vadd.f32 %v345, %v415
      %417 = vmatmul.f32.gmra.mxu0 %v277
      %v418 = vpop.f32.mrf.mxu0
      %v419 = vadd.f32 %v348, %v418
      %420 = vmatmul.f32.gmra.mxu0 %v280
      %v421 = vpop.f32.mrf.mxu0
      %v422 = vadd.f32 %v351, %v421
      %423 = vdwg.mxu0
      %s424 = scalar_lea.vmem %s1, 64
      %v425 = vld [vmem:[%s424] sm:$0xff]
      %v426 = vld [vmem:[%s424 + $0x8] sm:$0xff]
      %v427 = vld [vmem:[%s424 + $0x10] sm:$0xff]
      %v428 = vld [vmem:[%s424 + $0x18] sm:$0xff]
      %v430 = vsel %vm239, %v216, 0
      %v433 = vsel %vm239, %v217, 0
      %435 = vmatpush.msra.mxu0 0.0
      %436 = vmatpush.msra.mxu0 0.0
      %437 = vmatpush.msra.mxu0 0.0
      %438 = vmatpush.msra.mxu0 0.0
      %439 = vmatpush.msra.mxu0 0.0
      %440 = vmatpush.msra.mxu0 0.0
      %441 = vmatpush.msra.mxu0 0.0
      %442 = vmatpush.msra.mxu0 0.0
      %443 = vmatpush.msra.mxu0 0.0
      %444 = vmatpush.msra.mxu0 0.0
      %445 = vmatpush.msra.mxu0 0.0
      %446 = vmatpush.msra.mxu0 0.0
      %447 = vmatpush.msra.mxu0 %v428
      %448 = vmatpush.msra.mxu0 %v427
      %449 = vmatpush.msra.mxu0 %v426
      %450 = vmatpush.msra.mxu0 %v425
      %451 = vmatmul.f32.gmra.mxu0 %v247
      %v452 = vpop.f32.mrf.mxu0
      %v453 = vadd.f32 0.0, %v452
      %454 = vmatmul.f32.gmra.mxu0 %v250
      %v455 = vpop.f32.mrf.mxu0
      %v456 = vadd.f32 0.0, %v455
      %457 = vmatmul.f32.gmra.mxu0 %v253
      %v458 = vpop.f32.mrf.mxu0
      %v459 = vadd.f32 0.0, %v458
      %460 = vmatmul.f32.gmra.mxu0 %v256
      %v461 = vpop.f32.mrf.mxu0
      %v462 = vadd.f32 0.0, %v461
      %463 = vmatmul.f32.gmra.mxu0 %v259
      %v464 = vpop.f32.mrf.mxu0
      %v465 = vadd.f32 0.0, %v464
      %466 = vmatmul.f32.gmra.mxu0 %v262
      %v467 = vpop.f32.mrf.mxu0
      %v468 = vadd.f32 0.0, %v467
      %469 = vmatmul.f32.gmra.mxu0 %v265
      %v470 = vpop.f32.mrf.mxu0
      %v471 = vadd.f32 0.0, %v470
      %472 = vmatmul.f32.gmra.mxu0 %v268
      %v473 = vpop.f32.mrf.mxu0
      %v474 = vadd.f32 0.0, %v473
      %475 = vmatmul.f32.gmra.mxu0 %v271
      %v476 = vpop.f32.mrf.mxu0
      %v477 = vadd.f32 0.0, %v476
      %478 = vmatmul.f32.gmra.mxu0 %v274
      %v479 = vpop.f32.mrf.mxu0
      %v480 = vadd.f32 0.0, %v479
      %481 = vmatmul.f32.gmra.mxu0 %v277
      %v482 = vpop.f32.mrf.mxu0
      %v483 = vadd.f32 0.0, %v482
      %484 = vmatmul.f32.gmra.mxu0 %v280
      %v485 = vpop.f32.mrf.mxu0
      %v486 = vadd.f32 0.0, %v485
      %487 = vmatmul.f32.gmra.mxu0 %v283
      %v488 = vpop.f32.mrf.mxu0
      %v489 = vadd.f32 0.0, %v488
      %490 = vmatmul.f32.gmra.mxu0 %v286
      %v491 = vpop.f32.mrf.mxu0
      %v492 = vadd.f32 0.0, %v491
      %493 = vmatmul.f32.gmra.mxu0 %v430
      %v494 = vpop.f32.mrf.mxu0
      %v495 = vadd.f32 0.0, %v494
      %496 = vmatmul.f32.gmra.mxu0 %v433
      %v497 = vpop.f32.mrf.mxu0
      %v498 = vadd.f32 0.0, %v497
      %499 = vdwg.mxu0
      %v500 = vadd.f32 %v377, %v453
      %v501 = vadd.f32 %v380, %v456
      %v502 = vadd.f32 %v383, %v459
      %v503 = vadd.f32 %v386, %v462
      %v504 = vadd.f32 %v389, %v465
      %v505 = vadd.f32 %v392, %v468
      %v506 = vadd.f32 %v395, %v471
      %v507 = vadd.f32 %v398, %v474
      %v508 = vadd.f32 %v401, %v477
      %v509 = vadd.f32 %v404, %v480
      %v510 = vadd.f32 %v407, %v483
      %v511 = vadd.f32 %v410, %v486
      %v512 = vadd.f32 %v413, %v489
      %v513 = vadd.f32 %v416, %v492
      %v514 = vadd.f32 %v419, %v495
      %v515 = vadd.f32 %v422, %v498
      %s516 = scalar_lea.vmem %s1, 96
      %v517 = vld [vmem:[%s516] sm:$0xff]
      %v518 = vld [vmem:[%s516 + $0x8] sm:$0xff]
      %v519 = vld [vmem:[%s516 + $0x10] sm:$0xff]
      %v520 = vld [vmem:[%s516 + $0x18] sm:$0xff]
      %v522 = vsel %vm239, %v218, 0
      %v525 = vsel %vm239, %v219, 0
      %527 = vmatpush.msra.mxu0 0.0
      %528 = vmatpush.msra.mxu0 0.0
      %529 = vmatpush.msra.mxu0 0.0
      %530 = vmatpush.msra.mxu0 0.0
      %531 = vmatpush.msra.mxu0 0.0
      %532 = vmatpush.msra.mxu0 0.0
      %533 = vmatpush.msra.mxu0 0.0
      %534 = vmatpush.msra.mxu0 0.0
      %535 = vmatpush.msra.mxu0 0.0
      %536 = vmatpush.msra.mxu0 0.0
      %537 = vmatpush.msra.mxu0 0.0
      %538 = vmatpush.msra.mxu0 0.0
      %539 = vmatpush.msra.mxu0 %v520
      %540 = vmatpush.msra.mxu0 %v519
      %541 = vmatpush.msra.mxu0 %v518
      %542 = vmatpush.msra.mxu0 %v517
      %543 = vmatmul.f32.gmra.mxu0 %v253
      %v544 = vpop.f32.mrf.mxu0
      %v545 = vadd.f32 0.0, %v544
      %546 = vmatmul.f32.gmra.mxu0 %v256
      %v547 = vpop.f32.mrf.mxu0
      %v548 = vadd.f32 0.0, %v547
      %549 = vmatmul.f32.gmra.mxu0 %v259
      %v550 = vpop.f32.mrf.mxu0
      %v551 = vadd.f32 0.0, %v550
      %552 = vmatmul.f32.gmra.mxu0 %v262
      %v553 = vpop.f32.mrf.mxu0
      %v554 = vadd.f32 0.0, %v553
      %555 = vmatmul.f32.gmra.mxu0 %v265
      %v556 = vpop.f32.mrf.mxu0
      %v557 = vadd.f32 0.0, %v556
      %558 = vmatmul.f32.gmra.mxu0 %v268
      %v559 = vpop.f32.mrf.mxu0
      %v560 = vadd.f32 0.0, %v559
      %561 = vmatmul.f32.gmra.mxu0 %v271
      %v562 = vpop.f32.mrf.mxu0
      %v563 = vadd.f32 0.0, %v562
      %564 = vmatmul.f32.gmra.mxu0 %v274
      %v565 = vpop.f32.mrf.mxu0
      %v566 = vadd.f32 0.0, %v565
      %567 = vmatmul.f32.gmra.mxu0 %v277
      %v568 = vpop.f32.mrf.mxu0
      %v569 = vadd.f32 0.0, %v568
      %570 = vmatmul.f32.gmra.mxu0 %v280
      %v571 = vpop.f32.mrf.mxu0
      %v572 = vadd.f32 0.0, %v571
      %573 = vmatmul.f32.gmra.mxu0 %v283
      %v574 = vpop.f32.mrf.mxu0
      %v575 = vadd.f32 0.0, %v574
      %576 = vmatmul.f32.gmra.mxu0 %v286
      %v577 = vpop.f32.mrf.mxu0
      %v578 = vadd.f32 0.0, %v577
      %579 = vmatmul.f32.gmra.mxu0 %v430
      %v580 = vpop.f32.mrf.mxu0
      %v581 = vadd.f32 0.0, %v580
      %582 = vmatmul.f32.gmra.mxu0 %v433
      %v583 = vpop.f32.mrf.mxu0
      %v584 = vadd.f32 0.0, %v583
      %585 = vmatmul.f32.gmra.mxu0 %v522
      %v586 = vpop.f32.mrf.mxu0
      %v587 = vadd.f32 0.0, %v586
      %588 = vmatmul.f32.gmra.mxu0 %v525
      %v589 = vpop.f32.mrf.mxu0
      %v590 = vadd.f32 0.0, %v589
      %591 = vdwg.mxu0
      %v592 = vadd.f32 %v500, %v545
      %v593 = vadd.f32 %v501, %v548
      %v594 = vadd.f32 %v502, %v551
      %v595 = vadd.f32 %v503, %v554
      %v596 = vadd.f32 %v504, %v557
      %v597 = vadd.f32 %v505, %v560
      %v598 = vadd.f32 %v506, %v563
      %v599 = vadd.f32 %v507, %v566
      %v600 = vadd.f32 %v508, %v569
      %v601 = vadd.f32 %v509, %v572
      %v602 = vadd.f32 %v510, %v575
      %v603 = vadd.f32 %v511, %v578
      %v604 = vadd.f32 %v512, %v581
      %v605 = vadd.f32 %v513, %v584
      %v606 = vadd.f32 %v514, %v587
      %v607 = vadd.f32 %v515, %v590
      %s608 = scalar_lea.vmem %s1, 128
      %v609 = vld [vmem:[%s608] sm:$0xff]
      %v610 = vld [vmem:[%s608 + $0x8] sm:$0xff]
      %v611 = vld [vmem:[%s608 + $0x10] sm:$0xff]
      %v612 = vld [vmem:[%s608 + $0x18] sm:$0xff]
      %v614 = vsel %vm239, %v220, 0
      %v617 = vsel %vm239, %v221, 0
      %619 = vmatpush.msra.mxu0 0.0
      %620 = vmatpush.msra.mxu0 0.0
      %621 = vmatpush.msra.mxu0 0.0
      %622 = vmatpush.msra.mxu0 0.0
      %623 = vmatpush.msra.mxu0 0.0
      %624 = vmatpush.msra.mxu0 0.0
      %625 = vmatpush.msra.mxu0 0.0
      %626 = vmatpush.msra.mxu0 0.0
      %627 = vmatpush.msra.mxu0 0.0
      %628 = vmatpush.msra.mxu0 0.0
      %629 = vmatpush.msra.mxu0 0.0
      %630 = vmatpush.msra.mxu0 0.0
      %631 = vmatpush.msra.mxu0 %v612
      %632 = vmatpush.msra.mxu0 %v611
      %633 = vmatpush.msra.mxu0 %v610
      %634 = vmatpush.msra.mxu0 %v609
      %635 = vmatmul.f32.gmra.mxu0 %v259
      %v636 = vpop.f32.mrf.mxu0
      %v637 = vadd.f32 0.0, %v636
      %638 = vmatmul.f32.gmra.mxu0 %v262
      %v639 = vpop.f32.mrf.mxu0
      %v640 = vadd.f32 0.0, %v639
      %641 = vmatmul.f32.gmra.mxu0 %v265
      %v642 = vpop.f32.mrf.mxu0
      %v643 = vadd.f32 0.0, %v642
      %644 = vmatmul.f32.gmra.mxu0 %v268
      %v645 = vpop.f32.mrf.mxu0
      %v646 = vadd.f32 0.0, %v645
      %647 = vmatmul.f32.gmra.mxu0 %v271
      %v648 = vpop.f32.mrf.mxu0
      %v649 = vadd.f32 0.0, %v648
      %650 = vmatmul.f32.gmra.mxu0 %v274
      %v651 = vpop.f32.mrf.mxu0
      %v652 = vadd.f32 0.0, %v651
      %653 = vmatmul.f32.gmra.mxu0 %v277
      %v654 = vpop.f32.mrf.mxu0
      %v655 = vadd.f32 0.0, %v654
      %656 = vmatmul.f32.gmra.mxu0 %v280
      %v657 = vpop.f32.mrf.mxu0
      %v658 = vadd.f32 0.0, %v657
      %659 = vmatmul.f32.gmra.mxu0 %v283
      %v660 = vpop.f32.mrf.mxu0
      %v661 = vadd.f32 0.0, %v660
      %662 = vmatmul.f32.gmra.mxu0 %v286
      %v663 = vpop.f32.mrf.mxu0
      %v664 = vadd.f32 0.0, %v663
      %665 = vmatmul.f32.gmra.mxu0 %v430
      %v666 = vpop.f32.mrf.mxu0
      %v667 = vadd.f32 0.0, %v666
      %668 = vmatmul.f32.gmra.mxu0 %v433
      %v669 = vpop.f32.mrf.mxu0
      %v670 = vadd.f32 0.0, %v669
      %671 = vmatmul.f32.gmra.mxu0 %v522
      %v672 = vpop.f32.mrf.mxu0
      %v673 = vadd.f32 0.0, %v672
      %674 = vmatmul.f32.gmra.mxu0 %v525
      %v675 = vpop.f32.mrf.mxu0
      %v676 = vadd.f32 0.0, %v675
      %677 = vmatmul.f32.gmra.mxu0 %v614
      %v678 = vpop.f32.mrf.mxu0
      %v679 = vadd.f32 0.0, %v678
      %680 = vmatmul.f32.gmra.mxu0 %v617
      %v681 = vpop.f32.mrf.mxu0
      %v682 = vadd.f32 0.0, %v681
      %683 = vdwg.mxu0
      %v684 = vadd.f32 %v592, %v637
      %v685 = vadd.f32 %v593, %v640
      %v686 = vadd.f32 %v594, %v643
      %v687 = vadd.f32 %v595, %v646
      %v688 = vadd.f32 %v596, %v649
      %v689 = vadd.f32 %v597, %v652
      %v690 = vadd.f32 %v598, %v655
      %v691 = vadd.f32 %v599, %v658
      %v692 = vadd.f32 %v600, %v661
      %v693 = vadd.f32 %v601, %v664
      %v694 = vadd.f32 %v602, %v667
      %v695 = vadd.f32 %v603, %v670
      %v696 = vadd.f32 %v604, %v673
      %v697 = vadd.f32 %v605, %v676
      %v698 = vadd.f32 %v606, %v679
      %v699 = vadd.f32 %v607, %v682
      %s700 = scalar_lea.vmem %s1, 160
      %v701 = vld [vmem:[%s700] sm:$0xff]
      %v702 = vld [vmem:[%s700 + $0x8] sm:$0xff]
      %v703 = vld [vmem:[%s700 + $0x10] sm:$0xff]
      %v704 = vld [vmem:[%s700 + $0x18] sm:$0xff]
      %v706 = vsel %vm239, %v222, 0
      %v709 = vsel %vm239, %v223, 0
      %711 = vmatpush.msra.mxu0 0.0
      %712 = vmatpush.msra.mxu0 0.0
      %713 = vmatpush.msra.mxu0 0.0
      %714 = vmatpush.msra.mxu0 0.0
      %715 = vmatpush.msra.mxu0 0.0
      %716 = vmatpush.msra.mxu0 0.0
      %717 = vmatpush.msra.mxu0 0.0
      %718 = vmatpush.msra.mxu0 0.0
      %719 = vmatpush.msra.mxu0 0.0
      %720 = vmatpush.msra.mxu0 0.0
      %721 = vmatpush.msra.mxu0 0.0
      %722 = vmatpush.msra.mxu0 0.0
      %723 = vmatpush.msra.mxu0 %v704
      %724 = vmatpush.msra.mxu0 %v703
      %725 = vmatpush.msra.mxu0 %v702
      %726 = vmatpush.msra.mxu0 %v701
      %727 = vmatmul.f32.gmra.mxu0 %v265
      %v728 = vpop.f32.mrf.mxu0
      %v729 = vadd.f32 0.0, %v728
      %730 = vmatmul.f32.gmra.mxu0 %v268
      %v731 = vpop.f32.mrf.mxu0
      %v732 = vadd.f32 0.0, %v731
      %733 = vmatmul.f32.gmra.mxu0 %v271
      %v734 = vpop.f32.mrf.mxu0
      %v735 = vadd.f32 0.0, %v734
      %736 = vmatmul.f32.gmra.mxu0 %v274
      %v737 = vpop.f32.mrf.mxu0
      %v738 = vadd.f32 0.0, %v737
      %739 = vmatmul.f32.gmra.mxu0 %v277
      %v740 = vpop.f32.mrf.mxu0
      %v741 = vadd.f32 0.0, %v740
      %742 = vmatmul.f32.gmra.mxu0 %v280
      %v743 = vpop.f32.mrf.mxu0
      %v744 = vadd.f32 0.0, %v743
      %745 = vmatmul.f32.gmra.mxu0 %v283
      %v746 = vpop.f32.mrf.mxu0
      %v747 = vadd.f32 0.0, %v746
      %748 = vmatmul.f32.gmra.mxu0 %v286
      %v749 = vpop.f32.mrf.mxu0
      %v750 = vadd.f32 0.0, %v749
      %751 = vmatmul.f32.gmra.mxu0 %v430
      %v752 = vpop.f32.mrf.mxu0
      %v753 = vadd.f32 0.0, %v752
      %754 = vmatmul.f32.gmra.mxu0 %v433
      %v755 = vpop.f32.mrf.mxu0
      %v756 = vadd.f32 0.0, %v755
      %757 = vmatmul.f32.gmra.mxu0 %v522
      %v758 = vpop.f32.mrf.mxu0
      %v759 = vadd.f32 0.0, %v758
      %760 = vmatmul.f32.gmra.mxu0 %v525
      %v761 = vpop.f32.mrf.mxu0
      %v762 = vadd.f32 0.0, %v761
      %763 = vmatmul.f32.gmra.mxu0 %v614
      %v764 = vpop.f32.mrf.mxu0
      %v765 = vadd.f32 0.0, %v764
      %766 = vmatmul.f32.gmra.mxu0 %v617
      %v767 = vpop.f32.mrf.mxu0
      %v768 = vadd.f32 0.0, %v767
      %769 = vmatmul.f32.gmra.mxu0 %v706
      %v770 = vpop.f32.mrf.mxu0
      %v771 = vadd.f32 0.0, %v770
      %772 = vmatmul.f32.gmra.mxu0 %v709
      %v773 = vpop.f32.mrf.mxu0
      %v774 = vadd.f32 0.0, %v773
      %775 = vdwg.mxu0
      %v776 = vadd.f32 %v684, %v729
      %v777 = vadd.f32 %v685, %v732
      %v778 = vadd.f32 %v686, %v735
      %v779 = vadd.f32 %v687, %v738
      %v780 = vadd.f32 %v688, %v741
      %v781 = vadd.f32 %v689, %v744
      %v782 = vadd.f32 %v690, %v747
      %v783 = vadd.f32 %v691, %v750
      %v784 = vadd.f32 %v692, %v753
      %v785 = vadd.f32 %v693, %v756
      %v786 = vadd.f32 %v694, %v759
      %v787 = vadd.f32 %v695, %v762
      %v788 = vadd.f32 %v696, %v765
      %v789 = vadd.f32 %v697, %v768
      %v790 = vadd.f32 %v698, %v771
      %v791 = vadd.f32 %v699, %v774
      %s792 = scalar_lea.vmem %s1, 192
      %v793 = vld [vmem:[%s792] sm:$0xff]
      %v794 = vld [vmem:[%s792 + $0x8] sm:$0xff]
      %v795 = vld [vmem:[%s792 + $0x10] sm:$0xff]
      %v796 = vld [vmem:[%s792 + $0x18] sm:$0xff]
      %v798 = vsel %vm239, %v224, 0
      %v801 = vsel %vm239, %v225, 0
      %803 = vmatpush.msra.mxu0 0.0
      %804 = vmatpush.msra.mxu0 0.0
      %805 = vmatpush.msra.mxu0 0.0
      %806 = vmatpush.msra.mxu0 0.0
      %807 = vmatpush.msra.mxu0 0.0
      %808 = vmatpush.msra.mxu0 0.0
      %809 = vmatpush.msra.mxu0 0.0
      %810 = vmatpush.msra.mxu0 0.0
      %811 = vmatpush.msra.mxu0 0.0
      %812 = vmatpush.msra.mxu0 0.0
      %813 = vmatpush.msra.mxu0 0.0
      %814 = vmatpush.msra.mxu0 0.0
      %815 = vmatpush.msra.mxu0 %v796
      %816 = vmatpush.msra.mxu0 %v795
      %817 = vmatpush.msra.mxu0 %v794
      %818 = vmatpush.msra.mxu0 %v793
      %819 = vmatmul.f32.gmra.mxu0 %v271
      %v820 = vpop.f32.mrf.mxu0
      %v821 = vadd.f32 0.0, %v820
      %822 = vmatmul.f32.gmra.mxu0 %v274
      %v823 = vpop.f32.mrf.mxu0
      %v824 = vadd.f32 0.0, %v823
      %825 = vmatmul.f32.gmra.mxu0 %v277
      %v826 = vpop.f32.mrf.mxu0
      %v827 = vadd.f32 0.0, %v826
      %828 = vmatmul.f32.gmra.mxu0 %v280
      %v829 = vpop.f32.mrf.mxu0
      %v830 = vadd.f32 0.0, %v829
      %831 = vmatmul.f32.gmra.mxu0 %v283
      %v832 = vpop.f32.mrf.mxu0
      %v833 = vadd.f32 0.0, %v832
      %834 = vmatmul.f32.gmra.mxu0 %v286
      %v835 = vpop.f32.mrf.mxu0
      %v836 = vadd.f32 0.0, %v835
      %837 = vmatmul.f32.gmra.mxu0 %v430
      %v838 = vpop.f32.mrf.mxu0
      %v839 = vadd.f32 0.0, %v838
      %840 = vmatmul.f32.gmra.mxu0 %v433
      %v841 = vpop.f32.mrf.mxu0
      %v842 = vadd.f32 0.0, %v841
      %843 = vmatmul.f32.gmra.mxu0 %v522
      %v844 = vpop.f32.mrf.mxu0
      %v845 = vadd.f32 0.0, %v844
      %846 = vmatmul.f32.gmra.mxu0 %v525
      %v847 = vpop.f32.mrf.mxu0
      %v848 = vadd.f32 0.0, %v847
      %849 = vmatmul.f32.gmra.mxu0 %v614
      %v850 = vpop.f32.mrf.mxu0
      %v851 = vadd.f32 0.0, %v850
      %852 = vmatmul.f32.gmra.mxu0 %v617
      %v853 = vpop.f32.mrf.mxu0
      %v854 = vadd.f32 0.0, %v853
      %855 = vmatmul.f32.gmra.mxu0 %v706
      %v856 = vpop.f32.mrf.mxu0
      %v857 = vadd.f32 0.0, %v856
      %858 = vmatmul.f32.gmra.mxu0 %v709
      %v859 = vpop.f32.mrf.mxu0
      %v860 = vadd.f32 0.0, %v859
      %861 = vmatmul.f32.gmra.mxu0 %v798
      %v862 = vpop.f32.mrf.mxu0
      %v863 = vadd.f32 0.0, %v862
      %864 = vmatmul.f32.gmra.mxu0 %v801
      %v865 = vpop.f32.mrf.mxu0
      %v866 = vadd.f32 0.0, %v865
      %867 = vdwg.mxu0
      %v868 = vadd.f32 %v776, %v821
      %v869 = vadd.f32 %v777, %v824
      %v870 = vadd.f32 %v778, %v827
      %v871 = vadd.f32 %v779, %v830
      %v872 = vadd.f32 %v780, %v833
      %v873 = vadd.f32 %v781, %v836
      %v874 = vadd.f32 %v782, %v839
      %v875 = vadd.f32 %v783, %v842
      %v876 = vadd.f32 %v784, %v845
      %v877 = vadd.f32 %v785, %v848
      %v878 = vadd.f32 %v786, %v851
      %v879 = vadd.f32 %v787, %v854
      %v880 = vadd.f32 %v788, %v857
      %v881 = vadd.f32 %v789, %v860
      %v882 = vadd.f32 %v790, %v863
      %v883 = vadd.f32 %v791, %v866
      %s884 = scalar_lea.vmem %s1, 224
      %v885 = vld [vmem:[%s884] sm:$0xff]
      %v886 = vld [vmem:[%s884 + $0x8] sm:$0xff]
      %v887 = vld [vmem:[%s884 + $0x10] sm:$0xff]
      %v888 = vld [vmem:[%s884 + $0x18] sm:$0xff]
      %v890 = vsel %vm239, %v226, 0
      %v893 = vsel %vm239, %v227, 0
      %895 = vmatpush.msra.mxu0 0.0
      %896 = vmatpush.msra.mxu0 0.0
      %897 = vmatpush.msra.mxu0 0.0
      %898 = vmatpush.msra.mxu0 0.0
      %899 = vmatpush.msra.mxu0 0.0
      %900 = vmatpush.msra.mxu0 0.0
      %901 = vmatpush.msra.mxu0 0.0
      %902 = vmatpush.msra.mxu0 0.0
      %903 = vmatpush.msra.mxu0 0.0
      %904 = vmatpush.msra.mxu0 0.0
      %905 = vmatpush.msra.mxu0 0.0
      %906 = vmatpush.msra.mxu0 0.0
      %907 = vmatpush.msra.mxu0 %v888
      %908 = vmatpush.msra.mxu0 %v887
      %909 = vmatpush.msra.mxu0 %v886
      %910 = vmatpush.msra.mxu0 %v885
      %911 = vmatmul.f32.gmra.mxu0 %v277
      %v912 = vpop.f32.mrf.mxu0
      %v913 = vadd.f32 0.0, %v912
      %914 = vmatmul.f32.gmra.mxu0 %v280
      %v915 = vpop.f32.mrf.mxu0
      %v916 = vadd.f32 0.0, %v915
      %917 = vmatmul.f32.gmra.mxu0 %v283
      %v918 = vpop.f32.mrf.mxu0
      %v919 = vadd.f32 0.0, %v918
      %920 = vmatmul.f32.gmra.mxu0 %v286
      %v921 = vpop.f32.mrf.mxu0
      %v922 = vadd.f32 0.0, %v921
      %923 = vmatmul.f32.gmra.mxu0 %v430
      %v924 = vpop.f32.mrf.mxu0
      %v925 = vadd.f32 0.0, %v924
      %926 = vmatmul.f32.gmra.mxu0 %v433
      %v927 = vpop.f32.mrf.mxu0
      %v928 = vadd.f32 0.0, %v927
      %929 = vmatmul.f32.gmra.mxu0 %v522
      %v930 = vpop.f32.mrf.mxu0
      %v931 = vadd.f32 0.0, %v930
      %932 = vmatmul.f32.gmra.mxu0 %v525
      %v933 = vpop.f32.mrf.mxu0
      %v934 = vadd.f32 0.0, %v933
      %935 = vmatmul.f32.gmra.mxu0 %v614
      %v936 = vpop.f32.mrf.mxu0
      %v937 = vadd.f32 0.0, %v936
      %938 = vmatmul.f32.gmra.mxu0 %v617
      %v939 = vpop.f32.mrf.mxu0
      %v940 = vadd.f32 0.0, %v939
      %941 = vmatmul.f32.gmra.mxu0 %v706
      %v942 = vpop.f32.mrf.mxu0
      %v943 = vadd.f32 0.0, %v942
      %944 = vmatmul.f32.gmra.mxu0 %v709
      %v945 = vpop.f32.mrf.mxu0
      %v946 = vadd.f32 0.0, %v945
      %947 = vmatmul.f32.gmra.mxu0 %v798
      %v948 = vpop.f32.mrf.mxu0
      %v949 = vadd.f32 0.0, %v948
      %950 = vmatmul.f32.gmra.mxu0 %v801
      %v951 = vpop.f32.mrf.mxu0
      %v952 = vadd.f32 0.0, %v951
      %953 = vmatmul.f32.gmra.mxu0 %v890
      %v954 = vpop.f32.mrf.mxu0
      %v955 = vadd.f32 0.0, %v954
      %956 = vmatmul.f32.gmra.mxu0 %v893
      %v957 = vpop.f32.mrf.mxu0
      %v958 = vadd.f32 0.0, %v957
      %959 = vdwg.mxu0
      %v960 = vadd.f32 %v868, %v913
      %v961 = vadd.f32 %v869, %v916
      %v962 = vadd.f32 %v870, %v919
      %v963 = vadd.f32 %v871, %v922
      %v964 = vadd.f32 %v872, %v925
      %v965 = vadd.f32 %v873, %v928
      %v966 = vadd.f32 %v874, %v931
      %v967 = vadd.f32 %v875, %v934
      %v968 = vadd.f32 %v876, %v937
      %v969 = vadd.f32 %v877, %v940
      %v970 = vadd.f32 %v878, %v943
      %v971 = vadd.f32 %v879, %v946
      %v972 = vadd.f32 %v880, %v949
      %v973 = vadd.f32 %v881, %v952
      %v974 = vadd.f32 %v882, %v955
      %v975 = vadd.f32 %v883, %v958
      %s976 = scalar_lea.vmem %s1, 256
      %v977 = vld [vmem:[%s976] sm:$0xff]
      %v978 = vld [vmem:[%s976 + $0x8] sm:$0xff]
      %v979 = vld [vmem:[%s976 + $0x10] sm:$0xff]
      %v980 = vld [vmem:[%s976 + $0x18] sm:$0xff]
      %v982 = vsel %vm239, %v228, 0
      %v985 = vsel %vm239, %v229, 0
      %987 = vmatpush.msra.mxu0 0.0
      %988 = vmatpush.msra.mxu0 0.0
      %989 = vmatpush.msra.mxu0 0.0
      %990 = vmatpush.msra.mxu0 0.0
      %991 = vmatpush.msra.mxu0 0.0
      %992 = vmatpush.msra.mxu0 0.0
      %993 = vmatpush.msra.mxu0 0.0
      %994 = vmatpush.msra.mxu0 0.0
      %995 = vmatpush.msra.mxu0 0.0
      %996 = vmatpush.msra.mxu0 0.0
      %997 = vmatpush.msra.mxu0 0.0
      %998 = vmatpush.msra.mxu0 0.0
      %999 = vmatpush.msra.mxu0 %v980
      %1000 = vmatpush.msra.mxu0 %v979
      %1001 = vmatpush.msra.mxu0 %v978
      %1002 = vmatpush.msra.mxu0 %v977
      %1003 = vmatmul.f32.gmra.mxu0 %v283
      %v1004 = vpop.f32.mrf.mxu0
      %v1005 = vadd.f32 0.0, %v1004
      %1006 = vmatmul.f32.gmra.mxu0 %v286
      %v1007 = vpop.f32.mrf.mxu0
      %v1008 = vadd.f32 0.0, %v1007
      %1009 = vmatmul.f32.gmra.mxu0 %v430
      %v1010 = vpop.f32.mrf.mxu0
      %v1011 = vadd.f32 0.0, %v1010
      %1012 = vmatmul.f32.gmra.mxu0 %v433
      %v1013 = vpop.f32.mrf.mxu0
      %v1014 = vadd.f32 0.0, %v1013
      %1015 = vmatmul.f32.gmra.mxu0 %v522
      %v1016 = vpop.f32.mrf.mxu0
      %v1017 = vadd.f32 0.0, %v1016
      %1018 = vmatmul.f32.gmra.mxu0 %v525
      %v1019 = vpop.f32.mrf.mxu0
      %v1020 = vadd.f32 0.0, %v1019
      %1021 = vmatmul.f32.gmra.mxu0 %v614
      %v1022 = vpop.f32.mrf.mxu0
      %v1023 = vadd.f32 0.0, %v1022
      %1024 = vmatmul.f32.gmra.mxu0 %v617
      %v1025 = vpop.f32.mrf.mxu0
      %v1026 = vadd.f32 0.0, %v1025
      %1027 = vmatmul.f32.gmra.mxu0 %v706
      %v1028 = vpop.f32.mrf.mxu0
      %v1029 = vadd.f32 0.0, %v1028
      %1030 = vmatmul.f32.gmra.mxu0 %v709
      %v1031 = vpop.f32.mrf.mxu0
      %v1032 = vadd.f32 0.0, %v1031
      %1033 = vmatmul.f32.gmra.mxu0 %v798
      %v1034 = vpop.f32.mrf.mxu0
      %v1035 = vadd.f32 0.0, %v1034
      %1036 = vmatmul.f32.gmra.mxu0 %v801
      %v1037 = vpop.f32.mrf.mxu0
      %v1038 = vadd.f32 0.0, %v1037
      %1039 = vmatmul.f32.gmra.mxu0 %v890
      %v1040 = vpop.f32.mrf.mxu0
      %v1041 = vadd.f32 0.0, %v1040
      %1042 = vmatmul.f32.gmra.mxu0 %v893
      %v1043 = vpop.f32.mrf.mxu0
      %v1044 = vadd.f32 0.0, %v1043
      %1045 = vmatmul.f32.gmra.mxu0 %v982
      %v1046 = vpop.f32.mrf.mxu0
      %v1047 = vadd.f32 0.0, %v1046
      %1048 = vmatmul.f32.gmra.mxu0 %v985
      %v1049 = vpop.f32.mrf.mxu0
      %v1050 = vadd.f32 0.0, %v1049
      %1051 = vdwg.mxu0
      %v1052 = vadd.f32 %v960, %v1005
      %v1053 = vadd.f32 %v961, %v1008
      %v1054 = vadd.f32 %v962, %v1011
      %v1055 = vadd.f32 %v963, %v1014
      %v1056 = vadd.f32 %v964, %v1017
      %v1057 = vadd.f32 %v965, %v1020
      %v1058 = vadd.f32 %v966, %v1023
      %v1059 = vadd.f32 %v967, %v1026
      %v1060 = vadd.f32 %v968, %v1029
      %v1061 = vadd.f32 %v969, %v1032
      %v1062 = vadd.f32 %v970, %v1035
      %v1063 = vadd.f32 %v971, %v1038
      %v1064 = vadd.f32 %v972, %v1041
      %v1065 = vadd.f32 %v973, %v1044
      %v1066 = vadd.f32 %v974, %v1047
      %v1067 = vadd.f32 %v975, %v1050
      %v1068 = vld [vmem:[%s2] sm:$0x1]
      %v1070 = vperm.slane %v1068, 0
      %v1072 = vmul.f32 %v1052, %v1070
      %v1073 = vmul.f32 %v1053, %v1070
      %v1074 = vmul.f32 %v1054, %v1070
      %v1075 = vmul.f32 %v1055, %v1070
      %v1076 = vmul.f32 %v1056, %v1070
      %v1077 = vmul.f32 %v1057, %v1070
      %v1078 = vmul.f32 %v1058, %v1070
      %v1079 = vmul.f32 %v1059, %v1070
      %v1080 = vmul.f32 %v1060, %v1070
      %v1081 = vmul.f32 %v1061, %v1070
      %v1082 = vmul.f32 %v1062, %v1070
      %v1083 = vmul.f32 %v1063, %v1070
      %v1084 = vmul.f32 %v1064, %v1070
      %v1085 = vmul.f32 %v1065, %v1070
      %v1086 = vmul.f32 %v1066, %v1070
      %v1087 = vmul.f32 %v1067, %v1070
      %v1088 = vld [vmem:[%s3] sm:$0x1]
      %v1090 = vperm.slane %v1088, 0
      %v1092 = vadd.f32 %v1072, %v1090
      %v1093 = vadd.f32 %v1073, %v1090
      %v1094 = vadd.f32 %v1074, %v1090
      %v1095 = vadd.f32 %v1075, %v1090
      %v1096 = vadd.f32 %v1076, %v1090
      %v1097 = vadd.f32 %v1077, %v1090
      %v1098 = vadd.f32 %v1078, %v1090
      %v1099 = vadd.f32 %v1079, %v1090
      %v1100 = vadd.f32 %v1080, %v1090
      %v1101 = vadd.f32 %v1081, %v1090
      %v1102 = vadd.f32 %v1082, %v1090
      %v1103 = vadd.f32 %v1083, %v1090
      %v1104 = vadd.f32 %v1084, %v1090
      %v1105 = vadd.f32 %v1085, %v1090
      %v1106 = vadd.f32 %v1086, %v1090
      %v1107 = vadd.f32 %v1087, %v1090
      %v1108 = vmax.f32 %v1092, 0.0
      %v1109 = vmax.f32 %v1093, 0.0
      %v1110 = vmax.f32 %v1094, 0.0
      %v1111 = vmax.f32 %v1095, 0.0
      %v1112 = vmax.f32 %v1096, 0.0
      %v1113 = vmax.f32 %v1097, 0.0
      %v1114 = vmax.f32 %v1098, 0.0
      %v1115 = vmax.f32 %v1099, 0.0
      %v1116 = vmax.f32 %v1100, 0.0
      %v1117 = vmax.f32 %v1101, 0.0
      %v1118 = vmax.f32 %v1102, 0.0
      %v1119 = vmax.f32 %v1103, 0.0
      %v1120 = vmax.f32 %v1104, 0.0
      %v1121 = vmax.f32 %v1105, 0.0
      %v1122 = vmax.f32 %v1106, 0.0
      %v1123 = vmax.f32 %v1107, 0.0
      %1124 = vst.msk [vmem:[%s197] sm:$0xff] %vm239, %v1108
      %1125 = vst.msk [vmem:[%s197 + $0x8] sm:$0xff] %vm239, %v1109
      %1126 = vst.msk [vmem:[%s197 + $0x10] sm:$0xff] %vm239, %v1110
      %1127 = vst.msk [vmem:[%s197 + $0x18] sm:$0xff] %vm239, %v1111
      %1128 = vst.msk [vmem:[%s197 + $0x20] sm:$0xff] %vm239, %v1112
      %1129 = vst.msk [vmem:[%s197 + $0x28] sm:$0xff] %vm239, %v1113
      %1130 = vst.msk [vmem:[%s197 + $0x30] sm:$0xff] %vm239, %v1114
      %1131 = vst.msk [vmem:[%s197 + $0x38] sm:$0xff] %vm239, %v1115
      %1132 = vst.msk [vmem:[%s197 + $0x40] sm:$0xff] %vm239, %v1116
      %1133 = vst.msk [vmem:[%s197 + $0x48] sm:$0xff] %vm239, %v1117
      %1134 = vst.msk [vmem:[%s197 + $0x50] sm:$0xff] %vm239, %v1118
      %1135 = vst.msk [vmem:[%s197 + $0x58] sm:$0xff] %vm239, %v1119
      %1136 = vst.msk [vmem:[%s197 + $0x60] sm:$0xff] %vm239, %v1120
      %1137 = vst.msk [vmem:[%s197 + $0x68] sm:$0xff] %vm239, %v1121
      %1138 = vst.msk [vmem:[%s197 + $0x70] sm:$0xff] %vm239, %v1122
      %1139 = vst.msk [vmem:[%s197 + $0x78] sm:$0xff] %vm239, %v1123
      %p1140 = scmp.lt.s32.totalorder %s15, 1
      %s1141 = scalar_select %p1140, %s15, 1
      %s1142 = smul.addr %s1141, 16
      %s1143 = smul.addr %s1142, 8
      %s1144 = scalar_lea.vmem %s4, %s1143
      // Predicated region
      $region37: #{_lambda_.17} parent=35 // pred_check
        %p1145 = pneg %p122
      $region38: #{_lambda_.17} parent=35 // pred_check_branch
        %1147 = sbr.rel (%p1145) target = $region40
      $region39: #{_lambda_.17} parent=35 // pred_region
        _
      $region40: #{_lambda_.17} parent=35 // pred_fallthru
        _
    $region36: #{_lambda_.17} parent=5 // pred_fallthru
      _
    %p1148 = scmp.le.s32.totalorder 2, %s10
    // Predicated region
    $region41: #{_lambda_.17} parent=5 // pred_check
      %p1149 = pneg %p1148
    $region42: #{_lambda_.17} parent=5 // pred_check_branch
      %1151 = sbr.rel (%p1149) target = $region44
    $region43: #{_lambda_.17} parent=5 // pred_region
      %s1152 = ssub.s32 %s10, 2
      // Predicated region
      $region45: #{_lambda_.17} parent=43 // pred_check
        %p1153 = pneg %p128
      $region46: #{_lambda_.17} parent=43 // pred_check_branch
        %1155 = sbr.rel (%p1153) target = $region48
      $region47: #{_lambda_.17} parent=43 // pred_region
        %p1156 = scmp.lt.s32.totalorder %s16, 1
        %s1157 = scalar_select %p1156, %s16, 1
        %s1158 = smul.addr %s1157, 16
        %s1159 = smul.addr %s1158, 8
        %s1160 = scalar_lea.vmem %s4, %s1159
      $region48: #{_lambda_.17} parent=43 // pred_fallthru
        _
    $region44: #{_lambda_.17} parent=5 // pred_fallthru
      _
  $region6: #{_lambda_.17} parent=0 // loop_footer
    %s14 = sadd.s32 1, %s10
  $region7: #{_lambda_.17} parent=0 // loop_footer_branch
    %9 = sbr.rel target = $region3
  $region8: #{_lambda_.17} parent=0 // loop_exit
    _

// kernel: tile.10
$region0: #{tile.10}
  #allocation0 [shape = 's32[1]{0}', space=sflag, size = 0x4, scoped, tag = 'scoped memory for tile.10']
  %s0 = inlined_call_operand.vmem [shape: f32[4], index: 0, kind: input, shape index: {}]
  %s1 = inlined_call_operand.vmem [shape: f32[2,4], index: 1, kind: output, shape index: {}]
  // Predicated region
  $region2: #{tile.10} parent=0 // pred_check
    _
  $region3: #{tile.10} parent=0 // pred_check_branch
    %3 = sbr.rel (0) target = $region5
  $region4: #{tile.10} parent=0 // pred_region
    _
  $region5: #{tile.10} parent=0 // pred_fallthru
    _
  %v4 = vld [vmem:[%s0] ss:$0 sm:$0xff]
  %5 = vst [vmem:[%s1] sm:$0x3] %v4

// kernel: _lambda_.19
$region0: #{_lambda_.19}
  #allocation0 [shape = 'u32[]', space=smem, size = 0x4, offset = 0x4, fixed_abs, tag = 'smem constant byte address 0x4 - core index']
  #allocation1 [shape = 'u32[72,128]{1,0:T(1,128)}', space=vmem, size = 0x9000, scoped, tag = 'internal scratch']
  %s0 = inlined_call_operand.vmem [shape: f32[2,256,4], index: 0, kind: input, shape index: {}]
  %s1 = inlined_call_operand.vmem [shape: f32[9,4,28], index: 1, kind: input, shape index: {}]
  %s2 = inlined_call_operand.vmem [shape: f32[1,28], index: 2, kind: input, shape index: {}]
  %s3 = inlined_call_operand.vmem [shape: f32[1,28], index: 3, kind: input, shape index: {}]
  %s4 = inlined_call_operand.vmem [shape: f32[2,128,28], index: 4, kind: output, shape index: {}]
  %s5 = sld [smem:[#allocation0]]
  $region49: #{_lambda_.19} parent=0
    _
  %s7 = ssub.s32 1, %s5
  %s8 = scalar_select 0, %s7, %s5
  loop: start=0, step=1, limit=4
  $region2: #{_lambda_.19} parent=0 // loop_pre_header
    _
  $region3: #{_lambda_.19} parent=0 // loop_header
    %s10 = sphi 0, %s14
    %p11 = scmp.ge.s32.totalorder %s10, 4
    %s20 = sphi 0, %s22
    %s23 = sphi 0, %s20
    %s24 = sphi 0, %s23
    %s40 = sphi 0, %s24
    %s44 = sphi 0, %s44
    %s46 = sphi 0, %s44
    %s47 = sphi 0, %s46
    %s61 = sphi 0, %s47
    %s65 = sphi 0, %s65
    %s67 = sphi 0, %s65
    %s68 = sphi 0, %s67
    %s82 = sphi 0, %s68
    %s86 = sphi 0, %s86
    %s88 = sphi 0, %s86
    %s89 = sphi 0, %s88
    %s103 = sphi 0, %s89
    %s109 = sphi 0, %s111
    %s112 = sphi 0, %s109
    %s113 = sphi 0, %s112
    %s129 = sphi 0, %s113
  $region4: #{_lambda_.19} parent=0 // loop_header_branch
    %13 = sbr.rel (%p11) target = $region8
  $region5: #{_lambda_.19} parent=0 // loop_body
    %s15 = ssub.s32 %s10, 1
    %s16 = ssub.s32 %s10, 2
    %s17 = sadd.s32 %s10, 1
    %s18 = ssub.s32 %s10, %s17
    %p19 = scmp.eq.s32.totalorder %s18, 0
    %s21 = sadd.s32 %s20, 1
    %s22 = scalar_select %p19, %s20, %s21
    %p25 = pneg %p19
    %p26 = scmp.eq.s32.totalorder %s10, 1
    %p27 = por %p25, %p26
    %p28 = scmp.ne.s32.totalorder %s20, %s23
    %p29 = scmp.eq.s32.totalorder %s10, 0
    %p30 = por %p28, %p29
    %p31 = scmp.ne.s32.totalorder %s20, %s23
    %p32 = scmp.eq.s32.totalorder %s15, 1
    %p33 = por %p31, %p32
    %p34 = scmp.ne.s32.totalorder %s23, %s24
    %p35 = scmp.eq.s32.totalorder %s15, 0
    %p36 = por %p34, %p35
    %p37 = scmp.ne.s32.totalorder %s23, %s24
    %p38 = scmp.eq.s32.totalorder %s16, 1
    %p39 = por %p37, %p38
    %p41 = scmp.ne.s32.totalorder %s24, %s40
    %p42 = scmp.eq.s32.totalorder %s16, 0
    %p43 = por %p41, %p42
    %s45 = sadd.s32 %s44, 1
    %p48 = scmp.eq.s32.totalorder %s10, 1
    %p49 = scmp.ne.s32.totalorder %s44, %s46
    %p50 = scmp.eq.s32.totalorder %s10, 0
    %p51 = por %p49, %p50
    %p52 = scmp.ne.s32.totalorder %s44, %s46
    %p53 = scmp.eq.s32.totalorder %s15, 1
    %p54 = por %p52, %p53
    %p55 = scmp.ne.s32.totalorder %s46, %s47
    %p56 = scmp.eq.s32.totalorder %s15, 0
    %p57 = por %p55, %p56
    %p58 = scmp.ne.s32.totalorder %s46, %s47
    %p59 = scmp.eq.s32.totalorder %s16, 1
    %p60 = por %p58, %p59
    %p62 = scmp.ne.s32.totalorder %s47, %s61
    %p63 = scmp.eq.s32.totalorder %s16, 0
    %p64 = por %p62, %p63
    %s66 = sadd.s32 %s65, 1
    %p69 = scmp.eq.s32.totalorder %s10, 1
    %p70 = scmp.ne.s32.totalorder %s65, %s67
    %p71 = scmp.eq.s32.totalorder %s10, 0
    %p72 = por %p70, %p71
    %p73 = scmp.ne.s32.totalorder %s65, %s67
    %p74 = scmp.eq.s32.totalorder %s15, 1
    %p75 = por %p73, %p74
    %p76 = scmp.ne.s32.totalorder %s67, %s68
    %p77 = scmp.eq.s32.totalorder %s15, 0
    %p78 = por %p76, %p77
    %p79 = scmp.ne.s32.totalorder %s67, %s68
    %p80 = scmp.eq.s32.totalorder %s16, 1
    %p81 = por %p79, %p80
    %p83 = scmp.ne.s32.totalorder %s68, %s82
    %p84 = scmp.eq.s32.totalorder %s16, 0
    %p85 = por %p83, %p84
    %s87 = sadd.s32 %s86, 1
    %p90 = scmp.eq.s32.totalorder %s10, 1
    %p91 = scmp.ne.s32.totalorder %s86, %s88
    %p92 = scmp.eq.s32.totalorder %s10, 0
    %p93 = por %p91, %p92
    %p94 = scmp.ne.s32.totalorder %s86, %s88
    %p95 = scmp.eq.s32.totalorder %s15, 1
    %p96 = por %p94, %p95
    %p97 = scmp.ne.s32.totalorder %s88, %s89
    %p98 = scmp.eq.s32.totalorder %s15, 0
    %p99 = por %p97, %p98
    %p100 = scmp.ne.s32.totalorder %s88, %s89
    %p101 = scmp.eq.s32.totalorder %s16, 1
    %p102 = por %p100, %p101
    %p104 = scmp.ne.s32.totalorder %s89, %s103
    %p105 = scmp.eq.s32.totalorder %s16, 0
    %p106 = por %p104, %p105
    %s107 = ssub.s32 %s10, %s17
    %p108 = scmp.eq.s32.totalorder %s107, 0
    %s110 = sadd.s32 %s109, 1
    %s111 = scalar_select %p108, %s109, %s110
    %p114 = pneg %p108
    %p115 = scmp.eq.s32.totalorder %s10, 1
    %p116 = por %p114, %p115
    %p117 = scmp.ne.s32.totalorder %s109, %s112
    %p118 = scmp.eq.s32.totalorder %s10, 0
    %p119 = por %p117, %p118
    %p120 = scmp.ne.s32.totalorder %s109, %s112
    %p121 = scmp.eq.s32.totalorder %s15, 1
    %p122 = por %p120, %p121
    %p123 = scmp.ne.s32.totalorder %s112, %s113
    %p124 = scmp.eq.s32.totalorder %s15, 0
    %p125 = por %p123, %p124
    %p126 = scmp.ne.s32.totalorder %s112, %s113
    %p127 = scmp.eq.s32.totalorder %s16, 1
    %p128 = por %p126, %p127
    %p130 = scmp.ne.s32.totalorder %s113, %s129
    %p131 = scmp.eq.s32.totalorder %s16, 0
    %p132 = por %p130, %p131
    %p133 = scmp.le.s32.totalorder 1, %s10
    %p134 = scmp.lt.s32.totalorder %s10, 3
    %p135 = pnand %p133, %p134
    %p136 = pneg %p135
    // Predicated region
    $region9: #{_lambda_.19} parent=5 // pred_check
      _
    $region10: #{_lambda_.19} parent=5 // pred_check_branch
      %138 = sbr.rel (%p135) target = $region12
    $region11: #{_lambda_.19} parent=5 // pred_region
      %s139 = ssub.s32 %s10, 1
      // Predicated region
      $region13: #{_lambda_.19} parent=11 // pred_check
        %p140 = pneg %p57
      $region14: #{_lambda_.19} parent=11 // pred_check_branch
        %142 = sbr.rel (%p140) target = $region16
      $region15: #{_lambda_.19} parent=11 // pred_region
        _
      $region16: #{_lambda_.19} parent=11 // pred_fallthru
        _
      // Predicated region
      $region17: #{_lambda_.19} parent=11 // pred_check
        %p143 = pneg %p78
      $region18: #{_lambda_.19} parent=11 // pred_check_branch
        %145 = sbr.rel (%p143) target = $region20
      $region19: #{_lambda_.19} parent=11 // pred_region
        _
      $region20: #{_lambda_.19} parent=11 // pred_fallthru
        _
      // Predicated region
      $region21: #{_lambda_.19} parent=11 // pred_check
        %p146 = pneg %p99
      $region22: #{_lambda_.19} parent=11 // pred_check_branch
        %148 = sbr.rel (%p146) target = $region24
      $region23: #{_lambda_.19} parent=11 // pred_region
        _
      $region24: #{_lambda_.19} parent=11 // pred_fallthru
        _
    $region12: #{_lambda_.19} parent=5 // pred_fallthru
      _
    %p149 = scmp.lt.s32.totalorder %s10, 2
    // Predicated region
    $region25: #{_lambda_.19} parent=5 // pred_check
      %p150 = pneg %p149
    $region26: #{_lambda_.19} parent=5 // pred_check_branch
      %152 = sbr.rel (%p150) target = $region28
    $region27: #{_lambda_.19} parent=5 // pred_region
      // Predicated region
      $region29: #{_lambda_.19} parent=27 // pred_check
        %p153 = pneg %p30
      $region30: #{_lambda_.19} parent=27 // pred_check_branch
        %155 = sbr.rel (%p153) target = $region32
      $region31: #{_lambda_.19} parent=27 // pred_region
        %p156 = scmp.lt.s32.totalorder %s10, 1
        %s157 = scalar_select %p156, %s10, 1
        %s158 = smul.addr %s157, 32
        %s159 = smul.addr %s158, 8
        %s160 = scalar_lea.vmem %s0, %s159
      $region32: #{_lambda_.19} parent=27 // pred_fallthru
        _
    $region28: #{_lambda_.19} parent=5 // pred_fallthru
      _
    %p161 = scmp.le.s32.totalorder 1, %s10
    %p162 = scmp.lt.s32.totalorder %s10, 3
    %p163 = pnand %p161, %p162
    %p164 = pneg %p163
    // Predicated region
    $region33: #{_lambda_.19} parent=5 // pred_check
      _
    $region34: #{_lambda_.19} parent=5 // pred_check_branch
      %166 = sbr.rel (%p163) target = $region36
    $region35: #{_lambda_.19} parent=5 // pred_region
      %s167 = ssub.s32 %s10, 1
      %p168 = scmp.lt.s32.totalorder %s15, 1
      %s169 = scalar_select %p168, %s15, 1
      %s170 = smul.addr %s169, 32
      %s171 = smul.addr %s170, 8
      %s172 = scalar_lea.vmem %s0, %s171
      %p173 = pneg %p36
      %p174 = pneg %p33
      %p175 = pneg %p57
      %p176 = pneg %p54
      %p177 = pneg %p78
      %p178 = pneg %p75
      %p179 = pneg %p99
      %p180 = pneg %p96
      %p181 = pneg %p125
      %p182 = pneg %p122
      %p183 = scmp.lt.s32.totalorder %s15, 1
      %s184 = scalar_select %p183, %s15, 1
      %s185 = smul.addr %s184, 16
      %s186 = smul.addr %s185, 8
      %s187 = scalar_lea.vmem %s4, %s186
      %p188 = scmp.lt.s32.totalorder %s15, 1
      %s189 = scalar_select %p188, %s15, 1
      %s190 = smul.addr %s189, 32
      %s191 = smul.addr %s190, 8
      %s192 = scalar_lea.vmem %s0, %s191
      %p193 = scmp.lt.s32.totalorder %s15, 1
      %s194 = scalar_select %p193, %s15, 1
      %s195 = smul.addr %s194, 16
      %s196 = smul.addr %s195, 8
      %s197 = scalar_lea.vmem %s4, %s196
      %v198 = vld [vmem:[%s192] sm:$0xff]
      %v199 = vld [vmem:[%s192 + $0x8] sm:$0xff]
      %v200 = vld [vmem:[%s192 + $0x10] sm:$0xff]
      %v201 = vld [vmem:[%s192 + $0x18] sm:$0xff]
      %v202 = vld [vmem:[%s192 + $0x20] sm:$0xff]
      %v203 = vld [vmem:[%s192 + $0x28] sm:$0xff]
      %v204 = vld [vmem:[%s192 + $0x30] sm:$0xff]
      %v205 = vld [vmem:[%s192 + $0x38] sm:$0xff]
      %v206 = vld [vmem:[%s192 + $0x40] sm:$0xff]
      %v207 = vld [vmem:[%s192 + $0x48] sm:$0xff]
      %v208 = vld [vmem:[%s192 + $0x50] sm:$0xff]
      %v209 = vld [vmem:[%s192 + $0x58] sm:$0xff]
      %v210 = vld [vmem:[%s192 + $0x60] sm:$0xff]
      %v211 = vld [vmem:[%s192 + $0x68] sm:$0xff]
      %v212 = vld [vmem:[%s192 + $0x70] sm:$0xff]
      %v213 = vld [vmem:[%s192 + $0x78] sm:$0xff]
      %v214 = vld [vmem:[%s192 + $0x80] sm:$0xff]
      %v215 = vld [vmem:[%s192 + $0x88] sm:$0xff]
      %v216 = vld [vmem:[%s192 + $0x90] sm:$0xff]
      %v217 = vld [vmem:[%s192 + $0x98] sm:$0xff]
      %v218 = vld [vmem:[%s192 + $0xa0] sm:$0xff]
      %v219 = vld [vmem:[%s192 + $0xa8] sm:$0xff]
      %v220 = vld [vmem:[%s192 + $0xb0] sm:$0xff]
      %v221 = vld [vmem:[%s192 + $0xb8] sm:$0xff]
      %v222 = vld [vmem:[%s192 + $0xc0] sm:$0xff]
      %v223 = vld [vmem:[%s192 + $0xc8] sm:$0xff]
      %v224 = vld [vmem:[%s192 + $0xd0] sm:$0xff]
      %v225 = vld [vmem:[%s192 + $0xd8] sm:$0xff]
      %v226 = vld [vmem:[%s192 + $0xe0] sm:$0xff]
      %v227 = vld [vmem:[%s192 + $0xe8] sm:$0xff]
      %v228 = vld [vmem:[%s192 + $0xf0] sm:$0xff]
      %v229 = vld [vmem:[%s192 + $0xf8] sm:$0xff]
      %v230 = vld [vmem:[%s1] sm:$0xf]
      %s231 = scalar_lea.vmem %s1, 4
      %v232 = vld [vmem:[%s231] sm:$0xf]
      %vm233 = vcmask 31744
      %v235 = vsel %vm233, %v200, 0
      %v238 = vsel %vm233, %v201, 0
      %v241 = vsel %vm233, %v202, 0
      %v244 = vsel %vm233, %v203, 0
      %v247 = vsel %vm233, %v204, 0
      %v250 = vsel %vm233, %v205, 0
      %v253 = vsel %vm233, %v206, 0
      %v256 = vsel %vm233, %v207, 0
      %v259 = vsel %vm233, %v208, 0
      %v262 = vsel %vm233, %v209, 0
      %v265 = vsel %vm233, %v210, 0
      %v268 = vsel %vm233, %v211, 0
      %v271 = vsel %vm233, %v212, 0
      %v274 = vsel %vm233, %v213, 0
      %v277 = vsel %vm233, %v214, 0
      %v280 = vsel %vm233, %v215, 0
      %vm282 = vcmask 1043456
      %v284 = vsel %vm282, %v232, 0
      %286 = vmatpush.msra.mxu0 0.0
      %287 = vmatpush.msra.mxu0 0.0
      %288 = vmatpush.msra.mxu0 0.0
      %289 = vmatpush.msra.mxu0 0.0
      %290 = vmatpush.msra.mxu0 0.0
      %291 = vmatpush.msra.mxu0 0.0
      %292 = vmatpush.msra.mxu0 0.0
      %293 = vmatpush.msra.mxu0 0.0
      %294 = vmatpush.msra.mxu0 0.0
      %295 = vmatpush.msra.mxu0 0.0
      %296 = vmatpush.msra.mxu0 0.0
      %297 = vmatpush.msra.mxu0 0.0
      %298 = vmatpush.msra.mxu0 0.0
      %299 = vmatpush.msra.mxu0 0.0
      %300 = vmatpush.msra.mxu0 0.0
      %301 = vmatpush.msra.mxu0 %v284
      %302 = vmatmul.f32.gmra.mxu0 %v235
      %v303 = vpop.f32.mrf.mxu0
      %v304 = vadd.f32 0.0, %v303
      %305 = vmatmul.f32.gmra.mxu0 %v238
      %v306 = vpop.f32.mrf.mxu0
      %v307 = vadd.f32 0.0, %v306
      %308 = vmatmul.f32.gmra.mxu0 %v241
      %v309 = vpop.f32.mrf.mxu0
      %v310 = vadd.f32 0.0, %v309
      %311 = vmatmul.f32.gmra.mxu0 %v244
      %v312 = vpop.f32.mrf.mxu0
      %v313 = vadd.f32 0.0, %v312
      %314 = vmatmul.f32.gmra.mxu0 %v247
      %v315 = vpop.f32.mrf.mxu0
      %v316 = vadd.f32 0.0, %v315
      %317 = vmatmul.f32.gmra.mxu0 %v250
      %v318 = vpop.f32.mrf.mxu0
      %v319 = vadd.f32 0.0, %v318
      %320 = vmatmul.f32.gmra.mxu0 %v253
      %v321 = vpop.f32.mrf.mxu0
      %v322 = vadd.f32 0.0, %v321
      %323 = vmatmul.f32.gmra.mxu0 %v256
      %v324 = vpop.f32.mrf.mxu0
      %v325 = vadd.f32 0.0, %v324
      %326 = vmatmul.f32.gmra.mxu0 %v259
      %v327 = vpop.f32.mrf.mxu0
      %v328 = vadd.f32 0.0, %v327
      %329 = vmatmul.f32.gmra.mxu0 %v262
      %v330 = vpop.f32.mrf.mxu0
      %v331 = vadd.f32 0.0, %v330
      %332 = vmatmul.f32.gmra.mxu0 %v265
      %v333 = vpop.f32.mrf.mxu0
      %v334 = vadd.f32 0.0, %v333
      %335 = vmatmul.f32.gmra.mxu0 %v268
      %v336 = vpop.f32.mrf.mxu0
      %v337 = vadd.f32 0.0, %v336
      %338 = vmatmul.f32.gmra.mxu0 %v271
      %v339 = vpop.f32.mrf.mxu0
      %v340 = vadd.f32 0.0, %v339
      %341 = vmatmul.f32.gmra.mxu0 %v274
      %v342 = vpop.f32.mrf.mxu0
      %v343 = vadd.f32 0.0, %v342
      %344 = vmatmul.f32.gmra.mxu0 %v277
      %v345 = vpop.f32.mrf.mxu0
      %v346 = vadd.f32 0.0, %v345
      %347 = vmatmul.f32.gmra.mxu0 %v280
      %v348 = vpop.f32.mrf.mxu0
      %v349 = vadd.f32 0.0, %v348
      %350 = vdwg.mxu0
      %v352 = vsel %vm233, %v198, 0
      %v355 = vsel %vm233, %v199, 0
      %v358 = vsel %vm282, %v230, 0
      %360 = vmatpush.msra.mxu0 0.0
      %361 = vmatpush.msra.mxu0 0.0
      %362 = vmatpush.msra.mxu0 0.0
      %363 = vmatpush.msra.mxu0 0.0
      %364 = vmatpush.msra.mxu0 0.0
      %365 = vmatpush.msra.mxu0 0.0
      %366 = vmatpush.msra.mxu0 0.0
      %367 = vmatpush.msra.mxu0 0.0
      %368 = vmatpush.msra.mxu0 0.0
      %369 = vmatpush.msra.mxu0 0.0
      %370 = vmatpush.msra.mxu0 0.0
      %371 = vmatpush.msra.mxu0 0.0
      %372 = vmatpush.msra.mxu0 0.0
      %373 = vmatpush.msra.mxu0 0.0
      %374 = vmatpush.msra.mxu0 0.0
      %375 = vmatpush.msra.mxu0 %v358
      %376 = vmatmul.f32.gmra.mxu0 %v352
      %v377 = vpop.f32.mrf.mxu0
      %v378 = vadd.f32 %v304, %v377
      %379 = vmatmul.f32.gmra.mxu0 %v355
      %v380 = vpop.f32.mrf.mxu0
      %v381 = vadd.f32 %v307, %v380
      %382 = vmatmul.f32.gmra.mxu0 %v235
      %v383 = vpop.f32.mrf.mxu0
      %v384 = vadd.f32 %v310, %v383
      %385 = vmatmul.f32.gmra.mxu0 %v238
      %v386 = vpop.f32.mrf.mxu0
      %v387 = vadd.f32 %v313, %v386
      %388 = vmatmul.f32.gmra.mxu0 %v241
      %v389 = vpop.f32.mrf.mxu0
      %v390 = vadd.f32 %v316, %v389
      %391 = vmatmul.f32.gmra.mxu0 %v244
      %v392 = vpop.f32.mrf.mxu0
      %v393 = vadd.f32 %v319, %v392
      %394 = vmatmul.f32.gmra.mxu0 %v247
      %v395 = vpop.f32.mrf.mxu0
      %v396 = vadd.f32 %v322, %v395
      %397 = vmatmul.f32.gmra.mxu0 %v250
      %v398 = vpop.f32.mrf.mxu0
      %v399 = vadd.f32 %v325, %v398
      %400 = vmatmul.f32.gmra.mxu0 %v253
      %v401 = vpop.f32.mrf.mxu0
      %v402 = vadd.f32 %v328, %v401
      %403 = vmatmul.f32.gmra.mxu0 %v256
      %v404 = vpop.f32.mrf.mxu0
      %v405 = vadd.f32 %v331, %v404
      %406 = vmatmul.f32.gmra.mxu0 %v259
      %v407 = vpop.f32.mrf.mxu0
      %v408 = vadd.f32 %v334, %v407
      %409 = vmatmul.f32.gmra.mxu0 %v262
      %v410 = vpop.f32.mrf.mxu0
      %v411 = vadd.f32 %v337, %v410
      %412 = vmatmul.f32.gmra.mxu0 %v265
      %v413 = vpop.f32.mrf.mxu0
      %v414 = vadd.f32 %v340, %v413
      %415 = vmatmul.f32.gmra.mxu0 %v268
      %v416 = vpop.f32.mrf.mxu0
      %v417 = vadd.f32 %v343, %v416
      %418 = vmatmul.f32.gmra.mxu0 %v271
      %v419 = vpop.f32.mrf.mxu0
      %v420 = vadd.f32 %v346, %v419
      %421 = vmatmul.f32.gmra.mxu0 %v274
      %v422 = vpop.f32.mrf.mxu0
      %v423 = vadd.f32 %v349, %v422
      %424 = vdwg.mxu0
      %s425 = scalar_lea.vmem %s1, 8
      %v426 = vld [vmem:[%s425] sm:$0xf]
      %v428 = vsel %vm233, %v216, 0
      %v431 = vsel %vm233, %v217, 0
      %v434 = vsel %vm282, %v426, 0
      %436 = vmatpush.msra.mxu0 0.0
      %437 = vmatpush.msra.mxu0 0.0
      %438 = vmatpush.msra.mxu0 0.0
      %439 = vmatpush.msra.mxu0 0.0
      %440 = vmatpush.msra.mxu0 0.0
      %441 = vmatpush.msra.mxu0 0.0
      %442 = vmatpush.msra.mxu0 0.0
      %443 = vmatpush.msra.mxu0 0.0
      %444 = vmatpush.msra.mxu0 0.0
      %445 = vmatpush.msra.mxu0 0.0
      %446 = vmatpush.msra.mxu0 0.0
      %447 = vmatpush.msra.mxu0 0.0
      %448 = vmatpush.msra.mxu0 0.0
      %449 = vmatpush.msra.mxu0 0.0
      %450 = vmatpush.msra.mxu0 0.0
      %451 = vmatpush.msra.mxu0 %v434
      %452 = vmatmul.f32.gmra.mxu0 %v241
      %v453 = vpop.f32.mrf.mxu0
      %v454 = vadd.f32 0.0, %v453
      %455 = vmatmul.f32.gmra.mxu0 %v244
      %v456 = vpop.f32.mrf.mxu0
      %v457 = vadd.f32 0.0, %v456
      %458 = vmatmul.f32.gmra.mxu0 %v247
      %v459 = vpop.f32.mrf.mxu0
      %v460 = vadd.f32 0.0, %v459
      %461 = vmatmul.f32.gmra.mxu0 %v250
      %v462 = vpop.f32.mrf.mxu0
      %v463 = vadd.f32 0.0, %v462
      %464 = vmatmul.f32.gmra.mxu0 %v253
      %v465 = vpop.f32.mrf.mxu0
      %v466 = vadd.f32 0.0, %v465
      %467 = vmatmul.f32.gmra.mxu0 %v256
      %v468 = vpop.f32.mrf.mxu0
      %v469 = vadd.f32 0.0, %v468
      %470 = vmatmul.f32.gmra.mxu0 %v259
      %v471 = vpop.f32.mrf.mxu0
      %v472 = vadd.f32 0.0, %v471
      %473 = vmatmul.f32.gmra.mxu0 %v262
      %v474 = vpop.f32.mrf.mxu0
      %v475 = vadd.f32 0.0, %v474
      %476 = vmatmul.f32.gmra.mxu0 %v265
      %v477 = vpop.f32.mrf.mxu0
      %v478 = vadd.f32 0.0, %v477
      %479 = vmatmul.f32.gmra.mxu0 %v268
      %v480 = vpop.f32.mrf.mxu0
      %v481 = vadd.f32 0.0, %v480
      %482 = vmatmul.f32.gmra.mxu0 %v271
      %v483 = vpop.f32.mrf.mxu0
      %v484 = vadd.f32 0.0, %v483
      %485 = vmatmul.f32.gmra.mxu0 %v274
      %v486 = vpop.f32.mrf.mxu0
      %v487 = vadd.f32 0.0, %v486
      %488 = vmatmul.f32.gmra.mxu0 %v277
      %v489 = vpop.f32.mrf.mxu0
      %v490 = vadd.f32 0.0, %v489
      %491 = vmatmul.f32.gmra.mxu0 %v280
      %v492 = vpop.f32.mrf.mxu0
      %v493 = vadd.f32 0.0, %v492
      %494 = vmatmul.f32.gmra.mxu0 %v428
      %v495 = vpop.f32.mrf.mxu0
      %v496 = vadd.f32 0.0, %v495
      %497 = vmatmul.f32.gmra.mxu0 %v431
      %v498 = vpop.f32.mrf.mxu0
      %v499 = vadd.f32 0.0, %v498
      %500 = vdwg.mxu0
      %v501 = vadd.f32 %v378, %v454
      %v502 = vadd.f32 %v381, %v457
      %v503 = vadd.f32 %v384, %v460
      %v504 = vadd.f32 %v387, %v463
      %v505 = vadd.f32 %v390, %v466
      %v506 = vadd.f32 %v393, %v469
      %v507 = vadd.f32 %v396, %v472
      %v508 = vadd.f32 %v399, %v475
      %v509 = vadd.f32 %v402, %v478
      %v510 = vadd.f32 %v405, %v481
      %v511 = vadd.f32 %v408, %v484
      %v512 = vadd.f32 %v411, %v487
      %v513 = vadd.f32 %v414, %v490
      %v514 = vadd.f32 %v417, %v493
      %v515 = vadd.f32 %v420, %v496
      %v516 = vadd.f32 %v423, %v499
      %s517 = scalar_lea.vmem %s1, 12
      %v518 = vld [vmem:[%s517] sm:$0xf]
      %v520 = vsel %vm233, %v218, 0
      %v523 = vsel %vm233, %v219, 0
      %v526 = vsel %vm282, %v518, 0
      %528 = vmatpush.msra.mxu0 0.0
      %529 = vmatpush.msra.mxu0 0.0
      %530 = vmatpush.msra.mxu0 0.0
      %531 = vmatpush.msra.mxu0 0.0
      %532 = vmatpush.msra.mxu0 0.0
      %533 = vmatpush.msra.mxu0 0.0
      %534 = vmatpush.msra.mxu0 0.0
      %535 = vmatpush.msra.mxu0 0.0
      %536 = vmatpush.msra.mxu0 0.0
      %537 = vmatpush.msra.mxu0 0.0
      %538 = vmatpush.msra.mxu0 0.0
      %539 = vmatpush.msra.mxu0 0.0
      %540 = vmatpush.msra.mxu0 0.0
      %541 = vmatpush.msra.mxu0 0.0
      %542 = vmatpush.msra.mxu0 0.0
      %543 = vmatpush.msra.mxu0 %v526
      %544 = vmatmul.f32.gmra.mxu0 %v247
      %v545 = vpop.f32.mrf.mxu0
      %v546 = vadd.f32 0.0, %v545
      %547 = vmatmul.f32.gmra.mxu0 %v250
      %v548 = vpop.f32.mrf.mxu0
      %v549 = vadd.f32 0.0, %v548
      %550 = vmatmul.f32.gmra.mxu0 %v253
      %v551 = vpop.f32.mrf.mxu0
      %v552 = vadd.f32 0.0, %v551
      %553 = vmatmul.f32.gmra.mxu0 %v256
      %v554 = vpop.f32.mrf.mxu0
      %v555 = vadd.f32 0.0, %v554
      %556 = vmatmul.f32.gmra.mxu0 %v259
      %v557 = vpop.f32.mrf.mxu0
      %v558 = vadd.f32 0.0, %v557
      %559 = vmatmul.f32.gmra.mxu0 %v262
      %v560 = vpop.f32.mrf.mxu0
      %v561 = vadd.f32 0.0, %v560
      %562 = vmatmul.f32.gmra.mxu0 %v265
      %v563 = vpop.f32.mrf.mxu0
      %v564 = vadd.f32 0.0, %v563
      %565 = vmatmul.f32.gmra.mxu0 %v268
      %v566 = vpop.f32.mrf.mxu0
      %v567 = vadd.f32 0.0, %v566
      %568 = vmatmul.f32.gmra.mxu0 %v271
      %v569 = vpop.f32.mrf.mxu0
      %v570 = vadd.f32 0.0, %v569
      %571 = vmatmul.f32.gmra.mxu0 %v274
      %v572 = vpop.f32.mrf.mxu0
      %v573 = vadd.f32 0.0, %v572
      %574 = vmatmul.f32.gmra.mxu0 %v277
      %v575 = vpop.f32.mrf.mxu0
      %v576 = vadd.f32 0.0, %v575
      %577 = vmatmul.f32.gmra.mxu0 %v280
      %v578 = vpop.f32.mrf.mxu0
      %v579 = vadd.f32 0.0, %v578
      %580 = vmatmul.f32.gmra.mxu0 %v428
      %v581 = vpop.f32.mrf.mxu0
      %v582 = vadd.f32 0.0, %v581
      %583 = vmatmul.f32.gmra.mxu0 %v431
      %v584 = vpop.f32.mrf.mxu0
      %v585 = vadd.f32 0.0, %v584
      %586 = vmatmul.f32.gmra.mxu0 %v520
      %v587 = vpop.f32.mrf.mxu0
      %v588 = vadd.f32 0.0, %v587
      %589 = vmatmul.f32.gmra.mxu0 %v523
      %v590 = vpop.f32.mrf.mxu0
      %v591 = vadd.f32 0.0, %v590
      %592 = vdwg.mxu0
      %v593 = vadd.f32 %v501, %v546
      %v594 = vadd.f32 %v502, %v549
      %v595 = vadd.f32 %v503, %v552
      %v596 = vadd.f32 %v504, %v555
      %v597 = vadd.f32 %v505, %v558
      %v598 = vadd.f32 %v506, %v561
      %v599 = vadd.f32 %v507, %v564
      %v600 = vadd.f32 %v508, %v567
      %v601 = vadd.f32 %v509, %v570
      %v602 = vadd.f32 %v510, %v573
      %v603 = vadd.f32 %v511, %v576
      %v604 = vadd.f32 %v512, %v579
      %v605 = vadd.f32 %v513, %v582
      %v606 = vadd.f32 %v514, %v585
      %v607 = vadd.f32 %v515, %v588
      %v608 = vadd.f32 %v516, %v591
      %s609 = scalar_lea.vmem %s1, 16
      %v610 = vld [vmem:[%s609] sm:$0xf]
      %v612 = vsel %vm233, %v220, 0
      %v615 = vsel %vm233, %v221, 0
      %v618 = vsel %vm282, %v610, 0
      %620 = vmatpush.msra.mxu0 0.0
      %621 = vmatpush.msra.mxu0 0.0
      %622 = vmatpush.msra.mxu0 0.0
      %623 = vmatpush.msra.mxu0 0.0
      %624 = vmatpush.msra.mxu0 0.0
      %625 = vmatpush.msra.mxu0 0.0
      %626 = vmatpush.msra.mxu0 0.0
      %627 = vmatpush.msra.mxu0 0.0
      %628 = vmatpush.msra.mxu0 0.0
      %629 = vmatpush.msra.mxu0 0.0
      %630 = vmatpush.msra.mxu0 0.0
      %631 = vmatpush.msra.mxu0 0.0
      %632 = vmatpush.msra.mxu0 0.0
      %633 = vmatpush.msra.mxu0 0.0
      %634 = vmatpush.msra.mxu0 0.0
      %635 = vmatpush.msra.mxu0 %v618
      %636 = vmatmul.f32.gmra.mxu0 %v253
      %v637 = vpop.f32.mrf.mxu0
      %v638 = vadd.f32 0.0, %v637
      %639 = vmatmul.f32.gmra.mxu0 %v256
      %v640 = vpop.f32.mrf.mxu0
      %v641 = vadd.f32 0.0, %v640
      %642 = vmatmul.f32.gmra.mxu0 %v259
      %v643 = vpop.f32.mrf.mxu0
      %v644 = vadd.f32 0.0, %v643
      %645 = vmatmul.f32.gmra.mxu0 %v262
      %v646 = vpop.f32.mrf.mxu0
      %v647 = vadd.f32 0.0, %v646
      %648 = vmatmul.f32.gmra.mxu0 %v265
      %v649 = vpop.f32.mrf.mxu0
      %v650 = vadd.f32 0.0, %v649
      %651 = vmatmul.f32.gmra.mxu0 %v268
      %v652 = vpop.f32.mrf.mxu0
      %v653 = vadd.f32 0.0, %v652
      %654 = vmatmul.f32.gmra.mxu0 %v271
      %v655 = vpop.f32.mrf.mxu0
      %v656 = vadd.f32 0.0, %v655
      %657 = vmatmul.f32.gmra.mxu0 %v274
      %v658 = vpop.f32.mrf.mxu0
      %v659 = vadd.f32 0.0, %v658
      %660 = vmatmul.f32.gmra.mxu0 %v277
      %v661 = vpop.f32.mrf.mxu0
      %v662 = vadd.f32 0.0, %v661
      %663 = vmatmul.f32.gmra.mxu0 %v280
      %v664 = vpop.f32.mrf.mxu0
      %v665 = vadd.f32 0.0, %v664
      %666 = vmatmul.f32.gmra.mxu0 %v428
      %v667 = vpop.f32.mrf.mxu0
      %v668 = vadd.f32 0.0, %v667
      %669 = vmatmul.f32.gmra.mxu0 %v431
      %v670 = vpop.f32.mrf.mxu0
      %v671 = vadd.f32 0.0, %v670
      %672 = vmatmul.f32.gmra.mxu0 %v520
      %v673 = vpop.f32.mrf.mxu0
      %v674 = vadd.f32 0.0, %v673
      %675 = vmatmul.f32.gmra.mxu0 %v523
      %v676 = vpop.f32.mrf.mxu0
      %v677 = vadd.f32 0.0, %v676
      %678 = vmatmul.f32.gmra.mxu0 %v612
      %v679 = vpop.f32.mrf.mxu0
      %v680 = vadd.f32 0.0, %v679
      %681 = vmatmul.f32.gmra.mxu0 %v615
      %v682 = vpop.f32.mrf.mxu0
      %v683 = vadd.f32 0.0, %v682
      %684 = vdwg.mxu0
      %v685 = vadd.f32 %v593, %v638
      %v686 = vadd.f32 %v594, %v641
      %v687 = vadd.f32 %v595, %v644
      %v688 = vadd.f32 %v596, %v647
      %v689 = vadd.f32 %v597, %v650
      %v690 = vadd.f32 %v598, %v653
      %v691 = vadd.f32 %v599, %v656
      %v692 = vadd.f32 %v600, %v659
      %v693 = vadd.f32 %v601, %v662
      %v694 = vadd.f32 %v602, %v665
      %v695 = vadd.f32 %v603, %v668
      %v696 = vadd.f32 %v604, %v671
      %v697 = vadd.f32 %v605, %v674
      %v698 = vadd.f32 %v606, %v677
      %v699 = vadd.f32 %v607, %v680
      %v700 = vadd.f32 %v608, %v683
      %s701 = scalar_lea.vmem %s1, 20
      %v702 = vld [vmem:[%s701] sm:$0xf]
      %v704 = vsel %vm233, %v222, 0
      %v707 = vsel %vm233, %v223, 0
      %v710 = vsel %vm282, %v702, 0
      %712 = vmatpush.msra.mxu0 0.0
      %713 = vmatpush.msra.mxu0 0.0
      %714 = vmatpush.msra.mxu0 0.0
      %715 = vmatpush.msra.mxu0 0.0
      %716 = vmatpush.msra.mxu0 0.0
      %717 = vmatpush.msra.mxu0 0.0
      %718 = vmatpush.msra.mxu0 0.0
      %719 = vmatpush.msra.mxu0 0.0
      %720 = vmatpush.msra.mxu0 0.0
      %721 = vmatpush.msra.mxu0 0.0
      %722 = vmatpush.msra.mxu0 0.0
      %723 = vmatpush.msra.mxu0 0.0
      %724 = vmatpush.msra.mxu0 0.0
      %725 = vmatpush.msra.mxu0 0.0
      %726 = vmatpush.msra.mxu0 0.0
      %727 = vmatpush.msra.mxu0 %v710
      %728 = vmatmul.f32.gmra.mxu0 %v259
      %v729 = vpop.f32.mrf.mxu0
      %v730 = vadd.f32 0.0, %v729
      %731 = vmatmul.f32.gmra.mxu0 %v262
      %v732 = vpop.f32.mrf.mxu0
      %v733 = vadd.f32 0.0, %v732
      %734 = vmatmul.f32.gmra.mxu0 %v265
      %v735 = vpop.f32.mrf.mxu0
      %v736 = vadd.f32 0.0, %v735
      %737 = vmatmul.f32.gmra.mxu0 %v268
      %v738 = vpop.f32.mrf.mxu0
      %v739 = vadd.f32 0.0, %v738
      %740 = vmatmul.f32.gmra.mxu0 %v271
      %v741 = vpop.f32.mrf.mxu0
      %v742 = vadd.f32 0.0, %v741
      %743 = vmatmul.f32.gmra.mxu0 %v274
      %v744 = vpop.f32.mrf.mxu0
      %v745 = vadd.f32 0.0, %v744
      %746 = vmatmul.f32.gmra.mxu0 %v277
      %v747 = vpop.f32.mrf.mxu0
      %v748 = vadd.f32 0.0, %v747
      %749 = vmatmul.f32.gmra.mxu0 %v280
      %v750 = vpop.f32.mrf.mxu0
      %v751 = vadd.f32 0.0, %v750
      %752 = vmatmul.f32.gmra.mxu0 %v428
      %v753 = vpop.f32.mrf.mxu0
      %v754 = vadd.f32 0.0, %v753
      %755 = vmatmul.f32.gmra.mxu0 %v431
      %v756 = vpop.f32.mrf.mxu0
      %v757 = vadd.f32 0.0, %v756
      %758 = vmatmul.f32.gmra.mxu0 %v520
      %v759 = vpop.f32.mrf.mxu0
      %v760 = vadd.f32 0.0, %v759
      %761 = vmatmul.f32.gmra.mxu0 %v523
      %v762 = vpop.f32.mrf.mxu0
      %v763 = vadd.f32 0.0, %v762
      %764 = vmatmul.f32.gmra.mxu0 %v612
      %v765 = vpop.f32.mrf.mxu0
      %v766 = vadd.f32 0.0, %v765
      %767 = vmatmul.f32.gmra.mxu0 %v615
      %v768 = vpop.f32.mrf.mxu0
      %v769 = vadd.f32 0.0, %v768
      %770 = vmatmul.f32.gmra.mxu0 %v704
      %v771 = vpop.f32.mrf.mxu0
      %v772 = vadd.f32 0.0, %v771
      %773 = vmatmul.f32.gmra.mxu0 %v707
      %v774 = vpop.f32.mrf.mxu0
      %v775 = vadd.f32 0.0, %v774
      %776 = vdwg.mxu0
      %v777 = vadd.f32 %v685, %v730
      %v778 = vadd.f32 %v686, %v733
      %v779 = vadd.f32 %v687, %v736
      %v780 = vadd.f32 %v688, %v739
      %v781 = vadd.f32 %v689, %v742
      %v782 = vadd.f32 %v690, %v745
      %v783 = vadd.f32 %v691, %v748
      %v784 = vadd.f32 %v692, %v751
      %v785 = vadd.f32 %v693, %v754
      %v786 = vadd.f32 %v694, %v757
      %v787 = vadd.f32 %v695, %v760
      %v788 = vadd.f32 %v696, %v763
      %v789 = vadd.f32 %v697, %v766
      %v790 = vadd.f32 %v698, %v769
      %v791 = vadd.f32 %v699, %v772
      %v792 = vadd.f32 %v700, %v775
      %s793 = scalar_lea.vmem %s1, 24
      %v794 = vld [vmem:[%s793] sm:$0xf]
      %v796 = vsel %vm233, %v224, 0
      %v799 = vsel %vm233, %v225, 0
      %v802 = vsel %vm282, %v794, 0
      %804 = vmatpush.msra.mxu0 0.0
      %805 = vmatpush.msra.mxu0 0.0
      %806 = vmatpush.msra.mxu0 0.0
      %807 = vmatpush.msra.mxu0 0.0
      %808 = vmatpush.msra.mxu0 0.0
      %809 = vmatpush.msra.mxu0 0.0
      %810 = vmatpush.msra.mxu0 0.0
      %811 = vmatpush.msra.mxu0 0.0
      %812 = vmatpush.msra.mxu0 0.0
      %813 = vmatpush.msra.mxu0 0.0
      %814 = vmatpush.msra.mxu0 0.0
      %815 = vmatpush.msra.mxu0 0.0
      %816 = vmatpush.msra.mxu0 0.0
      %817 = vmatpush.msra.mxu0 0.0
      %818 = vmatpush.msra.mxu0 0.0
      %819 = vmatpush.msra.mxu0 %v802
      %820 = vmatmul.f32.gmra.mxu0 %v265
      %v821 = vpop.f32.mrf.mxu0
      %v822 = vadd.f32 0.0, %v821
      %823 = vmatmul.f32.gmra.mxu0 %v268
      %v824 = vpop.f32.mrf.mxu0
      %v825 = vadd.f32 0.0, %v824
      %826 = vmatmul.f32.gmra.mxu0 %v271
      %v827 = vpop.f32.mrf.mxu0
      %v828 = vadd.f32 0.0, %v827
      %829 = vmatmul.f32.gmra.mxu0 %v274
      %v830 = vpop.f32.mrf.mxu0
      %v831 = vadd.f32 0.0, %v830
      %832 = vmatmul.f32.gmra.mxu0 %v277
      %v833 = vpop.f32.mrf.mxu0
      %v834 = vadd.f32 0.0, %v833
      %835 = vmatmul.f32.gmra.mxu0 %v280
      %v836 = vpop.f32.mrf.mxu0
      %v837 = vadd.f32 0.0, %v836
      %838 = vmatmul.f32.gmra.mxu0 %v428
      %v839 = vpop.f32.mrf.mxu0
      %v840 = vadd.f32 0.0, %v839
      %841 = vmatmul.f32.gmra.mxu0 %v431
      %v842 = vpop.f32.mrf.mxu0
      %v843 = vadd.f32 0.0, %v842
      %844 = vmatmul.f32.gmra.mxu0 %v520
      %v845 = vpop.f32.mrf.mxu0
      %v846 = vadd.f32 0.0, %v845
      %847 = vmatmul.f32.gmra.mxu0 %v523
      %v848 = vpop.f32.mrf.mxu0
      %v849 = vadd.f32 0.0, %v848
      %850 = vmatmul.f32.gmra.mxu0 %v612
      %v851 = vpop.f32.mrf.mxu0
      %v852 = vadd.f32 0.0, %v851
      %853 = vmatmul.f32.gmra.mxu0 %v615
      %v854 = vpop.f32.mrf.mxu0
      %v855 = vadd.f32 0.0, %v854
      %856 = vmatmul.f32.gmra.mxu0 %v704
      %v857 = vpop.f32.mrf.mxu0
      %v858 = vadd.f32 0.0, %v857
      %859 = vmatmul.f32.gmra.mxu0 %v707
      %v860 = vpop.f32.mrf.mxu0
      %v861 = vadd.f32 0.0, %v860
      %862 = vmatmul.f32.gmra.mxu0 %v796
      %v863 = vpop.f32.mrf.mxu0
      %v864 = vadd.f32 0.0, %v863
      %865 = vmatmul.f32.gmra.mxu0 %v799
      %v866 = vpop.f32.mrf.mxu0
      %v867 = vadd.f32 0.0, %v866
      %868 = vdwg.mxu0
      %v869 = vadd.f32 %v777, %v822
      %v870 = vadd.f32 %v778, %v825
      %v871 = vadd.f32 %v779, %v828
      %v872 = vadd.f32 %v780, %v831
      %v873 = vadd.f32 %v781, %v834
      %v874 = vadd.f32 %v782, %v837
      %v875 = vadd.f32 %v783, %v840
      %v876 = vadd.f32 %v784, %v843
      %v877 = vadd.f32 %v785, %v846
      %v878 = vadd.f32 %v786, %v849
      %v879 = vadd.f32 %v787, %v852
      %v880 = vadd.f32 %v788, %v855
      %v881 = vadd.f32 %v789, %v858
      %v882 = vadd.f32 %v790, %v861
      %v883 = vadd.f32 %v791, %v864
      %v884 = vadd.f32 %v792, %v867
      %s885 = scalar_lea.vmem %s1, 28
      %v886 = vld [vmem:[%s885] sm:$0xf]
      %v888 = vsel %vm233, %v226, 0
      %v891 = vsel %vm233, %v227, 0
      %v894 = vsel %vm282, %v886, 0
      %896 = vmatpush.msra.mxu0 0.0
      %897 = vmatpush.msra.mxu0 0.0
      %898 = vmatpush.msra.mxu0 0.0
      %899 = vmatpush.msra.mxu0 0.0
      %900 = vmatpush.msra.mxu0 0.0
      %901 = vmatpush.msra.mxu0 0.0
      %902 = vmatpush.msra.mxu0 0.0
      %903 = vmatpush.msra.mxu0 0.0
      %904 = vmatpush.msra.mxu0 0.0
      %905 = vmatpush.msra.mxu0 0.0
      %906 = vmatpush.msra.mxu0 0.0
      %907 = vmatpush.msra.mxu0 0.0
      %908 = vmatpush.msra.mxu0 0.0
      %909 = vmatpush.msra.mxu0 0.0
      %910 = vmatpush.msra.mxu0 0.0
      %911 = vmatpush.msra.mxu0 %v894
      %912 = vmatmul.f32.gmra.mxu0 %v271
      %v913 = vpop.f32.mrf.mxu0
      %v914 = vadd.f32 0.0, %v913
      %915 = vmatmul.f32.gmra.mxu0 %v274
      %v916 = vpop.f32.mrf.mxu0
      %v917 = vadd.f32 0.0, %v916
      %918 = vmatmul.f32.gmra.mxu0 %v277
      %v919 = vpop.f32.mrf.mxu0
      %v920 = vadd.f32 0.0, %v919
      %921 = vmatmul.f32.gmra.mxu0 %v280
      %v922 = vpop.f32.mrf.mxu0
      %v923 = vadd.f32 0.0, %v922
      %924 = vmatmul.f32.gmra.mxu0 %v428
      %v925 = vpop.f32.mrf.mxu0
      %v926 = vadd.f32 0.0, %v925
      %927 = vmatmul.f32.gmra.mxu0 %v431
      %v928 = vpop.f32.mrf.mxu0
      %v929 = vadd.f32 0.0, %v928
      %930 = vmatmul.f32.gmra.mxu0 %v520
      %v931 = vpop.f32.mrf.mxu0
      %v932 = vadd.f32 0.0, %v931
      %933 = vmatmul.f32.gmra.mxu0 %v523
      %v934 = vpop.f32.mrf.mxu0
      %v935 = vadd.f32 0.0, %v934
      %936 = vmatmul.f32.gmra.mxu0 %v612
      %v937 = vpop.f32.mrf.mxu0
      %v938 = vadd.f32 0.0, %v937
      %939 = vmatmul.f32.gmra.mxu0 %v615
      %v940 = vpop.f32.mrf.mxu0
      %v941 = vadd.f32 0.0, %v940
      %942 = vmatmul.f32.gmra.mxu0 %v704
      %v943 = vpop.f32.mrf.mxu0
      %v944 = vadd.f32 0.0, %v943
      %945 = vmatmul.f32.gmra.mxu0 %v707
      %v946 = vpop.f32.mrf.mxu0
      %v947 = vadd.f32 0.0, %v946
      %948 = vmatmul.f32.gmra.mxu0 %v796
      %v949 = vpop.f32.mrf.mxu0
      %v950 = vadd.f32 0.0, %v949
      %951 = vmatmul.f32.gmra.mxu0 %v799
      %v952 = vpop.f32.mrf.mxu0
      %v953 = vadd.f32 0.0, %v952
      %954 = vmatmul.f32.gmra.mxu0 %v888
      %v955 = vpop.f32.mrf.mxu0
      %v956 = vadd.f32 0.0, %v955
      %957 = vmatmul.f32.gmra.mxu0 %v891
      %v958 = vpop.f32.mrf.mxu0
      %v959 = vadd.f32 0.0, %v958
      %960 = vdwg.mxu0
      %v961 = vadd.f32 %v869, %v914
      %v962 = vadd.f32 %v870, %v917
      %v963 = vadd.f32 %v871, %v920
      %v964 = vadd.f32 %v872, %v923
      %v965 = vadd.f32 %v873, %v926
      %v966 = vadd.f32 %v874, %v929
      %v967 = vadd.f32 %v875, %v932
      %v968 = vadd.f32 %v876, %v935
      %v969 = vadd.f32 %v877, %v938
      %v970 = vadd.f32 %v878, %v941
      %v971 = vadd.f32 %v879, %v944
      %v972 = vadd.f32 %v880, %v947
      %v973 = vadd.f32 %v881, %v950
      %v974 = vadd.f32 %v882, %v953
      %v975 = vadd.f32 %v883, %v956
      %v976 = vadd.f32 %v884, %v959
      %s977 = scalar_lea.vmem %s1, 32
      %v978 = vld [vmem:[%s977] sm:$0xf]
      %v980 = vsel %vm233, %v228, 0
      %v983 = vsel %vm233, %v229, 0
      %v986 = vsel %vm282, %v978, 0
      %988 = vmatpush.msra.mxu0 0.0
      %989 = vmatpush.msra.mxu0 0.0
      %990 = vmatpush.msra.mxu0 0.0
      %991 = vmatpush.msra.mxu0 0.0
      %992 = vmatpush.msra.mxu0 0.0
      %993 = vmatpush.msra.mxu0 0.0
      %994 = vmatpush.msra.mxu0 0.0
      %995 = vmatpush.msra.mxu0 0.0
      %996 = vmatpush.msra.mxu0 0.0
      %997 = vmatpush.msra.mxu0 0.0
      %998 = vmatpush.msra.mxu0 0.0
      %999 = vmatpush.msra.mxu0 0.0
      %1000 = vmatpush.msra.mxu0 0.0
      %1001 = vmatpush.msra.mxu0 0.0
      %1002 = vmatpush.msra.mxu0 0.0
      %1003 = vmatpush.msra.mxu0 %v986
      %1004 = vmatmul.f32.gmra.mxu0 %v277
      %v1005 = vpop.f32.mrf.mxu0
      %v1006 = vadd.f32 0.0, %v1005
      %1007 = vmatmul.f32.gmra.mxu0 %v280
      %v1008 = vpop.f32.mrf.mxu0
      %v1009 = vadd.f32 0.0, %v1008
      %1010 = vmatmul.f32.gmra.mxu0 %v428
      %v1011 = vpop.f32.mrf.mxu0
      %v1012 = vadd.f32 0.0, %v1011
      %1013 = vmatmul.f32.gmra.mxu0 %v431
      %v1014 = vpop.f32.mrf.mxu0
      %v1015 = vadd.f32 0.0, %v1014
      %1016 = vmatmul.f32.gmra.mxu0 %v520
      %v1017 = vpop.f32.mrf.mxu0
      %v1018 = vadd.f32 0.0, %v1017
      %1019 = vmatmul.f32.gmra.mxu0 %v523
      %v1020 = vpop.f32.mrf.mxu0
      %v1021 = vadd.f32 0.0, %v1020
      %1022 = vmatmul.f32.gmra.mxu0 %v612
      %v1023 = vpop.f32.mrf.mxu0
      %v1024 = vadd.f32 0.0, %v1023
      %1025 = vmatmul.f32.gmra.mxu0 %v615
      %v1026 = vpop.f32.mrf.mxu0
      %v1027 = vadd.f32 0.0, %v1026
      %1028 = vmatmul.f32.gmra.mxu0 %v704
      %v1029 = vpop.f32.mrf.mxu0
      %v1030 = vadd.f32 0.0, %v1029
      %1031 = vmatmul.f32.gmra.mxu0 %v707
      %v1032 = vpop.f32.mrf.mxu0
      %v1033 = vadd.f32 0.0, %v1032
      %1034 = vmatmul.f32.gmra.mxu0 %v796
      %v1035 = vpop.f32.mrf.mxu0
      %v1036 = vadd.f32 0.0, %v1035
      %1037 = vmatmul.f32.gmra.mxu0 %v799
      %v1038 = vpop.f32.mrf.mxu0
      %v1039 = vadd.f32 0.0, %v1038
      %1040 = vmatmul.f32.gmra.mxu0 %v888
      %v1041 = vpop.f32.mrf.mxu0
      %v1042 = vadd.f32 0.0, %v1041
      %1043 = vmatmul.f32.gmra.mxu0 %v891
      %v1044 = vpop.f32.mrf.mxu0
      %v1045 = vadd.f32 0.0, %v1044
      %1046 = vmatmul.f32.gmra.mxu0 %v980
      %v1047 = vpop.f32.mrf.mxu0
      %v1048 = vadd.f32 0.0, %v1047
      %1049 = vmatmul.f32.gmra.mxu0 %v983
      %v1050 = vpop.f32.mrf.mxu0
      %v1051 = vadd.f32 0.0, %v1050
      %1052 = vdwg.mxu0
      %v1053 = vadd.f32 %v961, %v1006
      %v1054 = vadd.f32 %v962, %v1009
      %v1055 = vadd.f32 %v963, %v1012
      %v1056 = vadd.f32 %v964, %v1015
      %v1057 = vadd.f32 %v965, %v1018
      %v1058 = vadd.f32 %v966, %v1021
      %v1059 = vadd.f32 %v967, %v1024
      %v1060 = vadd.f32 %v968, %v1027
      %v1061 = vadd.f32 %v969, %v1030
      %v1062 = vadd.f32 %v970, %v1033
      %v1063 = vadd.f32 %v971, %v1036
      %v1064 = vadd.f32 %v972, %v1039
      %v1065 = vadd.f32 %v973, %v1042
      %v1066 = vadd.f32 %v974, %v1045
      %v1067 = vadd.f32 %v975, %v1048
      %v1068 = vadd.f32 %v976, %v1051
      %v1069 = vld [vmem:[%s2] sm:$0x1]
      %v1071 = vperm.slane %v1069, 0
      %v1073 = vmul.f32 %v1053, %v1071
      %v1074 = vmul.f32 %v1054, %v1071
      %v1075 = vmul.f32 %v1055, %v1071
      %v1076 = vmul.f32 %v1056, %v1071
      %v1077 = vmul.f32 %v1057, %v1071
      %v1078 = vmul.f32 %v1058, %v1071
      %v1079 = vmul.f32 %v1059, %v1071
      %v1080 = vmul.f32 %v1060, %v1071
      %v1081 = vmul.f32 %v1061, %v1071
      %v1082 = vmul.f32 %v1062, %v1071
      %v1083 = vmul.f32 %v1063, %v1071
      %v1084 = vmul.f32 %v1064, %v1071
      %v1085 = vmul.f32 %v1065, %v1071
      %v1086 = vmul.f32 %v1066, %v1071
      %v1087 = vmul.f32 %v1067, %v1071
      %v1088 = vmul.f32 %v1068, %v1071
      %v1089 = vld [vmem:[%s3] sm:$0x1]
      %v1091 = vperm.slane %v1089, 0
      %v1093 = vadd.f32 %v1073, %v1091
      %v1094 = vadd.f32 %v1074, %v1091
      %v1095 = vadd.f32 %v1075, %v1091
      %v1096 = vadd.f32 %v1076, %v1091
      %v1097 = vadd.f32 %v1077, %v1091
      %v1098 = vadd.f32 %v1078, %v1091
      %v1099 = vadd.f32 %v1079, %v1091
      %v1100 = vadd.f32 %v1080, %v1091
      %v1101 = vadd.f32 %v1081, %v1091
      %v1102 = vadd.f32 %v1082, %v1091
      %v1103 = vadd.f32 %v1083, %v1091
      %v1104 = vadd.f32 %v1084, %v1091
      %v1105 = vadd.f32 %v1085, %v1091
      %v1106 = vadd.f32 %v1086, %v1091
      %v1107 = vadd.f32 %v1087, %v1091
      %v1108 = vadd.f32 %v1088, %v1091
      %v1109 = vmax.f32 %v1093, 0.0
      %v1110 = vmax.f32 %v1094, 0.0
      %v1111 = vmax.f32 %v1095, 0.0
      %v1112 = vmax.f32 %v1096, 0.0
      %v1113 = vmax.f32 %v1097, 0.0
      %v1114 = vmax.f32 %v1098, 0.0
      %v1115 = vmax.f32 %v1099, 0.0
      %v1116 = vmax.f32 %v1100, 0.0
      %v1117 = vmax.f32 %v1101, 0.0
      %v1118 = vmax.f32 %v1102, 0.0
      %v1119 = vmax.f32 %v1103, 0.0
      %v1120 = vmax.f32 %v1104, 0.0
      %v1121 = vmax.f32 %v1105, 0.0
      %v1122 = vmax.f32 %v1106, 0.0
      %v1123 = vmax.f32 %v1107, 0.0
      %v1124 = vmax.f32 %v1108, 0.0
      %vm1125 = vcmask 228352
      %1126 = vst.msk [vmem:[%s197] sm:$0xff] %vm1125, %v1109
      %1127 = vst.msk [vmem:[%s197 + $0x8] sm:$0xff] %vm1125, %v1110
      %1128 = vst.msk [vmem:[%s197 + $0x10] sm:$0xff] %vm1125, %v1111
      %1129 = vst.msk [vmem:[%s197 + $0x18] sm:$0xff] %vm1125, %v1112
      %1130 = vst.msk [vmem:[%s197 + $0x20] sm:$0xff] %vm1125, %v1113
      %1131 = vst.msk [vmem:[%s197 + $0x28] sm:$0xff] %vm1125, %v1114
      %1132 = vst.msk [vmem:[%s197 + $0x30] sm:$0xff] %vm1125, %v1115
      %1133 = vst.msk [vmem:[%s197 + $0x38] sm:$0xff] %vm1125, %v1116
      %1134 = vst.msk [vmem:[%s197 + $0x40] sm:$0xff] %vm1125, %v1117
      %1135 = vst.msk [vmem:[%s197 + $0x48] sm:$0xff] %vm1125, %v1118
      %1136 = vst.msk [vmem:[%s197 + $0x50] sm:$0xff] %vm1125, %v1119
      %1137 = vst.msk [vmem:[%s197 + $0x58] sm:$0xff] %vm1125, %v1120
      %1138 = vst.msk [vmem:[%s197 + $0x60] sm:$0xff] %vm1125, %v1121
      %1139 = vst.msk [vmem:[%s197 + $0x68] sm:$0xff] %vm1125, %v1122
      %1140 = vst.msk [vmem:[%s197 + $0x70] sm:$0xff] %vm1125, %v1123
      %1141 = vst.msk [vmem:[%s197 + $0x78] sm:$0xff] %vm1125, %v1124
      %p1142 = scmp.lt.s32.totalorder %s15, 1
      %s1143 = scalar_select %p1142, %s15, 1
      %s1144 = smul.addr %s1143, 16
      %s1145 = smul.addr %s1144, 8
      %s1146 = scalar_lea.vmem %s4, %s1145
      // Predicated region
      $region37: #{_lambda_.19} parent=35 // pred_check
        %p1147 = pneg %p122
      $region38: #{_lambda_.19} parent=35 // pred_check_branch
        %1149 = sbr.rel (%p1147) target = $region40
      $region39: #{_lambda_.19} parent=35 // pred_region
        _
      $region40: #{_lambda_.19} parent=35 // pred_fallthru
        _
    $region36: #{_lambda_.19} parent=5 // pred_fallthru
      _
    %p1150 = scmp.le.s32.totalorder 2, %s10
    // Predicated region
    $region41: #{_lambda_.19} parent=5 // pred_check
      %p1151 = pneg %p1150
    $region42: #{_lambda_.19} parent=5 // pred_check_branch
      %1153 = sbr.rel (%p1151) target = $region44
    $region43: #{_lambda_.19} parent=5 // pred_region
      %s1154 = ssub.s32 %s10, 2
      // Predicated region
      $region45: #{_lambda_.19} parent=43 // pred_check
        %p1155 = pneg %p128
      $region46: #{_lambda_.19} parent=43 // pred_check_branch
        %1157 = sbr.rel (%p1155) target = $region48
      $region47: #{_lambda_.19} parent=43 // pred_region
        %p1158 = scmp.lt.s32.totalorder %s16, 1
        %s1159 = scalar_select %p1158, %s16, 1
        %s1160 = smul.addr %s1159, 16
        %s1161 = smul.addr %s1160, 8
        %s1162 = scalar_lea.vmem %s4, %s1161
      $region48: #{_lambda_.19} parent=43 // pred_fallthru
        _
    $region44: #{_lambda_.19} parent=5 // pred_fallthru
      _
  $region6: #{_lambda_.19} parent=0 // loop_footer
    %s14 = sadd.s32 1, %s10
  $region7: #{_lambda_.19} parent=0 // loop_footer_branch
    %9 = sbr.rel target = $region3
  $region8: #{_lambda_.19} parent=0 // loop_exit
    _

// kernel: tile.11
$region0: #{tile.11}
  %s0 = inlined_call_operand.vmem [shape: f32[2,4], index: 0, kind: input, shape index: {}]
  %s1 = inlined_call_operand.vmem [shape: f32[1,8], index: 1, kind: output, shape index: {}]
  $region1: #{tile.11} parent=0
    #allocation0 [shape = 'u8[4096]{0}', space=vmem, size = 0x1000, scoped, tag = 'scoped mem for output reshape']
    #allocation1 [shape = 'u8[4096]{0}', space=vmem, size = 0x1000, scoped, tag = 'scoped mem for input reshape']
    %s3 = ssub.s32 4, 1
    %v4 = vld [vmem:[%s0] sm:%s3]
    %5 = vst [vmem:[#allocation1] sm:%s3] %v4
    %v6 = vld [vmem:[#allocation1] sm:$0x1]
    %vm7 = vcmask 31744
    %8 = vst.msk [vmem:[#allocation0] sm:$0x1] %vm7, %v6
    %s9 = scalar_lea.vmem [#allocation1], 1
    %v10 = vld [vmem:[%s9] sm:$0x1]
    %11 = vrot.lane.b32.xlu0 %v10, 4
    %v12 = vpop.permute.xlu0 %11
    %vm13 = vcmask 64544
    %14 = vst.msk [vmem:[#allocation0] sm:$0x1] %vm13, %v12
    %s16 = ssub.s32 2, 1
    %v17 = vld [vmem:[#allocation0] sm:%s16]
    %s19 = ssub.s32 2, 1
    %20 = vst [vmem:[%s1] sm:%s19] %v17

// kernel: tile.14
$region0: #{tile.14}
  #allocation0 [shape = 's32[1]{0}', space=sflag, size = 0x4, scoped, tag = 'scoped memory for tile.14']
  %s0 = inlined_call_operand.vmem [shape: f32[7], index: 0, kind: input, shape index: {}]
  %s1 = inlined_call_operand.vmem [shape: f32[2,7], index: 1, kind: output, shape index: {}]
  // Predicated region
  $region2: #{tile.14} parent=0 // pred_check
    _
  $region3: #{tile.14} parent=0 // pred_check_branch
    %3 = sbr.rel (0) target = $region5
  $region4: #{tile.14} parent=0 // pred_region
    _
  $region5: #{tile.14} parent=0 // pred_fallthru
    _
  %v4 = vld [vmem:[%s0] ss:$0 sm:$0xff]
  %5 = vst [vmem:[%s1] sm:$0x3] %v4

// kernel: tile.15
$region0: #{tile.15}
  %s0 = inlined_call_operand.vmem [shape: f32[2,7], index: 0, kind: input, shape index: {}]
  %s1 = inlined_call_operand.vmem [shape: f32[1,14], index: 1, kind: output, shape index: {}]
  $region1: #{tile.15} parent=0
    #allocation0 [shape = 'u8[4096]{0}', space=vmem, size = 0x1000, scoped, tag = 'scoped mem for output reshape']
    #allocation1 [shape = 'u8[4096]{0}', space=vmem, size = 0x1000, scoped, tag = 'scoped mem for input reshape']
    %s3 = ssub.s32 4, 1
    %v4 = vld [vmem:[%s0] sm:%s3]
    %5 = vst [vmem:[#allocation1] sm:%s3] %v4
    %v6 = vld [vmem:[#allocation1] sm:$0x1]
    %vm7 = vcmask 56320
    %8 = vst.msk [vmem:[#allocation0] sm:$0x1] %vm7, %v6
    %s9 = scalar_lea.vmem [#allocation1], 1
    %v10 = vld [vmem:[%s9] sm:$0x1]
    %11 = vrot.lane.b32.xlu0 %v10, 7
    %v12 = vpop.permute.xlu0 %11
    %vm13 = vcmask 113720
    %14 = vst.msk [vmem:[#allocation0] sm:$0x1] %vm13, %v12
    %s16 = ssub.s32 2, 1
    %v17 = vld [vmem:[#allocation0] sm:%s16]
    %s19 = ssub.s32 2, 1
    %20 = vst [vmem:[%s1] sm:%s19] %v17

// kernel: mul.51
$region0: #{mul.51}
  %s0 = inlined_call_operand.vmem [shape: f32[14], index: 0, kind: input, shape index: {}]
  %s1 = inlined_call_operand.vmem [shape: f32[2,7], index: 1, kind: output, shape index: {}]
  $region1: #{mul.51} parent=0
    #allocation0 [shape = 'u8[4096]{0}', space=vmem, size = 0x1000, scoped, tag = 'scoped mem for output reshape']
    #allocation1 [shape = 'u8[4096]{0}', space=vmem, size = 0x1000, scoped, tag = 'scoped mem for input reshape']
    %s3 = ssub.s32 2, 1
    %v4 = vld [vmem:[%s0] sm:%s3]
    %5 = vst [vmem:[#allocation1] sm:%s3] %v4
    %v6 = vld [vmem:[#allocation1] sm:$0x1]
    %vm7 = vcmask 56320
    %8 = vst.msk [vmem:[#allocation0] sm:$0x1] %vm7, %v6
    %v9 = vld [vmem:[#allocation1] sm:$0x1]
    %10 = vrot.lane.b32.xlu0 %v9, 121
    %v11 = vpop.permute.xlu0 %10
    %vm12 = vcmask 56320
    %s13 = scalar_lea.vmem [#allocation0], 1
    %14 = vst.msk [vmem:[%s13] sm:$0x1] %vm12, %v11
    %s16 = ssub.s32 4, 1
    %v17 = vld [vmem:[#allocation0] sm:%s16]
    %s19 = ssub.s32 4, 1
    %20 = vst [vmem:[%s1] sm:%s19] %v17

// kernel: _lambda_.14
$region0: #{_lambda_.14}
  #allocation0 [shape = 'u32[]', space=smem, size = 0x4, offset = 0x4, fixed_abs, tag = 'smem constant byte address 0x4 - core index']
  #allocation1 [shape = 'u32[72,128]{1,0:T(1,128)}', space=vmem, size = 0x9000, scoped, tag = 'internal scratch']
  %s0 = inlined_call_operand.vmem [shape: f32[128,14], index: 0, kind: input, shape index: {}]
  %s1 = inlined_call_operand.vmem [shape: f32[14,8], index: 1, kind: input, shape index: {}]
  %s2 = inlined_call_operand.vmem [shape: f32[14,8], index: 2, kind: input, shape index: {}]
  %s3 = inlined_call_operand.vmem [shape: f32[1,8], index: 3, kind: input, shape index: {}]
  %s4 = inlined_call_operand.vmem [shape: f32[8,14], index: 4, kind: input, shape index: {}]
  %s5 = inlined_call_operand.vmem [shape: f32[1,14], index: 5, kind: input, shape index: {}]
  %s6 = inlined_call_operand.vmem [shape: f32[1,14], index: 6, kind: output, shape index: {}]
  %s7 = sld [smem:[#allocation0]]
  $region34: #{_lambda_.14} parent=0
    _
  %s9 = ssub.s32 1, %s7
  %s10 = scalar_select 0, %s9, %s7
  // Predicated region
  $region2: #{_lambda_.14} parent=0 // pred_check
    _
  $region3: #{_lambda_.14} parent=0 // pred_check_branch
    %12 = sbr.rel (0) target = $region5
  $region4: #{_lambda_.14} parent=0 // pred_region
    _
  $region5: #{_lambda_.14} parent=0 // pred_fallthru
    _
  // Predicated region
  $region6: #{_lambda_.14} parent=0 // pred_check
    _
  $region7: #{_lambda_.14} parent=0 // pred_check_branch
    %14 = sbr.rel (0) target = $region9
  $region8: #{_lambda_.14} parent=0 // pred_region
    _
  $region9: #{_lambda_.14} parent=0 // pred_fallthru
    _
  // Predicated region
  $region10: #{_lambda_.14} parent=0 // pred_check
    _
  $region11: #{_lambda_.14} parent=0 // pred_check_branch
    %16 = sbr.rel (0) target = $region13
  $region12: #{_lambda_.14} parent=0 // pred_region
    _
  $region13: #{_lambda_.14} parent=0 // pred_fallthru
    _
  // Predicated region
  $region14: #{_lambda_.14} parent=0 // pred_check
    _
  $region15: #{_lambda_.14} parent=0 // pred_check_branch
    %18 = sbr.rel (0) target = $region17
  $region16: #{_lambda_.14} parent=0 // pred_region
    _
  $region17: #{_lambda_.14} parent=0 // pred_fallthru
    _
  // Predicated region
  $region18: #{_lambda_.14} parent=0 // pred_check
    _
  $region19: #{_lambda_.14} parent=0 // pred_check_branch
    %20 = sbr.rel (0) target = $region21
  $region20: #{_lambda_.14} parent=0 // pred_region
    _
  $region21: #{_lambda_.14} parent=0 // pred_fallthru
    _
  // Predicated region
  $region22: #{_lambda_.14} parent=0 // pred_check
    _
  $region23: #{_lambda_.14} parent=0 // pred_check_branch
    %22 = sbr.rel (0) target = $region25
  $region24: #{_lambda_.14} parent=0 // pred_region
    _
  $region25: #{_lambda_.14} parent=0 // pred_fallthru
    _
  %v23 = vld [vmem:[%s0] sm:$0xff]
  %v24 = vld [vmem:[%s0 + $0x8] sm:$0xff]
  %v25 = vld [vmem:[%s0 + $0x10] sm:$0xff]
  %v26 = vld [vmem:[%s0 + $0x18] sm:$0xff]
  %v27 = vld [vmem:[%s0 + $0x20] sm:$0xff]
  %v28 = vld [vmem:[%s0 + $0x28] sm:$0xff]
  %v29 = vld [vmem:[%s0 + $0x30] sm:$0xff]
  %v30 = vld [vmem:[%s0 + $0x38] sm:$0xff]
  %v31 = vld [vmem:[%s0 + $0x40] sm:$0xff]
  %v32 = vld [vmem:[%s0 + $0x48] sm:$0xff]
  %v33 = vld [vmem:[%s0 + $0x50] sm:$0xff]
  %v34 = vld [vmem:[%s0 + $0x58] sm:$0xff]
  %v35 = vld [vmem:[%s0 + $0x60] sm:$0xff]
  %v36 = vld [vmem:[%s0 + $0x68] sm:$0xff]
  %v37 = vld [vmem:[%s0 + $0x70] sm:$0xff]
  %v38 = vld [vmem:[%s0 + $0x78] sm:$0xff]
  %vm39 = vcmask 113664
  %v40 = vsel %vm39, %v23, 0.0
  %v41 = vsel %vm39, %v24, 0.0
  %v42 = vadd.f32 %v40, %v41
  %v43 = vsel %vm39, %v25, 0.0
  %v44 = vadd.f32 %v42, %v43
  %v45 = vsel %vm39, %v26, 0.0
  %v46 = vadd.f32 %v44, %v45
  %v47 = vsel %vm39, %v27, 0.0
  %v48 = vadd.f32 %v46, %v47
  %v49 = vsel %vm39, %v28, 0.0
  %v50 = vadd.f32 %v48, %v49
  %v51 = vsel %vm39, %v29, 0.0
  %v52 = vadd.f32 %v50, %v51
  %v53 = vsel %vm39, %v30, 0.0
  %v54 = vadd.f32 %v52, %v53
  %v55 = vsel %vm39, %v31, 0.0
  %v56 = vadd.f32 %v54, %v55
  %v57 = vsel %vm39, %v32, 0.0
  %v58 = vadd.f32 %v56, %v57
  %v59 = vsel %vm39, %v33, 0.0
  %v60 = vadd.f32 %v58, %v59
  %v61 = vsel %vm39, %v34, 0.0
  %v62 = vadd.f32 %v60, %v61
  %v63 = vsel %vm39, %v35, 0.0
  %v64 = vadd.f32 %v62, %v63
  %v65 = vsel %vm39, %v36, 0.0
  %v66 = vadd.f32 %v64, %v65
  %v67 = vsel %vm39, %v37, 0.0
  %v68 = vadd.f32 %v66, %v67
  %v69 = vsel %vm39, %v38, 0.0
  %v70 = vadd.f32 %v68, %v69
  %v71 = vrot.slane %v70, 4
  %v72 = vadd.f32 %v70, %v71
  %v73 = vrot.slane %v72, 2
  %v74 = vadd.f32 %v72, %v73
  %v75 = vrot.slane %v74, 1
  %v76 = vadd.f32 %v74, %v75
  %v77 = vmul.f32 %v76, 0.0078125
  %v78 = vsub.f32 %v23, %v77
  %v79 = vsub.f32 %v24, %v77
  %v80 = vsub.f32 %v25, %v77
  %v81 = vsub.f32 %v26, %v77
  %v82 = vsub.f32 %v27, %v77
  %v83 = vsub.f32 %v28, %v77
  %v84 = vsub.f32 %v29, %v77
  %v85 = vsub.f32 %v30, %v77
  %v86 = vsub.f32 %v31, %v77
  %v87 = vsub.f32 %v32, %v77
  %v88 = vsub.f32 %v33, %v77
  %v89 = vsub.f32 %v34, %v77
  %v90 = vsub.f32 %v35, %v77
  %v91 = vsub.f32 %v36, %v77
  %v92 = vsub.f32 %v37, %v77
  %v93 = vsub.f32 %v38, %v77
  %v94 = vmul.f32 %v78, %v78
  %v95 = vmul.f32 %v79, %v79
  %v96 = vmul.f32 %v80, %v80
  %v97 = vmul.f32 %v81, %v81
  %v98 = vmul.f32 %v82, %v82
  %v99 = vmul.f32 %v83, %v83
  %v100 = vmul.f32 %v84, %v84
  %v101 = vmul.f32 %v85, %v85
  %v102 = vmul.f32 %v86, %v86
  %v103 = vmul.f32 %v87, %v87
  %v104 = vmul.f32 %v88, %v88
  %v105 = vmul.f32 %v89, %v89
  %v106 = vmul.f32 %v90, %v90
  %v107 = vmul.f32 %v91, %v91
  %v108 = vmul.f32 %v92, %v92
  %v109 = vmul.f32 %v93, %v93
  %v110 = vsel %vm39, %v94, 0.0
  %v111 = vsel %vm39, %v95, 0.0
  %v112 = vadd.f32 %v110, %v111
  %v113 = vsel %vm39, %v96, 0.0
  %v114 = vadd.f32 %v112, %v113
  %v115 = vsel %vm39, %v97, 0.0
  %v116 = vadd.f32 %v114, %v115
  %v117 = vsel %vm39, %v98, 0.0
  %v118 = vadd.f32 %v116, %v117
  %v119 = vsel %vm39, %v99, 0.0
  %v120 = vadd.f32 %v118, %v119
  %v121 = vsel %vm39, %v100, 0.0
  %v122 = vadd.f32 %v120, %v121
  %v123 = vsel %vm39, %v101, 0.0
  %v124 = vadd.f32 %v122, %v123
  %v125 = vsel %vm39, %v102, 0.0
  %v126 = vadd.f32 %v124, %v125
  %v127 = vsel %vm39, %v103, 0.0
  %v128 = vadd.f32 %v126, %v127
  %v129 = vsel %vm39, %v104, 0.0
  %v130 = vadd.f32 %v128, %v129
  %v131 = vsel %vm39, %v105, 0.0
  %v132 = vadd.f32 %v130, %v131
  %v133 = vsel %vm39, %v106, 0.0
  %v134 = vadd.f32 %v132, %v133
  %v135 = vsel %vm39, %v107, 0.0
  %v136 = vadd.f32 %v134, %v135
  %v137 = vsel %vm39, %v108, 0.0
  %v138 = vadd.f32 %v136, %v137
  %v139 = vsel %vm39, %v109, 0.0
  %v140 = vadd.f32 %v138, %v139
  %v141 = vrot.slane %v140, 4
  %v142 = vadd.f32 %v140, %v141
  %v143 = vrot.slane %v142, 2
  %v144 = vadd.f32 %v142, %v143
  %v145 = vrot.slane %v144, 1
  %v146 = vadd.f32 %v144, %v145
  %v147 = vmul.f32 %v146, 0.007874016
  %v148 = vrsqrt.pop %v147
  %v149 = vmul.f32 %v148, %v147
  %v150 = vmul.f32 %v149, %v148
  %v151 = vmul.f32 0.5, %v150
  %v152 = vsub.f32 1.5, %v151
  %v153 = vmul.f32 %v148, %v152
  %v154 = vmul.f32 %v147, %v153
  %vm155 = vcmp.eq.f32.partialorder %v147, inf
  %v156 = vsel %vm155, %v147, %v154
  %vm157 = vcmp.eq.f32.partialorder %v147, 0.0
  %v158 = vand.u32 %v147, 2147483648
  %v159 = vsel %vm157, %v158, %v156
  %v160 = vld [vmem:[%s1] sm:$0xff]
  %v161 = vld [vmem:[%s1 + $0x8] sm:$0x3f]
  %v162 = vld [vmem:[%s2] sm:$0xff]
  %v163 = vld [vmem:[%s2 + $0x8] sm:$0x3f]
  %v165 = vsel %vm39, %v159, 0
  %vm167 = vcmask 1045504
  %v169 = vsel %vm167, %v163, 0
  %171 = vmatpush.msra.mxu0 0.0
  %172 = vmatpush.msra.mxu0 0.0
  %173 = vmatpush.msra.mxu0 0.0
  %174 = vmatpush.msra.mxu0 0.0
  %175 = vmatpush.msra.mxu0 0.0
  %176 = vmatpush.msra.mxu0 0.0
  %177 = vmatpush.msra.mxu0 0.0
  %178 = vmatpush.msra.mxu0 0.0
  %179 = vmatpush.msra.mxu0 0.0
  %180 = vmatpush.msra.mxu0 0.0
  %181 = vmatpush.msra.mxu0 0.0
  %182 = vmatpush.msra.mxu0 0.0
  %183 = vmatpush.msra.mxu0 0.0
  %184 = vmatpush.msra.mxu0 0.0
  %185 = vmatpush.msra.mxu0 %v169
  %186 = vmatpush.msra.mxu0 %v162
  %187 = vmatmul.f32.gmra.mxu0 %v165
  %v188 = vpop.f32.mrf.mxu0
  %v189 = vadd.f32 0.0, %v188
  %190 = vdwg.mxu0
  %v192 = vsel %vm39, %v77, 0
  %v195 = vsel %vm167, %v161, 0
  %197 = vmatpush.msra.mxu0 0.0
  %198 = vmatpush.msra.mxu0 0.0
  %199 = vmatpush.msra.mxu0 0.0
  %200 = vmatpush.msra.mxu0 0.0
  %201 = vmatpush.msra.mxu0 0.0
  %202 = vmatpush.msra.mxu0 0.0
  %203 = vmatpush.msra.mxu0 0.0
  %204 = vmatpush.msra.mxu0 0.0
  %205 = vmatpush.msra.mxu0 0.0
  %206 = vmatpush.msra.mxu0 0.0
  %207 = vmatpush.msra.mxu0 0.0
  %208 = vmatpush.msra.mxu0 0.0
  %209 = vmatpush.msra.mxu0 0.0
  %210 = vmatpush.msra.mxu0 0.0
  %211 = vmatpush.msra.mxu0 %v195
  %212 = vmatpush.msra.mxu0 %v160
  %213 = vmatmul.f32.gmra.mxu0 %v192
  %v214 = vpop.f32.mrf.mxu0
  %v215 = vadd.f32 %v189, %v214
  %216 = vdwg.mxu0
  %v217 = vld [vmem:[%s3] sm:$0x1]
  %v218 = vadd.f32 %v215, %v217
  %v219 = vmax.f32 %v218, 0.0
  %v220 = vld [vmem:[%s4] sm:$0xff]
  %v221 = vld [vmem:[%s5] sm:$0x1]
  %vm222 = vcmask 64512
  %v224 = vsel %vm222, %v219, 0
  %226 = vmatpush.msra.mxu0 0.0
  %227 = vmatpush.msra.mxu0 0.0
  %228 = vmatpush.msra.mxu0 0.0
  %229 = vmatpush.msra.mxu0 0.0
  %230 = vmatpush.msra.mxu0 0.0
  %231 = vmatpush.msra.mxu0 0.0
  %232 = vmatpush.msra.mxu0 0.0
  %233 = vmatpush.msra.mxu0 0.0
  %234 = vmatpush.msra.mxu0 0.0
  %235 = vmatpush.msra.mxu0 0.0
  %236 = vmatpush.msra.mxu0 0.0
  %237 = vmatpush.msra.mxu0 0.0
  %238 = vmatpush.msra.mxu0 0.0
  %239 = vmatpush.msra.mxu0 0.0
  %240 = vmatpush.msra.mxu0 0.0
  %241 = vmatpush.msra.mxu0 %v220
  %242 = vmatmul.f32.gmra.mxu0 %v224
  %v243 = vpop.f32.mrf.mxu0
  %v244 = vadd.f32 %v221, %v243
  %245 = vdwg.mxu0
  %v246 = vxor.u32 %v244, 2147483648
  %v247 = vmul.f32 %v246, 1.442695
  %v248 = vpow.pop %v247
  %v249 = vadd.f32 %v248, 1.0
  %v250 = vrcp.pop %v249
  %v251 = vmul.f32 %v249, %v250
  %v252 = vsub.f32 1.0, %v251
  %v253 = vmul.f32 %v250, %v252
  %v254 = vadd.f32 %v250, %v253
  %vm255 = vweird.f32 %v249
  %vm256 = vweird.f32 %v250
  %vm257 = vmor %vm255, %vm256
  %v258 = vsel %vm257, %v250, %v254
  %v259 = vand.u32 2147483647, %v249
  %vm260 = vcmp.eq.f32.partialorder %v259, 8.507059e+37
  %v261 = vand.u32 %v249, 2147483648
  %v262 = vor.u32 1.1754944e-38, %v261
  %v263 = vsel %vm260, %v262, %v258
  %v264 = vmul.f32 1.0, %v263
  %vm265 = vcmask 106496
  %266 = vst.msk [vmem:[%s6] sm:$0x1] %vm265, %v264
  // Predicated region
  $region26: #{_lambda_.14} parent=0 // pred_check
    _
  $region27: #{_lambda_.14} parent=0 // pred_check_branch
    %268 = sbr.rel (0) target = $region29
  $region28: #{_lambda_.14} parent=0 // pred_region
    _
  $region29: #{_lambda_.14} parent=0 // pred_fallthru
    _
  // Predicated region
  $region30: #{_lambda_.14} parent=0 // pred_check
    _
  $region31: #{_lambda_.14} parent=0 // pred_check_branch
    %270 = sbr.rel (0) target = $region33
  $region32: #{_lambda_.14} parent=0 // pred_region
    _
  $region33: #{_lambda_.14} parent=0 // pred_fallthru
    _

// kernel: _lambda_.23
$region0: #{_lambda_.23}
  #allocation0 [shape = 'u32[]', space=smem, size = 0x4, offset = 0x4, fixed_abs, tag = 'smem constant byte address 0x4 - core index']
  #allocation1 [shape = 'u32[72,128]{1,0:T(1,128)}', space=vmem, size = 0x9000, scoped, tag = 'internal scratch']
  %s0 = inlined_call_operand.vmem [shape: f32[2,256,7], index: 0, kind: input, shape index: {}]
  %s1 = inlined_call_operand.vmem [shape: f32[9,7,25], index: 1, kind: input, shape index: {}]
  %s2 = inlined_call_operand.vmem [shape: f32[1,25], index: 2, kind: input, shape index: {}]
  %s3 = inlined_call_operand.vmem [shape: f32[1,25], index: 3, kind: input, shape index: {}]
  %s4 = inlined_call_operand.vmem [shape: f32[2,128,25], index: 4, kind: output, shape index: {}]
  %s5 = sld [smem:[#allocation0]]
  $region49: #{_lambda_.23} parent=0
    _
  %s7 = ssub.s32 1, %s5
  %s8 = scalar_select 0, %s7, %s5
  loop: start=0, step=1, limit=4
  $region2: #{_lambda_.23} parent=0 // loop_pre_header
    _
  $region3: #{_lambda_.23} parent=0 // loop_header
    %s10 = sphi 0, %s14
    %p11 = scmp.ge.s32.totalorder %s10, 4
    %s20 = sphi 0, %s22
    %s23 = sphi 0, %s20
    %s24 = sphi 0, %s23
    %s40 = sphi 0, %s24
    %s44 = sphi 0, %s44
    %s46 = sphi 0, %s44
    %s47 = sphi 0, %s46
    %s61 = sphi 0, %s47
    %s65 = sphi 0, %s65
    %s67 = sphi 0, %s65
    %s68 = sphi 0, %s67
    %s82 = sphi 0, %s68
    %s86 = sphi 0, %s86
    %s88 = sphi 0, %s86
    %s89 = sphi 0, %s88
    %s103 = sphi 0, %s89
    %s109 = sphi 0, %s111
    %s112 = sphi 0, %s109
    %s113 = sphi 0, %s112
    %s129 = sphi 0, %s113
  $region4: #{_lambda_.23} parent=0 // loop_header_branch
    %13 = sbr.rel (%p11) target = $region8
  $region5: #{_lambda_.23} parent=0 // loop_body
    %s15 = ssub.s32 %s10, 1
    %s16 = ssub.s32 %s10, 2
    %s17 = sadd.s32 %s10, 1
    %s18 = ssub.s32 %s10, %s17
    %p19 = scmp.eq.s32.totalorder %s18, 0
    %s21 = sadd.s32 %s20, 1
    %s22 = scalar_select %p19, %s20, %s21
    %p25 = pneg %p19
    %p26 = scmp.eq.s32.totalorder %s10, 1
    %p27 = por %p25, %p26
    %p28 = scmp.ne.s32.totalorder %s20, %s23
    %p29 = scmp.eq.s32.totalorder %s10, 0
    %p30 = por %p28, %p29
    %p31 = scmp.ne.s32.totalorder %s20, %s23
    %p32 = scmp.eq.s32.totalorder %s15, 1
    %p33 = por %p31, %p32
    %p34 = scmp.ne.s32.totalorder %s23, %s24
    %p35 = scmp.eq.s32.totalorder %s15, 0
    %p36 = por %p34, %p35
    %p37 = scmp.ne.s32.totalorder %s23, %s24
    %p38 = scmp.eq.s32.totalorder %s16, 1
    %p39 = por %p37, %p38
    %p41 = scmp.ne.s32.totalorder %s24, %s40
    %p42 = scmp.eq.s32.totalorder %s16, 0
    %p43 = por %p41, %p42
    %s45 = sadd.s32 %s44, 1
    %p48 = scmp.eq.s32.totalorder %s10, 1
    %p49 = scmp.ne.s32.totalorder %s44, %s46
    %p50 = scmp.eq.s32.totalorder %s10, 0
    %p51 = por %p49, %p50
    %p52 = scmp.ne.s32.totalorder %s44, %s46
    %p53 = scmp.eq.s32.totalorder %s15, 1
    %p54 = por %p52, %p53
    %p55 = scmp.ne.s32.totalorder %s46, %s47
    %p56 = scmp.eq.s32.totalorder %s15, 0
    %p57 = por %p55, %p56
    %p58 = scmp.ne.s32.totalorder %s46, %s47
    %p59 = scmp.eq.s32.totalorder %s16, 1
    %p60 = por %p58, %p59
    %p62 = scmp.ne.s32.totalorder %s47, %s61
    %p63 = scmp.eq.s32.totalorder %s16, 0
    %p64 = por %p62, %p63
    %s66 = sadd.s32 %s65, 1
    %p69 = scmp.eq.s32.totalorder %s10, 1
    %p70 = scmp.ne.s32.totalorder %s65, %s67
    %p71 = scmp.eq.s32.totalorder %s10, 0
    %p72 = por %p70, %p71
    %p73 = scmp.ne.s32.totalorder %s65, %s67
    %p74 = scmp.eq.s32.totalorder %s15, 1
    %p75 = por %p73, %p74
    %p76 = scmp.ne.s32.totalorder %s67, %s68
    %p77 = scmp.eq.s32.totalorder %s15, 0
    %p78 = por %p76, %p77
    %p79 = scmp.ne.s32.totalorder %s67, %s68
    %p80 = scmp.eq.s32.totalorder %s16, 1
    %p81 = por %p79, %p80
    %p83 = scmp.ne.s32.totalorder %s68, %s82
    %p84 = scmp.eq.s32.totalorder %s16, 0
    %p85 = por %p83, %p84
    %s87 = sadd.s32 %s86, 1
    %p90 = scmp.eq.s32.totalorder %s10, 1
    %p91 = scmp.ne.s32.totalorder %s86, %s88
    %p92 = scmp.eq.s32.totalorder %s10, 0
    %p93 = por %p91, %p92
    %p94 = scmp.ne.s32.totalorder %s86, %s88
    %p95 = scmp.eq.s32.totalorder %s15, 1
    %p96 = por %p94, %p95
    %p97 = scmp.ne.s32.totalorder %s88, %s89
    %p98 = scmp.eq.s32.totalorder %s15, 0
    %p99 = por %p97, %p98
    %p100 = scmp.ne.s32.totalorder %s88, %s89
    %p101 = scmp.eq.s32.totalorder %s16, 1
    %p102 = por %p100, %p101
    %p104 = scmp.ne.s32.totalorder %s89, %s103
    %p105 = scmp.eq.s32.totalorder %s16, 0
    %p106 = por %p104, %p105
    %s107 = ssub.s32 %s10, %s17
    %p108 = scmp.eq.s32.totalorder %s107, 0
    %s110 = sadd.s32 %s109, 1
    %s111 = scalar_select %p108, %s109, %s110
    %p114 = pneg %p108
    %p115 = scmp.eq.s32.totalorder %s10, 1
    %p116 = por %p114, %p115
    %p117 = scmp.ne.s32.totalorder %s109, %s112
    %p118 = scmp.eq.s32.totalorder %s10, 0
    %p119 = por %p117, %p118
    %p120 = scmp.ne.s32.totalorder %s109, %s112
    %p121 = scmp.eq.s32.totalorder %s15, 1
    %p122 = por %p120, %p121
    %p123 = scmp.ne.s32.totalorder %s112, %s113
    %p124 = scmp.eq.s32.totalorder %s15, 0
    %p125 = por %p123, %p124
    %p126 = scmp.ne.s32.totalorder %s112, %s113
    %p127 = scmp.eq.s32.totalorder %s16, 1
    %p128 = por %p126, %p127
    %p130 = scmp.ne.s32.totalorder %s113, %s129
    %p131 = scmp.eq.s32.totalorder %s16, 0
    %p132 = por %p130, %p131
    %p133 = scmp.le.s32.totalorder 1, %s10
    %p134 = scmp.lt.s32.totalorder %s10, 3
    %p135 = pnand %p133, %p134
    %p136 = pneg %p135
    // Predicated region
    $region9: #{_lambda_.23} parent=5 // pred_check
      _
    $region10: #{_lambda_.23} parent=5 // pred_check_branch
      %138 = sbr.rel (%p135) target = $region12
    $region11: #{_lambda_.23} parent=5 // pred_region
      %s139 = ssub.s32 %s10, 1
      // Predicated region
      $region13: #{_lambda_.23} parent=11 // pred_check
        %p140 = pneg %p57
      $region14: #{_lambda_.23} parent=11 // pred_check_branch
        %142 = sbr.rel (%p140) target = $region16
      $region15: #{_lambda_.23} parent=11 // pred_region
        _
      $region16: #{_lambda_.23} parent=11 // pred_fallthru
        _
      // Predicated region
      $region17: #{_lambda_.23} parent=11 // pred_check
        %p143 = pneg %p78
      $region18: #{_lambda_.23} parent=11 // pred_check_branch
        %145 = sbr.rel (%p143) target = $region20
      $region19: #{_lambda_.23} parent=11 // pred_region
        _
      $region20: #{_lambda_.23} parent=11 // pred_fallthru
        _
      // Predicated region
      $region21: #{_lambda_.23} parent=11 // pred_check
        %p146 = pneg %p99
      $region22: #{_lambda_.23} parent=11 // pred_check_branch
        %148 = sbr.rel (%p146) target = $region24
      $region23: #{_lambda_.23} parent=11 // pred_region
        _
      $region24: #{_lambda_.23} parent=11 // pred_fallthru
        _
    $region12: #{_lambda_.23} parent=5 // pred_fallthru
      _
    %p149 = scmp.lt.s32.totalorder %s10, 2
    // Predicated region
    $region25: #{_lambda_.23} parent=5 // pred_check
      %p150 = pneg %p149
    $region26: #{_lambda_.23} parent=5 // pred_check_branch
      %152 = sbr.rel (%p150) target = $region28
    $region27: #{_lambda_.23} parent=5 // pred_region
      // Predicated region
      $region29: #{_lambda_.23} parent=27 // pred_check
        %p153 = pneg %p30
      $region30: #{_lambda_.23} parent=27 // pred_check_branch
        %155 = sbr.rel (%p153) target = $region32
      $region31: #{_lambda_.23} parent=27 // pred_region
        %p156 = scmp.lt.s32.totalorder %s10, 1
        %s157 = scalar_select %p156, %s10, 1
        %s158 = smul.addr %s157, 32
        %s159 = smul.addr %s158, 8
        %s160 = scalar_lea.vmem %s0, %s159
      $region32: #{_lambda_.23} parent=27 // pred_fallthru
        _
    $region28: #{_lambda_.23} parent=5 // pred_fallthru
      _
    %p161 = scmp.le.s32.totalorder 1, %s10
    %p162 = scmp.lt.s32.totalorder %s10, 3
    %p163 = pnand %p161, %p162
    %p164 = pneg %p163
    // Predicated region
    $region33: #{_lambda_.23} parent=5 // pred_check
      _
    $region34: #{_lambda_.23} parent=5 // pred_check_branch
      %166 = sbr.rel (%p163) target = $region36
    $region35: #{_lambda_.23} parent=5 // pred_region
      %s167 = ssub.s32 %s10, 1
      %p168 = scmp.lt.s32.totalorder %s15, 1
      %s169 = scalar_select %p168, %s15, 1
      %s170 = smul.addr %s169, 32
      %s171 = smul.addr %s170, 8
      %s172 = scalar_lea.vmem %s0, %s171
      %p173 = pneg %p36
      %p174 = pneg %p33
      %p175 = pneg %p57
      %p176 = pneg %p54
      %p177 = pneg %p78
      %p178 = pneg %p75
      %p179 = pneg %p99
      %p180 = pneg %p96
      %p181 = pneg %p125
      %p182 = pneg %p122
      %p183 = scmp.lt.s32.totalorder %s15, 1
      %s184 = scalar_select %p183, %s15, 1
      %s185 = smul.addr %s184, 16
      %s186 = smul.addr %s185, 8
      %s187 = scalar_lea.vmem %s4, %s186
      %p188 = scmp.lt.s32.totalorder %s15, 1
      %s189 = scalar_select %p188, %s15, 1
      %s190 = smul.addr %s189, 32
      %s191 = smul.addr %s190, 8
      %s192 = scalar_lea.vmem %s0, %s191
      %p193 = scmp.lt.s32.totalorder %s15, 1
      %s194 = scalar_select %p193, %s15, 1
      %s195 = smul.addr %s194, 16
      %s196 = smul.addr %s195, 8
      %s197 = scalar_lea.vmem %s4, %s196
      %v198 = vld [vmem:[%s192] sm:$0xff]
      %v199 = vld [vmem:[%s192 + $0x8] sm:$0xff]
      %v200 = vld [vmem:[%s192 + $0x10] sm:$0xff]
      %v201 = vld [vmem:[%s192 + $0x18] sm:$0xff]
      %v202 = vld [vmem:[%s192 + $0x20] sm:$0xff]
      %v203 = vld [vmem:[%s192 + $0x28] sm:$0xff]
      %v204 = vld [vmem:[%s192 + $0x30] sm:$0xff]
      %v205 = vld [vmem:[%s192 + $0x38] sm:$0xff]
      %v206 = vld [vmem:[%s192 + $0x40] sm:$0xff]
      %v207 = vld [vmem:[%s192 + $0x48] sm:$0xff]
      %v208 = vld [vmem:[%s192 + $0x50] sm:$0xff]
      %v209 = vld [vmem:[%s192 + $0x58] sm:$0xff]
      %v210 = vld [vmem:[%s192 + $0x60] sm:$0xff]
      %v211 = vld [vmem:[%s192 + $0x68] sm:$0xff]
      %v212 = vld [vmem:[%s192 + $0x70] sm:$0xff]
      %v213 = vld [vmem:[%s192 + $0x78] sm:$0xff]
      %v214 = vld [vmem:[%s192 + $0x80] sm:$0xff]
      %v215 = vld [vmem:[%s192 + $0x88] sm:$0xff]
      %v216 = vld [vmem:[%s192 + $0x90] sm:$0xff]
      %v217 = vld [vmem:[%s192 + $0x98] sm:$0xff]
      %v218 = vld [vmem:[%s192 + $0xa0] sm:$0xff]
      %v219 = vld [vmem:[%s192 + $0xa8] sm:$0xff]
      %v220 = vld [vmem:[%s192 + $0xb0] sm:$0xff]
      %v221 = vld [vmem:[%s192 + $0xb8] sm:$0xff]
      %v222 = vld [vmem:[%s192 + $0xc0] sm:$0xff]
      %v223 = vld [vmem:[%s192 + $0xc8] sm:$0xff]
      %v224 = vld [vmem:[%s192 + $0xd0] sm:$0xff]
      %v225 = vld [vmem:[%s192 + $0xd8] sm:$0xff]
      %v226 = vld [vmem:[%s192 + $0xe0] sm:$0xff]
      %v227 = vld [vmem:[%s192 + $0xe8] sm:$0xff]
      %v228 = vld [vmem:[%s192 + $0xf0] sm:$0xff]
      %v229 = vld [vmem:[%s192 + $0xf8] sm:$0xff]
      %v230 = vld [vmem:[%s1] sm:$0x7f]
      %s231 = scalar_lea.vmem %s1, 8
      %v232 = vld [vmem:[%s231] sm:$0x7f]
      %vm233 = vcmask 56320
      %v235 = vsel %vm233, %v200, 0
      %v238 = vsel %vm233, %v201, 0
      %v241 = vsel %vm233, %v202, 0
      %v244 = vsel %vm233, %v203, 0
      %v247 = vsel %vm233, %v204, 0
      %v250 = vsel %vm233, %v205, 0
      %v253 = vsel %vm233, %v206, 0
      %v256 = vsel %vm233, %v207, 0
      %v259 = vsel %vm233, %v208, 0
      %v262 = vsel %vm233, %v209, 0
      %v265 = vsel %vm233, %v210, 0
      %v268 = vsel %vm233, %v211, 0
      %v271 = vsel %vm233, %v212, 0
      %v274 = vsel %vm233, %v213, 0
      %v277 = vsel %vm233, %v214, 0
      %v280 = vsel %vm233, %v215, 0
      %vm282 = vcmask 1046528
      %v284 = vsel %vm282, %v232, 0
      %286 = vmatpush.msra.mxu0 0.0
      %287 = vmatpush.msra.mxu0 0.0
      %288 = vmatpush.msra.mxu0 0.0
      %289 = vmatpush.msra.mxu0 0.0
      %290 = vmatpush.msra.mxu0 0.0
      %291 = vmatpush.msra.mxu0 0.0
      %292 = vmatpush.msra.mxu0 0.0
      %293 = vmatpush.msra.mxu0 0.0
      %294 = vmatpush.msra.mxu0 0.0
      %295 = vmatpush.msra.mxu0 0.0
      %296 = vmatpush.msra.mxu0 0.0
      %297 = vmatpush.msra.mxu0 0.0
      %298 = vmatpush.msra.mxu0 0.0
      %299 = vmatpush.msra.mxu0 0.0
      %300 = vmatpush.msra.mxu0 0.0
      %301 = vmatpush.msra.mxu0 %v284
      %302 = vmatmul.f32.gmra.mxu0 %v235
      %v303 = vpop.f32.mrf.mxu0
      %v304 = vadd.f32 0.0, %v303
      %305 = vmatmul.f32.gmra.mxu0 %v238
      %v306 = vpop.f32.mrf.mxu0
      %v307 = vadd.f32 0.0, %v306
      %308 = vmatmul.f32.gmra.mxu0 %v241
      %v309 = vpop.f32.mrf.mxu0
      %v310 = vadd.f32 0.0, %v309
      %311 = vmatmul.f32.gmra.mxu0 %v244
      %v312 = vpop.f32.mrf.mxu0
      %v313 = vadd.f32 0.0, %v312
      %314 = vmatmul.f32.gmra.mxu0 %v247
      %v315 = vpop.f32.mrf.mxu0
      %v316 = vadd.f32 0.0, %v315
      %317 = vmatmul.f32.gmra.mxu0 %v250
      %v318 = vpop.f32.mrf.mxu0
      %v319 = vadd.f32 0.0, %v318
      %320 = vmatmul.f32.gmra.mxu0 %v253
      %v321 = vpop.f32.mrf.mxu0
      %v322 = vadd.f32 0.0, %v321
      %323 = vmatmul.f32.gmra.mxu0 %v256
      %v324 = vpop.f32.mrf.mxu0
      %v325 = vadd.f32 0.0, %v324
      %326 = vmatmul.f32.gmra.mxu0 %v259
      %v327 = vpop.f32.mrf.mxu0
      %v328 = vadd.f32 0.0, %v327
      %329 = vmatmul.f32.gmra.mxu0 %v262
      %v330 = vpop.f32.mrf.mxu0
      %v331 = vadd.f32 0.0, %v330
      %332 = vmatmul.f32.gmra.mxu0 %v265
      %v333 = vpop.f32.mrf.mxu0
      %v334 = vadd.f32 0.0, %v333
      %335 = vmatmul.f32.gmra.mxu0 %v268
      %v336 = vpop.f32.mrf.mxu0
      %v337 = vadd.f32 0.0, %v336
      %338 = vmatmul.f32.gmra.mxu0 %v271
      %v339 = vpop.f32.mrf.mxu0
      %v340 = vadd.f32 0.0, %v339
      %341 = vmatmul.f32.gmra.mxu0 %v274
      %v342 = vpop.f32.mrf.mxu0
      %v343 = vadd.f32 0.0, %v342
      %344 = vmatmul.f32.gmra.mxu0 %v277
      %v345 = vpop.f32.mrf.mxu0
      %v346 = vadd.f32 0.0, %v345
      %347 = vmatmul.f32.gmra.mxu0 %v280
      %v348 = vpop.f32.mrf.mxu0
      %v349 = vadd.f32 0.0, %v348
      %350 = vdwg.mxu0
      %v352 = vsel %vm233, %v198, 0
      %v355 = vsel %vm233, %v199, 0
      %v358 = vsel %vm282, %v230, 0
      %360 = vmatpush.msra.mxu0 0.0
      %361 = vmatpush.msra.mxu0 0.0
      %362 = vmatpush.msra.mxu0 0.0
      %363 = vmatpush.msra.mxu0 0.0
      %364 = vmatpush.msra.mxu0 0.0
      %365 = vmatpush.msra.mxu0 0.0
      %366 = vmatpush.msra.mxu0 0.0
      %367 = vmatpush.msra.mxu0 0.0
      %368 = vmatpush.msra.mxu0 0.0
      %369 = vmatpush.msra.mxu0 0.0
      %370 = vmatpush.msra.mxu0 0.0
      %371 = vmatpush.msra.mxu0 0.0
      %372 = vmatpush.msra.mxu0 0.0
      %373 = vmatpush.msra.mxu0 0.0
      %374 = vmatpush.msra.mxu0 0.0
      %375 = vmatpush.msra.mxu0 %v358
      %376 = vmatmul.f32.gmra.mxu0 %v352
      %v377 = vpop.f32.mrf.mxu0
      %v378 = vadd.f32 %v304, %v377
      %379 = vmatmul.f32.gmra.mxu0 %v355
      %v380 = vpop.f32.mrf.mxu0
      %v381 = vadd.f32 %v307, %v380
      %382 = vmatmul.f32.gmra.mxu0 %v235
      %v383 = vpop.f32.mrf.mxu0
      %v384 = vadd.f32 %v310, %v383
      %385 = vmatmul.f32.gmra.mxu0 %v238
      %v386 = vpop.f32.mrf.mxu0
      %v387 = vadd.f32 %v313, %v386
      %388 = vmatmul.f32.gmra.mxu0 %v241
      %v389 = vpop.f32.mrf.mxu0
      %v390 = vadd.f32 %v316, %v389
      %391 = vmatmul.f32.gmra.mxu0 %v244
      %v392 = vpop.f32.mrf.mxu0
      %v393 = vadd.f32 %v319, %v392
      %394 = vmatmul.f32.gmra.mxu0 %v247
      %v395 = vpop.f32.mrf.mxu0
      %v396 = vadd.f32 %v322, %v395
      %397 = vmatmul.f32.gmra.mxu0 %v250
      %v398 = vpop.f32.mrf.mxu0
      %v399 = vadd.f32 %v325, %v398
      %400 = vmatmul.f32.gmra.mxu0 %v253
      %v401 = vpop.f32.mrf.mxu0
      %v402 = vadd.f32 %v328, %v401
      %403 = vmatmul.f32.gmra.mxu0 %v256
      %v404 = vpop.f32.mrf.mxu0
      %v405 = vadd.f32 %v331, %v404
      %406 = vmatmul.f32.gmra.mxu0 %v259
      %v407 = vpop.f32.mrf.mxu0
      %v408 = vadd.f32 %v334, %v407
      %409 = vmatmul.f32.gmra.mxu0 %v262
      %v410 = vpop.f32.mrf.mxu0
      %v411 = vadd.f32 %v337, %v410
      %412 = vmatmul.f32.gmra.mxu0 %v265
      %v413 = vpop.f32.mrf.mxu0
      %v414 = vadd.f32 %v340, %v413
      %415 = vmatmul.f32.gmra.mxu0 %v268
      %v416 = vpop.f32.mrf.mxu0
      %v417 = vadd.f32 %v343, %v416
      %418 = vmatmul.f32.gmra.mxu0 %v271
      %v419 = vpop.f32.mrf.mxu0
      %v420 = vadd.f32 %v346, %v419
      %421 = vmatmul.f32.gmra.mxu0 %v274
      %v422 = vpop.f32.mrf.mxu0
      %v423 = vadd.f32 %v349, %v422
      %424 = vdwg.mxu0
      %s425 = scalar_lea.vmem %s1, 16
      %v426 = vld [vmem:[%s425] sm:$0x7f]
      %v428 = vsel %vm233, %v216, 0
      %v431 = vsel %vm233, %v217, 0
      %v434 = vsel %vm282, %v426, 0
      %436 = vmatpush.msra.mxu0 0.0
      %437 = vmatpush.msra.mxu0 0.0
      %438 = vmatpush.msra.mxu0 0.0
      %439 = vmatpush.msra.mxu0 0.0
      %440 = vmatpush.msra.mxu0 0.0
      %441 = vmatpush.msra.mxu0 0.0
      %442 = vmatpush.msra.mxu0 0.0
      %443 = vmatpush.msra.mxu0 0.0
      %444 = vmatpush.msra.mxu0 0.0
      %445 = vmatpush.msra.mxu0 0.0
      %446 = vmatpush.msra.mxu0 0.0
      %447 = vmatpush.msra.mxu0 0.0
      %448 = vmatpush.msra.mxu0 0.0
      %449 = vmatpush.msra.mxu0 0.0
      %450 = vmatpush.msra.mxu0 0.0
      %451 = vmatpush.msra.mxu0 %v434
      %452 = vmatmul.f32.gmra.mxu0 %v241
      %v453 = vpop.f32.mrf.mxu0
      %v454 = vadd.f32 0.0, %v453
      %455 = vmatmul.f32.gmra.mxu0 %v244
      %v456 = vpop.f32.mrf.mxu0
      %v457 = vadd.f32 0.0, %v456
      %458 = vmatmul.f32.gmra.mxu0 %v247
      %v459 = vpop.f32.mrf.mxu0
      %v460 = vadd.f32 0.0, %v459
      %461 = vmatmul.f32.gmra.mxu0 %v250
      %v462 = vpop.f32.mrf.mxu0
      %v463 = vadd.f32 0.0, %v462
      %464 = vmatmul.f32.gmra.mxu0 %v253
      %v465 = vpop.f32.mrf.mxu0
      %v466 = vadd.f32 0.0, %v465
      %467 = vmatmul.f32.gmra.mxu0 %v256
      %v468 = vpop.f32.mrf.mxu0
      %v469 = vadd.f32 0.0, %v468
      %470 = vmatmul.f32.gmra.mxu0 %v259
      %v471 = vpop.f32.mrf.mxu0
      %v472 = vadd.f32 0.0, %v471
      %473 = vmatmul.f32.gmra.mxu0 %v262
      %v474 = vpop.f32.mrf.mxu0
      %v475 = vadd.f32 0.0, %v474
      %476 = vmatmul.f32.gmra.mxu0 %v265
      %v477 = vpop.f32.mrf.mxu0
      %v478 = vadd.f32 0.0, %v477
      %479 = vmatmul.f32.gmra.mxu0 %v268
      %v480 = vpop.f32.mrf.mxu0
      %v481 = vadd.f32 0.0, %v480
      %482 = vmatmul.f32.gmra.mxu0 %v271
      %v483 = vpop.f32.mrf.mxu0
      %v484 = vadd.f32 0.0, %v483
      %485 = vmatmul.f32.gmra.mxu0 %v274
      %v486 = vpop.f32.mrf.mxu0
      %v487 = vadd.f32 0.0, %v486
      %488 = vmatmul.f32.gmra.mxu0 %v277
      %v489 = vpop.f32.mrf.mxu0
      %v490 = vadd.f32 0.0, %v489
      %491 = vmatmul.f32.gmra.mxu0 %v280
      %v492 = vpop.f32.mrf.mxu0
      %v493 = vadd.f32 0.0, %v492
      %494 = vmatmul.f32.gmra.mxu0 %v428
      %v495 = vpop.f32.mrf.mxu0
      %v496 = vadd.f32 0.0, %v495
      %497 = vmatmul.f32.gmra.mxu0 %v431
      %v498 = vpop.f32.mrf.mxu0
      %v499 = vadd.f32 0.0, %v498
      %500 = vdwg.mxu0
      %v501 = vadd.f32 %v378, %v454
      %v502 = vadd.f32 %v381, %v457
      %v503 = vadd.f32 %v384, %v460
      %v504 = vadd.f32 %v387, %v463
      %v505 = vadd.f32 %v390, %v466
      %v506 = vadd.f32 %v393, %v469
      %v507 = vadd.f32 %v396, %v472
      %v508 = vadd.f32 %v399, %v475
      %v509 = vadd.f32 %v402, %v478
      %v510 = vadd.f32 %v405, %v481
      %v511 = vadd.f32 %v408, %v484
      %v512 = vadd.f32 %v411, %v487
      %v513 = vadd.f32 %v414, %v490
      %v514 = vadd.f32 %v417, %v493
      %v515 = vadd.f32 %v420, %v496
      %v516 = vadd.f32 %v423, %v499
      %s517 = scalar_lea.vmem %s1, 24
      %v518 = vld [vmem:[%s517] sm:$0x7f]
      %v520 = vsel %vm233, %v218, 0
      %v523 = vsel %vm233, %v219, 0
      %v526 = vsel %vm282, %v518, 0
      %528 = vmatpush.msra.mxu0 0.0
      %529 = vmatpush.msra.mxu0 0.0
      %530 = vmatpush.msra.mxu0 0.0
      %531 = vmatpush.msra.mxu0 0.0
      %532 = vmatpush.msra.mxu0 0.0
      %533 = vmatpush.msra.mxu0 0.0
      %534 = vmatpush.msra.mxu0 0.0
      %535 = vmatpush.msra.mxu0 0.0
      %536 = vmatpush.msra.mxu0 0.0
      %537 = vmatpush.msra.mxu0 0.0
      %538 = vmatpush.msra.mxu0 0.0
      %539 = vmatpush.msra.mxu0 0.0
      %540 = vmatpush.msra.mxu0 0.0
      %541 = vmatpush.msra.mxu0 0.0
      %542 = vmatpush.msra.mxu0 0.0
      %543 = vmatpush.msra.mxu0 %v526
      %544 = vmatmul.f32.gmra.mxu0 %v247
      %v545 = vpop.f32.mrf.mxu0
      %v546 = vadd.f32 0.0, %v545
      %547 = vmatmul.f32.gmra.mxu0 %v250
      %v548 = vpop.f32.mrf.mxu0
      %v549 = vadd.f32 0.0, %v548
      %550 = vmatmul.f32.gmra.mxu0 %v253
      %v551 = vpop.f32.mrf.mxu0
      %v552 = vadd.f32 0.0, %v551
      %553 = vmatmul.f32.gmra.mxu0 %v256
      %v554 = vpop.f32.mrf.mxu0
      %v555 = vadd.f32 0.0, %v554
      %556 = vmatmul.f32.gmra.mxu0 %v259
      %v557 = vpop.f32.mrf.mxu0
      %v558 = vadd.f32 0.0, %v557
      %559 = vmatmul.f32.gmra.mxu0 %v262
      %v560 = vpop.f32.mrf.mxu0
      %v561 = vadd.f32 0.0, %v560
      %562 = vmatmul.f32.gmra.mxu0 %v265
      %v563 = vpop.f32.mrf.mxu0
      %v564 = vadd.f32 0.0, %v563
      %565 = vmatmul.f32.gmra.mxu0 %v268
      %v566 = vpop.f32.mrf.mxu0
      %v567 = vadd.f32 0.0, %v566
      %568 = vmatmul.f32.gmra.mxu0 %v271
      %v569 = vpop.f32.mrf.mxu0
      %v570 = vadd.f32 0.0, %v569
      %571 = vmatmul.f32.gmra.mxu0 %v274
      %v572 = vpop.f32.mrf.mxu0
      %v573 = vadd.f32 0.0, %v572
      %574 = vmatmul.f32.gmra.mxu0 %v277
      %v575 = vpop.f32.mrf.mxu0
      %v576 = vadd.f32 0.0, %v575
      %577 = vmatmul.f32.gmra.mxu0 %v280
      %v578 = vpop.f32.mrf.mxu0
      %v579 = vadd.f32 0.0, %v578
      %580 = vmatmul.f32.gmra.mxu0 %v428
      %v581 = vpop.f32.mrf.mxu0
      %v582 = vadd.f32 0.0, %v581
      %583 = vmatmul.f32.gmra.mxu0 %v431
      %v584 = vpop.f32.mrf.mxu0
      %v585 = vadd.f32 0.0, %v584
      %586 = vmatmul.f32.gmra.mxu0 %v520
      %v587 = vpop.f32.mrf.mxu0
      %v588 = vadd.f32 0.0, %v587
      %589 = vmatmul.f32.gmra.mxu0 %v523
      %v590 = vpop.f32.mrf.mxu0
      %v591 = vadd.f32 0.0, %v590
      %592 = vdwg.mxu0
      %v593 = vadd.f32 %v501, %v546
      %v594 = vadd.f32 %v502, %v549
      %v595 = vadd.f32 %v503, %v552
      %v596 = vadd.f32 %v504, %v555
      %v597 = vadd.f32 %v505, %v558
      %v598 = vadd.f32 %v506, %v561
      %v599 = vadd.f32 %v507, %v564
      %v600 = vadd.f32 %v508, %v567
      %v601 = vadd.f32 %v509, %v570
      %v602 = vadd.f32 %v510, %v573
      %v603 = vadd.f32 %v511, %v576
      %v604 = vadd.f32 %v512, %v579
      %v605 = vadd.f32 %v513, %v582
      %v606 = vadd.f32 %v514, %v585
      %v607 = vadd.f32 %v515, %v588
      %v608 = vadd.f32 %v516, %v591
      %s609 = scalar_lea.vmem %s1, 32
      %v610 = vld [vmem:[%s609] sm:$0x7f]
      %v612 = vsel %vm233, %v220, 0
      %v615 = vsel %vm233, %v221, 0
      %v618 = vsel %vm282, %v610, 0
      %620 = vmatpush.msra.mxu0 0.0
      %621 = vmatpush.msra.mxu0 0.0
      %622 = vmatpush.msra.mxu0 0.0
      %623 = vmatpush.msra.mxu0 0.0
      %624 = vmatpush.msra.mxu0 0.0
      %625 = vmatpush.msra.mxu0 0.0
      %626 = vmatpush.msra.mxu0 0.0
      %627 = vmatpush.msra.mxu0 0.0
      %628 = vmatpush.msra.mxu0 0.0
      %629 = vmatpush.msra.mxu0 0.0
      %630 = vmatpush.msra.mxu0 0.0
      %631 = vmatpush.msra.mxu0 0.0
      %632 = vmatpush.msra.mxu0 0.0
      %633 = vmatpush.msra.mxu0 0.0
      %634 = vmatpush.msra.mxu0 0.0
      %635 = vmatpush.msra.mxu0 %v618
      %636 = vmatmul.f32.gmra.mxu0 %v253
      %v637 = vpop.f32.mrf.mxu0
      %v638 = vadd.f32 0.0, %v637
      %639 = vmatmul.f32.gmra.mxu0 %v256
      %v640 = vpop.f32.mrf.mxu0
      %v641 = vadd.f32 0.0, %v640
      %642 = vmatmul.f32.gmra.mxu0 %v259
      %v643 = vpop.f32.mrf.mxu0
      %v644 = vadd.f32 0.0, %v643
      %645 = vmatmul.f32.gmra.mxu0 %v262
      %v646 = vpop.f32.mrf.mxu0
      %v647 = vadd.f32 0.0, %v646
      %648 = vmatmul.f32.gmra.mxu0 %v265
      %v649 = vpop.f32.mrf.mxu0
      %v650 = vadd.f32 0.0, %v649
      %651 = vmatmul.f32.gmra.mxu0 %v268
      %v652 = vpop.f32.mrf.mxu0
      %v653 = vadd.f32 0.0, %v652
      %654 = vmatmul.f32.gmra.mxu0 %v271
      %v655 = vpop.f32.mrf.mxu0
      %v656 = vadd.f32 0.0, %v655
      %657 = vmatmul.f32.gmra.mxu0 %v274
      %v658 = vpop.f32.mrf.mxu0
      %v659 = vadd.f32 0.0, %v658
      %660 = vmatmul.f32.gmra.mxu0 %v277
      %v661 = vpop.f32.mrf.mxu0
      %v662 = vadd.f32 0.0, %v661
      %663 = vmatmul.f32.gmra.mxu0 %v280
      %v664 = vpop.f32.mrf.mxu0
      %v665 = vadd.f32 0.0, %v664
      %666 = vmatmul.f32.gmra.mxu0 %v428
      %v667 = vpop.f32.mrf.mxu0
      %v668 = vadd.f32 0.0, %v667
      %669 = vmatmul.f32.gmra.mxu0 %v431
      %v670 = vpop.f32.mrf.mxu0
      %v671 = vadd.f32 0.0, %v670
      %672 = vmatmul.f32.gmra.mxu0 %v520
      %v673 = vpop.f32.mrf.mxu0
      %v674 = vadd.f32 0.0, %v673
      %675 = vmatmul.f32.gmra.mxu0 %v523
      %v676 = vpop.f32.mrf.mxu0
      %v677 = vadd.f32 0.0, %v676
      %678 = vmatmul.f32.gmra.mxu0 %v612
      %v679 = vpop.f32.mrf.mxu0
      %v680 = vadd.f32 0.0, %v679
      %681 = vmatmul.f32.gmra.mxu0 %v615
      %v682 = vpop.f32.mrf.mxu0
      %v683 = vadd.f32 0.0, %v682
      %684 = vdwg.mxu0
      %v685 = vadd.f32 %v593, %v638
      %v686 = vadd.f32 %v594, %v641
      %v687 = vadd.f32 %v595, %v644
      %v688 = vadd.f32 %v596, %v647
      %v689 = vadd.f32 %v597, %v650
      %v690 = vadd.f32 %v598, %v653
      %v691 = vadd.f32 %v599, %v656
      %v692 = vadd.f32 %v600, %v659
      %v693 = vadd.f32 %v601, %v662
      %v694 = vadd.f32 %v602, %v665
      %v695 = vadd.f32 %v603, %v668
      %v696 = vadd.f32 %v604, %v671
      %v697 = vadd.f32 %v605, %v674
      %v698 = vadd.f32 %v606, %v677
      %v699 = vadd.f32 %v607, %v680
      %v700 = vadd.f32 %v608, %v683
      %s701 = scalar_lea.vmem %s1, 40
      %v702 = vld [vmem:[%s701] sm:$0x7f]
      %v704 = vsel %vm233, %v222, 0
      %v707 = vsel %vm233, %v223, 0
      %v710 = vsel %vm282, %v702, 0
      %712 = vmatpush.msra.mxu0 0.0
      %713 = vmatpush.msra.mxu0 0.0
      %714 = vmatpush.msra.mxu0 0.0
      %715 = vmatpush.msra.mxu0 0.0
      %716 = vmatpush.msra.mxu0 0.0
      %717 = vmatpush.msra.mxu0 0.0
      %718 = vmatpush.msra.mxu0 0.0
      %719 = vmatpush.msra.mxu0 0.0
      %720 = vmatpush.msra.mxu0 0.0
      %721 = vmatpush.msra.mxu0 0.0
      %722 = vmatpush.msra.mxu0 0.0
      %723 = vmatpush.msra.mxu0 0.0
      %724 = vmatpush.msra.mxu0 0.0
      %725 = vmatpush.msra.mxu0 0.0
      %726 = vmatpush.msra.mxu0 0.0
      %727 = vmatpush.msra.mxu0 %v710
      %728 = vmatmul.f32.gmra.mxu0 %v259
      %v729 = vpop.f32.mrf.mxu0
      %v730 = vadd.f32 0.0, %v729
      %731 = vmatmul.f32.gmra.mxu0 %v262
      %v732 = vpop.f32.mrf.mxu0
      %v733 = vadd.f32 0.0, %v732
      %734 = vmatmul.f32.gmra.mxu0 %v265
      %v735 = vpop.f32.mrf.mxu0
      %v736 = vadd.f32 0.0, %v735
      %737 = vmatmul.f32.gmra.mxu0 %v268
      %v738 = vpop.f32.mrf.mxu0
      %v739 = vadd.f32 0.0, %v738
      %740 = vmatmul.f32.gmra.mxu0 %v271
      %v741 = vpop.f32.mrf.mxu0
      %v742 = vadd.f32 0.0, %v741
      %743 = vmatmul.f32.gmra.mxu0 %v274
      %v744 = vpop.f32.mrf.mxu0
      %v745 = vadd.f32 0.0, %v744
      %746 = vmatmul.f32.gmra.mxu0 %v277
      %v747 = vpop.f32.mrf.mxu0
      %v748 = vadd.f32 0.0, %v747
      %749 = vmatmul.f32.gmra.mxu0 %v280
      %v750 = vpop.f32.mrf.mxu0
      %v751 = vadd.f32 0.0, %v750
      %752 = vmatmul.f32.gmra.mxu0 %v428
      %v753 = vpop.f32.mrf.mxu0
      %v754 = vadd.f32 0.0, %v753
      %755 = vmatmul.f32.gmra.mxu0 %v431
      %v756 = vpop.f32.mrf.mxu0
      %v757 = vadd.f32 0.0, %v756
      %758 = vmatmul.f32.gmra.mxu0 %v520
      %v759 = vpop.f32.mrf.mxu0
      %v760 = vadd.f32 0.0, %v759
      %761 = vmatmul.f32.gmra.mxu0 %v523
      %v762 = vpop.f32.mrf.mxu0
      %v763 = vadd.f32 0.0, %v762
      %764 = vmatmul.f32.gmra.mxu0 %v612
      %v765 = vpop.f32.mrf.mxu0
      %v766 = vadd.f32 0.0, %v765
      %767 = vmatmul.f32.gmra.mxu0 %v615
      %v768 = vpop.f32.mrf.mxu0
      %v769 = vadd.f32 0.0, %v768
      %770 = vmatmul.f32.gmra.mxu0 %v704
      %v771 = vpop.f32.mrf.mxu0
      %v772 = vadd.f32 0.0, %v771
      %773 = vmatmul.f32.gmra.mxu0 %v707
      %v774 = vpop.f32.mrf.mxu0
      %v775 = vadd.f32 0.0, %v774
      %776 = vdwg.mxu0
      %v777 = vadd.f32 %v685, %v730
      %v778 = vadd.f32 %v686, %v733
      %v779 = vadd.f32 %v687, %v736
      %v780 = vadd.f32 %v688, %v739
      %v781 = vadd.f32 %v689, %v742
      %v782 = vadd.f32 %v690, %v745
      %v783 = vadd.f32 %v691, %v748
      %v784 = vadd.f32 %v692, %v751
      %v785 = vadd.f32 %v693, %v754
      %v786 = vadd.f32 %v694, %v757
      %v787 = vadd.f32 %v695, %v760
      %v788 = vadd.f32 %v696, %v763
      %v789 = vadd.f32 %v697, %v766
      %v790 = vadd.f32 %v698, %v769
      %v791 = vadd.f32 %v699, %v772
      %v792 = vadd.f32 %v700, %v775
      %s793 = scalar_lea.vmem %s1, 48
      %v794 = vld [vmem:[%s793] sm:$0x7f]
      %v796 = vsel %vm233, %v224, 0
      %v799 = vsel %vm233, %v225, 0
      %v802 = vsel %vm282, %v794, 0
      %804 = vmatpush.msra.mxu0 0.0
      %805 = vmatpush.msra.mxu0 0.0
      %806 = vmatpush.msra.mxu0 0.0
      %807 = vmatpush.msra.mxu0 0.0
      %808 = vmatpush.msra.mxu0 0.0
      %809 = vmatpush.msra.mxu0 0.0
      %810 = vmatpush.msra.mxu0 0.0
      %811 = vmatpush.msra.mxu0 0.0
      %812 = vmatpush.msra.mxu0 0.0
      %813 = vmatpush.msra.mxu0 0.0
      %814 = vmatpush.msra.mxu0 0.0
      %815 = vmatpush.msra.mxu0 0.0
      %816 = vmatpush.msra.mxu0 0.0
      %817 = vmatpush.msra.mxu0 0.0
      %818 = vmatpush.msra.mxu0 0.0
      %819 = vmatpush.msra.mxu0 %v802
      %820 = vmatmul.f32.gmra.mxu0 %v265
      %v821 = vpop.f32.mrf.mxu0
      %v822 = vadd.f32 0.0, %v821
      %823 = vmatmul.f32.gmra.mxu0 %v268
      %v824 = vpop.f32.mrf.mxu0
      %v825 = vadd.f32 0.0, %v824
      %826 = vmatmul.f32.gmra.mxu0 %v271
      %v827 = vpop.f32.mrf.mxu0
      %v828 = vadd.f32 0.0, %v827
      %829 = vmatmul.f32.gmra.mxu0 %v274
      %v830 = vpop.f32.mrf.mxu0
      %v831 = vadd.f32 0.0, %v830
      %832 = vmatmul.f32.gmra.mxu0 %v277
      %v833 = vpop.f32.mrf.mxu0
      %v834 = vadd.f32 0.0, %v833
      %835 = vmatmul.f32.gmra.mxu0 %v280
      %v836 = vpop.f32.mrf.mxu0
      %v837 = vadd.f32 0.0, %v836
      %838 = vmatmul.f32.gmra.mxu0 %v428
      %v839 = vpop.f32.mrf.mxu0
      %v840 = vadd.f32 0.0, %v839
      %841 = vmatmul.f32.gmra.mxu0 %v431
      %v842 = vpop.f32.mrf.mxu0
      %v843 = vadd.f32 0.0, %v842
      %844 = vmatmul.f32.gmra.mxu0 %v520
      %v845 = vpop.f32.mrf.mxu0
      %v846 = vadd.f32 0.0, %v845
      %847 = vmatmul.f32.gmra.mxu0 %v523
      %v848 = vpop.f32.mrf.mxu0
      %v849 = vadd.f32 0.0, %v848
      %850 = vmatmul.f32.gmra.mxu0 %v612
      %v851 = vpop.f32.mrf.mxu0
      %v852 = vadd.f32 0.0, %v851
      %853 = vmatmul.f32.gmra.mxu0 %v615
      %v854 = vpop.f32.mrf.mxu0
      %v855 = vadd.f32 0.0, %v854
      %856 = vmatmul.f32.gmra.mxu0 %v704
      %v857 = vpop.f32.mrf.mxu0
      %v858 = vadd.f32 0.0, %v857
      %859 = vmatmul.f32.gmra.mxu0 %v707
      %v860 = vpop.f32.mrf.mxu0
      %v861 = vadd.f32 0.0, %v860
      %862 = vmatmul.f32.gmra.mxu0 %v796
      %v863 = vpop.f32.mrf.mxu0
      %v864 = vadd.f32 0.0, %v863
      %865 = vmatmul.f32.gmra.mxu0 %v799
      %v866 = vpop.f32.mrf.mxu0
      %v867 = vadd.f32 0.0, %v866
      %868 = vdwg.mxu0
      %v869 = vadd.f32 %v777, %v822
      %v870 = vadd.f32 %v778, %v825
      %v871 = vadd.f32 %v779, %v828
      %v872 = vadd.f32 %v780, %v831
      %v873 = vadd.f32 %v781, %v834
      %v874 = vadd.f32 %v782, %v837
      %v875 = vadd.f32 %v783, %v840
      %v876 = vadd.f32 %v784, %v843
      %v877 = vadd.f32 %v785, %v846
      %v878 = vadd.f32 %v786, %v849
      %v879 = vadd.f32 %v787, %v852
      %v880 = vadd.f32 %v788, %v855
      %v881 = vadd.f32 %v789, %v858
      %v882 = vadd.f32 %v790, %v861
      %v883 = vadd.f32 %v791, %v864
      %v884 = vadd.f32 %v792, %v867
      %s885 = scalar_lea.vmem %s1, 56
      %v886 = vld [vmem:[%s885] sm:$0x7f]
      %v888 = vsel %vm233, %v226, 0
      %v891 = vsel %vm233, %v227, 0
      %v894 = vsel %vm282, %v886, 0
      %896 = vmatpush.msra.mxu0 0.0
      %897 = vmatpush.msra.mxu0 0.0
      %898 = vmatpush.msra.mxu0 0.0
      %899 = vmatpush.msra.mxu0 0.0
      %900 = vmatpush.msra.mxu0 0.0
      %901 = vmatpush.msra.mxu0 0.0
      %902 = vmatpush.msra.mxu0 0.0
      %903 = vmatpush.msra.mxu0 0.0
      %904 = vmatpush.msra.mxu0 0.0
      %905 = vmatpush.msra.mxu0 0.0
      %906 = vmatpush.msra.mxu0 0.0
      %907 = vmatpush.msra.mxu0 0.0
      %908 = vmatpush.msra.mxu0 0.0
      %909 = vmatpush.msra.mxu0 0.0
      %910 = vmatpush.msra.mxu0 0.0
      %911 = vmatpush.msra.mxu0 %v894
      %912 = vmatmul.f32.gmra.mxu0 %v271
      %v913 = vpop.f32.mrf.mxu0
      %v914 = vadd.f32 0.0, %v913
      %915 = vmatmul.f32.gmra.mxu0 %v274
      %v916 = vpop.f32.mrf.mxu0
      %v917 = vadd.f32 0.0, %v916
      %918 = vmatmul.f32.gmra.mxu0 %v277
      %v919 = vpop.f32.mrf.mxu0
      %v920 = vadd.f32 0.0, %v919
      %921 = vmatmul.f32.gmra.mxu0 %v280
      %v922 = vpop.f32.mrf.mxu0
      %v923 = vadd.f32 0.0, %v922
      %924 = vmatmul.f32.gmra.mxu0 %v428
      %v925 = vpop.f32.mrf.mxu0
      %v926 = vadd.f32 0.0, %v925
      %927 = vmatmul.f32.gmra.mxu0 %v431
      %v928 = vpop.f32.mrf.mxu0
      %v929 = vadd.f32 0.0, %v928
      %930 = vmatmul.f32.gmra.mxu0 %v520
      %v931 = vpop.f32.mrf.mxu0
      %v932 = vadd.f32 0.0, %v931
      %933 = vmatmul.f32.gmra.mxu0 %v523
      %v934 = vpop.f32.mrf.mxu0
      %v935 = vadd.f32 0.0, %v934
      %936 = vmatmul.f32.gmra.mxu0 %v612
      %v937 = vpop.f32.mrf.mxu0
      %v938 = vadd.f32 0.0, %v937
      %939 = vmatmul.f32.gmra.mxu0 %v615
      %v940 = vpop.f32.mrf.mxu0
      %v941 = vadd.f32 0.0, %v940
      %942 = vmatmul.f32.gmra.mxu0 %v704
      %v943 = vpop.f32.mrf.mxu0
      %v944 = vadd.f32 0.0, %v943
      %945 = vmatmul.f32.gmra.mxu0 %v707
      %v946 = vpop.f32.mrf.mxu0
      %v947 = vadd.f32 0.0, %v946
      %948 = vmatmul.f32.gmra.mxu0 %v796
      %v949 = vpop.f32.mrf.mxu0
      %v950 = vadd.f32 0.0, %v949
      %951 = vmatmul.f32.gmra.mxu0 %v799
      %v952 = vpop.f32.mrf.mxu0
      %v953 = vadd.f32 0.0, %v952
      %954 = vmatmul.f32.gmra.mxu0 %v888
      %v955 = vpop.f32.mrf.mxu0
      %v956 = vadd.f32 0.0, %v955
      %957 = vmatmul.f32.gmra.mxu0 %v891
      %v958 = vpop.f32.mrf.mxu0
      %v959 = vadd.f32 0.0, %v958
      %960 = vdwg.mxu0
      %v961 = vadd.f32 %v869, %v914
      %v962 = vadd.f32 %v870, %v917
      %v963 = vadd.f32 %v871, %v920
      %v964 = vadd.f32 %v872, %v923
      %v965 = vadd.f32 %v873, %v926
      %v966 = vadd.f32 %v874, %v929
      %v967 = vadd.f32 %v875, %v932
      %v968 = vadd.f32 %v876, %v935
      %v969 = vadd.f32 %v877, %v938
      %v970 = vadd.f32 %v878, %v941
      %v971 = vadd.f32 %v879, %v944
      %v972 = vadd.f32 %v880, %v947
      %v973 = vadd.f32 %v881, %v950
      %v974 = vadd.f32 %v882, %v953
      %v975 = vadd.f32 %v883, %v956
      %v976 = vadd.f32 %v884, %v959
      %s977 = scalar_lea.vmem %s1, 64
      %v978 = vld [vmem:[%s977] sm:$0x7f]
      %v980 = vsel %vm233, %v228, 0
      %v983 = vsel %vm233, %v229, 0
      %v986 = vsel %vm282, %v978, 0
      %988 = vmatpush.msra.mxu0 0.0
      %989 = vmatpush.msra.mxu0 0.0
      %990 = vmatpush.msra.mxu0 0.0
      %991 = vmatpush.msra.mxu0 0.0
      %992 = vmatpush.msra.mxu0 0.0
      %993 = vmatpush.msra.mxu0 0.0
      %994 = vmatpush.msra.mxu0 0.0
      %995 = vmatpush.msra.mxu0 0.0
      %996 = vmatpush.msra.mxu0 0.0
      %997 = vmatpush.msra.mxu0 0.0
      %998 = vmatpush.msra.mxu0 0.0
      %999 = vmatpush.msra.mxu0 0.0
      %1000 = vmatpush.msra.mxu0 0.0
      %1001 = vmatpush.msra.mxu0 0.0
      %1002 = vmatpush.msra.mxu0 0.0
      %1003 = vmatpush.msra.mxu0 %v986
      %1004 = vmatmul.f32.gmra.mxu0 %v277
      %v1005 = vpop.f32.mrf.mxu0
      %v1006 = vadd.f32 0.0, %v1005
      %1007 = vmatmul.f32.gmra.mxu0 %v280
      %v1008 = vpop.f32.mrf.mxu0
      %v1009 = vadd.f32 0.0, %v1008
      %1010 = vmatmul.f32.gmra.mxu0 %v428
      %v1011 = vpop.f32.mrf.mxu0
      %v1012 = vadd.f32 0.0, %v1011
      %1013 = vmatmul.f32.gmra.mxu0 %v431
      %v1014 = vpop.f32.mrf.mxu0
      %v1015 = vadd.f32 0.0, %v1014
      %1016 = vmatmul.f32.gmra.mxu0 %v520
      %v1017 = vpop.f32.mrf.mxu0
      %v1018 = vadd.f32 0.0, %v1017
      %1019 = vmatmul.f32.gmra.mxu0 %v523
      %v1020 = vpop.f32.mrf.mxu0
      %v1021 = vadd.f32 0.0, %v1020
      %1022 = vmatmul.f32.gmra.mxu0 %v612
      %v1023 = vpop.f32.mrf.mxu0
      %v1024 = vadd.f32 0.0, %v1023
      %1025 = vmatmul.f32.gmra.mxu0 %v615
      %v1026 = vpop.f32.mrf.mxu0
      %v1027 = vadd.f32 0.0, %v1026
      %1028 = vmatmul.f32.gmra.mxu0 %v704
      %v1029 = vpop.f32.mrf.mxu0
      %v1030 = vadd.f32 0.0, %v1029
      %1031 = vmatmul.f32.gmra.mxu0 %v707
      %v1032 = vpop.f32.mrf.mxu0
      %v1033 = vadd.f32 0.0, %v1032
      %1034 = vmatmul.f32.gmra.mxu0 %v796
      %v1035 = vpop.f32.mrf.mxu0
      %v1036 = vadd.f32 0.0, %v1035
      %1037 = vmatmul.f32.gmra.mxu0 %v799
      %v1038 = vpop.f32.mrf.mxu0
      %v1039 = vadd.f32 0.0, %v1038
      %1040 = vmatmul.f32.gmra.mxu0 %v888
      %v1041 = vpop.f32.mrf.mxu0
      %v1042 = vadd.f32 0.0, %v1041
      %1043 = vmatmul.f32.gmra.mxu0 %v891
      %v1044 = vpop.f32.mrf.mxu0
      %v1045 = vadd.f32 0.0, %v1044
      %1046 = vmatmul.f32.gmra.mxu0 %v980
      %v1047 = vpop.f32.mrf.mxu0
      %v1048 = vadd.f32 0.0, %v1047
      %1049 = vmatmul.f32.gmra.mxu0 %v983
      %v1050 = vpop.f32.mrf.mxu0
      %v1051 = vadd.f32 0.0, %v1050
      %1052 = vdwg.mxu0
      %v1053 = vadd.f32 %v961, %v1006
      %v1054 = vadd.f32 %v962, %v1009
      %v1055 = vadd.f32 %v963, %v1012
      %v1056 = vadd.f32 %v964, %v1015
      %v1057 = vadd.f32 %v965, %v1018
      %v1058 = vadd.f32 %v966, %v1021
      %v1059 = vadd.f32 %v967, %v1024
      %v1060 = vadd.f32 %v968, %v1027
      %v1061 = vadd.f32 %v969, %v1030
      %v1062 = vadd.f32 %v970, %v1033
      %v1063 = vadd.f32 %v971, %v1036
      %v1064 = vadd.f32 %v972, %v1039
      %v1065 = vadd.f32 %v973, %v1042
      %v1066 = vadd.f32 %v974, %v1045
      %v1067 = vadd.f32 %v975, %v1048
      %v1068 = vadd.f32 %v976, %v1051
      %v1069 = vld [vmem:[%s2] sm:$0x1]
      %v1071 = vperm.slane %v1069, 0
      %v1073 = vmul.f32 %v1053, %v1071
      %v1074 = vmul.f32 %v1054, %v1071
      %v1075 = vmul.f32 %v1055, %v1071
      %v1076 = vmul.f32 %v1056, %v1071
      %v1077 = vmul.f32 %v1057, %v1071
      %v1078 = vmul.f32 %v1058, %v1071
      %v1079 = vmul.f32 %v1059, %v1071
      %v1080 = vmul.f32 %v1060, %v1071
      %v1081 = vmul.f32 %v1061, %v1071
      %v1082 = vmul.f32 %v1062, %v1071
      %v1083 = vmul.f32 %v1063, %v1071
      %v1084 = vmul.f32 %v1064, %v1071
      %v1085 = vmul.f32 %v1065, %v1071
      %v1086 = vmul.f32 %v1066, %v1071
      %v1087 = vmul.f32 %v1067, %v1071
      %v1088 = vmul.f32 %v1068, %v1071
      %v1089 = vld [vmem:[%s3] sm:$0x1]
      %v1091 = vperm.slane %v1089, 0
      %v1093 = vadd.f32 %v1073, %v1091
      %v1094 = vadd.f32 %v1074, %v1091
      %v1095 = vadd.f32 %v1075, %v1091
      %v1096 = vadd.f32 %v1076, %v1091
      %v1097 = vadd.f32 %v1077, %v1091
      %v1098 = vadd.f32 %v1078, %v1091
      %v1099 = vadd.f32 %v1079, %v1091
      %v1100 = vadd.f32 %v1080, %v1091
      %v1101 = vadd.f32 %v1081, %v1091
      %v1102 = vadd.f32 %v1082, %v1091
      %v1103 = vadd.f32 %v1083, %v1091
      %v1104 = vadd.f32 %v1084, %v1091
      %v1105 = vadd.f32 %v1085, %v1091
      %v1106 = vadd.f32 %v1086, %v1091
      %v1107 = vadd.f32 %v1087, %v1091
      %v1108 = vadd.f32 %v1088, %v1091
      %v1109 = vmax.f32 %v1093, 0.0
      %v1110 = vmax.f32 %v1094, 0.0
      %v1111 = vmax.f32 %v1095, 0.0
      %v1112 = vmax.f32 %v1096, 0.0
      %v1113 = vmax.f32 %v1097, 0.0
      %v1114 = vmax.f32 %v1098, 0.0
      %v1115 = vmax.f32 %v1099, 0.0
      %v1116 = vmax.f32 %v1100, 0.0
      %v1117 = vmax.f32 %v1101, 0.0
      %v1118 = vmax.f32 %v1102, 0.0
      %v1119 = vmax.f32 %v1103, 0.0
      %v1120 = vmax.f32 %v1104, 0.0
      %v1121 = vmax.f32 %v1105, 0.0
      %v1122 = vmax.f32 %v1106, 0.0
      %v1123 = vmax.f32 %v1107, 0.0
      %v1124 = vmax.f32 %v1108, 0.0
      %vm1125 = vcmask 203776
      %1126 = vst.msk [vmem:[%s197] sm:$0xff] %vm1125, %v1109
      %1127 = vst.msk [vmem:[%s197 + $0x8] sm:$0xff] %vm1125, %v1110
      %1128 = vst.msk [vmem:[%s197 + $0x10] sm:$0xff] %vm1125, %v1111
      %1129 = vst.msk [vmem:[%s197 + $0x18] sm:$0xff] %vm1125, %v1112
      %1130 = vst.msk [vmem:[%s197 + $0x20] sm:$0xff] %vm1125, %v1113
      %1131 = vst.msk [vmem:[%s197 + $0x28] sm:$0xff] %vm1125, %v1114
      %1132 = vst.msk [vmem:[%s197 + $0x30] sm:$0xff] %vm1125, %v1115
      %1133 = vst.msk [vmem:[%s197 + $0x38] sm:$0xff] %vm1125, %v1116
      %1134 = vst.msk [vmem:[%s197 + $0x40] sm:$0xff] %vm1125, %v1117
      %1135 = vst.msk [vmem:[%s197 + $0x48] sm:$0xff] %vm1125, %v1118
      %1136 = vst.msk [vmem:[%s197 + $0x50] sm:$0xff] %vm1125, %v1119
      %1137 = vst.msk [vmem:[%s197 + $0x58] sm:$0xff] %vm1125, %v1120
      %1138 = vst.msk [vmem:[%s197 + $0x60] sm:$0xff] %vm1125, %v1121
      %1139 = vst.msk [vmem:[%s197 + $0x68] sm:$0xff] %vm1125, %v1122
      %1140 = vst.msk [vmem:[%s197 + $0x70] sm:$0xff] %vm1125, %v1123
      %1141 = vst.msk [vmem:[%s197 + $0x78] sm:$0xff] %vm1125, %v1124
      %p1142 = scmp.lt.s32.totalorder %s15, 1
      %s1143 = scalar_select %p1142, %s15, 1
      %s1144 = smul.addr %s1143, 16
      %s1145 = smul.addr %s1144, 8
      %s1146 = scalar_lea.vmem %s4, %s1145
      // Predicated region
      $region37: #{_lambda_.23} parent=35 // pred_check
        %p1147 = pneg %p122
      $region38: #{_lambda_.23} parent=35 // pred_check_branch
        %1149 = sbr.rel (%p1147) target = $region40
      $region39: #{_lambda_.23} parent=35 // pred_region
        _
      $region40: #{_lambda_.23} parent=35 // pred_fallthru
        _
    $region36: #{_lambda_.23} parent=5 // pred_fallthru
      _
    %p1150 = scmp.le.s32.totalorder 2, %s10
    // Predicated region
    $region41: #{_lambda_.23} parent=5 // pred_check
      %p1151 = pneg %p1150
    $region42: #{_lambda_.23} parent=5 // pred_check_branch
      %1153 = sbr.rel (%p1151) target = $region44
    $region43: #{_lambda_.23} parent=5 // pred_region
      %s1154 = ssub.s32 %s10, 2
      // Predicated region
      $region45: #{_lambda_.23} parent=43 // pred_check
        %p1155 = pneg %p128
      $region46: #{_lambda_.23} parent=43 // pred_check_branch
        %1157 = sbr.rel (%p1155) target = $region48
      $region47: #{_lambda_.23} parent=43 // pred_region
        %p1158 = scmp.lt.s32.totalorder %s16, 1
        %s1159 = scalar_select %p1158, %s16, 1
        %s1160 = smul.addr %s1159, 16
        %s1161 = smul.addr %s1160, 8
        %s1162 = scalar_lea.vmem %s4, %s1161
      $region48: #{_lambda_.23} parent=43 // pred_fallthru
        _
    $region44: #{_lambda_.23} parent=5 // pred_fallthru
      _
  $region6: #{_lambda_.23} parent=0 // loop_footer
    %s14 = sadd.s32 1, %s10
  $region7: #{_lambda_.23} parent=0 // loop_footer_branch
    %9 = sbr.rel target = $region3
  $region8: #{_lambda_.23} parent=0 // loop_exit
    _

// kernel: _lambda_.27
$region0: #{_lambda_.27}
  #allocation0 [shape = 'u32[]', space=smem, size = 0x4, offset = 0x4, fixed_abs, tag = 'smem constant byte address 0x4 - core index']
  #allocation1 [shape = 'u32[72,128]{1,0:T(1,128)}', space=vmem, size = 0x9000, scoped, tag = 'internal scratch']
  #allocation2 [shape = 'f32[1,1]{1,0:T(1,128)S(1)}', space=vmem, size = 0x200, scoped, tag = 'scoped memory for _lambda_.27']
  #allocation3 [shape = 'f32[1,1]{1,0:T(1,128)S(1)}', space=vmem, size = 0x200, scoped, tag = 'scoped memory for _lambda_.27']
  %s0 = inlined_call_operand.vmem [shape: f32[6,32], index: 0, kind: input, shape index: {}]
  %s1 = inlined_call_operand.vmem [shape: f32[32,256], index: 1, kind: input, shape index: {}]
  %s2 = inlined_call_operand.vmem [shape: f32[1,256], index: 2, kind: input, shape index: {}]
  %s3 = inlined_call_operand.vmem [shape: f32[1,256], index: 3, kind: input, shape index: {}]
  %s4 = inlined_call_operand.vmem [shape: f32[256,128], index: 4, kind: input, shape index: {}]
  %s5 = inlined_call_operand.vmem [shape: f32[1,128], index: 5, kind: input, shape index: {}]
  %s6 = inlined_call_operand.vmem [shape: f32[1,128], index: 6, kind: input, shape index: {}]
  %s7 = inlined_call_operand.vmem [shape: f32[128,64], index: 7, kind: input, shape index: {}]
  %s8 = inlined_call_operand.vmem [shape: f32[1,64], index: 8, kind: input, shape index: {}]
  %s9 = inlined_call_operand.vmem [shape: f32[1,64], index: 9, kind: input, shape index: {}]
  %s10 = inlined_call_operand.vmem [shape: f32[64,1], index: 10, kind: input, shape index: {}]
  %s11 = inlined_call_operand.<no memory space> [shape: f32[1,1], index: 11, kind: input, shape index: {}]
  %s12 = inlined_call_operand.<no memory space> [shape: f32[1,1], index: 12, kind: input, shape index: {}]
  %s13 = inlined_call_operand.vmem [shape: f32[6,1], index: 13, kind: output, shape index: {}]
  %s14 = sld [smem:[#allocation0]]
  $region62: #{_lambda_.27} parent=0
    _
  %s16 = ssub.s32 1, %s14
  %s17 = scalar_select 0, %s16, %s14
  %v18 = vstv %s11
  %19 = vst [vmem:[#allocation2] sm:$0x1] %v18
  %v20 = vstv %s12
  %21 = vst [vmem:[#allocation3] sm:$0x1] %v20
  // Predicated region
  $region2: #{_lambda_.27} parent=0 // pred_check
    _
  $region3: #{_lambda_.27} parent=0 // pred_check_branch
    %23 = sbr.rel (0) target = $region5
  $region4: #{_lambda_.27} parent=0 // pred_region
    _
  $region5: #{_lambda_.27} parent=0 // pred_fallthru
    _
  // Predicated region
  $region6: #{_lambda_.27} parent=0 // pred_check
    _
  $region7: #{_lambda_.27} parent=0 // pred_check_branch
    %25 = sbr.rel (0) target = $region9
  $region8: #{_lambda_.27} parent=0 // pred_region
    _
  $region9: #{_lambda_.27} parent=0 // pred_fallthru
    _
  // Predicated region
  $region10: #{_lambda_.27} parent=0 // pred_check
    _
  $region11: #{_lambda_.27} parent=0 // pred_check_branch
    %27 = sbr.rel (0) target = $region13
  $region12: #{_lambda_.27} parent=0 // pred_region
    _
  $region13: #{_lambda_.27} parent=0 // pred_fallthru
    _
  // Predicated region
  $region14: #{_lambda_.27} parent=0 // pred_check
    _
  $region15: #{_lambda_.27} parent=0 // pred_check_branch
    %29 = sbr.rel (0) target = $region17
  $region16: #{_lambda_.27} parent=0 // pred_region
    _
  $region17: #{_lambda_.27} parent=0 // pred_fallthru
    _
  // Predicated region
  $region18: #{_lambda_.27} parent=0 // pred_check
    _
  $region19: #{_lambda_.27} parent=0 // pred_check_branch
    %31 = sbr.rel (0) target = $region21
  $region20: #{_lambda_.27} parent=0 // pred_region
    _
  $region21: #{_lambda_.27} parent=0 // pred_fallthru
    _
  // Predicated region
  $region22: #{_lambda_.27} parent=0 // pred_check
    _
  $region23: #{_lambda_.27} parent=0 // pred_check_branch
    %33 = sbr.rel (0) target = $region25
  $region24: #{_lambda_.27} parent=0 // pred_region
    _
  $region25: #{_lambda_.27} parent=0 // pred_fallthru
    _
  // Predicated region
  $region26: #{_lambda_.27} parent=0 // pred_check
    _
  $region27: #{_lambda_.27} parent=0 // pred_check_branch
    %35 = sbr.rel (0) target = $region29
  $region28: #{_lambda_.27} parent=0 // pred_region
    _
  $region29: #{_lambda_.27} parent=0 // pred_fallthru
    _
  // Predicated region
  $region30: #{_lambda_.27} parent=0 // pred_check
    _
  $region31: #{_lambda_.27} parent=0 // pred_check_branch
    %37 = sbr.rel (0) target = $region33
  $region32: #{_lambda_.27} parent=0 // pred_region
    _
  $region33: #{_lambda_.27} parent=0 // pred_fallthru
    _
  // Predicated region
  $region34: #{_lambda_.27} parent=0 // pred_check
    _
  $region35: #{_lambda_.27} parent=0 // pred_check_branch
    %39 = sbr.rel (0) target = $region37
  $region36: #{_lambda_.27} parent=0 // pred_region
    _
  $region37: #{_lambda_.27} parent=0 // pred_fallthru
    _
  // Predicated region
  $region38: #{_lambda_.27} parent=0 // pred_check
    _
  $region39: #{_lambda_.27} parent=0 // pred_check_branch
    %41 = sbr.rel (0) target = $region41
  $region40: #{_lambda_.27} parent=0 // pred_region
    _
  $region41: #{_lambda_.27} parent=0 // pred_fallthru
    _
  // Predicated region
  $region42: #{_lambda_.27} parent=0 // pred_check
    _
  $region43: #{_lambda_.27} parent=0 // pred_check_branch
    %43 = sbr.rel (0) target = $region45
  $region44: #{_lambda_.27} parent=0 // pred_region
    _
  $region45: #{_lambda_.27} parent=0 // pred_fallthru
    _
  // Predicated region
  $region46: #{_lambda_.27} parent=0 // pred_check
    _
  $region47: #{_lambda_.27} parent=0 // pred_check_branch
    %45 = sbr.rel (0) target = $region49
  $region48: #{_lambda_.27} parent=0 // pred_region
    _
  $region49: #{_lambda_.27} parent=0 // pred_fallthru
    _
  // Predicated region
  $region50: #{_lambda_.27} parent=0 // pred_check
    _
  $region51: #{_lambda_.27} parent=0 // pred_check_branch
    %47 = sbr.rel (0) target = $region53
  $region52: #{_lambda_.27} parent=0 // pred_region
    _
  $region53: #{_lambda_.27} parent=0 // pred_fallthru
    _
  %v48 = vld [vmem:[%s0] sm:$0x3f]
  %v49 = vld [vmem:[%s1] sm:$0xff]
  %v50 = vld [vmem:[%s1 + $0x8] sm:$0xff]
  %v51 = vld [vmem:[%s1 + $0x10] sm:$0xff]
  %v52 = vld [vmem:[%s1 + $0x18] sm:$0xff]
  %v53 = vld [vmem:[%s1 + $0x20] sm:$0xff]
  %v54 = vld [vmem:[%s1 + $0x28] sm:$0xff]
  %v55 = vld [vmem:[%s1 + $0x30] sm:$0xff]
  %v56 = vld [vmem:[%s1 + $0x38] sm:$0xff]
  %vm57 = vcmask 261120
  %v59 = vsel %vm57, %v48, 0
  %61 = vmatpush.msra.mxu0 0.0
  %62 = vmatpush.msra.mxu0 0.0
  %63 = vmatpush.msra.mxu0 0.0
  %64 = vmatpush.msra.mxu0 0.0
  %65 = vmatpush.msra.mxu0 0.0
  %66 = vmatpush.msra.mxu0 0.0
  %67 = vmatpush.msra.mxu0 0.0
  %68 = vmatpush.msra.mxu0 0.0
  %69 = vmatpush.msra.mxu0 0.0
  %70 = vmatpush.msra.mxu0 0.0
  %71 = vmatpush.msra.mxu0 0.0
  %72 = vmatpush.msra.mxu0 0.0
  %73 = vmatpush.msra.mxu0 %v55
  %74 = vmatpush.msra.mxu0 %v53
  %75 = vmatpush.msra.mxu0 %v51
  %76 = vmatpush.msra.mxu0 %v49
  %77 = vmatmul.f32.gmra.mxu0 %v59
  %v78 = vpop.f32.mrf.mxu0
  %v79 = vadd.f32 0.0, %v78
  %80 = vdwg.mxu0
  %81 = vmatpush.msra.mxu0 0.0
  %82 = vmatpush.msra.mxu0 0.0
  %83 = vmatpush.msra.mxu0 0.0
  %84 = vmatpush.msra.mxu0 0.0
  %85 = vmatpush.msra.mxu0 0.0
  %86 = vmatpush.msra.mxu0 0.0
  %87 = vmatpush.msra.mxu0 0.0
  %88 = vmatpush.msra.mxu0 0.0
  %89 = vmatpush.msra.mxu0 0.0
  %90 = vmatpush.msra.mxu0 0.0
  %91 = vmatpush.msra.mxu0 0.0
  %92 = vmatpush.msra.mxu0 0.0
  %93 = vmatpush.msra.mxu0 %v56
  %94 = vmatpush.msra.mxu0 %v54
  %95 = vmatpush.msra.mxu0 %v52
  %96 = vmatpush.msra.mxu0 %v50
  %97 = vmatmul.f32.gmra.mxu0 %v59
  %v98 = vpop.f32.mrf.mxu0
  %v99 = vadd.f32 0.0, %v98
  %100 = vdwg.mxu0
  %v101 = vld [vmem:[%s2] sm:$0x3]
  %v103 = vperm.slane %v101, 0
  %v104 = vperm.slane %v101, 1
  %v107 = vmul.f32 %v79, %v103
  %v108 = vmul.f32 %v99, %v104
  %v109 = vld [vmem:[%s3] sm:$0x3]
  %v111 = vperm.slane %v109, 0
  %v112 = vperm.slane %v109, 1
  %v115 = vadd.f32 %v107, %v111
  %v116 = vadd.f32 %v108, %v112
  %vm117 = vcmp.ge.f32.partialorder %v115, 0.0
  %vm118 = vcmp.ge.f32.partialorder %v116, 0.0
  %v119 = vmul.f32 %v115, 0.01
  %v120 = vmul.f32 %v116, 0.01
  %v121 = vsel %vm117, %v115, %v119
  %v122 = vsel %vm118, %v116, %v120
  %v123 = vld [vmem:[%s4] sm:$0xff]
  %v124 = vld [vmem:[%s4 + $0x8] sm:$0xff]
  %v125 = vld [vmem:[%s4 + $0x10] sm:$0xff]
  %v126 = vld [vmem:[%s4 + $0x18] sm:$0xff]
  %v127 = vld [vmem:[%s4 + $0x20] sm:$0xff]
  %v128 = vld [vmem:[%s4 + $0x28] sm:$0xff]
  %v129 = vld [vmem:[%s4 + $0x30] sm:$0xff]
  %v130 = vld [vmem:[%s4 + $0x38] sm:$0xff]
  %v131 = vld [vmem:[%s4 + $0x40] sm:$0xff]
  %v132 = vld [vmem:[%s4 + $0x48] sm:$0xff]
  %v133 = vld [vmem:[%s4 + $0x50] sm:$0xff]
  %v134 = vld [vmem:[%s4 + $0x58] sm:$0xff]
  %v135 = vld [vmem:[%s4 + $0x60] sm:$0xff]
  %v136 = vld [vmem:[%s4 + $0x68] sm:$0xff]
  %v137 = vld [vmem:[%s4 + $0x70] sm:$0xff]
  %v138 = vld [vmem:[%s4 + $0x78] sm:$0xff]
  %v139 = vld [vmem:[%s4 + $0x80] sm:$0xff]
  %v140 = vld [vmem:[%s4 + $0x88] sm:$0xff]
  %v141 = vld [vmem:[%s4 + $0x90] sm:$0xff]
  %v142 = vld [vmem:[%s4 + $0x98] sm:$0xff]
  %v143 = vld [vmem:[%s4 + $0xa0] sm:$0xff]
  %v144 = vld [vmem:[%s4 + $0xa8] sm:$0xff]
  %v145 = vld [vmem:[%s4 + $0xb0] sm:$0xff]
  %v146 = vld [vmem:[%s4 + $0xb8] sm:$0xff]
  %v147 = vld [vmem:[%s4 + $0xc0] sm:$0xff]
  %v148 = vld [vmem:[%s4 + $0xc8] sm:$0xff]
  %v149 = vld [vmem:[%s4 + $0xd0] sm:$0xff]
  %v150 = vld [vmem:[%s4 + $0xd8] sm:$0xff]
  %v151 = vld [vmem:[%s4 + $0xe0] sm:$0xff]
  %v152 = vld [vmem:[%s4 + $0xe8] sm:$0xff]
  %v153 = vld [vmem:[%s4 + $0xf0] sm:$0xff]
  %v154 = vld [vmem:[%s4 + $0xf8] sm:$0xff]
  %155 = vmatpush.msra.mxu0 %v138
  %156 = vmatpush.msra.mxu0 %v137
  %157 = vmatpush.msra.mxu0 %v136
  %158 = vmatpush.msra.mxu0 %v135
  %159 = vmatpush.msra.mxu0 %v134
  %160 = vmatpush.msra.mxu0 %v133
  %161 = vmatpush.msra.mxu0 %v132
  %162 = vmatpush.msra.mxu0 %v131
  %163 = vmatpush.msra.mxu0 %v130
  %164 = vmatpush.msra.mxu0 %v129
  %165 = vmatpush.msra.mxu0 %v128
  %166 = vmatpush.msra.mxu0 %v127
  %167 = vmatpush.msra.mxu0 %v126
  %168 = vmatpush.msra.mxu0 %v125
  %169 = vmatpush.msra.mxu0 %v124
  %170 = vmatpush.msra.mxu0 %v123
  %171 = vmatmul.f32.gmra.mxu0 %v121
  %v172 = vpop.f32.mrf.mxu0
  %v173 = vadd.f32 0.0, %v172
  %174 = vdwg.mxu0
  %175 = vmatpush.msra.mxu0 %v154
  %176 = vmatpush.msra.mxu0 %v153
  %177 = vmatpush.msra.mxu0 %v152
  %178 = vmatpush.msra.mxu0 %v151
  %179 = vmatpush.msra.mxu0 %v150
  %180 = vmatpush.msra.mxu0 %v149
  %181 = vmatpush.msra.mxu0 %v148
  %182 = vmatpush.msra.mxu0 %v147
  %183 = vmatpush.msra.mxu0 %v146
  %184 = vmatpush.msra.mxu0 %v145
  %185 = vmatpush.msra.mxu0 %v144
  %186 = vmatpush.msra.mxu0 %v143
  %187 = vmatpush.msra.mxu0 %v142
  %188 = vmatpush.msra.mxu0 %v141
  %189 = vmatpush.msra.mxu0 %v140
  %190 = vmatpush.msra.mxu0 %v139
  %191 = vmatmul.f32.gmra.mxu0 %v122
  %v192 = vpop.f32.mrf.mxu0
  %v193 = vadd.f32 %v173, %v192
  %194 = vdwg.mxu0
  %v195 = vld [vmem:[%s5] sm:$0x1]
  %v197 = vperm.slane %v195, 0
  %v199 = vmul.f32 %v193, %v197
  %v200 = vld [vmem:[%s6] sm:$0x1]
  %v202 = vperm.slane %v200, 0
  %v204 = vadd.f32 %v199, %v202
  %vm205 = vcmp.ge.f32.partialorder %v204, 0.0
  %v206 = vmul.f32 %v204, 0.01
  %v207 = vsel %vm205, %v204, %v206
  %v208 = vld [vmem:[%s7] sm:$0xff]
  %v209 = vld [vmem:[%s7 + $0x8] sm:$0xff]
  %v210 = vld [vmem:[%s7 + $0x10] sm:$0xff]
  %v211 = vld [vmem:[%s7 + $0x18] sm:$0xff]
  %v212 = vld [vmem:[%s7 + $0x20] sm:$0xff]
  %v213 = vld [vmem:[%s7 + $0x28] sm:$0xff]
  %v214 = vld [vmem:[%s7 + $0x30] sm:$0xff]
  %v215 = vld [vmem:[%s7 + $0x38] sm:$0xff]
  %v216 = vld [vmem:[%s7 + $0x40] sm:$0xff]
  %v217 = vld [vmem:[%s7 + $0x48] sm:$0xff]
  %v218 = vld [vmem:[%s7 + $0x50] sm:$0xff]
  %v219 = vld [vmem:[%s7 + $0x58] sm:$0xff]
  %v220 = vld [vmem:[%s7 + $0x60] sm:$0xff]
  %v221 = vld [vmem:[%s7 + $0x68] sm:$0xff]
  %v222 = vld [vmem:[%s7 + $0x70] sm:$0xff]
  %v223 = vld [vmem:[%s7 + $0x78] sm:$0xff]
  %224 = vmatpush.msra.mxu0 %v223
  %225 = vmatpush.msra.mxu0 %v222
  %226 = vmatpush.msra.mxu0 %v221
  %227 = vmatpush.msra.mxu0 %v220
  %228 = vmatpush.msra.mxu0 %v219
  %229 = vmatpush.msra.mxu0 %v218
  %230 = vmatpush.msra.mxu0 %v217
  %231 = vmatpush.msra.mxu0 %v216
  %232 = vmatpush.msra.mxu0 %v215
  %233 = vmatpush.msra.mxu0 %v214
  %234 = vmatpush.msra.mxu0 %v213
  %235 = vmatpush.msra.mxu0 %v212
  %236 = vmatpush.msra.mxu0 %v211
  %237 = vmatpush.msra.mxu0 %v210
  %238 = vmatpush.msra.mxu0 %v209
  %239 = vmatpush.msra.mxu0 %v208
  %240 = vmatmul.f32.gmra.mxu0 %v207
  %v241 = vpop.f32.mrf.mxu0
  %v242 = vadd.f32 0.0, %v241
  %243 = vdwg.mxu0
  %v244 = vld [vmem:[%s8] sm:$0x1]
  %v246 = vperm.slane %v244, 0
  %v248 = vmul.f32 %v242, %v246
  %v249 = vld [vmem:[%s9] sm:$0x1]
  %v251 = vperm.slane %v249, 0
  %v253 = vadd.f32 %v248, %v251
  %vm254 = vcmp.ge.f32.partialorder %v253, 0.0
  %v255 = vmul.f32 %v253, 0.01
  %v256 = vsel %vm254, %v253, %v255
  %v257 = vld [vmem:[%s10] sm:$0xff]
  %v258 = vld [vmem:[%s10 + $0x8] sm:$0xff]
  %v259 = vld [vmem:[%s10 + $0x10] sm:$0xff]
  %v260 = vld [vmem:[%s10 + $0x18] sm:$0xff]
  %v261 = vld [vmem:[%s10 + $0x20] sm:$0xff]
  %v262 = vld [vmem:[%s10 + $0x28] sm:$0xff]
  %v263 = vld [vmem:[%s10 + $0x30] sm:$0xff]
  %v264 = vld [vmem:[%s10 + $0x38] sm:$0xff]
  %vm265 = vcmask 523264
  %v267 = vsel %vm265, %v256, 0
  %269 = vmatpush.msra.mxu0 0.0
  %270 = vmatpush.msra.mxu0 0.0
  %271 = vmatpush.msra.mxu0 0.0
  %272 = vmatpush.msra.mxu0 0.0
  %273 = vmatpush.msra.mxu0 0.0
  %274 = vmatpush.msra.mxu0 0.0
  %275 = vmatpush.msra.mxu0 0.0
  %276 = vmatpush.msra.mxu0 0.0
  %277 = vmatpush.msra.mxu0 %v264
  %278 = vmatpush.msra.mxu0 %v263
  %279 = vmatpush.msra.mxu0 %v262
  %280 = vmatpush.msra.mxu0 %v261
  %281 = vmatpush.msra.mxu0 %v260
  %282 = vmatpush.msra.mxu0 %v259
  %283 = vmatpush.msra.mxu0 %v258
  %284 = vmatpush.msra.mxu0 %v257
  %285 = vmatmul.f32.gmra.mxu0 %v267
  %v286 = vpop.f32.mrf.mxu0
  %v287 = vadd.f32 0.0, %v286
  %288 = vdwg.mxu0
  %v289 = vld [vmem:[#allocation2] sm:$0x1]
  %v291 = vperm.slane %v289, 0
  %v293 = vmul.f32 %v287, %v291
  %v294 = vld [vmem:[#allocation3] sm:$0x1]
  %v296 = vperm.slane %v294, 0
  %v298 = vadd.f32 %v293, %v296
  %vm299 = vcmask 5120
  %300 = vst.msk [vmem:[%s13] sm:$0x3f] %vm299, %v298
  // Predicated region
  $region54: #{_lambda_.27} parent=0 // pred_check
    _
  $region55: #{_lambda_.27} parent=0 // pred_check_branch
    %302 = sbr.rel (0) target = $region57
  $region56: #{_lambda_.27} parent=0 // pred_region
    _
  $region57: #{_lambda_.27} parent=0 // pred_fallthru
    _
  // Predicated region
  $region58: #{_lambda_.27} parent=0 // pred_check
    _
  $region59: #{_lambda_.27} parent=0 // pred_check_branch
    %304 = sbr.rel (0) target = $region61
  $region60: #{_lambda_.27} parent=0 // pred_region
    _
  $region61: #{_lambda_.27} parent=0 // pred_fallthru
    _

</llo_original>
